<compile_context>
chip_gen: v7x
topology: tpu7x:2x2x1
jax: 0.10.0
libtpu: 0.0.40
codegen_flags: <defaults>
</compile_context>

<pallas_src>
import jax
import jax.numpy as jnp
from jax.experimental import pallas as pl
from jax.experimental.pallas import tpu as pltpu

HIDDEN_SIZES = [1024, 1024, 1024, 512, 512, 512, 512, 512]  # + out_size appended


def _round_up(x, m):
    return ((x + m - 1) // m) * m


def _fused_mlp_kernel(x_ref, b_ref, s_ref, a_ref, *rest):
    """Fused 9-layer MLP with manually streamed int8 weights.

    x_ref : (B, K0)     f32  VMEM   input activations
    b_ref : (16, 1024)  f32  VMEM   packed biases        (row i = layer i)
    s_ref : (16, 1024)  f32  VMEM   packed per-output-channel dequant scales
    a_ref : (9,)        f32  SMEM   packed PReLU alphas  (last entry unused)
    rest  : 9x HBM weight refs (int8, (K_i, N_i)),
            out_ref (B, Nout_pad) f32,
            9x VMEM int8 weight scratch buffers,
            DMA semaphore array of shape (9,)
    """
    n = (len(rest) - 2) // 2
    w_hbm = rest[:n]
    out_ref = rest[n]
    w_vmem = rest[n + 1:2 * n + 1]
    sem = rest[2 * n + 1]

    # Issue every weight DMA up front (HBM -> VMEM, int8).  Each copy has its
    # own semaphore, so computing layer i overlaps the still-in-flight copies
    # of layers > i (an N-deep prefetch pipeline instead of DMA-then-compute).
    copies = []
    for i in range(n):
        cp = pltpu.make_async_copy(w_hbm[i], w_vmem[i], sem.at[i])
        cp.start()
        copies.append(cp)

    # Activation stays on-chip for the whole network; cast to bf16 once per
    # layer (here for the input, and at the end of each layer's epilogue).
    h = x_ref[...].astype(jnp.bfloat16)
    for i in range(n):
        copies[i].wait()
        cols = w_vmem[i].shape[1]
        # Weight-only int8 dequant: int8 -> bf16 is exact; the per-channel
        # scale commutes with the contraction and is applied in the f32
        # epilogue (before the PReLU), together with the bias.
        w = w_vmem[i][...].astype(jnp.bfloat16)
        y = jnp.dot(h, w, preferred_element_type=jnp.float32)      # MXU, f32 acc
        y = y * s_ref[i:i + 1, :cols] + b_ref[i:i + 1, :cols]      # f32 epilogue
        if i < n - 1:
            y = jnp.where(y >= 0, y, a_ref[i] * y)                 # scalar PReLU
            h = y.astype(jnp.bfloat16)
        else:
            out_ref[...] = y.astype(out_ref.dtype)


def _fused_forward_call(x, b_packed, s_packed, alphas, ws_q):
    """Single pallas_call running the whole fused network."""
    B = x.shape[0]
    nout_pad = ws_q[-1].shape[1]
    in_specs = (
        [pl.BlockSpec(x.shape, lambda i: (0, 0)),
         pl.BlockSpec(b_packed.shape, lambda i: (0, 0)),
         pl.BlockSpec(s_packed.shape, lambda i: (0, 0)),
         pl.BlockSpec(memory_space=pltpu.MemorySpace.SMEM)]
        + [pl.BlockSpec(memory_space=pl.ANY) for _ in ws_q]   # weights stay in HBM
    )
    scratch_shapes = (
        [pltpu.VMEM(w.shape, jnp.int8) for w in ws_q]          # single-buffered
        + [pltpu.SemaphoreType.DMA((len(ws_q),))]
    )
    return pl.pallas_call(
        _fused_mlp_kernel,
        out_shape=jax.ShapeDtypeStruct((B, nout_pad), jnp.float32),
        grid=(1,),
        in_specs=in_specs,
        out_specs=pl.BlockSpec((B, nout_pad), lambda i: (0, 0)),
        scratch_shapes=scratch_shapes,
        compiler_params=pltpu.CompilerParams(
            dimension_semantics=("arbitrary",),
            # ~3.6 MiB int8 weight scratch + dequant temporaries; generous
            # headroom but far below every generation's VMEM (v7x: 64 MiB).
            vmem_limit_bytes=20 * 1024 * 1024,
        ),
    )(x, b_packed, s_packed, alphas, *ws_q)


def init_fully_connected_params(key, in_size, out_size):
    """Deterministic init mirroring PyTorch nn.Linear / nn.PReLU defaults.

    Linear: weight, bias ~ U(-1/sqrt(fan_in), 1/sqrt(fan_in));  PReLU alpha = 0.25.
    Weights are stored (in,out)-major and quantized to per-output-channel
    symmetric int8; dequant scales and biases are packed into (16,1024) f32
    arrays.  Only the first layer's K (to a multiple of 32, int8 tiling) and
    the last layer's N (to 128, lane-dense store) are zero-padded.
    """
    sizes = [in_size] + HIDDEN_SIZES + [out_size]
    n_layers = len(sizes) - 1
    k0_pad = _round_up(in_size, 32)
    nout_pad = max(128, _round_up(out_size, 128))

    ws_q, ws_f32, bs_f32 = [], [], []
    b_packed = jnp.zeros((_round_up(n_layers, 8), 1024), jnp.float32)
    s_packed = jnp.ones((_round_up(n_layers, 8), 1024), jnp.float32)
    for li in range(n_layers):
        fan_in, fan_out = sizes[li], sizes[li + 1]
        key, kw, kb = jax.random.split(key, 3)
        bound = 1.0 / (fan_in ** 0.5)
        w = jax.random.uniform(kw, (fan_in, fan_out), jnp.float32, -bound, bound)
        b = jax.random.uniform(kb, (fan_out,), jnp.float32, -bound, bound)
        ws_f32.append(w)
        bs_f32.append(b)

        kp = k0_pad if li == 0 else fan_in
        np_ = nout_pad if li == n_layers - 1 else fan_out
        w_pad = jnp.pad(w, ((0, kp - fan_in), (0, np_ - fan_out)))
        amax = jnp.max(jnp.abs(w_pad), axis=0)
        scale = jnp.where(amax > 0, amax / 127.0, 1.0)
        w_q = jnp.clip(jnp.round(w_pad / scale), -127, 127).astype(jnp.int8)
        ws_q.append(w_q)
        s_packed = s_packed.at[li, :np_].set(scale)
        b_packed = b_packed.at[li, :fan_out].set(b)

    alphas = jnp.full((n_layers,), 0.25, jnp.float32)   # last entry unused (no PReLU)
    meta = dict(in_size=in_size, out_size=out_size, k0_pad=k0_pad, nout_pad=nout_pad)
    return dict(ws_q=ws_q, b=b_packed, s=s_packed, alphas=alphas,
                ws_f32=ws_f32, bs_f32=bs_f32, meta=meta)


def fully_connected_forward(params, x):
    """Forward pass of FullyConnected via a single fused Pallas kernel."""
    meta = params["meta"]
    if meta["k0_pad"] != meta["in_size"]:
        x = jnp.pad(x, ((0, 0), (0, meta["k0_pad"] - meta["in_size"])))
    y_pad = _fused_forward_call(x, params["b"], params["s"], params["alphas"],
                                params["ws_q"])
    return y_pad[:, :meta["out_size"]]


def fully_connected_ref_kernel_math(params, x):
    """Pure-JAX replay of the exact kernel math (int8 dequant, bf16 MXU, f32 epilogue)."""
    meta = params["meta"]
    n_layers = len(params["ws_q"])
    if meta["k0_pad"] != meta["in_size"]:
        x = jnp.pad(x, ((0, 0), (0, meta["k0_pad"] - meta["in_size"])))
    h = x.astype(jnp.bfloat16)
    y = None
    for i, w_q in enumerate(params["ws_q"]):
        cols = w_q.shape[1]
        y = jnp.dot(h, w_q.astype(jnp.bfloat16), preferred_element_type=jnp.float32)
        y = y * params["s"][i, :cols] + params["b"][i, :cols]
        if i < n_layers - 1:
            y = jnp.where(y >= 0, y, params["alphas"][i] * y)
            h = y.astype(jnp.bfloat16)
    return y[:, :meta["out_size"]]


def fully_connected_ref_f32(params, x):
    """Pure-f32 reference of the original PyTorch module (no quantization)."""
    n_layers = len(params["ws_f32"])
    h = x
    for i in range(n_layers):
        h = jnp.dot(h, params["ws_f32"][i],
                    precision=jax.lax.Precision.HIGHEST) + params["bs_f32"][i]
        if i < n_layers - 1:
            h = jnp.where(h >= 0, h, params["alphas"][i] * h)
    return h


if __name__ == "__main__":
    in_size, out_size, batch = 32, 4, 8

    key = jax.random.PRNGKey(0)
    key, kx = jax.random.split(key)
    params = init_fully_connected_params(key, in_size, out_size)
    x = jax.random.normal(kx, (batch, in_size), dtype=jnp.float32)

    out = jax.block_until_ready(fully_connected_forward(params, x))
    assert out.shape == (batch, out_size), out.shape

    # (1) bit-level sanity: replay of the kernel's own quantized math.
    ref_kernel = fully_connected_ref_kernel_math(params, x)
    assert jnp.allclose(out, ref_kernel, atol=1e-3, rtol=1e-3), \
        "mismatch vs kernel-math reference"
    # (2) accuracy budget vs the true f32 module (int8+bf16 quantization error).
    ref_f32 = fully_connected_ref_f32(params, x)
    assert jnp.allclose(out, ref_f32, atol=2e-2, rtol=5e-2), \
        "mismatch vs pure-f32 reference"

    print("KERNEL_OK")
</pallas_src>

<mosaic_0001>
module attributes {stable_mosaic.version = 11 : i64} {
  func.func @_fused_mlp_kernel(%arg0: i32, %arg1: memref<8x32xf32, #tpu.memory_space<vmem>>, %arg2: memref<16x1024xf32, #tpu.memory_space<vmem>>, %arg3: memref<16x1024xf32, #tpu.memory_space<vmem>>, %arg4: memref<9xf32, #tpu.memory_space<smem>>, %arg5: memref<32x1024xi8, #tpu.memory_space<any>>, %arg6: memref<1024x1024xi8, #tpu.memory_space<any>>, %arg7: memref<1024x1024xi8, #tpu.memory_space<any>>, %arg8: memref<1024x512xi8, #tpu.memory_space<any>>, %arg9: memref<512x512xi8, #tpu.memory_space<any>>, %arg10: memref<512x512xi8, #tpu.memory_space<any>>, %arg11: memref<512x512xi8, #tpu.memory_space<any>>, %arg12: memref<512x512xi8, #tpu.memory_space<any>>, %arg13: memref<512x128xi8, #tpu.memory_space<any>>, %arg14: memref<8x128xf32, #tpu.memory_space<vmem>>, %arg15: memref<32x1024xi8, #tpu.memory_space<vmem>>, %arg16: memref<1024x1024xi8, #tpu.memory_space<vmem>>, %arg17: memref<1024x1024xi8, #tpu.memory_space<vmem>>, %arg18: memref<1024x512xi8, #tpu.memory_space<vmem>>, %arg19: memref<512x512xi8, #tpu.memory_space<vmem>>, %arg20: memref<512x512xi8, #tpu.memory_space<vmem>>, %arg21: memref<512x512xi8, #tpu.memory_space<vmem>>, %arg22: memref<512x512xi8, #tpu.memory_space<vmem>>, %arg23: memref<512x128xi8, #tpu.memory_space<vmem>>, %arg24: memref<9x!tpu.dma_semaphore, #tpu.memory_space<semaphore_mem>>) attributes {dimension_semantics = [#tpu.dimension_semantics<arbitrary>], iteration_bounds = array<i64: 1>, scalar_prefetch = 0 : i64, scratch_operands = 10 : i64, tpu.core_type = #tpu.core_type<tc>, window_params = [{pipeline_mode = #tpu.pipeline_mode<synchronous>, transform_indices = @transform_0, window_bounds = array<i64: 8, 32>}, {pipeline_mode = #tpu.pipeline_mode<synchronous>, transform_indices = @transform_1, window_bounds = array<i64: 16, 1024>}, {pipeline_mode = #tpu.pipeline_mode<synchronous>, transform_indices = @transform_2, window_bounds = array<i64: 16, 1024>}, {transform_indices = @transform_3, window_bounds = array<i64: 9>}, {}, {}, {}, {}, {}, {}, {}, {}, {}, {pipeline_mode = #tpu.pipeline_mode<synchronous>, transform_indices = @transform_13, window_bounds = array<i64: 8, 128>}]} {
    %c0_i32 = arith.constant 0 : i32
    %0 = tpu.memref_slice %arg24[%c0_i32] : memref<9x!tpu.dma_semaphore, #tpu.memory_space<semaphore_mem>> -> memref<1x!tpu.dma_semaphore, #tpu.memory_space<semaphore_mem>>
    %1 = tpu.memref_squeeze %0 : memref<1x!tpu.dma_semaphore, #tpu.memory_space<semaphore_mem>> -> memref<!tpu.dma_semaphore, #tpu.memory_space<semaphore_mem>>
    tpu.enqueue_dma source(%arg5 : memref<32x1024xi8, #tpu.memory_space<any>>) target(%arg15 : memref<32x1024xi8, #tpu.memory_space<vmem>>) target_semaphore(%1 : memref<!tpu.dma_semaphore, #tpu.memory_space<semaphore_mem>>)
    %c1_i32 = arith.constant 1 : i32
    %2 = tpu.memref_slice %arg24[%c1_i32] : memref<9x!tpu.dma_semaphore, #tpu.memory_space<semaphore_mem>> -> memref<1x!tpu.dma_semaphore, #tpu.memory_space<semaphore_mem>>
    %3 = tpu.memref_squeeze %2 : memref<1x!tpu.dma_semaphore, #tpu.memory_space<semaphore_mem>> -> memref<!tpu.dma_semaphore, #tpu.memory_space<semaphore_mem>>
    tpu.enqueue_dma source(%arg6 : memref<1024x1024xi8, #tpu.memory_space<any>>) target(%arg16 : memref<1024x1024xi8, #tpu.memory_space<vmem>>) target_semaphore(%3 : memref<!tpu.dma_semaphore, #tpu.memory_space<semaphore_mem>>)
    %c2_i32 = arith.constant 2 : i32
    %4 = tpu.memref_slice %arg24[%c2_i32] : memref<9x!tpu.dma_semaphore, #tpu.memory_space<semaphore_mem>> -> memref<1x!tpu.dma_semaphore, #tpu.memory_space<semaphore_mem>>
    %5 = tpu.memref_squeeze %4 : memref<1x!tpu.dma_semaphore, #tpu.memory_space<semaphore_mem>> -> memref<!tpu.dma_semaphore, #tpu.memory_space<semaphore_mem>>
    tpu.enqueue_dma source(%arg7 : memref<1024x1024xi8, #tpu.memory_space<any>>) target(%arg17 : memref<1024x1024xi8, #tpu.memory_space<vmem>>) target_semaphore(%5 : memref<!tpu.dma_semaphore, #tpu.memory_space<semaphore_mem>>)
    %c3_i32 = arith.constant 3 : i32
    %6 = tpu.memref_slice %arg24[%c3_i32] : memref<9x!tpu.dma_semaphore, #tpu.memory_space<semaphore_mem>> -> memref<1x!tpu.dma_semaphore, #tpu.memory_space<semaphore_mem>>
    %7 = tpu.memref_squeeze %6 : memref<1x!tpu.dma_semaphore, #tpu.memory_space<semaphore_mem>> -> memref<!tpu.dma_semaphore, #tpu.memory_space<semaphore_mem>>
    tpu.enqueue_dma source(%arg8 : memref<1024x512xi8, #tpu.memory_space<any>>) target(%arg18 : memref<1024x512xi8, #tpu.memory_space<vmem>>) target_semaphore(%7 : memref<!tpu.dma_semaphore, #tpu.memory_space<semaphore_mem>>)
    %c4_i32 = arith.constant 4 : i32
    %8 = tpu.memref_slice %arg24[%c4_i32] : memref<9x!tpu.dma_semaphore, #tpu.memory_space<semaphore_mem>> -> memref<1x!tpu.dma_semaphore, #tpu.memory_space<semaphore_mem>>
    %9 = tpu.memref_squeeze %8 : memref<1x!tpu.dma_semaphore, #tpu.memory_space<semaphore_mem>> -> memref<!tpu.dma_semaphore, #tpu.memory_space<semaphore_mem>>
    tpu.enqueue_dma source(%arg9 : memref<512x512xi8, #tpu.memory_space<any>>) target(%arg19 : memref<512x512xi8, #tpu.memory_space<vmem>>) target_semaphore(%9 : memref<!tpu.dma_semaphore, #tpu.memory_space<semaphore_mem>>)
    %c5_i32 = arith.constant 5 : i32
    %10 = tpu.memref_slice %arg24[%c5_i32] : memref<9x!tpu.dma_semaphore, #tpu.memory_space<semaphore_mem>> -> memref<1x!tpu.dma_semaphore, #tpu.memory_space<semaphore_mem>>
    %11 = tpu.memref_squeeze %10 : memref<1x!tpu.dma_semaphore, #tpu.memory_space<semaphore_mem>> -> memref<!tpu.dma_semaphore, #tpu.memory_space<semaphore_mem>>
    tpu.enqueue_dma source(%arg10 : memref<512x512xi8, #tpu.memory_space<any>>) target(%arg20 : memref<512x512xi8, #tpu.memory_space<vmem>>) target_semaphore(%11 : memref<!tpu.dma_semaphore, #tpu.memory_space<semaphore_mem>>)
    %c6_i32 = arith.constant 6 : i32
    %12 = tpu.memref_slice %arg24[%c6_i32] : memref<9x!tpu.dma_semaphore, #tpu.memory_space<semaphore_mem>> -> memref<1x!tpu.dma_semaphore, #tpu.memory_space<semaphore_mem>>
    %13 = tpu.memref_squeeze %12 : memref<1x!tpu.dma_semaphore, #tpu.memory_space<semaphore_mem>> -> memref<!tpu.dma_semaphore, #tpu.memory_space<semaphore_mem>>
    tpu.enqueue_dma source(%arg11 : memref<512x512xi8, #tpu.memory_space<any>>) target(%arg21 : memref<512x512xi8, #tpu.memory_space<vmem>>) target_semaphore(%13 : memref<!tpu.dma_semaphore, #tpu.memory_space<semaphore_mem>>)
    %c7_i32 = arith.constant 7 : i32
    %14 = tpu.memref_slice %arg24[%c7_i32] : memref<9x!tpu.dma_semaphore, #tpu.memory_space<semaphore_mem>> -> memref<1x!tpu.dma_semaphore, #tpu.memory_space<semaphore_mem>>
    %15 = tpu.memref_squeeze %14 : memref<1x!tpu.dma_semaphore, #tpu.memory_space<semaphore_mem>> -> memref<!tpu.dma_semaphore, #tpu.memory_space<semaphore_mem>>
    tpu.enqueue_dma source(%arg12 : memref<512x512xi8, #tpu.memory_space<any>>) target(%arg22 : memref<512x512xi8, #tpu.memory_space<vmem>>) target_semaphore(%15 : memref<!tpu.dma_semaphore, #tpu.memory_space<semaphore_mem>>)
    %c8_i32 = arith.constant 8 : i32
    %16 = tpu.memref_slice %arg24[%c8_i32] : memref<9x!tpu.dma_semaphore, #tpu.memory_space<semaphore_mem>> -> memref<1x!tpu.dma_semaphore, #tpu.memory_space<semaphore_mem>>
    %17 = tpu.memref_squeeze %16 : memref<1x!tpu.dma_semaphore, #tpu.memory_space<semaphore_mem>> -> memref<!tpu.dma_semaphore, #tpu.memory_space<semaphore_mem>>
    tpu.enqueue_dma source(%arg13 : memref<512x128xi8, #tpu.memory_space<any>>) target(%arg23 : memref<512x128xi8, #tpu.memory_space<vmem>>) target_semaphore(%17 : memref<!tpu.dma_semaphore, #tpu.memory_space<semaphore_mem>>)
    %c0 = arith.constant 0 : index
    %c0_0 = arith.constant 0 : index
    %18 = vector.load %arg1[%c0, %c0_0] : memref<8x32xf32, #tpu.memory_space<vmem>>, vector<8x32xf32>
    %19 = arith.truncf %18 : vector<8x32xf32> to vector<8x32xbf16>
    %c0_i32_1 = arith.constant 0 : i32
    %20 = tpu.memref_slice %arg24[%c0_i32_1] : memref<9x!tpu.dma_semaphore, #tpu.memory_space<semaphore_mem>> -> memref<1x!tpu.dma_semaphore, #tpu.memory_space<semaphore_mem>>
    %21 = tpu.memref_squeeze %20 : memref<1x!tpu.dma_semaphore, #tpu.memory_space<semaphore_mem>> -> memref<!tpu.dma_semaphore, #tpu.memory_space<semaphore_mem>>
    tpu.wait_dma2 semaphore(%21 : memref<!tpu.dma_semaphore, #tpu.memory_space<semaphore_mem>>) src(%arg5 : memref<32x1024xi8, #tpu.memory_space<any>>) dst(%arg15 : memref<32x1024xi8, #tpu.memory_space<vmem>>)
    %c0_2 = arith.constant 0 : index
    %c0_3 = arith.constant 0 : index
    %22 = vector.load %arg15[%c0_2, %c0_3] : memref<32x1024xi8, #tpu.memory_space<vmem>>, vector<32x1024xi8>
    %23 = arith.sitofp %22 : vector<32x1024xi8> to vector<32x1024xbf16>
    %cst = arith.constant dense<0.000000e+00> : vector<8x1024xf32>
    %24 = tpu.matmul %19, %23, %cst {dimension_numbers = #tpu.dot_dimension_numbers<[1], [0], [0], [1], [0, 0, 1, 1], [], []>} : vector<8x32xbf16>, vector<32x1024xbf16>, vector<8x1024xf32> -> vector<8x1024xf32>
    %c0_4 = arith.constant 0 : index
    %c0_5 = arith.constant 0 : index
    %25 = vector.load %arg3[%c0_4, %c0_5] : memref<16x1024xf32, #tpu.memory_space<vmem>>, vector<1x1024xf32>
    %26 = vector.broadcast %25 : vector<1x1024xf32> to vector<8x1024xf32>
    %27 = arith.mulf %24, %26 : vector<8x1024xf32>
    %c0_6 = arith.constant 0 : index
    %c0_7 = arith.constant 0 : index
    %28 = vector.load %arg2[%c0_6, %c0_7] : memref<16x1024xf32, #tpu.memory_space<vmem>>, vector<1x1024xf32>
    %29 = vector.broadcast %28 : vector<1x1024xf32> to vector<8x1024xf32>
    %30 = arith.addf %27, %29 : vector<8x1024xf32>
    %cst_8 = arith.constant 0.000000e+00 : f32
    %31 = vector.broadcast %cst_8 : f32 to vector<8x1024xf32>
    %32 = arith.cmpf oge, %30, %31 : vector<8x1024xf32>
    %c0_9 = arith.constant 0 : index
    %33 = memref.load %arg4[%c0_9] : memref<9xf32, #tpu.memory_space<smem>>
    %34 = vector.broadcast %33 : f32 to vector<8x1024xf32>
    %35 = arith.mulf %34, %30 : vector<8x1024xf32>
    %36 = arith.select %32, %30, %35 : vector<8x1024xi1>, vector<8x1024xf32>
    %37 = arith.truncf %36 : vector<8x1024xf32> to vector<8x1024xbf16>
    %c1_i32_10 = arith.constant 1 : i32
    %38 = tpu.memref_slice %arg24[%c1_i32_10] : memref<9x!tpu.dma_semaphore, #tpu.memory_space<semaphore_mem>> -> memref<1x!tpu.dma_semaphore, #tpu.memory_space<semaphore_mem>>
    %39 = tpu.memref_squeeze %38 : memref<1x!tpu.dma_semaphore, #tpu.memory_space<semaphore_mem>> -> memref<!tpu.dma_semaphore, #tpu.memory_space<semaphore_mem>>
    tpu.wait_dma2 semaphore(%39 : memref<!tpu.dma_semaphore, #tpu.memory_space<semaphore_mem>>) src(%arg6 : memref<1024x1024xi8, #tpu.memory_space<any>>) dst(%arg16 : memref<1024x1024xi8, #tpu.memory_space<vmem>>)
    %c0_11 = arith.constant 0 : index
    %c0_12 = arith.constant 0 : index
    %40 = vector.load %arg16[%c0_11, %c0_12] : memref<1024x1024xi8, #tpu.memory_space<vmem>>, vector<1024x1024xi8>
    %41 = arith.sitofp %40 : vector<1024x1024xi8> to vector<1024x1024xbf16>
    %cst_13 = arith.constant dense<0.000000e+00> : vector<8x1024xf32>
    %42 = tpu.matmul %37, %41, %cst_13 {dimension_numbers = #tpu.dot_dimension_numbers<[1], [0], [0], [1], [0, 0, 1, 1], [], []>} : vector<8x1024xbf16>, vector<1024x1024xbf16>, vector<8x1024xf32> -> vector<8x1024xf32>
    %c1 = arith.constant 1 : index
    %c0_14 = arith.constant 0 : index
    %43 = vector.load %arg3[%c1, %c0_14] : memref<16x1024xf32, #tpu.memory_space<vmem>>, vector<1x1024xf32>
    %44 = vector.broadcast %43 : vector<1x1024xf32> to vector<8x1024xf32>
    %45 = arith.mulf %42, %44 : vector<8x1024xf32>
    %c1_15 = arith.constant 1 : index
    %c0_16 = arith.constant 0 : index
    %46 = vector.load %arg2[%c1_15, %c0_16] : memref<16x1024xf32, #tpu.memory_space<vmem>>, vector<1x1024xf32>
    %47 = vector.broadcast %46 : vector<1x1024xf32> to vector<8x1024xf32>
    %48 = arith.addf %45, %47 : vector<8x1024xf32>
    %cst_17 = arith.constant 0.000000e+00 : f32
    %49 = vector.broadcast %cst_17 : f32 to vector<8x1024xf32>
    %50 = arith.cmpf oge, %48, %49 : vector<8x1024xf32>
    %c1_18 = arith.constant 1 : index
    %51 = memref.load %arg4[%c1_18] : memref<9xf32, #tpu.memory_space<smem>>
    %52 = vector.broadcast %51 : f32 to vector<8x1024xf32>
    %53 = arith.mulf %52, %48 : vector<8x1024xf32>
    %54 = arith.select %50, %48, %53 : vector<8x1024xi1>, vector<8x1024xf32>
    %55 = arith.truncf %54 : vector<8x1024xf32> to vector<8x1024xbf16>
    %c2_i32_19 = arith.constant 2 : i32
    %56 = tpu.memref_slice %arg24[%c2_i32_19] : memref<9x!tpu.dma_semaphore, #tpu.memory_space<semaphore_mem>> -> memref<1x!tpu.dma_semaphore, #tpu.memory_space<semaphore_mem>>
    %57 = tpu.memref_squeeze %56 : memref<1x!tpu.dma_semaphore, #tpu.memory_space<semaphore_mem>> -> memref<!tpu.dma_semaphore, #tpu.memory_space<semaphore_mem>>
    tpu.wait_dma2 semaphore(%57 : memref<!tpu.dma_semaphore, #tpu.memory_space<semaphore_mem>>) src(%arg7 : memref<1024x1024xi8, #tpu.memory_space<any>>) dst(%arg17 : memref<1024x1024xi8, #tpu.memory_space<vmem>>)
    %c0_20 = arith.constant 0 : index
    %c0_21 = arith.constant 0 : index
    %58 = vector.load %arg17[%c0_20, %c0_21] : memref<1024x1024xi8, #tpu.memory_space<vmem>>, vector<1024x1024xi8>
    %59 = arith.sitofp %58 : vector<1024x1024xi8> to vector<1024x1024xbf16>
    %cst_22 = arith.constant dense<0.000000e+00> : vector<8x1024xf32>
    %60 = tpu.matmul %55, %59, %cst_22 {dimension_numbers = #tpu.dot_dimension_numbers<[1], [0], [0], [1], [0, 0, 1, 1], [], []>} : vector<8x1024xbf16>, vector<1024x1024xbf16>, vector<8x1024xf32> -> vector<8x1024xf32>
    %c2 = arith.constant 2 : index
    %c0_23 = arith.constant 0 : index
    %61 = vector.load %arg3[%c2, %c0_23] : memref<16x1024xf32, #tpu.memory_space<vmem>>, vector<1x1024xf32>
    %62 = vector.broadcast %61 : vector<1x1024xf32> to vector<8x1024xf32>
    %63 = arith.mulf %60, %62 : vector<8x1024xf32>
    %c2_24 = arith.constant 2 : index
    %c0_25 = arith.constant 0 : index
    %64 = vector.load %arg2[%c2_24, %c0_25] : memref<16x1024xf32, #tpu.memory_space<vmem>>, vector<1x1024xf32>
    %65 = vector.broadcast %64 : vector<1x1024xf32> to vector<8x1024xf32>
    %66 = arith.addf %63, %65 : vector<8x1024xf32>
    %cst_26 = arith.constant 0.000000e+00 : f32
    %67 = vector.broadcast %cst_26 : f32 to vector<8x1024xf32>
    %68 = arith.cmpf oge, %66, %67 : vector<8x1024xf32>
    %c2_27 = arith.constant 2 : index
    %69 = memref.load %arg4[%c2_27] : memref<9xf32, #tpu.memory_space<smem>>
    %70 = vector.broadcast %69 : f32 to vector<8x1024xf32>
    %71 = arith.mulf %70, %66 : vector<8x1024xf32>
    %72 = arith.select %68, %66, %71 : vector<8x1024xi1>, vector<8x1024xf32>
    %73 = arith.truncf %72 : vector<8x1024xf32> to vector<8x1024xbf16>
    %c3_i32_28 = arith.constant 3 : i32
    %74 = tpu.memref_slice %arg24[%c3_i32_28] : memref<9x!tpu.dma_semaphore, #tpu.memory_space<semaphore_mem>> -> memref<1x!tpu.dma_semaphore, #tpu.memory_space<semaphore_mem>>
    %75 = tpu.memref_squeeze %74 : memref<1x!tpu.dma_semaphore, #tpu.memory_space<semaphore_mem>> -> memref<!tpu.dma_semaphore, #tpu.memory_space<semaphore_mem>>
    tpu.wait_dma2 semaphore(%75 : memref<!tpu.dma_semaphore, #tpu.memory_space<semaphore_mem>>) src(%arg8 : memref<1024x512xi8, #tpu.memory_space<any>>) dst(%arg18 : memref<1024x512xi8, #tpu.memory_space<vmem>>)
    %c0_29 = arith.constant 0 : index
    %c0_30 = arith.constant 0 : index
    %76 = vector.load %arg18[%c0_29, %c0_30] : memref<1024x512xi8, #tpu.memory_space<vmem>>, vector<1024x512xi8>
    %77 = arith.sitofp %76 : vector<1024x512xi8> to vector<1024x512xbf16>
    %cst_31 = arith.constant dense<0.000000e+00> : vector<8x512xf32>
    %78 = tpu.matmul %73, %77, %cst_31 {dimension_numbers = #tpu.dot_dimension_numbers<[1], [0], [0], [1], [0, 0, 1, 1], [], []>} : vector<8x1024xbf16>, vector<1024x512xbf16>, vector<8x512xf32> -> vector<8x512xf32>
    %c3 = arith.constant 3 : index
    %c0_32 = arith.constant 0 : index
    %79 = vector.load %arg3[%c3, %c0_32] : memref<16x1024xf32, #tpu.memory_space<vmem>>, vector<1x512xf32>
    %80 = vector.broadcast %79 : vector<1x512xf32> to vector<8x512xf32>
    %81 = arith.mulf %78, %80 : vector<8x512xf32>
    %c3_33 = arith.constant 3 : index
    %c0_34 = arith.constant 0 : index
    %82 = vector.load %arg2[%c3_33, %c0_34] : memref<16x1024xf32, #tpu.memory_space<vmem>>, vector<1x512xf32>
    %83 = vector.broadcast %82 : vector<1x512xf32> to vector<8x512xf32>
    %84 = arith.addf %81, %83 : vector<8x512xf32>
    %cst_35 = arith.constant 0.000000e+00 : f32
    %85 = vector.broadcast %cst_35 : f32 to vector<8x512xf32>
    %86 = arith.cmpf oge, %84, %85 : vector<8x512xf32>
    %c3_36 = arith.constant 3 : index
    %87 = memref.load %arg4[%c3_36] : memref<9xf32, #tpu.memory_space<smem>>
    %88 = vector.broadcast %87 : f32 to vector<8x512xf32>
    %89 = arith.mulf %88, %84 : vector<8x512xf32>
    %90 = arith.select %86, %84, %89 : vector<8x512xi1>, vector<8x512xf32>
    %91 = arith.truncf %90 : vector<8x512xf32> to vector<8x512xbf16>
    %c4_i32_37 = arith.constant 4 : i32
    %92 = tpu.memref_slice %arg24[%c4_i32_37] : memref<9x!tpu.dma_semaphore, #tpu.memory_space<semaphore_mem>> -> memref<1x!tpu.dma_semaphore, #tpu.memory_space<semaphore_mem>>
    %93 = tpu.memref_squeeze %92 : memref<1x!tpu.dma_semaphore, #tpu.memory_space<semaphore_mem>> -> memref<!tpu.dma_semaphore, #tpu.memory_space<semaphore_mem>>
    tpu.wait_dma2 semaphore(%93 : memref<!tpu.dma_semaphore, #tpu.memory_space<semaphore_mem>>) src(%arg9 : memref<512x512xi8, #tpu.memory_space<any>>) dst(%arg19 : memref<512x512xi8, #tpu.memory_space<vmem>>)
    %c0_38 = arith.constant 0 : index
    %c0_39 = arith.constant 0 : index
    %94 = vector.load %arg19[%c0_38, %c0_39] : memref<512x512xi8, #tpu.memory_space<vmem>>, vector<512x512xi8>
    %95 = arith.sitofp %94 : vector<512x512xi8> to vector<512x512xbf16>
    %cst_40 = arith.constant dense<0.000000e+00> : vector<8x512xf32>
    %96 = tpu.matmul %91, %95, %cst_40 {dimension_numbers = #tpu.dot_dimension_numbers<[1], [0], [0], [1], [0, 0, 1, 1], [], []>} : vector<8x512xbf16>, vector<512x512xbf16>, vector<8x512xf32> -> vector<8x512xf32>
    %c4 = arith.constant 4 : index
    %c0_41 = arith.constant 0 : index
    %97 = vector.load %arg3[%c4, %c0_41] : memref<16x1024xf32, #tpu.memory_space<vmem>>, vector<1x512xf32>
    %98 = vector.broadcast %97 : vector<1x512xf32> to vector<8x512xf32>
    %99 = arith.mulf %96, %98 : vector<8x512xf32>
    %c4_42 = arith.constant 4 : index
    %c0_43 = arith.constant 0 : index
    %100 = vector.load %arg2[%c4_42, %c0_43] : memref<16x1024xf32, #tpu.memory_space<vmem>>, vector<1x512xf32>
    %101 = vector.broadcast %100 : vector<1x512xf32> to vector<8x512xf32>
    %102 = arith.addf %99, %101 : vector<8x512xf32>
    %cst_44 = arith.constant 0.000000e+00 : f32
    %103 = vector.broadcast %cst_44 : f32 to vector<8x512xf32>
    %104 = arith.cmpf oge, %102, %103 : vector<8x512xf32>
    %c4_45 = arith.constant 4 : index
    %105 = memref.load %arg4[%c4_45] : memref<9xf32, #tpu.memory_space<smem>>
    %106 = vector.broadcast %105 : f32 to vector<8x512xf32>
    %107 = arith.mulf %106, %102 : vector<8x512xf32>
    %108 = arith.select %104, %102, %107 : vector<8x512xi1>, vector<8x512xf32>
    %109 = arith.truncf %108 : vector<8x512xf32> to vector<8x512xbf16>
    %c5_i32_46 = arith.constant 5 : i32
    %110 = tpu.memref_slice %arg24[%c5_i32_46] : memref<9x!tpu.dma_semaphore, #tpu.memory_space<semaphore_mem>> -> memref<1x!tpu.dma_semaphore, #tpu.memory_space<semaphore_mem>>
    %111 = tpu.memref_squeeze %110 : memref<1x!tpu.dma_semaphore, #tpu.memory_space<semaphore_mem>> -> memref<!tpu.dma_semaphore, #tpu.memory_space<semaphore_mem>>
    tpu.wait_dma2 semaphore(%111 : memref<!tpu.dma_semaphore, #tpu.memory_space<semaphore_mem>>) src(%arg10 : memref<512x512xi8, #tpu.memory_space<any>>) dst(%arg20 : memref<512x512xi8, #tpu.memory_space<vmem>>)
    %c0_47 = arith.constant 0 : index
    %c0_48 = arith.constant 0 : index
    %112 = vector.load %arg20[%c0_47, %c0_48] : memref<512x512xi8, #tpu.memory_space<vmem>>, vector<512x512xi8>
    %113 = arith.sitofp %112 : vector<512x512xi8> to vector<512x512xbf16>
    %cst_49 = arith.constant dense<0.000000e+00> : vector<8x512xf32>
    %114 = tpu.matmul %109, %113, %cst_49 {dimension_numbers = #tpu.dot_dimension_numbers<[1], [0], [0], [1], [0, 0, 1, 1], [], []>} : vector<8x512xbf16>, vector<512x512xbf16>, vector<8x512xf32> -> vector<8x512xf32>
    %c5 = arith.constant 5 : index
    %c0_50 = arith.constant 0 : index
    %115 = vector.load %arg3[%c5, %c0_50] : memref<16x1024xf32, #tpu.memory_space<vmem>>, vector<1x512xf32>
    %116 = vector.broadcast %115 : vector<1x512xf32> to vector<8x512xf32>
    %117 = arith.mulf %114, %116 : vector<8x512xf32>
    %c5_51 = arith.constant 5 : index
    %c0_52 = arith.constant 0 : index
    %118 = vector.load %arg2[%c5_51, %c0_52] : memref<16x1024xf32, #tpu.memory_space<vmem>>, vector<1x512xf32>
    %119 = vector.broadcast %118 : vector<1x512xf32> to vector<8x512xf32>
    %120 = arith.addf %117, %119 : vector<8x512xf32>
    %cst_53 = arith.constant 0.000000e+00 : f32
    %121 = vector.broadcast %cst_53 : f32 to vector<8x512xf32>
    %122 = arith.cmpf oge, %120, %121 : vector<8x512xf32>
    %c5_54 = arith.constant 5 : index
    %123 = memref.load %arg4[%c5_54] : memref<9xf32, #tpu.memory_space<smem>>
    %124 = vector.broadcast %123 : f32 to vector<8x512xf32>
    %125 = arith.mulf %124, %120 : vector<8x512xf32>
    %126 = arith.select %122, %120, %125 : vector<8x512xi1>, vector<8x512xf32>
    %127 = arith.truncf %126 : vector<8x512xf32> to vector<8x512xbf16>
    %c6_i32_55 = arith.constant 6 : i32
    %128 = tpu.memref_slice %arg24[%c6_i32_55] : memref<9x!tpu.dma_semaphore, #tpu.memory_space<semaphore_mem>> -> memref<1x!tpu.dma_semaphore, #tpu.memory_space<semaphore_mem>>
    %129 = tpu.memref_squeeze %128 : memref<1x!tpu.dma_semaphore, #tpu.memory_space<semaphore_mem>> -> memref<!tpu.dma_semaphore, #tpu.memory_space<semaphore_mem>>
    tpu.wait_dma2 semaphore(%129 : memref<!tpu.dma_semaphore, #tpu.memory_space<semaphore_mem>>) src(%arg11 : memref<512x512xi8, #tpu.memory_space<any>>) dst(%arg21 : memref<512x512xi8, #tpu.memory_space<vmem>>)
    %c0_56 = arith.constant 0 : index
    %c0_57 = arith.constant 0 : index
    %130 = vector.load %arg21[%c0_56, %c0_57] : memref<512x512xi8, #tpu.memory_space<vmem>>, vector<512x512xi8>
    %131 = arith.sitofp %130 : vector<512x512xi8> to vector<512x512xbf16>
    %cst_58 = arith.constant dense<0.000000e+00> : vector<8x512xf32>
    %132 = tpu.matmul %127, %131, %cst_58 {dimension_numbers = #tpu.dot_dimension_numbers<[1], [0], [0], [1], [0, 0, 1, 1], [], []>} : vector<8x512xbf16>, vector<512x512xbf16>, vector<8x512xf32> -> vector<8x512xf32>
    %c6 = arith.constant 6 : index
    %c0_59 = arith.constant 0 : index
    %133 = vector.load %arg3[%c6, %c0_59] : memref<16x1024xf32, #tpu.memory_space<vmem>>, vector<1x512xf32>
    %134 = vector.broadcast %133 : vector<1x512xf32> to vector<8x512xf32>
    %135 = arith.mulf %132, %134 : vector<8x512xf32>
    %c6_60 = arith.constant 6 : index
    %c0_61 = arith.constant 0 : index
    %136 = vector.load %arg2[%c6_60, %c0_61] : memref<16x1024xf32, #tpu.memory_space<vmem>>, vector<1x512xf32>
    %137 = vector.broadcast %136 : vector<1x512xf32> to vector<8x512xf32>
    %138 = arith.addf %135, %137 : vector<8x512xf32>
    %cst_62 = arith.constant 0.000000e+00 : f32
    %139 = vector.broadcast %cst_62 : f32 to vector<8x512xf32>
    %140 = arith.cmpf oge, %138, %139 : vector<8x512xf32>
    %c6_63 = arith.constant 6 : index
    %141 = memref.load %arg4[%c6_63] : memref<9xf32, #tpu.memory_space<smem>>
    %142 = vector.broadcast %141 : f32 to vector<8x512xf32>
    %143 = arith.mulf %142, %138 : vector<8x512xf32>
    %144 = arith.select %140, %138, %143 : vector<8x512xi1>, vector<8x512xf32>
    %145 = arith.truncf %144 : vector<8x512xf32> to vector<8x512xbf16>
    %c7_i32_64 = arith.constant 7 : i32
    %146 = tpu.memref_slice %arg24[%c7_i32_64] : memref<9x!tpu.dma_semaphore, #tpu.memory_space<semaphore_mem>> -> memref<1x!tpu.dma_semaphore, #tpu.memory_space<semaphore_mem>>
    %147 = tpu.memref_squeeze %146 : memref<1x!tpu.dma_semaphore, #tpu.memory_space<semaphore_mem>> -> memref<!tpu.dma_semaphore, #tpu.memory_space<semaphore_mem>>
    tpu.wait_dma2 semaphore(%147 : memref<!tpu.dma_semaphore, #tpu.memory_space<semaphore_mem>>) src(%arg12 : memref<512x512xi8, #tpu.memory_space<any>>) dst(%arg22 : memref<512x512xi8, #tpu.memory_space<vmem>>)
    %c0_65 = arith.constant 0 : index
    %c0_66 = arith.constant 0 : index
    %148 = vector.load %arg22[%c0_65, %c0_66] : memref<512x512xi8, #tpu.memory_space<vmem>>, vector<512x512xi8>
    %149 = arith.sitofp %148 : vector<512x512xi8> to vector<512x512xbf16>
    %cst_67 = arith.constant dense<0.000000e+00> : vector<8x512xf32>
    %150 = tpu.matmul %145, %149, %cst_67 {dimension_numbers = #tpu.dot_dimension_numbers<[1], [0], [0], [1], [0, 0, 1, 1], [], []>} : vector<8x512xbf16>, vector<512x512xbf16>, vector<8x512xf32> -> vector<8x512xf32>
    %c7 = arith.constant 7 : index
    %c0_68 = arith.constant 0 : index
    %151 = vector.load %arg3[%c7, %c0_68] : memref<16x1024xf32, #tpu.memory_space<vmem>>, vector<1x512xf32>
    %152 = vector.broadcast %151 : vector<1x512xf32> to vector<8x512xf32>
    %153 = arith.mulf %150, %152 : vector<8x512xf32>
    %c7_69 = arith.constant 7 : index
    %c0_70 = arith.constant 0 : index
    %154 = vector.load %arg2[%c7_69, %c0_70] : memref<16x1024xf32, #tpu.memory_space<vmem>>, vector<1x512xf32>
    %155 = vector.broadcast %154 : vector<1x512xf32> to vector<8x512xf32>
    %156 = arith.addf %153, %155 : vector<8x512xf32>
    %cst_71 = arith.constant 0.000000e+00 : f32
    %157 = vector.broadcast %cst_71 : f32 to vector<8x512xf32>
    %158 = arith.cmpf oge, %156, %157 : vector<8x512xf32>
    %c7_72 = arith.constant 7 : index
    %159 = memref.load %arg4[%c7_72] : memref<9xf32, #tpu.memory_space<smem>>
    %160 = vector.broadcast %159 : f32 to vector<8x512xf32>
    %161 = arith.mulf %160, %156 : vector<8x512xf32>
    %162 = arith.select %158, %156, %161 : vector<8x512xi1>, vector<8x512xf32>
    %163 = arith.truncf %162 : vector<8x512xf32> to vector<8x512xbf16>
    %c8_i32_73 = arith.constant 8 : i32
    %164 = tpu.memref_slice %arg24[%c8_i32_73] : memref<9x!tpu.dma_semaphore, #tpu.memory_space<semaphore_mem>> -> memref<1x!tpu.dma_semaphore, #tpu.memory_space<semaphore_mem>>
    %165 = tpu.memref_squeeze %164 : memref<1x!tpu.dma_semaphore, #tpu.memory_space<semaphore_mem>> -> memref<!tpu.dma_semaphore, #tpu.memory_space<semaphore_mem>>
    tpu.wait_dma2 semaphore(%165 : memref<!tpu.dma_semaphore, #tpu.memory_space<semaphore_mem>>) src(%arg13 : memref<512x128xi8, #tpu.memory_space<any>>) dst(%arg23 : memref<512x128xi8, #tpu.memory_space<vmem>>)
    %c0_74 = arith.constant 0 : index
    %c0_75 = arith.constant 0 : index
    %166 = vector.load %arg23[%c0_74, %c0_75] : memref<512x128xi8, #tpu.memory_space<vmem>>, vector<512x128xi8>
    %167 = arith.sitofp %166 : vector<512x128xi8> to vector<512x128xbf16>
    %cst_76 = arith.constant dense<0.000000e+00> : vector<8x128xf32>
    %168 = tpu.matmul %163, %167, %cst_76 {dimension_numbers = #tpu.dot_dimension_numbers<[1], [0], [0], [1], [0, 0, 1, 1], [], []>} : vector<8x512xbf16>, vector<512x128xbf16>, vector<8x128xf32> -> vector<8x128xf32>
    %c8 = arith.constant 8 : index
    %c0_77 = arith.constant 0 : index
    %169 = vector.load %arg3[%c8, %c0_77] : memref<16x1024xf32, #tpu.memory_space<vmem>>, vector<1x128xf32>
    %170 = vector.broadcast %169 : vector<1x128xf32> to vector<8x128xf32>
    %171 = arith.mulf %168, %170 : vector<8x128xf32>
    %c8_78 = arith.constant 8 : index
    %c0_79 = arith.constant 0 : index
    %172 = vector.load %arg2[%c8_78, %c0_79] : memref<16x1024xf32, #tpu.memory_space<vmem>>, vector<1x128xf32>
    %173 = vector.broadcast %172 : vector<1x128xf32> to vector<8x128xf32>
    %174 = arith.addf %171, %173 : vector<8x128xf32>
    %c0_80 = arith.constant 0 : index
    %c0_81 = arith.constant 0 : index
    %175 = vector.load %arg14[%c0_80, %c0_81] : memref<8x128xf32, #tpu.memory_space<vmem>>, vector<8x128xf32>
    tpu.vector_store %arg14[%c0_80, %c0_81], %174 {strides = array<i32>} : memref<8x128xf32, #tpu.memory_space<vmem>>, vector<8x128xf32>,
    return
  }
  func.func @transform_0(%arg0: i32) -> (i32, i32) {
    %c0_i32 = arith.constant 0 : i32
    %c0_i32_0 = arith.constant 0 : i32
    %c0_i32_1 = arith.constant 0 : i32
    return %c0_i32, %c0_i32_0 : i32, i32
  }
  func.func @transform_1(%arg0: i32) -> (i32, i32) {
    %c0_i32 = arith.constant 0 : i32
    %c0_i32_0 = arith.constant 0 : i32
    %c0_i32_1 = arith.constant 0 : i32
    return %c0_i32, %c0_i32_0 : i32, i32
  }
  func.func @transform_2(%arg0: i32) -> (i32, i32) {
    %c0_i32 = arith.constant 0 : i32
    %c0_i32_0 = arith.constant 0 : i32
    %c0_i32_1 = arith.constant 0 : i32
    return %c0_i32, %c0_i32_0 : i32, i32
  }
  func.func @transform_3(%arg0: i32) -> i32 {
    %c0_i32 = arith.constant 0 : i32
    %c0_i32_0 = arith.constant 0 : i32
    return %c0_i32 : i32
  }
  func.func @transform_13(%arg0: i32) -> (i32, i32) {
    %c0_i32 = arith.constant 0 : i32
    %c0_i32_0 = arith.constant 0 : i32
    %c0_i32_1 = arith.constant 0 : i32
    return %c0_i32, %c0_i32_0 : i32, i32
  }
}

</mosaic_0001>

<llo_original>
// kernel: tpu_custom_call.1
$region0: #{tpu_custom_call.1}
  #allocation0 [shape = 'u32[]', space=smem, size = 0x4, offset = 0x4, fixed_abs, tag = 'smem constant byte address 0x4 - core index']
  #allocation1 [shape = 'u32[144,128]{1,0:T(1,128)}', space=vmem, size = 0x12000, scoped, tag = 'internal scratch']
  #allocation2 [shape = 's8[32,1024]{1,0:T(32,128)(4,1)}', space=vmem, size = 0x8000, scoped, tag = 'scratch operand']
  #allocation3 [shape = 's8[1024,1024]{1,0:T(32,128)(4,1)}', space=vmem, size = 0x100000, scoped, tag = 'scratch operand']
  #allocation4 [shape = 's8[1024,1024]{1,0:T(32,128)(4,1)}', space=vmem, size = 0x100000, scoped, tag = 'scratch operand']
  #allocation5 [shape = 's8[1024,512]{1,0:T(32,128)(4,1)}', space=vmem, size = 0x80000, scoped, tag = 'scratch operand']
  #allocation6 [shape = 's8[512,512]{1,0:T(32,128)(4,1)}', space=vmem, size = 0x40000, scoped, tag = 'scratch operand']
  #allocation7 [shape = 's8[512,512]{1,0:T(32,128)(4,1)}', space=vmem, size = 0x40000, scoped, tag = 'scratch operand']
  #allocation8 [shape = 's8[512,512]{1,0:T(32,128)(4,1)}', space=vmem, size = 0x40000, scoped, tag = 'scratch operand']
  #allocation9 [shape = 's8[512,512]{1,0:T(32,128)(4,1)}', space=vmem, size = 0x40000, scoped, tag = 'scratch operand']
  #allocation10 [shape = 's8[512,128]{1,0:T(32,128)(4,1)}', space=vmem, size = 0x10000, scoped, tag = 'scratch operand']
  #allocation11 [shape = 's32[9]{0}', space=sflag, size = 0x24, scoped, tag = 'scratch operand']
  #allocation21 [shape = 's32[]', space=sflag, size = 0x4, offset = 0, fixed_abs, tag = 'sflag constant byte address 0x0 - dummy sync flag']
  #allocation22 [shape = 's32[]', space=sflag, size = 0x4, offset = 0, fixed_abs, tag = 'sflag constant byte address 0x0 - dummy sync flag']
  #allocation23 [shape = 'u32[]', space=smem, size = 0x4, offset = 0x44, fixed_abs, tag = 'smem constant byte address 0x44 - assertion arg 0']
  #allocation24 [shape = 'u32[]', space=smem, size = 0x4, offset = 0x48, fixed_abs, tag = 'smem constant byte address 0x48 - assertion arg 1']
  #allocation25 [shape = 's32[]', space=sflag, size = 0x4, offset = 0, fixed_abs, tag = 'sflag constant byte address 0x0 - dummy sync flag']
  #allocation26 [shape = 's32[]', space=sflag, size = 0x4, offset = 0, fixed_abs, tag = 'sflag constant byte address 0x0 - dummy sync flag']
  #allocation27 [shape = 's32[]', space=sflag, size = 0x4, offset = 0, fixed_abs, tag = 'sflag constant byte address 0x0 - dummy sync flag']
  #allocation28 [shape = 's32[]', space=sflag, size = 0x4, offset = 0, fixed_abs, tag = 'sflag constant byte address 0x0 - dummy sync flag']
  #allocation29 [shape = 's32[]', space=sflag, size = 0x4, offset = 0, fixed_abs, tag = 'sflag constant byte address 0x0 - dummy sync flag']
  #allocation30 [shape = 's32[]', space=sflag, size = 0x4, offset = 0, fixed_abs, tag = 'sflag constant byte address 0x0 - dummy sync flag']
  #allocation31 [shape = 's32[]', space=sflag, size = 0x4, offset = 0, fixed_abs, tag = 'sflag constant byte address 0x0 - dummy sync flag']
  #allocation32 [shape = 's32[]', space=sflag, size = 0x4, offset = 0, fixed_abs, tag = 'sflag constant byte address 0x0 - dummy sync flag']
  #allocation33 [shape = 's32[]', space=sflag, size = 0x4, offset = 0, fixed_abs, tag = 'sflag constant byte address 0x0 - dummy sync flag']
  #allocation34 [shape = 's32[]', space=sflag, size = 0x4, offset = 0, fixed_abs, tag = 'sflag constant byte address 0x0 - dummy sync flag']
  #allocation35 [shape = 's32[]', space=sflag, size = 0x4, offset = 0, fixed_abs, tag = 'sflag constant byte address 0x0 - dummy sync flag']
  #allocation36 [shape = 's32[]', space=sflag, size = 0x4, offset = 0, fixed_abs, tag = 'sflag constant byte address 0x0 - dummy sync flag']
  #allocation37 [shape = 's32[]', space=sflag, size = 0x4, offset = 0, fixed_abs, tag = 'sflag constant byte address 0x0 - dummy sync flag']
  #allocation38 [shape = 's32[]', space=sflag, size = 0x4, offset = 0, fixed_abs, tag = 'sflag constant byte address 0x0 - dummy sync flag']
  #allocation39 [shape = 's32[]', space=sflag, size = 0x4, offset = 0, fixed_abs, tag = 'sflag constant byte address 0x0 - dummy sync flag']
  #allocation40 [shape = 's32[]', space=sflag, size = 0x4, offset = 0, fixed_abs, tag = 'sflag constant byte address 0x0 - dummy sync flag']
  %s0 = inlined_call_operand.hbm [shape: f32[8,32], index: 0, kind: input, shape index: {}]
  %s1 = inlined_call_operand.hbm [shape: f32[16,1024], index: 1, kind: input, shape index: {}]
  %s2 = inlined_call_operand.hbm [shape: f32[16,1024], index: 2, kind: input, shape index: {}]
  %s3 = inlined_call_operand.vmem [shape: f32[9], index: 3, kind: input, shape index: {}]
  %s4 = inlined_call_operand.hbm [shape: s8[32,1024], index: 4, kind: input, shape index: {}]
  %s5 = inlined_call_operand.hbm [shape: s8[1024,1024], index: 5, kind: input, shape index: {}]
  %s6 = inlined_call_operand.hbm [shape: s8[1024,1024], index: 6, kind: input, shape index: {}]
  %s7 = inlined_call_operand.hbm [shape: s8[1024,512], index: 7, kind: input, shape index: {}]
  %s8 = inlined_call_operand.hbm [shape: s8[512,512], index: 8, kind: input, shape index: {}]
  %s9 = inlined_call_operand.hbm [shape: s8[512,512], index: 9, kind: input, shape index: {}]
  %s10 = inlined_call_operand.hbm [shape: s8[512,512], index: 10, kind: input, shape index: {}]
  %s11 = inlined_call_operand.hbm [shape: s8[512,512], index: 11, kind: input, shape index: {}]
  %s12 = inlined_call_operand.hbm [shape: s8[512,128], index: 12, kind: input, shape index: {}]
  %s13 = inlined_call_operand.hbm [shape: f32[8,128], index: 13, kind: output, shape index: {}]
  %s14 = sld [smem:[#allocation0]]
  $region78: #{tpu_custom_call.1} parent=0
    _
  %s16 = ssub.s32 1, %s14
  %s17 = scalar_select 0, %s16, %s14
  $region1: #{tpu_custom_call.1} parent=0
    #allocation12 [shape = 'u8[4096]{0}', space=vmem, size = 0x1000, scoped, tag = 'input window, operand 0, single buffered']
    #allocation13 [shape = 's32[1]{0}', space=sflag, size = 0x4, scoped, tag = 'scoped memory for tpu_custom_call.1']
    #allocation14 [shape = 's32[1]{0}', space=sflag, size = 0x4, scoped, tag = 'scoped memory for tpu_custom_call.1']
    #allocation15 [shape = 's32[1]{0}', space=sflag, size = 0x4, scoped, tag = 'scoped memory for tpu_custom_call.1']
    #allocation16 [shape = 'u8[65536]{0}', space=vmem, size = 0x10000, scoped, tag = 'input window, operand 1, single buffered']
    #allocation17 [shape = 's32[1]{0}', space=sflag, size = 0x4, scoped, tag = 'scoped memory for tpu_custom_call.1']
    #allocation18 [shape = 'u8[65536]{0}', space=vmem, size = 0x10000, scoped, tag = 'input window, operand 2, single buffered']
    #allocation19 [shape = 'u8[512]{0}', space=smem, size = 0x200, scoped, tag = 'input window, operand 3, single buffered']
    #allocation20 [shape = 'u8[4096]{0}', space=vmem, size = 0x1000, scoped, tag = 'output window, operand 0, single buffered']
    %18 = vsyncpa [#allocation13], 0
    %19 = vsyncpa [#allocation17], 0
    %20 = vsyncpa [#allocation15], 0
    %21 = vsyncpa [#allocation14], 0
    // Predicated region
    $region2: #{tpu_custom_call.1} parent=1 // pred_check
      _
    $region3: #{tpu_custom_call.1} parent=1 // pred_check_branch
      %23 = sbr.rel (0) target = $region5
    $region4: #{tpu_custom_call.1} parent=1 // pred_region
      %s25 = ssub.s32 128, 128
      %26 = vsyncadd [#allocation13], %s25
      %s28 = sshll.u32 [#allocation12], 4
      %s29 = int_to_ptr.vmem [resolvable:$true] %s28
      %31 = dma.hbm_to_vmem [thread:$0]  %s0, 128, %s29, [#allocation13]
    $region5: #{tpu_custom_call.1} parent=1 // pred_fallthru
      _
    // Predicated region
    $region6: #{tpu_custom_call.1} parent=1 // pred_check
      _
    $region7: #{tpu_custom_call.1} parent=1 // pred_check_branch
      %33 = sbr.rel (0) target = $region9
    $region8: #{tpu_custom_call.1} parent=1 // pred_region
      %s35 = ssub.s32 2048, 2048
      %36 = vsyncadd [#allocation17], %s35
      %s37 = sshll.u32 [#allocation16], 4
      %s38 = int_to_ptr.vmem [resolvable:$true] %s37
      %43 = dma.hbm_to_vmem [thread:$0]  %s1, 2048, %s38, [#allocation17], 1024, 1024, 64
    $region9: #{tpu_custom_call.1} parent=1 // pred_fallthru
      _
    // Predicated region
    $region10: #{tpu_custom_call.1} parent=1 // pred_check
      _
    $region11: #{tpu_custom_call.1} parent=1 // pred_check_branch
      %45 = sbr.rel (0) target = $region13
    $region12: #{tpu_custom_call.1} parent=1 // pred_region
      %s47 = ssub.s32 2048, 2048
      %48 = vsyncadd [#allocation17], %s47
      %s49 = sshll.u32 [#allocation18], 4
      %s50 = int_to_ptr.vmem [resolvable:$true] %s49
      %55 = dma.hbm_to_vmem [thread:$0]  %s2, 2048, %s50, [#allocation17], 1024, 1024, 64
    $region13: #{tpu_custom_call.1} parent=1 // pred_fallthru
      _
    // Predicated region
    $region14: #{tpu_custom_call.1} parent=1 // pred_check
      _
    $region15: #{tpu_custom_call.1} parent=1 // pred_check_branch
      %57 = sbr.rel (0) target = $region17
    $region16: #{tpu_custom_call.1} parent=1 // pred_region
      %s59 = ssub.s32 16, 16
      %60 = vsyncadd [#allocation15], %s59
      %s62 = sshll.u32 %s3, 4
      %s63 = int_to_ptr.vmem [resolvable:$true] %s62
      %65 = dma.vmem_to_smem %s63, 16, [#allocation19], [#allocation15]
    $region17: #{tpu_custom_call.1} parent=1 // pred_fallthru
      _
    // Predicated region
    $region18: #{tpu_custom_call.1} parent=1 // pred_check
      _
    $region19: #{tpu_custom_call.1} parent=1 // pred_check_branch
      %67 = sbr.rel (0) target = $region21
    $region20: #{tpu_custom_call.1} parent=1 // pred_region
      %68 = dma.done [#allocation13], 128
    $region21: #{tpu_custom_call.1} parent=1 // pred_fallthru
      _
    // Predicated region
    $region22: #{tpu_custom_call.1} parent=1 // pred_check
      _
    $region23: #{tpu_custom_call.1} parent=1 // pred_check_branch
      %70 = sbr.rel (0) target = $region25
    $region24: #{tpu_custom_call.1} parent=1 // pred_region
      %71 = dma.done [#allocation17], 2048
    $region25: #{tpu_custom_call.1} parent=1 // pred_fallthru
      _
    // Predicated region
    $region26: #{tpu_custom_call.1} parent=1 // pred_check
      _
    $region27: #{tpu_custom_call.1} parent=1 // pred_check_branch
      %73 = sbr.rel (0) target = $region29
    $region28: #{tpu_custom_call.1} parent=1 // pred_region
      %74 = dma.done [#allocation17], 2048
    $region29: #{tpu_custom_call.1} parent=1 // pred_fallthru
      _
    // Predicated region
    $region30: #{tpu_custom_call.1} parent=1 // pred_check
      _
    $region31: #{tpu_custom_call.1} parent=1 // pred_check_branch
      %76 = sbr.rel (0) target = $region33
    $region32: #{tpu_custom_call.1} parent=1 // pred_region
      %77 = dma.done [#allocation15], 16
    $region33: #{tpu_custom_call.1} parent=1 // pred_fallthru
      _
    %78 = sfence
    // Predicated region
    $region34: #{tpu_custom_call.1} parent=1 // pred_check
      _
    $region35: #{tpu_custom_call.1} parent=1 // pred_check_branch
      %81 = sbr.rel target = $region37
    $region36: #{tpu_custom_call.1} parent=1 // pred_region
      %82 = sst [smem:[#allocation23]] [#allocation22]
      %83 = sst [smem:[#allocation24]] [#allocation21]
    $region37: #{tpu_custom_call.1} parent=1 // pred_fallthru
      _
    %85 = shalt.err (0)
    %s87 = sshll.u32 [#allocation2], 4
    %s88 = int_to_ptr.vmem [resolvable:$true] %s87
    %90 = dma.hbm_to_vmem [thread:$0]  %s4, 1024, %s88, [#allocation11]
    %s91 = scalar_lea.sflag [#allocation11], 1
    // Predicated region
    $region38: #{tpu_custom_call.1} parent=1 // pred_check
      _
    $region39: #{tpu_custom_call.1} parent=1 // pred_check_branch
      %93 = sbr.rel target = $region41
    $region40: #{tpu_custom_call.1} parent=1 // pred_region
      %94 = sst [smem:[#allocation23]] [#allocation26]
      %95 = sst [smem:[#allocation24]] [#allocation25]
    $region41: #{tpu_custom_call.1} parent=1 // pred_fallthru
      _
    %97 = shalt.err (0)
    %s99 = sshll.u32 [#allocation3], 4
    %s100 = int_to_ptr.vmem [resolvable:$true] %s99
    %102 = dma.hbm_to_vmem [thread:$0]  %s5, 32768, %s100, %s91
    %s103 = scalar_lea.sflag [#allocation11], 2
    // Predicated region
    $region42: #{tpu_custom_call.1} parent=1 // pred_check
      _
    $region43: #{tpu_custom_call.1} parent=1 // pred_check_branch
      %105 = sbr.rel target = $region45
    $region44: #{tpu_custom_call.1} parent=1 // pred_region
      %106 = sst [smem:[#allocation23]] [#allocation28]
      %107 = sst [smem:[#allocation24]] [#allocation27]
    $region45: #{tpu_custom_call.1} parent=1 // pred_fallthru
      _
    %109 = shalt.err (0)
    %s111 = sshll.u32 [#allocation4], 4
    %s112 = int_to_ptr.vmem [resolvable:$true] %s111
    %114 = dma.hbm_to_vmem [thread:$0]  %s6, 32768, %s112, %s103
    %s115 = scalar_lea.sflag [#allocation11], 3
    // Predicated region
    $region46: #{tpu_custom_call.1} parent=1 // pred_check
      _
    $region47: #{tpu_custom_call.1} parent=1 // pred_check_branch
      %117 = sbr.rel target = $region49
    $region48: #{tpu_custom_call.1} parent=1 // pred_region
      %118 = sst [smem:[#allocation23]] [#allocation30]
      %119 = sst [smem:[#allocation24]] [#allocation29]
    $region49: #{tpu_custom_call.1} parent=1 // pred_fallthru
      _
    %121 = shalt.err (0)
    %s123 = sshll.u32 [#allocation5], 4
    %s124 = int_to_ptr.vmem [resolvable:$true] %s123
    %126 = dma.hbm_to_vmem [thread:$0]  %s7, 16384, %s124, %s115
    %s127 = scalar_lea.sflag [#allocation11], 4
    // Predicated region
    $region50: #{tpu_custom_call.1} parent=1 // pred_check
      _
    $region51: #{tpu_custom_call.1} parent=1 // pred_check_branch
      %129 = sbr.rel target = $region53
    $region52: #{tpu_custom_call.1} parent=1 // pred_region
      %130 = sst [smem:[#allocation23]] [#allocation32]
      %131 = sst [smem:[#allocation24]] [#allocation31]
    $region53: #{tpu_custom_call.1} parent=1 // pred_fallthru
      _
    %133 = shalt.err (0)
    %s135 = sshll.u32 [#allocation6], 4
    %s136 = int_to_ptr.vmem [resolvable:$true] %s135
    %138 = dma.hbm_to_vmem [thread:$0]  %s8, 8192, %s136, %s127
    %s139 = scalar_lea.sflag [#allocation11], 5
    // Predicated region
    $region54: #{tpu_custom_call.1} parent=1 // pred_check
      _
    $region55: #{tpu_custom_call.1} parent=1 // pred_check_branch
      %141 = sbr.rel target = $region57
    $region56: #{tpu_custom_call.1} parent=1 // pred_region
      %142 = sst [smem:[#allocation23]] [#allocation34]
      %143 = sst [smem:[#allocation24]] [#allocation33]
    $region57: #{tpu_custom_call.1} parent=1 // pred_fallthru
      _
    %145 = shalt.err (0)
    %s147 = sshll.u32 [#allocation7], 4
    %s148 = int_to_ptr.vmem [resolvable:$true] %s147
    %150 = dma.hbm_to_vmem [thread:$0]  %s9, 8192, %s148, %s139
    %s151 = scalar_lea.sflag [#allocation11], 6
    // Predicated region
    $region58: #{tpu_custom_call.1} parent=1 // pred_check
      _
    $region59: #{tpu_custom_call.1} parent=1 // pred_check_branch
      %153 = sbr.rel target = $region61
    $region60: #{tpu_custom_call.1} parent=1 // pred_region
      %154 = sst [smem:[#allocation23]] [#allocation36]
      %155 = sst [smem:[#allocation24]] [#allocation35]
    $region61: #{tpu_custom_call.1} parent=1 // pred_fallthru
      _
    %157 = shalt.err (0)
    %s159 = sshll.u32 [#allocation8], 4
    %s160 = int_to_ptr.vmem [resolvable:$true] %s159
    %162 = dma.hbm_to_vmem [thread:$0]  %s10, 8192, %s160, %s151
    %s163 = scalar_lea.sflag [#allocation11], 7
    // Predicated region
    $region62: #{tpu_custom_call.1} parent=1 // pred_check
      _
    $region63: #{tpu_custom_call.1} parent=1 // pred_check_branch
      %165 = sbr.rel target = $region65
    $region64: #{tpu_custom_call.1} parent=1 // pred_region
      %166 = sst [smem:[#allocation23]] [#allocation38]
      %167 = sst [smem:[#allocation24]] [#allocation37]
    $region65: #{tpu_custom_call.1} parent=1 // pred_fallthru
      _
    %169 = shalt.err (0)
    %s171 = sshll.u32 [#allocation9], 4
    %s172 = int_to_ptr.vmem [resolvable:$true] %s171
    %174 = dma.hbm_to_vmem [thread:$0]  %s11, 8192, %s172, %s163
    %s175 = scalar_lea.sflag [#allocation11], 8
    // Predicated region
    $region66: #{tpu_custom_call.1} parent=1 // pred_check
      _
    $region67: #{tpu_custom_call.1} parent=1 // pred_check_branch
      %177 = sbr.rel target = $region69
    $region68: #{tpu_custom_call.1} parent=1 // pred_region
      %178 = sst [smem:[#allocation23]] [#allocation40]
      %179 = sst [smem:[#allocation24]] [#allocation39]
    $region69: #{tpu_custom_call.1} parent=1 // pred_fallthru
      _
    %181 = shalt.err (0)
    %s183 = sshll.u32 [#allocation10], 4
    %s184 = int_to_ptr.vmem [resolvable:$true] %s183
    %186 = dma.hbm_to_vmem [thread:$0]  %s12, 2048, %s184, %s175
    %v187 = vld [vmem:[#allocation12] sm:$0xff]
    %v188 = vpack.c.bf16 %v187, %v187
    %s189 = smul.u32 2, 4
    %s190 = smul.u32 %s189, 8
    %s191 = sshll.u32 %s190, 4
    %192 = dma.done [#allocation11], %s191
    %v193 = vld [vmem:[#allocation2] sm:$0xff]
    %v194 = vld [vmem:[#allocation2 + $0x8] sm:$0xff]
    %v195 = vld [vmem:[#allocation2 + $0x10] sm:$0xff]
    %v196 = vld [vmem:[#allocation2 + $0x18] sm:$0xff]
    %v197 = vld [vmem:[#allocation2 + $0x20] sm:$0xff]
    %v198 = vld [vmem:[#allocation2 + $0x28] sm:$0xff]
    %v199 = vld [vmem:[#allocation2 + $0x30] sm:$0xff]
    %v200 = vld [vmem:[#allocation2 + $0x38] sm:$0xff]
    %v201 = vunpack.c.l.s8.bf16 %v193
    %v202 = vunpack.c.l.s8.bf16 %v194
    %v203 = vunpack.c.l.s8.bf16 %v195
    %v204 = vunpack.c.l.s8.bf16 %v196
    %v205 = vunpack.c.l.s8.bf16 %v197
    %v206 = vunpack.c.l.s8.bf16 %v198
    %v207 = vunpack.c.l.s8.bf16 %v199
    %v208 = vunpack.c.l.s8.bf16 %v200
    %v209 = vunpack.c.h.s8.bf16 %v193
    %v210 = vunpack.c.h.s8.bf16 %v194
    %v211 = vunpack.c.h.s8.bf16 %v195
    %v212 = vunpack.c.h.s8.bf16 %v196
    %v213 = vunpack.c.h.s8.bf16 %v197
    %v214 = vunpack.c.h.s8.bf16 %v198
    %v215 = vunpack.c.h.s8.bf16 %v199
    %v216 = vunpack.c.h.s8.bf16 %v200
    %vm217 = vcmask 261120
    %v219 = vsel %vm217, %v188, 0
    %221 = vmatprep.subr.bf16.mxu0 %v202
    %222 = vmatpush1.bf16.msra.mxu0 %v201
    %223 = vmatprep.subr.bf16.mxu0 %v210
    %224 = vmatpush1.bf16.msra.mxu0 %v209
    %225 = vmatprep.subr.bf16.mxu0 0
    %226 = vmatpush1.bf16.msra.mxu0 0
    %227 = vmatprep.subr.bf16.mxu0 0
    %228 = vmatpush1.bf16.msra.mxu0 0
    %229 = vmatprep.subr.bf16.mxu0 0
    %230 = vmatpush1.bf16.msra.mxu0 0
    %231 = vmatprep.subr.bf16.mxu0 0
    %232 = vmatpush1.bf16.msra.mxu0 0
    %233 = vmatprep.subr.bf16.mxu0 0
    %234 = vmatpush1.bf16.msra.mxu0 0
    %235 = vmatprep.subr.bf16.mxu0 0
    %236 = vmatpush1.bf16.msra.mxu0 0
    %237 = vmatprep.subr.bf16.mxu0 0
    %238 = vmatpush1.bf16.msra.mxu0 0
    %239 = vmatprep.subr.bf16.mxu0 0
    %240 = vmatpush1.bf16.msra.mxu0 0
    %241 = vmatprep.subr.bf16.mxu0 0
    %242 = vmatpush1.bf16.msra.mxu0 0
    %243 = vmatprep.subr.bf16.mxu0 0
    %244 = vmatpush1.bf16.msra.mxu0 0
    %245 = vmatprep.subr.bf16.mxu0 0
    %246 = vmatpush1.bf16.msra.mxu0 0
    %247 = vmatprep.subr.bf16.mxu0 0
    %248 = vmatpush1.bf16.msra.mxu0 0
    %249 = vmatprep.subr.bf16.mxu0 0
    %250 = vmatpush1.bf16.msra.mxu0 0
    %251 = vmatprep.subr.bf16.mxu0 0
    %252 = vmatpush1.bf16.msra.mxu0 0
    %253 = vmatprep.mubr.bf16.mxu0 0
    %254 = vmatmul.mubr.bf16.gmra.mrb[0].mxu0 %v219
    %v255 = vpop.f32.mrb[0].mxu0
    %v256 = vadd.f32 0.0, %v255
    %v257 = vpop.f32.mrb[0].mxu0
    %v258 = vadd.f32 0.0, %v257
    %v259 = vpop.f32.mrb[0].mxu0
    %v260 = vpop.f32.mrb[0].mxu0
    %261 = vdwg.mxu0
    %262 = vmatprep.subr.bf16.mxu0 %v204
    %263 = vmatpush1.bf16.msra.mxu0 %v203
    %264 = vmatprep.subr.bf16.mxu0 %v212
    %265 = vmatpush1.bf16.msra.mxu0 %v211
    %266 = vmatprep.subr.bf16.mxu0 0
    %267 = vmatpush1.bf16.msra.mxu0 0
    %268 = vmatprep.subr.bf16.mxu0 0
    %269 = vmatpush1.bf16.msra.mxu0 0
    %270 = vmatprep.subr.bf16.mxu0 0
    %271 = vmatpush1.bf16.msra.mxu0 0
    %272 = vmatprep.subr.bf16.mxu0 0
    %273 = vmatpush1.bf16.msra.mxu0 0
    %274 = vmatprep.subr.bf16.mxu0 0
    %275 = vmatpush1.bf16.msra.mxu0 0
    %276 = vmatprep.subr.bf16.mxu0 0
    %277 = vmatpush1.bf16.msra.mxu0 0
    %278 = vmatprep.subr.bf16.mxu0 0
    %279 = vmatpush1.bf16.msra.mxu0 0
    %280 = vmatprep.subr.bf16.mxu0 0
    %281 = vmatpush1.bf16.msra.mxu0 0
    %282 = vmatprep.subr.bf16.mxu0 0
    %283 = vmatpush1.bf16.msra.mxu0 0
    %284 = vmatprep.subr.bf16.mxu0 0
    %285 = vmatpush1.bf16.msra.mxu0 0
    %286 = vmatprep.subr.bf16.mxu0 0
    %287 = vmatpush1.bf16.msra.mxu0 0
    %288 = vmatprep.subr.bf16.mxu0 0
    %289 = vmatpush1.bf16.msra.mxu0 0
    %290 = vmatprep.subr.bf16.mxu0 0
    %291 = vmatpush1.bf16.msra.mxu0 0
    %292 = vmatprep.subr.bf16.mxu0 0
    %293 = vmatpush1.bf16.msra.mxu0 0
    %294 = vmatprep.mubr.bf16.mxu0 0
    %295 = vmatmul.mubr.bf16.gmra.mrb[0].mxu0 %v219
    %v296 = vpop.f32.mrb[0].mxu0
    %v297 = vadd.f32 0.0, %v296
    %v298 = vpop.f32.mrb[0].mxu0
    %v299 = vadd.f32 0.0, %v298
    %v300 = vpop.f32.mrb[0].mxu0
    %v301 = vpop.f32.mrb[0].mxu0
    %302 = vdwg.mxu0
    %303 = vmatprep.subr.bf16.mxu0 %v206
    %304 = vmatpush1.bf16.msra.mxu0 %v205
    %305 = vmatprep.subr.bf16.mxu0 %v214
    %306 = vmatpush1.bf16.msra.mxu0 %v213
    %307 = vmatprep.subr.bf16.mxu0 0
    %308 = vmatpush1.bf16.msra.mxu0 0
    %309 = vmatprep.subr.bf16.mxu0 0
    %310 = vmatpush1.bf16.msra.mxu0 0
    %311 = vmatprep.subr.bf16.mxu0 0
    %312 = vmatpush1.bf16.msra.mxu0 0
    %313 = vmatprep.subr.bf16.mxu0 0
    %314 = vmatpush1.bf16.msra.mxu0 0
    %315 = vmatprep.subr.bf16.mxu0 0
    %316 = vmatpush1.bf16.msra.mxu0 0
    %317 = vmatprep.subr.bf16.mxu0 0
    %318 = vmatpush1.bf16.msra.mxu0 0
    %319 = vmatprep.subr.bf16.mxu0 0
    %320 = vmatpush1.bf16.msra.mxu0 0
    %321 = vmatprep.subr.bf16.mxu0 0
    %322 = vmatpush1.bf16.msra.mxu0 0
    %323 = vmatprep.subr.bf16.mxu0 0
    %324 = vmatpush1.bf16.msra.mxu0 0
    %325 = vmatprep.subr.bf16.mxu0 0
    %326 = vmatpush1.bf16.msra.mxu0 0
    %327 = vmatprep.subr.bf16.mxu0 0
    %328 = vmatpush1.bf16.msra.mxu0 0
    %329 = vmatprep.subr.bf16.mxu0 0
    %330 = vmatpush1.bf16.msra.mxu0 0
    %331 = vmatprep.subr.bf16.mxu0 0
    %332 = vmatpush1.bf16.msra.mxu0 0
    %333 = vmatprep.subr.bf16.mxu0 0
    %334 = vmatpush1.bf16.msra.mxu0 0
    %335 = vmatprep.mubr.bf16.mxu0 0
    %336 = vmatmul.mubr.bf16.gmra.mrb[0].mxu0 %v219
    %v337 = vpop.f32.mrb[0].mxu0
    %v338 = vadd.f32 0.0, %v337
    %v339 = vpop.f32.mrb[0].mxu0
    %v340 = vadd.f32 0.0, %v339
    %v341 = vpop.f32.mrb[0].mxu0
    %v342 = vpop.f32.mrb[0].mxu0
    %343 = vdwg.mxu0
    %344 = vmatprep.subr.bf16.mxu0 %v208
    %345 = vmatpush1.bf16.msra.mxu0 %v207
    %346 = vmatprep.subr.bf16.mxu0 %v216
    %347 = vmatpush1.bf16.msra.mxu0 %v215
    %348 = vmatprep.subr.bf16.mxu0 0
    %349 = vmatpush1.bf16.msra.mxu0 0
    %350 = vmatprep.subr.bf16.mxu0 0
    %351 = vmatpush1.bf16.msra.mxu0 0
    %352 = vmatprep.subr.bf16.mxu0 0
    %353 = vmatpush1.bf16.msra.mxu0 0
    %354 = vmatprep.subr.bf16.mxu0 0
    %355 = vmatpush1.bf16.msra.mxu0 0
    %356 = vmatprep.subr.bf16.mxu0 0
    %357 = vmatpush1.bf16.msra.mxu0 0
    %358 = vmatprep.subr.bf16.mxu0 0
    %359 = vmatpush1.bf16.msra.mxu0 0
    %360 = vmatprep.subr.bf16.mxu0 0
    %361 = vmatpush1.bf16.msra.mxu0 0
    %362 = vmatprep.subr.bf16.mxu0 0
    %363 = vmatpush1.bf16.msra.mxu0 0
    %364 = vmatprep.subr.bf16.mxu0 0
    %365 = vmatpush1.bf16.msra.mxu0 0
    %366 = vmatprep.subr.bf16.mxu0 0
    %367 = vmatpush1.bf16.msra.mxu0 0
    %368 = vmatprep.subr.bf16.mxu0 0
    %369 = vmatpush1.bf16.msra.mxu0 0
    %370 = vmatprep.subr.bf16.mxu0 0
    %371 = vmatpush1.bf16.msra.mxu0 0
    %372 = vmatprep.subr.bf16.mxu0 0
    %373 = vmatpush1.bf16.msra.mxu0 0
    %374 = vmatprep.subr.bf16.mxu0 0
    %375 = vmatpush1.bf16.msra.mxu0 0
    %376 = vmatprep.mubr.bf16.mxu0 0
    %377 = vmatmul.mubr.bf16.gmra.mrb[0].mxu0 %v219
    %v378 = vpop.f32.mrb[0].mxu0
    %v379 = vadd.f32 0.0, %v378
    %v380 = vpop.f32.mrb[0].mxu0
    %v381 = vadd.f32 0.0, %v380
    %v382 = vpop.f32.mrb[0].mxu0
    %v383 = vpop.f32.mrb[0].mxu0
    %384 = vdwg.mxu0
    %v385 = vld [vmem:[#allocation18] ss:$8 sm:$0xf]
    %v386 = vld [vmem:[#allocation18] ss:$8 sm:$0xf0]
    %v387 = vor.u32 %v385, %v386
    %v389 = vlaneseq
    %v390 = vshrl.u32 %v389, 7
    %v391 = vsub.s32 0, %v390
    %v392 = vrot.slane %v387, %v391
    %v393 = vlaneseq
    %v394 = vshrl.u32 %v393, 7
    %v395 = vsub.s32 1, %v394
    %v396 = vrot.slane %v387, %v395
    %v397 = vlaneseq
    %v398 = vshrl.u32 %v397, 7
    %v399 = vsub.s32 2, %v398
    %v400 = vrot.slane %v387, %v399
    %v401 = vlaneseq
    %v402 = vshrl.u32 %v401, 7
    %v403 = vsub.s32 3, %v402
    %v404 = vrot.slane %v387, %v403
    %v405 = vlaneseq
    %v406 = vshrl.u32 %v405, 7
    %v407 = vsub.s32 4, %v406
    %v408 = vrot.slane %v387, %v407
    %v409 = vlaneseq
    %v410 = vshrl.u32 %v409, 7
    %v411 = vsub.s32 5, %v410
    %v412 = vrot.slane %v387, %v411
    %v413 = vlaneseq
    %v414 = vshrl.u32 %v413, 7
    %v415 = vsub.s32 6, %v414
    %v416 = vrot.slane %v387, %v415
    %v417 = vlaneseq
    %v418 = vshrl.u32 %v417, 7
    %v419 = vsub.s32 7, %v418
    %v420 = vrot.slane %v387, %v419
    %v429 = vmul.f32 %v256, %v392
    %v430 = vmul.f32 %v258, %v396
    %v431 = vmul.f32 %v297, %v400
    %v432 = vmul.f32 %v299, %v404
    %v433 = vmul.f32 %v338, %v408
    %v434 = vmul.f32 %v340, %v412
    %v435 = vmul.f32 %v379, %v416
    %v436 = vmul.f32 %v381, %v420
    %v437 = vld [vmem:[#allocation16] ss:$8 sm:$0xf]
    %v438 = vld [vmem:[#allocation16] ss:$8 sm:$0xf0]
    %v439 = vor.u32 %v437, %v438
    %v441 = vlaneseq
    %v442 = vshrl.u32 %v441, 7
    %v443 = vsub.s32 0, %v442
    %v444 = vrot.slane %v439, %v443
    %v445 = vlaneseq
    %v446 = vshrl.u32 %v445, 7
    %v447 = vsub.s32 1, %v446
    %v448 = vrot.slane %v439, %v447
    %v449 = vlaneseq
    %v450 = vshrl.u32 %v449, 7
    %v451 = vsub.s32 2, %v450
    %v452 = vrot.slane %v439, %v451
    %v453 = vlaneseq
    %v454 = vshrl.u32 %v453, 7
    %v455 = vsub.s32 3, %v454
    %v456 = vrot.slane %v439, %v455
    %v457 = vlaneseq
    %v458 = vshrl.u32 %v457, 7
    %v459 = vsub.s32 4, %v458
    %v460 = vrot.slane %v439, %v459
    %v461 = vlaneseq
    %v462 = vshrl.u32 %v461, 7
    %v463 = vsub.s32 5, %v462
    %v464 = vrot.slane %v439, %v463
    %v465 = vlaneseq
    %v466 = vshrl.u32 %v465, 7
    %v467 = vsub.s32 6, %v466
    %v468 = vrot.slane %v439, %v467
    %v469 = vlaneseq
    %v470 = vshrl.u32 %v469, 7
    %v471 = vsub.s32 7, %v470
    %v472 = vrot.slane %v439, %v471
    %v481 = vadd.f32 %v429, %v444
    %v482 = vadd.f32 %v430, %v448
    %v483 = vadd.f32 %v431, %v452
    %v484 = vadd.f32 %v432, %v456
    %v485 = vadd.f32 %v433, %v460
    %v486 = vadd.f32 %v434, %v464
    %v487 = vadd.f32 %v435, %v468
    %v488 = vadd.f32 %v436, %v472
    %vm489 = vcmp.ge.f32.partialorder %v481, 0.0
    %vm490 = vcmp.ge.f32.partialorder %v482, 0.0
    %vm491 = vcmp.ge.f32.partialorder %v483, 0.0
    %vm492 = vcmp.ge.f32.partialorder %v484, 0.0
    %vm493 = vcmp.ge.f32.partialorder %v485, 0.0
    %vm494 = vcmp.ge.f32.partialorder %v486, 0.0
    %vm495 = vcmp.ge.f32.partialorder %v487, 0.0
    %vm496 = vcmp.ge.f32.partialorder %v488, 0.0
    %s497 = sld [smem:[#allocation19]]
    %v498 = vstv %s497
    %v499 = vmul.f32 %v498, %v481
    %v500 = vmul.f32 %v498, %v482
    %v501 = vmul.f32 %v498, %v483
    %v502 = vmul.f32 %v498, %v484
    %v503 = vmul.f32 %v498, %v485
    %v504 = vmul.f32 %v498, %v486
    %v505 = vmul.f32 %v498, %v487
    %v506 = vmul.f32 %v498, %v488
    %v507 = vsel %vm489, %v481, %v499
    %v508 = vsel %vm490, %v482, %v500
    %v509 = vsel %vm491, %v483, %v501
    %v510 = vsel %vm492, %v484, %v502
    %v511 = vsel %vm493, %v485, %v503
    %v512 = vsel %vm494, %v486, %v504
    %v513 = vsel %vm495, %v487, %v505
    %v514 = vsel %vm496, %v488, %v506
    %v515 = vpack.c.bf16 %v507, %v507
    %v516 = vpack.c.bf16 %v508, %v508
    %v517 = vpack.c.bf16 %v509, %v509
    %v518 = vpack.c.bf16 %v510, %v510
    %v519 = vpack.c.bf16 %v511, %v511
    %v520 = vpack.c.bf16 %v512, %v512
    %v521 = vpack.c.bf16 %v513, %v513
    %v522 = vpack.c.bf16 %v514, %v514
    %s523 = smul.u32 2, 128
    %s524 = smul.u32 %s523, 8
    %s525 = sshll.u32 %s524, 4
    %526 = dma.done %s91, %s525
    %v527 = vld [vmem:[#allocation3] sm:$0xff]
    %v528 = vld [vmem:[#allocation3 + $0x8] sm:$0xff]
    %v529 = vld [vmem:[#allocation3 + $0x10] sm:$0xff]
    %v530 = vld [vmem:[#allocation3 + $0x18] sm:$0xff]
    %v531 = vld [vmem:[#allocation3 + $0x20] sm:$0xff]
    %v532 = vld [vmem:[#allocation3 + $0x28] sm:$0xff]
    %v533 = vld [vmem:[#allocation3 + $0x30] sm:$0xff]
    %v534 = vld [vmem:[#allocation3 + $0x38] sm:$0xff]
    %v535 = vld [vmem:[#allocation3 + $0x40] sm:$0xff]
    %v536 = vld [vmem:[#allocation3 + $0x48] sm:$0xff]
    %v537 = vld [vmem:[#allocation3 + $0x50] sm:$0xff]
    %v538 = vld [vmem:[#allocation3 + $0x58] sm:$0xff]
    %v539 = vld [vmem:[#allocation3 + $0x60] sm:$0xff]
    %v540 = vld [vmem:[#allocation3 + $0x68] sm:$0xff]
    %v541 = vld [vmem:[#allocation3 + $0x70] sm:$0xff]
    %v542 = vld [vmem:[#allocation3 + $0x78] sm:$0xff]
    %v543 = vld [vmem:[#allocation3 + $0x80] sm:$0xff]
    %v544 = vld [vmem:[#allocation3 + $0x88] sm:$0xff]
    %v545 = vld [vmem:[#allocation3 + $0x90] sm:$0xff]
    %v546 = vld [vmem:[#allocation3 + $0x98] sm:$0xff]
    %v547 = vld [vmem:[#allocation3 + $0xa0] sm:$0xff]
    %v548 = vld [vmem:[#allocation3 + $0xa8] sm:$0xff]
    %v549 = vld [vmem:[#allocation3 + $0xb0] sm:$0xff]
    %v550 = vld [vmem:[#allocation3 + $0xb8] sm:$0xff]
    %v551 = vld [vmem:[#allocation3 + $0xc0] sm:$0xff]
    %v552 = vld [vmem:[#allocation3 + $0xc8] sm:$0xff]
    %v553 = vld [vmem:[#allocation3 + $0xd0] sm:$0xff]
    %v554 = vld [vmem:[#allocation3 + $0xd8] sm:$0xff]
    %v555 = vld [vmem:[#allocation3 + $0xe0] sm:$0xff]
    %v556 = vld [vmem:[#allocation3 + $0xe8] sm:$0xff]
    %v557 = vld [vmem:[#allocation3 + $0xf0] sm:$0xff]
    %v558 = vld [vmem:[#allocation3 + $0xf8] sm:$0xff]
    %v559 = vld [vmem:[#allocation3 + $0x100] sm:$0xff]
    %v560 = vld [vmem:[#allocation3 + $0x108] sm:$0xff]
    %v561 = vld [vmem:[#allocation3 + $0x110] sm:$0xff]
    %v562 = vld [vmem:[#allocation3 + $0x118] sm:$0xff]
    %v563 = vld [vmem:[#allocation3 + $0x120] sm:$0xff]
    %v564 = vld [vmem:[#allocation3 + $0x128] sm:$0xff]
    %v565 = vld [vmem:[#allocation3 + $0x130] sm:$0xff]
    %v566 = vld [vmem:[#allocation3 + $0x138] sm:$0xff]
    %v567 = vld [vmem:[#allocation3 + $0x140] sm:$0xff]
    %v568 = vld [vmem:[#allocation3 + $0x148] sm:$0xff]
    %v569 = vld [vmem:[#allocation3 + $0x150] sm:$0xff]
    %v570 = vld [vmem:[#allocation3 + $0x158] sm:$0xff]
    %v571 = vld [vmem:[#allocation3 + $0x160] sm:$0xff]
    %v572 = vld [vmem:[#allocation3 + $0x168] sm:$0xff]
    %v573 = vld [vmem:[#allocation3 + $0x170] sm:$0xff]
    %v574 = vld [vmem:[#allocation3 + $0x178] sm:$0xff]
    %v575 = vld [vmem:[#allocation3 + $0x180] sm:$0xff]
    %v576 = vld [vmem:[#allocation3 + $0x188] sm:$0xff]
    %v577 = vld [vmem:[#allocation3 + $0x190] sm:$0xff]
    %v578 = vld [vmem:[#allocation3 + $0x198] sm:$0xff]
    %v579 = vld [vmem:[#allocation3 + $0x1a0] sm:$0xff]
    %v580 = vld [vmem:[#allocation3 + $0x1a8] sm:$0xff]
    %v581 = vld [vmem:[#allocation3 + $0x1b0] sm:$0xff]
    %v582 = vld [vmem:[#allocation3 + $0x1b8] sm:$0xff]
    %v583 = vld [vmem:[#allocation3 + $0x1c0] sm:$0xff]
    %v584 = vld [vmem:[#allocation3 + $0x1c8] sm:$0xff]
    %v585 = vld [vmem:[#allocation3 + $0x1d0] sm:$0xff]
    %v586 = vld [vmem:[#allocation3 + $0x1d8] sm:$0xff]
    %v587 = vld [vmem:[#allocation3 + $0x1e0] sm:$0xff]
    %v588 = vld [vmem:[#allocation3 + $0x1e8] sm:$0xff]
    %v589 = vld [vmem:[#allocation3 + $0x1f0] sm:$0xff]
    %v590 = vld [vmem:[#allocation3 + $0x1f8] sm:$0xff]
    %v591 = vld [vmem:[#allocation3 + $0x200] sm:$0xff]
    %v592 = vld [vmem:[#allocation3 + $0x208] sm:$0xff]
    %v593 = vld [vmem:[#allocation3 + $0x210] sm:$0xff]
    %v594 = vld [vmem:[#allocation3 + $0x218] sm:$0xff]
    %v595 = vld [vmem:[#allocation3 + $0x220] sm:$0xff]
    %v596 = vld [vmem:[#allocation3 + $0x228] sm:$0xff]
    %v597 = vld [vmem:[#allocation3 + $0x230] sm:$0xff]
    %v598 = vld [vmem:[#allocation3 + $0x238] sm:$0xff]
    %v599 = vld [vmem:[#allocation3 + $0x240] sm:$0xff]
    %v600 = vld [vmem:[#allocation3 + $0x248] sm:$0xff]
    %v601 = vld [vmem:[#allocation3 + $0x250] sm:$0xff]
    %v602 = vld [vmem:[#allocation3 + $0x258] sm:$0xff]
    %v603 = vld [vmem:[#allocation3 + $0x260] sm:$0xff]
    %v604 = vld [vmem:[#allocation3 + $0x268] sm:$0xff]
    %v605 = vld [vmem:[#allocation3 + $0x270] sm:$0xff]
    %v606 = vld [vmem:[#allocation3 + $0x278] sm:$0xff]
    %v607 = vld [vmem:[#allocation3 + $0x280] sm:$0xff]
    %v608 = vld [vmem:[#allocation3 + $0x288] sm:$0xff]
    %v609 = vld [vmem:[#allocation3 + $0x290] sm:$0xff]
    %v610 = vld [vmem:[#allocation3 + $0x298] sm:$0xff]
    %v611 = vld [vmem:[#allocation3 + $0x2a0] sm:$0xff]
    %v612 = vld [vmem:[#allocation3 + $0x2a8] sm:$0xff]
    %v613 = vld [vmem:[#allocation3 + $0x2b0] sm:$0xff]
    %v614 = vld [vmem:[#allocation3 + $0x2b8] sm:$0xff]
    %v615 = vld [vmem:[#allocation3 + $0x2c0] sm:$0xff]
    %v616 = vld [vmem:[#allocation3 + $0x2c8] sm:$0xff]
    %v617 = vld [vmem:[#allocation3 + $0x2d0] sm:$0xff]
    %v618 = vld [vmem:[#allocation3 + $0x2d8] sm:$0xff]
    %v619 = vld [vmem:[#allocation3 + $0x2e0] sm:$0xff]
    %v620 = vld [vmem:[#allocation3 + $0x2e8] sm:$0xff]
    %v621 = vld [vmem:[#allocation3 + $0x2f0] sm:$0xff]
    %v622 = vld [vmem:[#allocation3 + $0x2f8] sm:$0xff]
    %v623 = vld [vmem:[#allocation3 + $0x300] sm:$0xff]
    %v624 = vld [vmem:[#allocation3 + $0x308] sm:$0xff]
    %v625 = vld [vmem:[#allocation3 + $0x310] sm:$0xff]
    %v626 = vld [vmem:[#allocation3 + $0x318] sm:$0xff]
    %v627 = vld [vmem:[#allocation3 + $0x320] sm:$0xff]
    %v628 = vld [vmem:[#allocation3 + $0x328] sm:$0xff]
    %v629 = vld [vmem:[#allocation3 + $0x330] sm:$0xff]
    %v630 = vld [vmem:[#allocation3 + $0x338] sm:$0xff]
    %v631 = vld [vmem:[#allocation3 + $0x340] sm:$0xff]
    %v632 = vld [vmem:[#allocation3 + $0x348] sm:$0xff]
    %v633 = vld [vmem:[#allocation3 + $0x350] sm:$0xff]
    %v634 = vld [vmem:[#allocation3 + $0x358] sm:$0xff]
    %v635 = vld [vmem:[#allocation3 + $0x360] sm:$0xff]
    %v636 = vld [vmem:[#allocation3 + $0x368] sm:$0xff]
    %v637 = vld [vmem:[#allocation3 + $0x370] sm:$0xff]
    %v638 = vld [vmem:[#allocation3 + $0x378] sm:$0xff]
    %v639 = vld [vmem:[#allocation3 + $0x380] sm:$0xff]
    %v640 = vld [vmem:[#allocation3 + $0x388] sm:$0xff]
    %v641 = vld [vmem:[#allocation3 + $0x390] sm:$0xff]
    %v642 = vld [vmem:[#allocation3 + $0x398] sm:$0xff]
    %v643 = vld [vmem:[#allocation3 + $0x3a0] sm:$0xff]
    %v644 = vld [vmem:[#allocation3 + $0x3a8] sm:$0xff]
    %v645 = vld [vmem:[#allocation3 + $0x3b0] sm:$0xff]
    %v646 = vld [vmem:[#allocation3 + $0x3b8] sm:$0xff]
    %v647 = vld [vmem:[#allocation3 + $0x3c0] sm:$0xff]
    %v648 = vld [vmem:[#allocation3 + $0x3c8] sm:$0xff]
    %v649 = vld [vmem:[#allocation3 + $0x3d0] sm:$0xff]
    %v650 = vld [vmem:[#allocation3 + $0x3d8] sm:$0xff]
    %v651 = vld [vmem:[#allocation3 + $0x3e0] sm:$0xff]
    %v652 = vld [vmem:[#allocation3 + $0x3e8] sm:$0xff]
    %v653 = vld [vmem:[#allocation3 + $0x3f0] sm:$0xff]
    %v654 = vld [vmem:[#allocation3 + $0x3f8] sm:$0xff]
    %v655 = vld [vmem:[#allocation3 + $0x400] sm:$0xff]
    %v656 = vld [vmem:[#allocation3 + $0x408] sm:$0xff]
    %v657 = vld [vmem:[#allocation3 + $0x410] sm:$0xff]
    %v658 = vld [vmem:[#allocation3 + $0x418] sm:$0xff]
    %v659 = vld [vmem:[#allocation3 + $0x420] sm:$0xff]
    %v660 = vld [vmem:[#allocation3 + $0x428] sm:$0xff]
    %v661 = vld [vmem:[#allocation3 + $0x430] sm:$0xff]
    %v662 = vld [vmem:[#allocation3 + $0x438] sm:$0xff]
    %v663 = vld [vmem:[#allocation3 + $0x440] sm:$0xff]
    %v664 = vld [vmem:[#allocation3 + $0x448] sm:$0xff]
    %v665 = vld [vmem:[#allocation3 + $0x450] sm:$0xff]
    %v666 = vld [vmem:[#allocation3 + $0x458] sm:$0xff]
    %v667 = vld [vmem:[#allocation3 + $0x460] sm:$0xff]
    %v668 = vld [vmem:[#allocation3 + $0x468] sm:$0xff]
    %v669 = vld [vmem:[#allocation3 + $0x470] sm:$0xff]
    %v670 = vld [vmem:[#allocation3 + $0x478] sm:$0xff]
    %v671 = vld [vmem:[#allocation3 + $0x480] sm:$0xff]
    %v672 = vld [vmem:[#allocation3 + $0x488] sm:$0xff]
    %v673 = vld [vmem:[#allocation3 + $0x490] sm:$0xff]
    %v674 = vld [vmem:[#allocation3 + $0x498] sm:$0xff]
    %v675 = vld [vmem:[#allocation3 + $0x4a0] sm:$0xff]
    %v676 = vld [vmem:[#allocation3 + $0x4a8] sm:$0xff]
    %v677 = vld [vmem:[#allocation3 + $0x4b0] sm:$0xff]
    %v678 = vld [vmem:[#allocation3 + $0x4b8] sm:$0xff]
    %v679 = vld [vmem:[#allocation3 + $0x4c0] sm:$0xff]
    %v680 = vld [vmem:[#allocation3 + $0x4c8] sm:$0xff]
    %v681 = vld [vmem:[#allocation3 + $0x4d0] sm:$0xff]
    %v682 = vld [vmem:[#allocation3 + $0x4d8] sm:$0xff]
    %v683 = vld [vmem:[#allocation3 + $0x4e0] sm:$0xff]
    %v684 = vld [vmem:[#allocation3 + $0x4e8] sm:$0xff]
    %v685 = vld [vmem:[#allocation3 + $0x4f0] sm:$0xff]
    %v686 = vld [vmem:[#allocation3 + $0x4f8] sm:$0xff]
    %v687 = vld [vmem:[#allocation3 + $0x500] sm:$0xff]
    %v688 = vld [vmem:[#allocation3 + $0x508] sm:$0xff]
    %v689 = vld [vmem:[#allocation3 + $0x510] sm:$0xff]
    %v690 = vld [vmem:[#allocation3 + $0x518] sm:$0xff]
    %v691 = vld [vmem:[#allocation3 + $0x520] sm:$0xff]
    %v692 = vld [vmem:[#allocation3 + $0x528] sm:$0xff]
    %v693 = vld [vmem:[#allocation3 + $0x530] sm:$0xff]
    %v694 = vld [vmem:[#allocation3 + $0x538] sm:$0xff]
    %v695 = vld [vmem:[#allocation3 + $0x540] sm:$0xff]
    %v696 = vld [vmem:[#allocation3 + $0x548] sm:$0xff]
    %v697 = vld [vmem:[#allocation3 + $0x550] sm:$0xff]
    %v698 = vld [vmem:[#allocation3 + $0x558] sm:$0xff]
    %v699 = vld [vmem:[#allocation3 + $0x560] sm:$0xff]
    %v700 = vld [vmem:[#allocation3 + $0x568] sm:$0xff]
    %v701 = vld [vmem:[#allocation3 + $0x570] sm:$0xff]
    %v702 = vld [vmem:[#allocation3 + $0x578] sm:$0xff]
    %v703 = vld [vmem:[#allocation3 + $0x580] sm:$0xff]
    %v704 = vld [vmem:[#allocation3 + $0x588] sm:$0xff]
    %v705 = vld [vmem:[#allocation3 + $0x590] sm:$0xff]
    %v706 = vld [vmem:[#allocation3 + $0x598] sm:$0xff]
    %v707 = vld [vmem:[#allocation3 + $0x5a0] sm:$0xff]
    %v708 = vld [vmem:[#allocation3 + $0x5a8] sm:$0xff]
    %v709 = vld [vmem:[#allocation3 + $0x5b0] sm:$0xff]
    %v710 = vld [vmem:[#allocation3 + $0x5b8] sm:$0xff]
    %v711 = vld [vmem:[#allocation3 + $0x5c0] sm:$0xff]
    %v712 = vld [vmem:[#allocation3 + $0x5c8] sm:$0xff]
    %v713 = vld [vmem:[#allocation3 + $0x5d0] sm:$0xff]
    %v714 = vld [vmem:[#allocation3 + $0x5d8] sm:$0xff]
    %v715 = vld [vmem:[#allocation3 + $0x5e0] sm:$0xff]
    %v716 = vld [vmem:[#allocation3 + $0x5e8] sm:$0xff]
    %v717 = vld [vmem:[#allocation3 + $0x5f0] sm:$0xff]
    %v718 = vld [vmem:[#allocation3 + $0x5f8] sm:$0xff]
    %v719 = vld [vmem:[#allocation3 + $0x600] sm:$0xff]
    %v720 = vld [vmem:[#allocation3 + $0x608] sm:$0xff]
    %v721 = vld [vmem:[#allocation3 + $0x610] sm:$0xff]
    %v722 = vld [vmem:[#allocation3 + $0x618] sm:$0xff]
    %v723 = vld [vmem:[#allocation3 + $0x620] sm:$0xff]
    %v724 = vld [vmem:[#allocation3 + $0x628] sm:$0xff]
    %v725 = vld [vmem:[#allocation3 + $0x630] sm:$0xff]
    %v726 = vld [vmem:[#allocation3 + $0x638] sm:$0xff]
    %v727 = vld [vmem:[#allocation3 + $0x640] sm:$0xff]
    %v728 = vld [vmem:[#allocation3 + $0x648] sm:$0xff]
    %v729 = vld [vmem:[#allocation3 + $0x650] sm:$0xff]
    %v730 = vld [vmem:[#allocation3 + $0x658] sm:$0xff]
    %v731 = vld [vmem:[#allocation3 + $0x660] sm:$0xff]
    %v732 = vld [vmem:[#allocation3 + $0x668] sm:$0xff]
    %v733 = vld [vmem:[#allocation3 + $0x670] sm:$0xff]
    %v734 = vld [vmem:[#allocation3 + $0x678] sm:$0xff]
    %v735 = vld [vmem:[#allocation3 + $0x680] sm:$0xff]
    %v736 = vld [vmem:[#allocation3 + $0x688] sm:$0xff]
    %v737 = vld [vmem:[#allocation3 + $0x690] sm:$0xff]
    %v738 = vld [vmem:[#allocation3 + $0x698] sm:$0xff]
    %v739 = vld [vmem:[#allocation3 + $0x6a0] sm:$0xff]
    %v740 = vld [vmem:[#allocation3 + $0x6a8] sm:$0xff]
    %v741 = vld [vmem:[#allocation3 + $0x6b0] sm:$0xff]
    %v742 = vld [vmem:[#allocation3 + $0x6b8] sm:$0xff]
    %v743 = vld [vmem:[#allocation3 + $0x6c0] sm:$0xff]
    %v744 = vld [vmem:[#allocation3 + $0x6c8] sm:$0xff]
    %v745 = vld [vmem:[#allocation3 + $0x6d0] sm:$0xff]
    %v746 = vld [vmem:[#allocation3 + $0x6d8] sm:$0xff]
    %v747 = vld [vmem:[#allocation3 + $0x6e0] sm:$0xff]
    %v748 = vld [vmem:[#allocation3 + $0x6e8] sm:$0xff]
    %v749 = vld [vmem:[#allocation3 + $0x6f0] sm:$0xff]
    %v750 = vld [vmem:[#allocation3 + $0x6f8] sm:$0xff]
    %v751 = vld [vmem:[#allocation3 + $0x700] sm:$0xff]
    %v752 = vld [vmem:[#allocation3 + $0x708] sm:$0xff]
    %v753 = vld [vmem:[#allocation3 + $0x710] sm:$0xff]
    %v754 = vld [vmem:[#allocation3 + $0x718] sm:$0xff]
    %v755 = vld [vmem:[#allocation3 + $0x720] sm:$0xff]
    %v756 = vld [vmem:[#allocation3 + $0x728] sm:$0xff]
    %v757 = vld [vmem:[#allocation3 + $0x730] sm:$0xff]
    %v758 = vld [vmem:[#allocation3 + $0x738] sm:$0xff]
    %v759 = vld [vmem:[#allocation3 + $0x740] sm:$0xff]
    %v760 = vld [vmem:[#allocation3 + $0x748] sm:$0xff]
    %v761 = vld [vmem:[#allocation3 + $0x750] sm:$0xff]
    %v762 = vld [vmem:[#allocation3 + $0x758] sm:$0xff]
    %v763 = vld [vmem:[#allocation3 + $0x760] sm:$0xff]
    %v764 = vld [vmem:[#allocation3 + $0x768] sm:$0xff]
    %v765 = vld [vmem:[#allocation3 + $0x770] sm:$0xff]
    %v766 = vld [vmem:[#allocation3 + $0x778] sm:$0xff]
    %v767 = vld [vmem:[#allocation3 + $0x780] sm:$0xff]
    %v768 = vld [vmem:[#allocation3 + $0x788] sm:$0xff]
    %v769 = vld [vmem:[#allocation3 + $0x790] sm:$0xff]
    %v770 = vld [vmem:[#allocation3 + $0x798] sm:$0xff]
    %v771 = vld [vmem:[#allocation3 + $0x7a0] sm:$0xff]
    %v772 = vld [vmem:[#allocation3 + $0x7a8] sm:$0xff]
    %v773 = vld [vmem:[#allocation3 + $0x7b0] sm:$0xff]
    %v774 = vld [vmem:[#allocation3 + $0x7b8] sm:$0xff]
    %v775 = vld [vmem:[#allocation3 + $0x7c0] sm:$0xff]
    %v776 = vld [vmem:[#allocation3 + $0x7c8] sm:$0xff]
    %v777 = vld [vmem:[#allocation3 + $0x7d0] sm:$0xff]
    %v778 = vld [vmem:[#allocation3 + $0x7d8] sm:$0xff]
    %v779 = vld [vmem:[#allocation3 + $0x7e0] sm:$0xff]
    %v780 = vld [vmem:[#allocation3 + $0x7e8] sm:$0xff]
    %v781 = vld [vmem:[#allocation3 + $0x7f0] sm:$0xff]
    %v782 = vld [vmem:[#allocation3 + $0x7f8] sm:$0xff]
    %v783 = vunpack.c.l.s8.bf16 %v527
    %v784 = vunpack.c.l.s8.bf16 %v528
    %v785 = vunpack.c.l.s8.bf16 %v529
    %v786 = vunpack.c.l.s8.bf16 %v530
    %v787 = vunpack.c.l.s8.bf16 %v531
    %v788 = vunpack.c.l.s8.bf16 %v532
    %v789 = vunpack.c.l.s8.bf16 %v533
    %v790 = vunpack.c.l.s8.bf16 %v534
    %v791 = vunpack.c.h.s8.bf16 %v527
    %v792 = vunpack.c.h.s8.bf16 %v528
    %v793 = vunpack.c.h.s8.bf16 %v529
    %v794 = vunpack.c.h.s8.bf16 %v530
    %v795 = vunpack.c.h.s8.bf16 %v531
    %v796 = vunpack.c.h.s8.bf16 %v532
    %v797 = vunpack.c.h.s8.bf16 %v533
    %v798 = vunpack.c.h.s8.bf16 %v534
    %v799 = vunpack.c.l.s8.bf16 %v535
    %v800 = vunpack.c.l.s8.bf16 %v536
    %v801 = vunpack.c.l.s8.bf16 %v537
    %v802 = vunpack.c.l.s8.bf16 %v538
    %v803 = vunpack.c.l.s8.bf16 %v539
    %v804 = vunpack.c.l.s8.bf16 %v540
    %v805 = vunpack.c.l.s8.bf16 %v541
    %v806 = vunpack.c.l.s8.bf16 %v542
    %v807 = vunpack.c.h.s8.bf16 %v535
    %v808 = vunpack.c.h.s8.bf16 %v536
    %v809 = vunpack.c.h.s8.bf16 %v537
    %v810 = vunpack.c.h.s8.bf16 %v538
    %v811 = vunpack.c.h.s8.bf16 %v539
    %v812 = vunpack.c.h.s8.bf16 %v540
    %v813 = vunpack.c.h.s8.bf16 %v541
    %v814 = vunpack.c.h.s8.bf16 %v542
    %v815 = vunpack.c.l.s8.bf16 %v543
    %v816 = vunpack.c.l.s8.bf16 %v544
    %v817 = vunpack.c.l.s8.bf16 %v545
    %v818 = vunpack.c.l.s8.bf16 %v546
    %v819 = vunpack.c.l.s8.bf16 %v547
    %v820 = vunpack.c.l.s8.bf16 %v548
    %v821 = vunpack.c.l.s8.bf16 %v549
    %v822 = vunpack.c.l.s8.bf16 %v550
    %v823 = vunpack.c.h.s8.bf16 %v543
    %v824 = vunpack.c.h.s8.bf16 %v544
    %v825 = vunpack.c.h.s8.bf16 %v545
    %v826 = vunpack.c.h.s8.bf16 %v546
    %v827 = vunpack.c.h.s8.bf16 %v547
    %v828 = vunpack.c.h.s8.bf16 %v548
    %v829 = vunpack.c.h.s8.bf16 %v549
    %v830 = vunpack.c.h.s8.bf16 %v550
    %v831 = vunpack.c.l.s8.bf16 %v551
    %v832 = vunpack.c.l.s8.bf16 %v552
    %v833 = vunpack.c.l.s8.bf16 %v553
    %v834 = vunpack.c.l.s8.bf16 %v554
    %v835 = vunpack.c.l.s8.bf16 %v555
    %v836 = vunpack.c.l.s8.bf16 %v556
    %v837 = vunpack.c.l.s8.bf16 %v557
    %v838 = vunpack.c.l.s8.bf16 %v558
    %v839 = vunpack.c.h.s8.bf16 %v551
    %v840 = vunpack.c.h.s8.bf16 %v552
    %v841 = vunpack.c.h.s8.bf16 %v553
    %v842 = vunpack.c.h.s8.bf16 %v554
    %v843 = vunpack.c.h.s8.bf16 %v555
    %v844 = vunpack.c.h.s8.bf16 %v556
    %v845 = vunpack.c.h.s8.bf16 %v557
    %v846 = vunpack.c.h.s8.bf16 %v558
    %v847 = vunpack.c.l.s8.bf16 %v559
    %v848 = vunpack.c.l.s8.bf16 %v560
    %v849 = vunpack.c.l.s8.bf16 %v561
    %v850 = vunpack.c.l.s8.bf16 %v562
    %v851 = vunpack.c.l.s8.bf16 %v563
    %v852 = vunpack.c.l.s8.bf16 %v564
    %v853 = vunpack.c.l.s8.bf16 %v565
    %v854 = vunpack.c.l.s8.bf16 %v566
    %v855 = vunpack.c.h.s8.bf16 %v559
    %v856 = vunpack.c.h.s8.bf16 %v560
    %v857 = vunpack.c.h.s8.bf16 %v561
    %v858 = vunpack.c.h.s8.bf16 %v562
    %v859 = vunpack.c.h.s8.bf16 %v563
    %v860 = vunpack.c.h.s8.bf16 %v564
    %v861 = vunpack.c.h.s8.bf16 %v565
    %v862 = vunpack.c.h.s8.bf16 %v566
    %v863 = vunpack.c.l.s8.bf16 %v567
    %v864 = vunpack.c.l.s8.bf16 %v568
    %v865 = vunpack.c.l.s8.bf16 %v569
    %v866 = vunpack.c.l.s8.bf16 %v570
    %v867 = vunpack.c.l.s8.bf16 %v571
    %v868 = vunpack.c.l.s8.bf16 %v572
    %v869 = vunpack.c.l.s8.bf16 %v573
    %v870 = vunpack.c.l.s8.bf16 %v574
    %v871 = vunpack.c.h.s8.bf16 %v567
    %v872 = vunpack.c.h.s8.bf16 %v568
    %v873 = vunpack.c.h.s8.bf16 %v569
    %v874 = vunpack.c.h.s8.bf16 %v570
    %v875 = vunpack.c.h.s8.bf16 %v571
    %v876 = vunpack.c.h.s8.bf16 %v572
    %v877 = vunpack.c.h.s8.bf16 %v573
    %v878 = vunpack.c.h.s8.bf16 %v574
    %v879 = vunpack.c.l.s8.bf16 %v575
    %v880 = vunpack.c.l.s8.bf16 %v576
    %v881 = vunpack.c.l.s8.bf16 %v577
    %v882 = vunpack.c.l.s8.bf16 %v578
    %v883 = vunpack.c.l.s8.bf16 %v579
    %v884 = vunpack.c.l.s8.bf16 %v580
    %v885 = vunpack.c.l.s8.bf16 %v581
    %v886 = vunpack.c.l.s8.bf16 %v582
    %v887 = vunpack.c.h.s8.bf16 %v575
    %v888 = vunpack.c.h.s8.bf16 %v576
    %v889 = vunpack.c.h.s8.bf16 %v577
    %v890 = vunpack.c.h.s8.bf16 %v578
    %v891 = vunpack.c.h.s8.bf16 %v579
    %v892 = vunpack.c.h.s8.bf16 %v580
    %v893 = vunpack.c.h.s8.bf16 %v581
    %v894 = vunpack.c.h.s8.bf16 %v582
    %v895 = vunpack.c.l.s8.bf16 %v583
    %v896 = vunpack.c.l.s8.bf16 %v584
    %v897 = vunpack.c.l.s8.bf16 %v585
    %v898 = vunpack.c.l.s8.bf16 %v586
    %v899 = vunpack.c.l.s8.bf16 %v587
    %v900 = vunpack.c.l.s8.bf16 %v588
    %v901 = vunpack.c.l.s8.bf16 %v589
    %v902 = vunpack.c.l.s8.bf16 %v590
    %v903 = vunpack.c.h.s8.bf16 %v583
    %v904 = vunpack.c.h.s8.bf16 %v584
    %v905 = vunpack.c.h.s8.bf16 %v585
    %v906 = vunpack.c.h.s8.bf16 %v586
    %v907 = vunpack.c.h.s8.bf16 %v587
    %v908 = vunpack.c.h.s8.bf16 %v588
    %v909 = vunpack.c.h.s8.bf16 %v589
    %v910 = vunpack.c.h.s8.bf16 %v590
    %v911 = vunpack.c.l.s8.bf16 %v591
    %v912 = vunpack.c.l.s8.bf16 %v592
    %v913 = vunpack.c.l.s8.bf16 %v593
    %v914 = vunpack.c.l.s8.bf16 %v594
    %v915 = vunpack.c.l.s8.bf16 %v595
    %v916 = vunpack.c.l.s8.bf16 %v596
    %v917 = vunpack.c.l.s8.bf16 %v597
    %v918 = vunpack.c.l.s8.bf16 %v598
    %v919 = vunpack.c.h.s8.bf16 %v591
    %v920 = vunpack.c.h.s8.bf16 %v592
    %v921 = vunpack.c.h.s8.bf16 %v593
    %v922 = vunpack.c.h.s8.bf16 %v594
    %v923 = vunpack.c.h.s8.bf16 %v595
    %v924 = vunpack.c.h.s8.bf16 %v596
    %v925 = vunpack.c.h.s8.bf16 %v597
    %v926 = vunpack.c.h.s8.bf16 %v598
    %v927 = vunpack.c.l.s8.bf16 %v599
    %v928 = vunpack.c.l.s8.bf16 %v600
    %v929 = vunpack.c.l.s8.bf16 %v601
    %v930 = vunpack.c.l.s8.bf16 %v602
    %v931 = vunpack.c.l.s8.bf16 %v603
    %v932 = vunpack.c.l.s8.bf16 %v604
    %v933 = vunpack.c.l.s8.bf16 %v605
    %v934 = vunpack.c.l.s8.bf16 %v606
    %v935 = vunpack.c.h.s8.bf16 %v599
    %v936 = vunpack.c.h.s8.bf16 %v600
    %v937 = vunpack.c.h.s8.bf16 %v601
    %v938 = vunpack.c.h.s8.bf16 %v602
    %v939 = vunpack.c.h.s8.bf16 %v603
    %v940 = vunpack.c.h.s8.bf16 %v604
    %v941 = vunpack.c.h.s8.bf16 %v605
    %v942 = vunpack.c.h.s8.bf16 %v606
    %v943 = vunpack.c.l.s8.bf16 %v607
    %v944 = vunpack.c.l.s8.bf16 %v608
    %v945 = vunpack.c.l.s8.bf16 %v609
    %v946 = vunpack.c.l.s8.bf16 %v610
    %v947 = vunpack.c.l.s8.bf16 %v611
    %v948 = vunpack.c.l.s8.bf16 %v612
    %v949 = vunpack.c.l.s8.bf16 %v613
    %v950 = vunpack.c.l.s8.bf16 %v614
    %v951 = vunpack.c.h.s8.bf16 %v607
    %v952 = vunpack.c.h.s8.bf16 %v608
    %v953 = vunpack.c.h.s8.bf16 %v609
    %v954 = vunpack.c.h.s8.bf16 %v610
    %v955 = vunpack.c.h.s8.bf16 %v611
    %v956 = vunpack.c.h.s8.bf16 %v612
    %v957 = vunpack.c.h.s8.bf16 %v613
    %v958 = vunpack.c.h.s8.bf16 %v614
    %v959 = vunpack.c.l.s8.bf16 %v615
    %v960 = vunpack.c.l.s8.bf16 %v616
    %v961 = vunpack.c.l.s8.bf16 %v617
    %v962 = vunpack.c.l.s8.bf16 %v618
    %v963 = vunpack.c.l.s8.bf16 %v619
    %v964 = vunpack.c.l.s8.bf16 %v620
    %v965 = vunpack.c.l.s8.bf16 %v621
    %v966 = vunpack.c.l.s8.bf16 %v622
    %v967 = vunpack.c.h.s8.bf16 %v615
    %v968 = vunpack.c.h.s8.bf16 %v616
    %v969 = vunpack.c.h.s8.bf16 %v617
    %v970 = vunpack.c.h.s8.bf16 %v618
    %v971 = vunpack.c.h.s8.bf16 %v619
    %v972 = vunpack.c.h.s8.bf16 %v620
    %v973 = vunpack.c.h.s8.bf16 %v621
    %v974 = vunpack.c.h.s8.bf16 %v622
    %v975 = vunpack.c.l.s8.bf16 %v623
    %v976 = vunpack.c.l.s8.bf16 %v624
    %v977 = vunpack.c.l.s8.bf16 %v625
    %v978 = vunpack.c.l.s8.bf16 %v626
    %v979 = vunpack.c.l.s8.bf16 %v627
    %v980 = vunpack.c.l.s8.bf16 %v628
    %v981 = vunpack.c.l.s8.bf16 %v629
    %v982 = vunpack.c.l.s8.bf16 %v630
    %v983 = vunpack.c.h.s8.bf16 %v623
    %v984 = vunpack.c.h.s8.bf16 %v624
    %v985 = vunpack.c.h.s8.bf16 %v625
    %v986 = vunpack.c.h.s8.bf16 %v626
    %v987 = vunpack.c.h.s8.bf16 %v627
    %v988 = vunpack.c.h.s8.bf16 %v628
    %v989 = vunpack.c.h.s8.bf16 %v629
    %v990 = vunpack.c.h.s8.bf16 %v630
    %v991 = vunpack.c.l.s8.bf16 %v631
    %v992 = vunpack.c.l.s8.bf16 %v632
    %v993 = vunpack.c.l.s8.bf16 %v633
    %v994 = vunpack.c.l.s8.bf16 %v634
    %v995 = vunpack.c.l.s8.bf16 %v635
    %v996 = vunpack.c.l.s8.bf16 %v636
    %v997 = vunpack.c.l.s8.bf16 %v637
    %v998 = vunpack.c.l.s8.bf16 %v638
    %v999 = vunpack.c.h.s8.bf16 %v631
    %v1000 = vunpack.c.h.s8.bf16 %v632
    %v1001 = vunpack.c.h.s8.bf16 %v633
    %v1002 = vunpack.c.h.s8.bf16 %v634
    %v1003 = vunpack.c.h.s8.bf16 %v635
    %v1004 = vunpack.c.h.s8.bf16 %v636
    %v1005 = vunpack.c.h.s8.bf16 %v637
    %v1006 = vunpack.c.h.s8.bf16 %v638
    %v1007 = vunpack.c.l.s8.bf16 %v639
    %v1008 = vunpack.c.l.s8.bf16 %v640
    %v1009 = vunpack.c.l.s8.bf16 %v641
    %v1010 = vunpack.c.l.s8.bf16 %v642
    %v1011 = vunpack.c.l.s8.bf16 %v643
    %v1012 = vunpack.c.l.s8.bf16 %v644
    %v1013 = vunpack.c.l.s8.bf16 %v645
    %v1014 = vunpack.c.l.s8.bf16 %v646
    %v1015 = vunpack.c.h.s8.bf16 %v639
    %v1016 = vunpack.c.h.s8.bf16 %v640
    %v1017 = vunpack.c.h.s8.bf16 %v641
    %v1018 = vunpack.c.h.s8.bf16 %v642
    %v1019 = vunpack.c.h.s8.bf16 %v643
    %v1020 = vunpack.c.h.s8.bf16 %v644
    %v1021 = vunpack.c.h.s8.bf16 %v645
    %v1022 = vunpack.c.h.s8.bf16 %v646
    %v1023 = vunpack.c.l.s8.bf16 %v647
    %v1024 = vunpack.c.l.s8.bf16 %v648
    %v1025 = vunpack.c.l.s8.bf16 %v649
    %v1026 = vunpack.c.l.s8.bf16 %v650
    %v1027 = vunpack.c.l.s8.bf16 %v651
    %v1028 = vunpack.c.l.s8.bf16 %v652
    %v1029 = vunpack.c.l.s8.bf16 %v653
    %v1030 = vunpack.c.l.s8.bf16 %v654
    %v1031 = vunpack.c.h.s8.bf16 %v647
    %v1032 = vunpack.c.h.s8.bf16 %v648
    %v1033 = vunpack.c.h.s8.bf16 %v649
    %v1034 = vunpack.c.h.s8.bf16 %v650
    %v1035 = vunpack.c.h.s8.bf16 %v651
    %v1036 = vunpack.c.h.s8.bf16 %v652
    %v1037 = vunpack.c.h.s8.bf16 %v653
    %v1038 = vunpack.c.h.s8.bf16 %v654
    %v1039 = vunpack.c.l.s8.bf16 %v655
    %v1040 = vunpack.c.l.s8.bf16 %v656
    %v1041 = vunpack.c.l.s8.bf16 %v657
    %v1042 = vunpack.c.l.s8.bf16 %v658
    %v1043 = vunpack.c.l.s8.bf16 %v659
    %v1044 = vunpack.c.l.s8.bf16 %v660
    %v1045 = vunpack.c.l.s8.bf16 %v661
    %v1046 = vunpack.c.l.s8.bf16 %v662
    %v1047 = vunpack.c.h.s8.bf16 %v655
    %v1048 = vunpack.c.h.s8.bf16 %v656
    %v1049 = vunpack.c.h.s8.bf16 %v657
    %v1050 = vunpack.c.h.s8.bf16 %v658
    %v1051 = vunpack.c.h.s8.bf16 %v659
    %v1052 = vunpack.c.h.s8.bf16 %v660
    %v1053 = vunpack.c.h.s8.bf16 %v661
    %v1054 = vunpack.c.h.s8.bf16 %v662
    %v1055 = vunpack.c.l.s8.bf16 %v663
    %v1056 = vunpack.c.l.s8.bf16 %v664
    %v1057 = vunpack.c.l.s8.bf16 %v665
    %v1058 = vunpack.c.l.s8.bf16 %v666
    %v1059 = vunpack.c.l.s8.bf16 %v667
    %v1060 = vunpack.c.l.s8.bf16 %v668
    %v1061 = vunpack.c.l.s8.bf16 %v669
    %v1062 = vunpack.c.l.s8.bf16 %v670
    %v1063 = vunpack.c.h.s8.bf16 %v663
    %v1064 = vunpack.c.h.s8.bf16 %v664
    %v1065 = vunpack.c.h.s8.bf16 %v665
    %v1066 = vunpack.c.h.s8.bf16 %v666
    %v1067 = vunpack.c.h.s8.bf16 %v667
    %v1068 = vunpack.c.h.s8.bf16 %v668
    %v1069 = vunpack.c.h.s8.bf16 %v669
    %v1070 = vunpack.c.h.s8.bf16 %v670
    %v1071 = vunpack.c.l.s8.bf16 %v671
    %v1072 = vunpack.c.l.s8.bf16 %v672
    %v1073 = vunpack.c.l.s8.bf16 %v673
    %v1074 = vunpack.c.l.s8.bf16 %v674
    %v1075 = vunpack.c.l.s8.bf16 %v675
    %v1076 = vunpack.c.l.s8.bf16 %v676
    %v1077 = vunpack.c.l.s8.bf16 %v677
    %v1078 = vunpack.c.l.s8.bf16 %v678
    %v1079 = vunpack.c.h.s8.bf16 %v671
    %v1080 = vunpack.c.h.s8.bf16 %v672
    %v1081 = vunpack.c.h.s8.bf16 %v673
    %v1082 = vunpack.c.h.s8.bf16 %v674
    %v1083 = vunpack.c.h.s8.bf16 %v675
    %v1084 = vunpack.c.h.s8.bf16 %v676
    %v1085 = vunpack.c.h.s8.bf16 %v677
    %v1086 = vunpack.c.h.s8.bf16 %v678
    %v1087 = vunpack.c.l.s8.bf16 %v679
    %v1088 = vunpack.c.l.s8.bf16 %v680
    %v1089 = vunpack.c.l.s8.bf16 %v681
    %v1090 = vunpack.c.l.s8.bf16 %v682
    %v1091 = vunpack.c.l.s8.bf16 %v683
    %v1092 = vunpack.c.l.s8.bf16 %v684
    %v1093 = vunpack.c.l.s8.bf16 %v685
    %v1094 = vunpack.c.l.s8.bf16 %v686
    %v1095 = vunpack.c.h.s8.bf16 %v679
    %v1096 = vunpack.c.h.s8.bf16 %v680
    %v1097 = vunpack.c.h.s8.bf16 %v681
    %v1098 = vunpack.c.h.s8.bf16 %v682
    %v1099 = vunpack.c.h.s8.bf16 %v683
    %v1100 = vunpack.c.h.s8.bf16 %v684
    %v1101 = vunpack.c.h.s8.bf16 %v685
    %v1102 = vunpack.c.h.s8.bf16 %v686
    %v1103 = vunpack.c.l.s8.bf16 %v687
    %v1104 = vunpack.c.l.s8.bf16 %v688
    %v1105 = vunpack.c.l.s8.bf16 %v689
    %v1106 = vunpack.c.l.s8.bf16 %v690
    %v1107 = vunpack.c.l.s8.bf16 %v691
    %v1108 = vunpack.c.l.s8.bf16 %v692
    %v1109 = vunpack.c.l.s8.bf16 %v693
    %v1110 = vunpack.c.l.s8.bf16 %v694
    %v1111 = vunpack.c.h.s8.bf16 %v687
    %v1112 = vunpack.c.h.s8.bf16 %v688
    %v1113 = vunpack.c.h.s8.bf16 %v689
    %v1114 = vunpack.c.h.s8.bf16 %v690
    %v1115 = vunpack.c.h.s8.bf16 %v691
    %v1116 = vunpack.c.h.s8.bf16 %v692
    %v1117 = vunpack.c.h.s8.bf16 %v693
    %v1118 = vunpack.c.h.s8.bf16 %v694
    %v1119 = vunpack.c.l.s8.bf16 %v695
    %v1120 = vunpack.c.l.s8.bf16 %v696
    %v1121 = vunpack.c.l.s8.bf16 %v697
    %v1122 = vunpack.c.l.s8.bf16 %v698
    %v1123 = vunpack.c.l.s8.bf16 %v699
    %v1124 = vunpack.c.l.s8.bf16 %v700
    %v1125 = vunpack.c.l.s8.bf16 %v701
    %v1126 = vunpack.c.l.s8.bf16 %v702
    %v1127 = vunpack.c.h.s8.bf16 %v695
    %v1128 = vunpack.c.h.s8.bf16 %v696
    %v1129 = vunpack.c.h.s8.bf16 %v697
    %v1130 = vunpack.c.h.s8.bf16 %v698
    %v1131 = vunpack.c.h.s8.bf16 %v699
    %v1132 = vunpack.c.h.s8.bf16 %v700
    %v1133 = vunpack.c.h.s8.bf16 %v701
    %v1134 = vunpack.c.h.s8.bf16 %v702
    %v1135 = vunpack.c.l.s8.bf16 %v703
    %v1136 = vunpack.c.l.s8.bf16 %v704
    %v1137 = vunpack.c.l.s8.bf16 %v705
    %v1138 = vunpack.c.l.s8.bf16 %v706
    %v1139 = vunpack.c.l.s8.bf16 %v707
    %v1140 = vunpack.c.l.s8.bf16 %v708
    %v1141 = vunpack.c.l.s8.bf16 %v709
    %v1142 = vunpack.c.l.s8.bf16 %v710
    %v1143 = vunpack.c.h.s8.bf16 %v703
    %v1144 = vunpack.c.h.s8.bf16 %v704
    %v1145 = vunpack.c.h.s8.bf16 %v705
    %v1146 = vunpack.c.h.s8.bf16 %v706
    %v1147 = vunpack.c.h.s8.bf16 %v707
    %v1148 = vunpack.c.h.s8.bf16 %v708
    %v1149 = vunpack.c.h.s8.bf16 %v709
    %v1150 = vunpack.c.h.s8.bf16 %v710
    %v1151 = vunpack.c.l.s8.bf16 %v711
    %v1152 = vunpack.c.l.s8.bf16 %v712
    %v1153 = vunpack.c.l.s8.bf16 %v713
    %v1154 = vunpack.c.l.s8.bf16 %v714
    %v1155 = vunpack.c.l.s8.bf16 %v715
    %v1156 = vunpack.c.l.s8.bf16 %v716
    %v1157 = vunpack.c.l.s8.bf16 %v717
    %v1158 = vunpack.c.l.s8.bf16 %v718
    %v1159 = vunpack.c.h.s8.bf16 %v711
    %v1160 = vunpack.c.h.s8.bf16 %v712
    %v1161 = vunpack.c.h.s8.bf16 %v713
    %v1162 = vunpack.c.h.s8.bf16 %v714
    %v1163 = vunpack.c.h.s8.bf16 %v715
    %v1164 = vunpack.c.h.s8.bf16 %v716
    %v1165 = vunpack.c.h.s8.bf16 %v717
    %v1166 = vunpack.c.h.s8.bf16 %v718
    %v1167 = vunpack.c.l.s8.bf16 %v719
    %v1168 = vunpack.c.l.s8.bf16 %v720
    %v1169 = vunpack.c.l.s8.bf16 %v721
    %v1170 = vunpack.c.l.s8.bf16 %v722
    %v1171 = vunpack.c.l.s8.bf16 %v723
    %v1172 = vunpack.c.l.s8.bf16 %v724
    %v1173 = vunpack.c.l.s8.bf16 %v725
    %v1174 = vunpack.c.l.s8.bf16 %v726
    %v1175 = vunpack.c.h.s8.bf16 %v719
    %v1176 = vunpack.c.h.s8.bf16 %v720
    %v1177 = vunpack.c.h.s8.bf16 %v721
    %v1178 = vunpack.c.h.s8.bf16 %v722
    %v1179 = vunpack.c.h.s8.bf16 %v723
    %v1180 = vunpack.c.h.s8.bf16 %v724
    %v1181 = vunpack.c.h.s8.bf16 %v725
    %v1182 = vunpack.c.h.s8.bf16 %v726
    %v1183 = vunpack.c.l.s8.bf16 %v727
    %v1184 = vunpack.c.l.s8.bf16 %v728
    %v1185 = vunpack.c.l.s8.bf16 %v729
    %v1186 = vunpack.c.l.s8.bf16 %v730
    %v1187 = vunpack.c.l.s8.bf16 %v731
    %v1188 = vunpack.c.l.s8.bf16 %v732
    %v1189 = vunpack.c.l.s8.bf16 %v733
    %v1190 = vunpack.c.l.s8.bf16 %v734
    %v1191 = vunpack.c.h.s8.bf16 %v727
    %v1192 = vunpack.c.h.s8.bf16 %v728
    %v1193 = vunpack.c.h.s8.bf16 %v729
    %v1194 = vunpack.c.h.s8.bf16 %v730
    %v1195 = vunpack.c.h.s8.bf16 %v731
    %v1196 = vunpack.c.h.s8.bf16 %v732
    %v1197 = vunpack.c.h.s8.bf16 %v733
    %v1198 = vunpack.c.h.s8.bf16 %v734
    %v1199 = vunpack.c.l.s8.bf16 %v735
    %v1200 = vunpack.c.l.s8.bf16 %v736
    %v1201 = vunpack.c.l.s8.bf16 %v737
    %v1202 = vunpack.c.l.s8.bf16 %v738
    %v1203 = vunpack.c.l.s8.bf16 %v739
    %v1204 = vunpack.c.l.s8.bf16 %v740
    %v1205 = vunpack.c.l.s8.bf16 %v741
    %v1206 = vunpack.c.l.s8.bf16 %v742
    %v1207 = vunpack.c.h.s8.bf16 %v735
    %v1208 = vunpack.c.h.s8.bf16 %v736
    %v1209 = vunpack.c.h.s8.bf16 %v737
    %v1210 = vunpack.c.h.s8.bf16 %v738
    %v1211 = vunpack.c.h.s8.bf16 %v739
    %v1212 = vunpack.c.h.s8.bf16 %v740
    %v1213 = vunpack.c.h.s8.bf16 %v741
    %v1214 = vunpack.c.h.s8.bf16 %v742
    %v1215 = vunpack.c.l.s8.bf16 %v743
    %v1216 = vunpack.c.l.s8.bf16 %v744
    %v1217 = vunpack.c.l.s8.bf16 %v745
    %v1218 = vunpack.c.l.s8.bf16 %v746
    %v1219 = vunpack.c.l.s8.bf16 %v747
    %v1220 = vunpack.c.l.s8.bf16 %v748
    %v1221 = vunpack.c.l.s8.bf16 %v749
    %v1222 = vunpack.c.l.s8.bf16 %v750
    %v1223 = vunpack.c.h.s8.bf16 %v743
    %v1224 = vunpack.c.h.s8.bf16 %v744
    %v1225 = vunpack.c.h.s8.bf16 %v745
    %v1226 = vunpack.c.h.s8.bf16 %v746
    %v1227 = vunpack.c.h.s8.bf16 %v747
    %v1228 = vunpack.c.h.s8.bf16 %v748
    %v1229 = vunpack.c.h.s8.bf16 %v749
    %v1230 = vunpack.c.h.s8.bf16 %v750
    %v1231 = vunpack.c.l.s8.bf16 %v751
    %v1232 = vunpack.c.l.s8.bf16 %v752
    %v1233 = vunpack.c.l.s8.bf16 %v753
    %v1234 = vunpack.c.l.s8.bf16 %v754
    %v1235 = vunpack.c.l.s8.bf16 %v755
    %v1236 = vunpack.c.l.s8.bf16 %v756
    %v1237 = vunpack.c.l.s8.bf16 %v757
    %v1238 = vunpack.c.l.s8.bf16 %v758
    %v1239 = vunpack.c.h.s8.bf16 %v751
    %v1240 = vunpack.c.h.s8.bf16 %v752
    %v1241 = vunpack.c.h.s8.bf16 %v753
    %v1242 = vunpack.c.h.s8.bf16 %v754
    %v1243 = vunpack.c.h.s8.bf16 %v755
    %v1244 = vunpack.c.h.s8.bf16 %v756
    %v1245 = vunpack.c.h.s8.bf16 %v757
    %v1246 = vunpack.c.h.s8.bf16 %v758
    %v1247 = vunpack.c.l.s8.bf16 %v759
    %v1248 = vunpack.c.l.s8.bf16 %v760
    %v1249 = vunpack.c.l.s8.bf16 %v761
    %v1250 = vunpack.c.l.s8.bf16 %v762
    %v1251 = vunpack.c.l.s8.bf16 %v763
    %v1252 = vunpack.c.l.s8.bf16 %v764
    %v1253 = vunpack.c.l.s8.bf16 %v765
    %v1254 = vunpack.c.l.s8.bf16 %v766
    %v1255 = vunpack.c.h.s8.bf16 %v759
    %v1256 = vunpack.c.h.s8.bf16 %v760
    %v1257 = vunpack.c.h.s8.bf16 %v761
    %v1258 = vunpack.c.h.s8.bf16 %v762
    %v1259 = vunpack.c.h.s8.bf16 %v763
    %v1260 = vunpack.c.h.s8.bf16 %v764
    %v1261 = vunpack.c.h.s8.bf16 %v765
    %v1262 = vunpack.c.h.s8.bf16 %v766
    %v1263 = vunpack.c.l.s8.bf16 %v767
    %v1264 = vunpack.c.l.s8.bf16 %v768
    %v1265 = vunpack.c.l.s8.bf16 %v769
    %v1266 = vunpack.c.l.s8.bf16 %v770
    %v1267 = vunpack.c.l.s8.bf16 %v771
    %v1268 = vunpack.c.l.s8.bf16 %v772
    %v1269 = vunpack.c.l.s8.bf16 %v773
    %v1270 = vunpack.c.l.s8.bf16 %v774
    %v1271 = vunpack.c.h.s8.bf16 %v767
    %v1272 = vunpack.c.h.s8.bf16 %v768
    %v1273 = vunpack.c.h.s8.bf16 %v769
    %v1274 = vunpack.c.h.s8.bf16 %v770
    %v1275 = vunpack.c.h.s8.bf16 %v771
    %v1276 = vunpack.c.h.s8.bf16 %v772
    %v1277 = vunpack.c.h.s8.bf16 %v773
    %v1278 = vunpack.c.h.s8.bf16 %v774
    %v1279 = vunpack.c.l.s8.bf16 %v775
    %v1280 = vunpack.c.l.s8.bf16 %v776
    %v1281 = vunpack.c.l.s8.bf16 %v777
    %v1282 = vunpack.c.l.s8.bf16 %v778
    %v1283 = vunpack.c.l.s8.bf16 %v779
    %v1284 = vunpack.c.l.s8.bf16 %v780
    %v1285 = vunpack.c.l.s8.bf16 %v781
    %v1286 = vunpack.c.l.s8.bf16 %v782
    %v1287 = vunpack.c.h.s8.bf16 %v775
    %v1288 = vunpack.c.h.s8.bf16 %v776
    %v1289 = vunpack.c.h.s8.bf16 %v777
    %v1290 = vunpack.c.h.s8.bf16 %v778
    %v1291 = vunpack.c.h.s8.bf16 %v779
    %v1292 = vunpack.c.h.s8.bf16 %v780
    %v1293 = vunpack.c.h.s8.bf16 %v781
    %v1294 = vunpack.c.h.s8.bf16 %v782
    %1295 = vmatprep.subr.bf16.mxu0 %v784
    %1296 = vmatpush1.bf16.msra.mxu0 %v783
    %1297 = vmatprep.subr.bf16.mxu0 %v792
    %1298 = vmatpush1.bf16.msra.mxu0 %v791
    %1299 = vmatprep.subr.bf16.mxu0 %v800
    %1300 = vmatpush1.bf16.msra.mxu0 %v799
    %1301 = vmatprep.subr.bf16.mxu0 %v808
    %1302 = vmatpush1.bf16.msra.mxu0 %v807
    %1303 = vmatprep.subr.bf16.mxu0 %v816
    %1304 = vmatpush1.bf16.msra.mxu0 %v815
    %1305 = vmatprep.subr.bf16.mxu0 %v824
    %1306 = vmatpush1.bf16.msra.mxu0 %v823
    %1307 = vmatprep.subr.bf16.mxu0 %v832
    %1308 = vmatpush1.bf16.msra.mxu0 %v831
    %1309 = vmatprep.subr.bf16.mxu0 %v840
    %1310 = vmatpush1.bf16.msra.mxu0 %v839
    %1311 = vmatprep.subr.bf16.mxu0 %v848
    %1312 = vmatpush1.bf16.msra.mxu0 %v847
    %1313 = vmatprep.subr.bf16.mxu0 %v856
    %1314 = vmatpush1.bf16.msra.mxu0 %v855
    %1315 = vmatprep.subr.bf16.mxu0 %v864
    %1316 = vmatpush1.bf16.msra.mxu0 %v863
    %1317 = vmatprep.subr.bf16.mxu0 %v872
    %1318 = vmatpush1.bf16.msra.mxu0 %v871
    %1319 = vmatprep.subr.bf16.mxu0 %v880
    %1320 = vmatpush1.bf16.msra.mxu0 %v879
    %1321 = vmatprep.subr.bf16.mxu0 %v888
    %1322 = vmatpush1.bf16.msra.mxu0 %v887
    %1323 = vmatprep.subr.bf16.mxu0 %v896
    %1324 = vmatpush1.bf16.msra.mxu0 %v895
    %1325 = vmatprep.subr.bf16.mxu0 %v904
    %1326 = vmatpush1.bf16.msra.mxu0 %v903
    %1327 = vmatprep.mubr.bf16.mxu0 %v516
    %1328 = vmatmul.mubr.bf16.gmra.mrb[0].mxu0 %v515
    %v1329 = vpop.f32.mrb[0].mxu0
    %v1330 = vadd.f32 0.0, %v1329
    %v1331 = vpop.f32.mrb[0].mxu0
    %v1332 = vadd.f32 0.0, %v1331
    %v1333 = vpop.f32.mrb[0].mxu0
    %v1334 = vpop.f32.mrb[0].mxu0
    %1335 = vdwg.mxu0
    %1336 = vmatprep.subr.bf16.mxu0 %v912
    %1337 = vmatpush1.bf16.msra.mxu0 %v911
    %1338 = vmatprep.subr.bf16.mxu0 %v920
    %1339 = vmatpush1.bf16.msra.mxu0 %v919
    %1340 = vmatprep.subr.bf16.mxu0 %v928
    %1341 = vmatpush1.bf16.msra.mxu0 %v927
    %1342 = vmatprep.subr.bf16.mxu0 %v936
    %1343 = vmatpush1.bf16.msra.mxu0 %v935
    %1344 = vmatprep.subr.bf16.mxu0 %v944
    %1345 = vmatpush1.bf16.msra.mxu0 %v943
    %1346 = vmatprep.subr.bf16.mxu0 %v952
    %1347 = vmatpush1.bf16.msra.mxu0 %v951
    %1348 = vmatprep.subr.bf16.mxu0 %v960
    %1349 = vmatpush1.bf16.msra.mxu0 %v959
    %1350 = vmatprep.subr.bf16.mxu0 %v968
    %1351 = vmatpush1.bf16.msra.mxu0 %v967
    %1352 = vmatprep.subr.bf16.mxu0 %v976
    %1353 = vmatpush1.bf16.msra.mxu0 %v975
    %1354 = vmatprep.subr.bf16.mxu0 %v984
    %1355 = vmatpush1.bf16.msra.mxu0 %v983
    %1356 = vmatprep.subr.bf16.mxu0 %v992
    %1357 = vmatpush1.bf16.msra.mxu0 %v991
    %1358 = vmatprep.subr.bf16.mxu0 %v1000
    %1359 = vmatpush1.bf16.msra.mxu0 %v999
    %1360 = vmatprep.subr.bf16.mxu0 %v1008
    %1361 = vmatpush1.bf16.msra.mxu0 %v1007
    %1362 = vmatprep.subr.bf16.mxu0 %v1016
    %1363 = vmatpush1.bf16.msra.mxu0 %v1015
    %1364 = vmatprep.subr.bf16.mxu0 %v1024
    %1365 = vmatpush1.bf16.msra.mxu0 %v1023
    %1366 = vmatprep.subr.bf16.mxu0 %v1032
    %1367 = vmatpush1.bf16.msra.mxu0 %v1031
    %1368 = vmatprep.mubr.bf16.mxu0 %v518
    %1369 = vmatmul.mubr.bf16.gmra.mrb[0].mxu0 %v517
    %v1370 = vpop.f32.mrb[0].mxu0
    %v1371 = vadd.f32 %v1330, %v1370
    %v1372 = vpop.f32.mrb[0].mxu0
    %v1373 = vadd.f32 %v1332, %v1372
    %v1374 = vpop.f32.mrb[0].mxu0
    %v1375 = vpop.f32.mrb[0].mxu0
    %1376 = vdwg.mxu0
    %1377 = vmatprep.subr.bf16.mxu0 %v1040
    %1378 = vmatpush1.bf16.msra.mxu0 %v1039
    %1379 = vmatprep.subr.bf16.mxu0 %v1048
    %1380 = vmatpush1.bf16.msra.mxu0 %v1047
    %1381 = vmatprep.subr.bf16.mxu0 %v1056
    %1382 = vmatpush1.bf16.msra.mxu0 %v1055
    %1383 = vmatprep.subr.bf16.mxu0 %v1064
    %1384 = vmatpush1.bf16.msra.mxu0 %v1063
    %1385 = vmatprep.subr.bf16.mxu0 %v1072
    %1386 = vmatpush1.bf16.msra.mxu0 %v1071
    %1387 = vmatprep.subr.bf16.mxu0 %v1080
    %1388 = vmatpush1.bf16.msra.mxu0 %v1079
    %1389 = vmatprep.subr.bf16.mxu0 %v1088
    %1390 = vmatpush1.bf16.msra.mxu0 %v1087
    %1391 = vmatprep.subr.bf16.mxu0 %v1096
    %1392 = vmatpush1.bf16.msra.mxu0 %v1095
    %1393 = vmatprep.subr.bf16.mxu0 %v1104
    %1394 = vmatpush1.bf16.msra.mxu0 %v1103
    %1395 = vmatprep.subr.bf16.mxu0 %v1112
    %1396 = vmatpush1.bf16.msra.mxu0 %v1111
    %1397 = vmatprep.subr.bf16.mxu0 %v1120
    %1398 = vmatpush1.bf16.msra.mxu0 %v1119
    %1399 = vmatprep.subr.bf16.mxu0 %v1128
    %1400 = vmatpush1.bf16.msra.mxu0 %v1127
    %1401 = vmatprep.subr.bf16.mxu0 %v1136
    %1402 = vmatpush1.bf16.msra.mxu0 %v1135
    %1403 = vmatprep.subr.bf16.mxu0 %v1144
    %1404 = vmatpush1.bf16.msra.mxu0 %v1143
    %1405 = vmatprep.subr.bf16.mxu0 %v1152
    %1406 = vmatpush1.bf16.msra.mxu0 %v1151
    %1407 = vmatprep.subr.bf16.mxu0 %v1160
    %1408 = vmatpush1.bf16.msra.mxu0 %v1159
    %1409 = vmatprep.mubr.bf16.mxu0 %v520
    %1410 = vmatmul.mubr.bf16.gmra.mrb[0].mxu0 %v519
    %v1411 = vpop.f32.mrb[0].mxu0
    %v1412 = vadd.f32 %v1371, %v1411
    %v1413 = vpop.f32.mrb[0].mxu0
    %v1414 = vadd.f32 %v1373, %v1413
    %v1415 = vpop.f32.mrb[0].mxu0
    %v1416 = vpop.f32.mrb[0].mxu0
    %1417 = vdwg.mxu0
    %1418 = vmatprep.subr.bf16.mxu0 %v1168
    %1419 = vmatpush1.bf16.msra.mxu0 %v1167
    %1420 = vmatprep.subr.bf16.mxu0 %v1176
    %1421 = vmatpush1.bf16.msra.mxu0 %v1175
    %1422 = vmatprep.subr.bf16.mxu0 %v1184
    %1423 = vmatpush1.bf16.msra.mxu0 %v1183
    %1424 = vmatprep.subr.bf16.mxu0 %v1192
    %1425 = vmatpush1.bf16.msra.mxu0 %v1191
    %1426 = vmatprep.subr.bf16.mxu0 %v1200
    %1427 = vmatpush1.bf16.msra.mxu0 %v1199
    %1428 = vmatprep.subr.bf16.mxu0 %v1208
    %1429 = vmatpush1.bf16.msra.mxu0 %v1207
    %1430 = vmatprep.subr.bf16.mxu0 %v1216
    %1431 = vmatpush1.bf16.msra.mxu0 %v1215
    %1432 = vmatprep.subr.bf16.mxu0 %v1224
    %1433 = vmatpush1.bf16.msra.mxu0 %v1223
    %1434 = vmatprep.subr.bf16.mxu0 %v1232
    %1435 = vmatpush1.bf16.msra.mxu0 %v1231
    %1436 = vmatprep.subr.bf16.mxu0 %v1240
    %1437 = vmatpush1.bf16.msra.mxu0 %v1239
    %1438 = vmatprep.subr.bf16.mxu0 %v1248
    %1439 = vmatpush1.bf16.msra.mxu0 %v1247
    %1440 = vmatprep.subr.bf16.mxu0 %v1256
    %1441 = vmatpush1.bf16.msra.mxu0 %v1255
    %1442 = vmatprep.subr.bf16.mxu0 %v1264
    %1443 = vmatpush1.bf16.msra.mxu0 %v1263
    %1444 = vmatprep.subr.bf16.mxu0 %v1272
    %1445 = vmatpush1.bf16.msra.mxu0 %v1271
    %1446 = vmatprep.subr.bf16.mxu0 %v1280
    %1447 = vmatpush1.bf16.msra.mxu0 %v1279
    %1448 = vmatprep.subr.bf16.mxu0 %v1288
    %1449 = vmatpush1.bf16.msra.mxu0 %v1287
    %1450 = vmatprep.mubr.bf16.mxu0 %v522
    %1451 = vmatmul.mubr.bf16.gmra.mrb[0].mxu0 %v521
    %v1452 = vpop.f32.mrb[0].mxu0
    %v1453 = vadd.f32 %v1412, %v1452
    %v1454 = vpop.f32.mrb[0].mxu0
    %v1455 = vadd.f32 %v1414, %v1454
    %v1456 = vpop.f32.mrb[0].mxu0
    %v1457 = vpop.f32.mrb[0].mxu0
    %1458 = vdwg.mxu0
    %1459 = vmatprep.subr.bf16.mxu0 %v786
    %1460 = vmatpush1.bf16.msra.mxu0 %v785
    %1461 = vmatprep.subr.bf16.mxu0 %v794
    %1462 = vmatpush1.bf16.msra.mxu0 %v793
    %1463 = vmatprep.subr.bf16.mxu0 %v802
    %1464 = vmatpush1.bf16.msra.mxu0 %v801
    %1465 = vmatprep.subr.bf16.mxu0 %v810
    %1466 = vmatpush1.bf16.msra.mxu0 %v809
    %1467 = vmatprep.subr.bf16.mxu0 %v818
    %1468 = vmatpush1.bf16.msra.mxu0 %v817
    %1469 = vmatprep.subr.bf16.mxu0 %v826
    %1470 = vmatpush1.bf16.msra.mxu0 %v825
    %1471 = vmatprep.subr.bf16.mxu0 %v834
    %1472 = vmatpush1.bf16.msra.mxu0 %v833
    %1473 = vmatprep.subr.bf16.mxu0 %v842
    %1474 = vmatpush1.bf16.msra.mxu0 %v841
    %1475 = vmatprep.subr.bf16.mxu0 %v850
    %1476 = vmatpush1.bf16.msra.mxu0 %v849
    %1477 = vmatprep.subr.bf16.mxu0 %v858
    %1478 = vmatpush1.bf16.msra.mxu0 %v857
    %1479 = vmatprep.subr.bf16.mxu0 %v866
    %1480 = vmatpush1.bf16.msra.mxu0 %v865
    %1481 = vmatprep.subr.bf16.mxu0 %v874
    %1482 = vmatpush1.bf16.msra.mxu0 %v873
    %1483 = vmatprep.subr.bf16.mxu0 %v882
    %1484 = vmatpush1.bf16.msra.mxu0 %v881
    %1485 = vmatprep.subr.bf16.mxu0 %v890
    %1486 = vmatpush1.bf16.msra.mxu0 %v889
    %1487 = vmatprep.subr.bf16.mxu0 %v898
    %1488 = vmatpush1.bf16.msra.mxu0 %v897
    %1489 = vmatprep.subr.bf16.mxu0 %v906
    %1490 = vmatpush1.bf16.msra.mxu0 %v905
    %1491 = vmatprep.mubr.bf16.mxu0 %v516
    %1492 = vmatmul.mubr.bf16.gmra.mrb[0].mxu0 %v515
    %v1493 = vpop.f32.mrb[0].mxu0
    %v1494 = vadd.f32 0.0, %v1493
    %v1495 = vpop.f32.mrb[0].mxu0
    %v1496 = vadd.f32 0.0, %v1495
    %v1497 = vpop.f32.mrb[0].mxu0
    %v1498 = vpop.f32.mrb[0].mxu0
    %1499 = vdwg.mxu0
    %1500 = vmatprep.subr.bf16.mxu0 %v914
    %1501 = vmatpush1.bf16.msra.mxu0 %v913
    %1502 = vmatprep.subr.bf16.mxu0 %v922
    %1503 = vmatpush1.bf16.msra.mxu0 %v921
    %1504 = vmatprep.subr.bf16.mxu0 %v930
    %1505 = vmatpush1.bf16.msra.mxu0 %v929
    %1506 = vmatprep.subr.bf16.mxu0 %v938
    %1507 = vmatpush1.bf16.msra.mxu0 %v937
    %1508 = vmatprep.subr.bf16.mxu0 %v946
    %1509 = vmatpush1.bf16.msra.mxu0 %v945
    %1510 = vmatprep.subr.bf16.mxu0 %v954
    %1511 = vmatpush1.bf16.msra.mxu0 %v953
    %1512 = vmatprep.subr.bf16.mxu0 %v962
    %1513 = vmatpush1.bf16.msra.mxu0 %v961
    %1514 = vmatprep.subr.bf16.mxu0 %v970
    %1515 = vmatpush1.bf16.msra.mxu0 %v969
    %1516 = vmatprep.subr.bf16.mxu0 %v978
    %1517 = vmatpush1.bf16.msra.mxu0 %v977
    %1518 = vmatprep.subr.bf16.mxu0 %v986
    %1519 = vmatpush1.bf16.msra.mxu0 %v985
    %1520 = vmatprep.subr.bf16.mxu0 %v994
    %1521 = vmatpush1.bf16.msra.mxu0 %v993
    %1522 = vmatprep.subr.bf16.mxu0 %v1002
    %1523 = vmatpush1.bf16.msra.mxu0 %v1001
    %1524 = vmatprep.subr.bf16.mxu0 %v1010
    %1525 = vmatpush1.bf16.msra.mxu0 %v1009
    %1526 = vmatprep.subr.bf16.mxu0 %v1018
    %1527 = vmatpush1.bf16.msra.mxu0 %v1017
    %1528 = vmatprep.subr.bf16.mxu0 %v1026
    %1529 = vmatpush1.bf16.msra.mxu0 %v1025
    %1530 = vmatprep.subr.bf16.mxu0 %v1034
    %1531 = vmatpush1.bf16.msra.mxu0 %v1033
    %1532 = vmatprep.mubr.bf16.mxu0 %v518
    %1533 = vmatmul.mubr.bf16.gmra.mrb[0].mxu0 %v517
    %v1534 = vpop.f32.mrb[0].mxu0
    %v1535 = vadd.f32 %v1494, %v1534
    %v1536 = vpop.f32.mrb[0].mxu0
    %v1537 = vadd.f32 %v1496, %v1536
    %v1538 = vpop.f32.mrb[0].mxu0
    %v1539 = vpop.f32.mrb[0].mxu0
    %1540 = vdwg.mxu0
    %1541 = vmatprep.subr.bf16.mxu0 %v1042
    %1542 = vmatpush1.bf16.msra.mxu0 %v1041
    %1543 = vmatprep.subr.bf16.mxu0 %v1050
    %1544 = vmatpush1.bf16.msra.mxu0 %v1049
    %1545 = vmatprep.subr.bf16.mxu0 %v1058
    %1546 = vmatpush1.bf16.msra.mxu0 %v1057
    %1547 = vmatprep.subr.bf16.mxu0 %v1066
    %1548 = vmatpush1.bf16.msra.mxu0 %v1065
    %1549 = vmatprep.subr.bf16.mxu0 %v1074
    %1550 = vmatpush1.bf16.msra.mxu0 %v1073
    %1551 = vmatprep.subr.bf16.mxu0 %v1082
    %1552 = vmatpush1.bf16.msra.mxu0 %v1081
    %1553 = vmatprep.subr.bf16.mxu0 %v1090
    %1554 = vmatpush1.bf16.msra.mxu0 %v1089
    %1555 = vmatprep.subr.bf16.mxu0 %v1098
    %1556 = vmatpush1.bf16.msra.mxu0 %v1097
    %1557 = vmatprep.subr.bf16.mxu0 %v1106
    %1558 = vmatpush1.bf16.msra.mxu0 %v1105
    %1559 = vmatprep.subr.bf16.mxu0 %v1114
    %1560 = vmatpush1.bf16.msra.mxu0 %v1113
    %1561 = vmatprep.subr.bf16.mxu0 %v1122
    %1562 = vmatpush1.bf16.msra.mxu0 %v1121
    %1563 = vmatprep.subr.bf16.mxu0 %v1130
    %1564 = vmatpush1.bf16.msra.mxu0 %v1129
    %1565 = vmatprep.subr.bf16.mxu0 %v1138
    %1566 = vmatpush1.bf16.msra.mxu0 %v1137
    %1567 = vmatprep.subr.bf16.mxu0 %v1146
    %1568 = vmatpush1.bf16.msra.mxu0 %v1145
    %1569 = vmatprep.subr.bf16.mxu0 %v1154
    %1570 = vmatpush1.bf16.msra.mxu0 %v1153
    %1571 = vmatprep.subr.bf16.mxu0 %v1162
    %1572 = vmatpush1.bf16.msra.mxu0 %v1161
    %1573 = vmatprep.mubr.bf16.mxu0 %v520
    %1574 = vmatmul.mubr.bf16.gmra.mrb[0].mxu0 %v519
    %v1575 = vpop.f32.mrb[0].mxu0
    %v1576 = vadd.f32 %v1535, %v1575
    %v1577 = vpop.f32.mrb[0].mxu0
    %v1578 = vadd.f32 %v1537, %v1577
    %v1579 = vpop.f32.mrb[0].mxu0
    %v1580 = vpop.f32.mrb[0].mxu0
    %1581 = vdwg.mxu0
    %1582 = vmatprep.subr.bf16.mxu0 %v1170
    %1583 = vmatpush1.bf16.msra.mxu0 %v1169
    %1584 = vmatprep.subr.bf16.mxu0 %v1178
    %1585 = vmatpush1.bf16.msra.mxu0 %v1177
    %1586 = vmatprep.subr.bf16.mxu0 %v1186
    %1587 = vmatpush1.bf16.msra.mxu0 %v1185
    %1588 = vmatprep.subr.bf16.mxu0 %v1194
    %1589 = vmatpush1.bf16.msra.mxu0 %v1193
    %1590 = vmatprep.subr.bf16.mxu0 %v1202
    %1591 = vmatpush1.bf16.msra.mxu0 %v1201
    %1592 = vmatprep.subr.bf16.mxu0 %v1210
    %1593 = vmatpush1.bf16.msra.mxu0 %v1209
    %1594 = vmatprep.subr.bf16.mxu0 %v1218
    %1595 = vmatpush1.bf16.msra.mxu0 %v1217
    %1596 = vmatprep.subr.bf16.mxu0 %v1226
    %1597 = vmatpush1.bf16.msra.mxu0 %v1225
    %1598 = vmatprep.subr.bf16.mxu0 %v1234
    %1599 = vmatpush1.bf16.msra.mxu0 %v1233
    %1600 = vmatprep.subr.bf16.mxu0 %v1242
    %1601 = vmatpush1.bf16.msra.mxu0 %v1241
    %1602 = vmatprep.subr.bf16.mxu0 %v1250
    %1603 = vmatpush1.bf16.msra.mxu0 %v1249
    %1604 = vmatprep.subr.bf16.mxu0 %v1258
    %1605 = vmatpush1.bf16.msra.mxu0 %v1257
    %1606 = vmatprep.subr.bf16.mxu0 %v1266
    %1607 = vmatpush1.bf16.msra.mxu0 %v1265
    %1608 = vmatprep.subr.bf16.mxu0 %v1274
    %1609 = vmatpush1.bf16.msra.mxu0 %v1273
    %1610 = vmatprep.subr.bf16.mxu0 %v1282
    %1611 = vmatpush1.bf16.msra.mxu0 %v1281
    %1612 = vmatprep.subr.bf16.mxu0 %v1290
    %1613 = vmatpush1.bf16.msra.mxu0 %v1289
    %1614 = vmatprep.mubr.bf16.mxu0 %v522
    %1615 = vmatmul.mubr.bf16.gmra.mrb[0].mxu0 %v521
    %v1616 = vpop.f32.mrb[0].mxu0
    %v1617 = vadd.f32 %v1576, %v1616
    %v1618 = vpop.f32.mrb[0].mxu0
    %v1619 = vadd.f32 %v1578, %v1618
    %v1620 = vpop.f32.mrb[0].mxu0
    %v1621 = vpop.f32.mrb[0].mxu0
    %1622 = vdwg.mxu0
    %1623 = vmatprep.subr.bf16.mxu0 %v788
    %1624 = vmatpush1.bf16.msra.mxu0 %v787
    %1625 = vmatprep.subr.bf16.mxu0 %v796
    %1626 = vmatpush1.bf16.msra.mxu0 %v795
    %1627 = vmatprep.subr.bf16.mxu0 %v804
    %1628 = vmatpush1.bf16.msra.mxu0 %v803
    %1629 = vmatprep.subr.bf16.mxu0 %v812
    %1630 = vmatpush1.bf16.msra.mxu0 %v811
    %1631 = vmatprep.subr.bf16.mxu0 %v820
    %1632 = vmatpush1.bf16.msra.mxu0 %v819
    %1633 = vmatprep.subr.bf16.mxu0 %v828
    %1634 = vmatpush1.bf16.msra.mxu0 %v827
    %1635 = vmatprep.subr.bf16.mxu0 %v836
    %1636 = vmatpush1.bf16.msra.mxu0 %v835
    %1637 = vmatprep.subr.bf16.mxu0 %v844
    %1638 = vmatpush1.bf16.msra.mxu0 %v843
    %1639 = vmatprep.subr.bf16.mxu0 %v852
    %1640 = vmatpush1.bf16.msra.mxu0 %v851
    %1641 = vmatprep.subr.bf16.mxu0 %v860
    %1642 = vmatpush1.bf16.msra.mxu0 %v859
    %1643 = vmatprep.subr.bf16.mxu0 %v868
    %1644 = vmatpush1.bf16.msra.mxu0 %v867
    %1645 = vmatprep.subr.bf16.mxu0 %v876
    %1646 = vmatpush1.bf16.msra.mxu0 %v875
    %1647 = vmatprep.subr.bf16.mxu0 %v884
    %1648 = vmatpush1.bf16.msra.mxu0 %v883
    %1649 = vmatprep.subr.bf16.mxu0 %v892
    %1650 = vmatpush1.bf16.msra.mxu0 %v891
    %1651 = vmatprep.subr.bf16.mxu0 %v900
    %1652 = vmatpush1.bf16.msra.mxu0 %v899
    %1653 = vmatprep.subr.bf16.mxu0 %v908
    %1654 = vmatpush1.bf16.msra.mxu0 %v907
    %1655 = vmatprep.mubr.bf16.mxu0 %v516
    %1656 = vmatmul.mubr.bf16.gmra.mrb[0].mxu0 %v515
    %v1657 = vpop.f32.mrb[0].mxu0
    %v1658 = vadd.f32 0.0, %v1657
    %v1659 = vpop.f32.mrb[0].mxu0
    %v1660 = vadd.f32 0.0, %v1659
    %v1661 = vpop.f32.mrb[0].mxu0
    %v1662 = vpop.f32.mrb[0].mxu0
    %1663 = vdwg.mxu0
    %1664 = vmatprep.subr.bf16.mxu0 %v916
    %1665 = vmatpush1.bf16.msra.mxu0 %v915
    %1666 = vmatprep.subr.bf16.mxu0 %v924
    %1667 = vmatpush1.bf16.msra.mxu0 %v923
    %1668 = vmatprep.subr.bf16.mxu0 %v932
    %1669 = vmatpush1.bf16.msra.mxu0 %v931
    %1670 = vmatprep.subr.bf16.mxu0 %v940
    %1671 = vmatpush1.bf16.msra.mxu0 %v939
    %1672 = vmatprep.subr.bf16.mxu0 %v948
    %1673 = vmatpush1.bf16.msra.mxu0 %v947
    %1674 = vmatprep.subr.bf16.mxu0 %v956
    %1675 = vmatpush1.bf16.msra.mxu0 %v955
    %1676 = vmatprep.subr.bf16.mxu0 %v964
    %1677 = vmatpush1.bf16.msra.mxu0 %v963
    %1678 = vmatprep.subr.bf16.mxu0 %v972
    %1679 = vmatpush1.bf16.msra.mxu0 %v971
    %1680 = vmatprep.subr.bf16.mxu0 %v980
    %1681 = vmatpush1.bf16.msra.mxu0 %v979
    %1682 = vmatprep.subr.bf16.mxu0 %v988
    %1683 = vmatpush1.bf16.msra.mxu0 %v987
    %1684 = vmatprep.subr.bf16.mxu0 %v996
    %1685 = vmatpush1.bf16.msra.mxu0 %v995
    %1686 = vmatprep.subr.bf16.mxu0 %v1004
    %1687 = vmatpush1.bf16.msra.mxu0 %v1003
    %1688 = vmatprep.subr.bf16.mxu0 %v1012
    %1689 = vmatpush1.bf16.msra.mxu0 %v1011
    %1690 = vmatprep.subr.bf16.mxu0 %v1020
    %1691 = vmatpush1.bf16.msra.mxu0 %v1019
    %1692 = vmatprep.subr.bf16.mxu0 %v1028
    %1693 = vmatpush1.bf16.msra.mxu0 %v1027
    %1694 = vmatprep.subr.bf16.mxu0 %v1036
    %1695 = vmatpush1.bf16.msra.mxu0 %v1035
    %1696 = vmatprep.mubr.bf16.mxu0 %v518
    %1697 = vmatmul.mubr.bf16.gmra.mrb[0].mxu0 %v517
    %v1698 = vpop.f32.mrb[0].mxu0
    %v1699 = vadd.f32 %v1658, %v1698
    %v1700 = vpop.f32.mrb[0].mxu0
    %v1701 = vadd.f32 %v1660, %v1700
    %v1702 = vpop.f32.mrb[0].mxu0
    %v1703 = vpop.f32.mrb[0].mxu0
    %1704 = vdwg.mxu0
    %1705 = vmatprep.subr.bf16.mxu0 %v1044
    %1706 = vmatpush1.bf16.msra.mxu0 %v1043
    %1707 = vmatprep.subr.bf16.mxu0 %v1052
    %1708 = vmatpush1.bf16.msra.mxu0 %v1051
    %1709 = vmatprep.subr.bf16.mxu0 %v1060
    %1710 = vmatpush1.bf16.msra.mxu0 %v1059
    %1711 = vmatprep.subr.bf16.mxu0 %v1068
    %1712 = vmatpush1.bf16.msra.mxu0 %v1067
    %1713 = vmatprep.subr.bf16.mxu0 %v1076
    %1714 = vmatpush1.bf16.msra.mxu0 %v1075
    %1715 = vmatprep.subr.bf16.mxu0 %v1084
    %1716 = vmatpush1.bf16.msra.mxu0 %v1083
    %1717 = vmatprep.subr.bf16.mxu0 %v1092
    %1718 = vmatpush1.bf16.msra.mxu0 %v1091
    %1719 = vmatprep.subr.bf16.mxu0 %v1100
    %1720 = vmatpush1.bf16.msra.mxu0 %v1099
    %1721 = vmatprep.subr.bf16.mxu0 %v1108
    %1722 = vmatpush1.bf16.msra.mxu0 %v1107
    %1723 = vmatprep.subr.bf16.mxu0 %v1116
    %1724 = vmatpush1.bf16.msra.mxu0 %v1115
    %1725 = vmatprep.subr.bf16.mxu0 %v1124
    %1726 = vmatpush1.bf16.msra.mxu0 %v1123
    %1727 = vmatprep.subr.bf16.mxu0 %v1132
    %1728 = vmatpush1.bf16.msra.mxu0 %v1131
    %1729 = vmatprep.subr.bf16.mxu0 %v1140
    %1730 = vmatpush1.bf16.msra.mxu0 %v1139
    %1731 = vmatprep.subr.bf16.mxu0 %v1148
    %1732 = vmatpush1.bf16.msra.mxu0 %v1147
    %1733 = vmatprep.subr.bf16.mxu0 %v1156
    %1734 = vmatpush1.bf16.msra.mxu0 %v1155
    %1735 = vmatprep.subr.bf16.mxu0 %v1164
    %1736 = vmatpush1.bf16.msra.mxu0 %v1163
    %1737 = vmatprep.mubr.bf16.mxu0 %v520
    %1738 = vmatmul.mubr.bf16.gmra.mrb[0].mxu0 %v519
    %v1739 = vpop.f32.mrb[0].mxu0
    %v1740 = vadd.f32 %v1699, %v1739
    %v1741 = vpop.f32.mrb[0].mxu0
    %v1742 = vadd.f32 %v1701, %v1741
    %v1743 = vpop.f32.mrb[0].mxu0
    %v1744 = vpop.f32.mrb[0].mxu0
    %1745 = vdwg.mxu0
    %1746 = vmatprep.subr.bf16.mxu0 %v1172
    %1747 = vmatpush1.bf16.msra.mxu0 %v1171
    %1748 = vmatprep.subr.bf16.mxu0 %v1180
    %1749 = vmatpush1.bf16.msra.mxu0 %v1179
    %1750 = vmatprep.subr.bf16.mxu0 %v1188
    %1751 = vmatpush1.bf16.msra.mxu0 %v1187
    %1752 = vmatprep.subr.bf16.mxu0 %v1196
    %1753 = vmatpush1.bf16.msra.mxu0 %v1195
    %1754 = vmatprep.subr.bf16.mxu0 %v1204
    %1755 = vmatpush1.bf16.msra.mxu0 %v1203
    %1756 = vmatprep.subr.bf16.mxu0 %v1212
    %1757 = vmatpush1.bf16.msra.mxu0 %v1211
    %1758 = vmatprep.subr.bf16.mxu0 %v1220
    %1759 = vmatpush1.bf16.msra.mxu0 %v1219
    %1760 = vmatprep.subr.bf16.mxu0 %v1228
    %1761 = vmatpush1.bf16.msra.mxu0 %v1227
    %1762 = vmatprep.subr.bf16.mxu0 %v1236
    %1763 = vmatpush1.bf16.msra.mxu0 %v1235
    %1764 = vmatprep.subr.bf16.mxu0 %v1244
    %1765 = vmatpush1.bf16.msra.mxu0 %v1243
    %1766 = vmatprep.subr.bf16.mxu0 %v1252
    %1767 = vmatpush1.bf16.msra.mxu0 %v1251
    %1768 = vmatprep.subr.bf16.mxu0 %v1260
    %1769 = vmatpush1.bf16.msra.mxu0 %v1259
    %1770 = vmatprep.subr.bf16.mxu0 %v1268
    %1771 = vmatpush1.bf16.msra.mxu0 %v1267
    %1772 = vmatprep.subr.bf16.mxu0 %v1276
    %1773 = vmatpush1.bf16.msra.mxu0 %v1275
    %1774 = vmatprep.subr.bf16.mxu0 %v1284
    %1775 = vmatpush1.bf16.msra.mxu0 %v1283
    %1776 = vmatprep.subr.bf16.mxu0 %v1292
    %1777 = vmatpush1.bf16.msra.mxu0 %v1291
    %1778 = vmatprep.mubr.bf16.mxu0 %v522
    %1779 = vmatmul.mubr.bf16.gmra.mrb[0].mxu0 %v521
    %v1780 = vpop.f32.mrb[0].mxu0
    %v1781 = vadd.f32 %v1740, %v1780
    %v1782 = vpop.f32.mrb[0].mxu0
    %v1783 = vadd.f32 %v1742, %v1782
    %v1784 = vpop.f32.mrb[0].mxu0
    %v1785 = vpop.f32.mrb[0].mxu0
    %1786 = vdwg.mxu0
    %1787 = vmatprep.subr.bf16.mxu0 %v790
    %1788 = vmatpush1.bf16.msra.mxu0 %v789
    %1789 = vmatprep.subr.bf16.mxu0 %v798
    %1790 = vmatpush1.bf16.msra.mxu0 %v797
    %1791 = vmatprep.subr.bf16.mxu0 %v806
    %1792 = vmatpush1.bf16.msra.mxu0 %v805
    %1793 = vmatprep.subr.bf16.mxu0 %v814
    %1794 = vmatpush1.bf16.msra.mxu0 %v813
    %1795 = vmatprep.subr.bf16.mxu0 %v822
    %1796 = vmatpush1.bf16.msra.mxu0 %v821
    %1797 = vmatprep.subr.bf16.mxu0 %v830
    %1798 = vmatpush1.bf16.msra.mxu0 %v829
    %1799 = vmatprep.subr.bf16.mxu0 %v838
    %1800 = vmatpush1.bf16.msra.mxu0 %v837
    %1801 = vmatprep.subr.bf16.mxu0 %v846
    %1802 = vmatpush1.bf16.msra.mxu0 %v845
    %1803 = vmatprep.subr.bf16.mxu0 %v854
    %1804 = vmatpush1.bf16.msra.mxu0 %v853
    %1805 = vmatprep.subr.bf16.mxu0 %v862
    %1806 = vmatpush1.bf16.msra.mxu0 %v861
    %1807 = vmatprep.subr.bf16.mxu0 %v870
    %1808 = vmatpush1.bf16.msra.mxu0 %v869
    %1809 = vmatprep.subr.bf16.mxu0 %v878
    %1810 = vmatpush1.bf16.msra.mxu0 %v877
    %1811 = vmatprep.subr.bf16.mxu0 %v886
    %1812 = vmatpush1.bf16.msra.mxu0 %v885
    %1813 = vmatprep.subr.bf16.mxu0 %v894
    %1814 = vmatpush1.bf16.msra.mxu0 %v893
    %1815 = vmatprep.subr.bf16.mxu0 %v902
    %1816 = vmatpush1.bf16.msra.mxu0 %v901
    %1817 = vmatprep.subr.bf16.mxu0 %v910
    %1818 = vmatpush1.bf16.msra.mxu0 %v909
    %1819 = vmatprep.mubr.bf16.mxu0 %v516
    %1820 = vmatmul.mubr.bf16.gmra.mrb[0].mxu0 %v515
    %v1821 = vpop.f32.mrb[0].mxu0
    %v1822 = vadd.f32 0.0, %v1821
    %v1823 = vpop.f32.mrb[0].mxu0
    %v1824 = vadd.f32 0.0, %v1823
    %v1825 = vpop.f32.mrb[0].mxu0
    %v1826 = vpop.f32.mrb[0].mxu0
    %1827 = vdwg.mxu0
    %1828 = vmatprep.subr.bf16.mxu0 %v918
    %1829 = vmatpush1.bf16.msra.mxu0 %v917
    %1830 = vmatprep.subr.bf16.mxu0 %v926
    %1831 = vmatpush1.bf16.msra.mxu0 %v925
    %1832 = vmatprep.subr.bf16.mxu0 %v934
    %1833 = vmatpush1.bf16.msra.mxu0 %v933
    %1834 = vmatprep.subr.bf16.mxu0 %v942
    %1835 = vmatpush1.bf16.msra.mxu0 %v941
    %1836 = vmatprep.subr.bf16.mxu0 %v950
    %1837 = vmatpush1.bf16.msra.mxu0 %v949
    %1838 = vmatprep.subr.bf16.mxu0 %v958
    %1839 = vmatpush1.bf16.msra.mxu0 %v957
    %1840 = vmatprep.subr.bf16.mxu0 %v966
    %1841 = vmatpush1.bf16.msra.mxu0 %v965
    %1842 = vmatprep.subr.bf16.mxu0 %v974
    %1843 = vmatpush1.bf16.msra.mxu0 %v973
    %1844 = vmatprep.subr.bf16.mxu0 %v982
    %1845 = vmatpush1.bf16.msra.mxu0 %v981
    %1846 = vmatprep.subr.bf16.mxu0 %v990
    %1847 = vmatpush1.bf16.msra.mxu0 %v989
    %1848 = vmatprep.subr.bf16.mxu0 %v998
    %1849 = vmatpush1.bf16.msra.mxu0 %v997
    %1850 = vmatprep.subr.bf16.mxu0 %v1006
    %1851 = vmatpush1.bf16.msra.mxu0 %v1005
    %1852 = vmatprep.subr.bf16.mxu0 %v1014
    %1853 = vmatpush1.bf16.msra.mxu0 %v1013
    %1854 = vmatprep.subr.bf16.mxu0 %v1022
    %1855 = vmatpush1.bf16.msra.mxu0 %v1021
    %1856 = vmatprep.subr.bf16.mxu0 %v1030
    %1857 = vmatpush1.bf16.msra.mxu0 %v1029
    %1858 = vmatprep.subr.bf16.mxu0 %v1038
    %1859 = vmatpush1.bf16.msra.mxu0 %v1037
    %1860 = vmatprep.mubr.bf16.mxu0 %v518
    %1861 = vmatmul.mubr.bf16.gmra.mrb[0].mxu0 %v517
    %v1862 = vpop.f32.mrb[0].mxu0
    %v1863 = vadd.f32 %v1822, %v1862
    %v1864 = vpop.f32.mrb[0].mxu0
    %v1865 = vadd.f32 %v1824, %v1864
    %v1866 = vpop.f32.mrb[0].mxu0
    %v1867 = vpop.f32.mrb[0].mxu0
    %1868 = vdwg.mxu0
    %1869 = vmatprep.subr.bf16.mxu0 %v1046
    %1870 = vmatpush1.bf16.msra.mxu0 %v1045
    %1871 = vmatprep.subr.bf16.mxu0 %v1054
    %1872 = vmatpush1.bf16.msra.mxu0 %v1053
    %1873 = vmatprep.subr.bf16.mxu0 %v1062
    %1874 = vmatpush1.bf16.msra.mxu0 %v1061
    %1875 = vmatprep.subr.bf16.mxu0 %v1070
    %1876 = vmatpush1.bf16.msra.mxu0 %v1069
    %1877 = vmatprep.subr.bf16.mxu0 %v1078
    %1878 = vmatpush1.bf16.msra.mxu0 %v1077
    %1879 = vmatprep.subr.bf16.mxu0 %v1086
    %1880 = vmatpush1.bf16.msra.mxu0 %v1085
    %1881 = vmatprep.subr.bf16.mxu0 %v1094
    %1882 = vmatpush1.bf16.msra.mxu0 %v1093
    %1883 = vmatprep.subr.bf16.mxu0 %v1102
    %1884 = vmatpush1.bf16.msra.mxu0 %v1101
    %1885 = vmatprep.subr.bf16.mxu0 %v1110
    %1886 = vmatpush1.bf16.msra.mxu0 %v1109
    %1887 = vmatprep.subr.bf16.mxu0 %v1118
    %1888 = vmatpush1.bf16.msra.mxu0 %v1117
    %1889 = vmatprep.subr.bf16.mxu0 %v1126
    %1890 = vmatpush1.bf16.msra.mxu0 %v1125
    %1891 = vmatprep.subr.bf16.mxu0 %v1134
    %1892 = vmatpush1.bf16.msra.mxu0 %v1133
    %1893 = vmatprep.subr.bf16.mxu0 %v1142
    %1894 = vmatpush1.bf16.msra.mxu0 %v1141
    %1895 = vmatprep.subr.bf16.mxu0 %v1150
    %1896 = vmatpush1.bf16.msra.mxu0 %v1149
    %1897 = vmatprep.subr.bf16.mxu0 %v1158
    %1898 = vmatpush1.bf16.msra.mxu0 %v1157
    %1899 = vmatprep.subr.bf16.mxu0 %v1166
    %1900 = vmatpush1.bf16.msra.mxu0 %v1165
    %1901 = vmatprep.mubr.bf16.mxu0 %v520
    %1902 = vmatmul.mubr.bf16.gmra.mrb[0].mxu0 %v519
    %v1903 = vpop.f32.mrb[0].mxu0
    %v1904 = vadd.f32 %v1863, %v1903
    %v1905 = vpop.f32.mrb[0].mxu0
    %v1906 = vadd.f32 %v1865, %v1905
    %v1907 = vpop.f32.mrb[0].mxu0
    %v1908 = vpop.f32.mrb[0].mxu0
    %1909 = vdwg.mxu0
    %1910 = vmatprep.subr.bf16.mxu0 %v1174
    %1911 = vmatpush1.bf16.msra.mxu0 %v1173
    %1912 = vmatprep.subr.bf16.mxu0 %v1182
    %1913 = vmatpush1.bf16.msra.mxu0 %v1181
    %1914 = vmatprep.subr.bf16.mxu0 %v1190
    %1915 = vmatpush1.bf16.msra.mxu0 %v1189
    %1916 = vmatprep.subr.bf16.mxu0 %v1198
    %1917 = vmatpush1.bf16.msra.mxu0 %v1197
    %1918 = vmatprep.subr.bf16.mxu0 %v1206
    %1919 = vmatpush1.bf16.msra.mxu0 %v1205
    %1920 = vmatprep.subr.bf16.mxu0 %v1214
    %1921 = vmatpush1.bf16.msra.mxu0 %v1213
    %1922 = vmatprep.subr.bf16.mxu0 %v1222
    %1923 = vmatpush1.bf16.msra.mxu0 %v1221
    %1924 = vmatprep.subr.bf16.mxu0 %v1230
    %1925 = vmatpush1.bf16.msra.mxu0 %v1229
    %1926 = vmatprep.subr.bf16.mxu0 %v1238
    %1927 = vmatpush1.bf16.msra.mxu0 %v1237
    %1928 = vmatprep.subr.bf16.mxu0 %v1246
    %1929 = vmatpush1.bf16.msra.mxu0 %v1245
    %1930 = vmatprep.subr.bf16.mxu0 %v1254
    %1931 = vmatpush1.bf16.msra.mxu0 %v1253
    %1932 = vmatprep.subr.bf16.mxu0 %v1262
    %1933 = vmatpush1.bf16.msra.mxu0 %v1261
    %1934 = vmatprep.subr.bf16.mxu0 %v1270
    %1935 = vmatpush1.bf16.msra.mxu0 %v1269
    %1936 = vmatprep.subr.bf16.mxu0 %v1278
    %1937 = vmatpush1.bf16.msra.mxu0 %v1277
    %1938 = vmatprep.subr.bf16.mxu0 %v1286
    %1939 = vmatpush1.bf16.msra.mxu0 %v1285
    %1940 = vmatprep.subr.bf16.mxu0 %v1294
    %1941 = vmatpush1.bf16.msra.mxu0 %v1293
    %1942 = vmatprep.mubr.bf16.mxu0 %v522
    %1943 = vmatmul.mubr.bf16.gmra.mrb[0].mxu0 %v521
    %v1944 = vpop.f32.mrb[0].mxu0
    %v1945 = vadd.f32 %v1904, %v1944
    %v1946 = vpop.f32.mrb[0].mxu0
    %v1947 = vadd.f32 %v1906, %v1946
    %v1948 = vpop.f32.mrb[0].mxu0
    %v1949 = vpop.f32.mrb[0].mxu0
    %1950 = vdwg.mxu0
    %s1951 = scalar_lea.vmem [#allocation18], 1
    %v1952 = vld [vmem:[%s1951] ss:$8 sm:$0xf]
    %v1953 = vld [vmem:[%s1951] ss:$8 sm:$0xf0]
    %v1954 = vor.u32 %v1952, %v1953
    %v1956 = vlaneseq
    %v1957 = vshrl.u32 %v1956, 7
    %v1958 = vsub.s32 0, %v1957
    %v1959 = vrot.slane %v1954, %v1958
    %v1960 = vlaneseq
    %v1961 = vshrl.u32 %v1960, 7
    %v1962 = vsub.s32 1, %v1961
    %v1963 = vrot.slane %v1954, %v1962
    %v1964 = vlaneseq
    %v1965 = vshrl.u32 %v1964, 7
    %v1966 = vsub.s32 2, %v1965
    %v1967 = vrot.slane %v1954, %v1966
    %v1968 = vlaneseq
    %v1969 = vshrl.u32 %v1968, 7
    %v1970 = vsub.s32 3, %v1969
    %v1971 = vrot.slane %v1954, %v1970
    %v1972 = vlaneseq
    %v1973 = vshrl.u32 %v1972, 7
    %v1974 = vsub.s32 4, %v1973
    %v1975 = vrot.slane %v1954, %v1974
    %v1976 = vlaneseq
    %v1977 = vshrl.u32 %v1976, 7
    %v1978 = vsub.s32 5, %v1977
    %v1979 = vrot.slane %v1954, %v1978
    %v1980 = vlaneseq
    %v1981 = vshrl.u32 %v1980, 7
    %v1982 = vsub.s32 6, %v1981
    %v1983 = vrot.slane %v1954, %v1982
    %v1984 = vlaneseq
    %v1985 = vshrl.u32 %v1984, 7
    %v1986 = vsub.s32 7, %v1985
    %v1987 = vrot.slane %v1954, %v1986
    %v1996 = vmul.f32 %v1453, %v1959
    %v1997 = vmul.f32 %v1455, %v1963
    %v1998 = vmul.f32 %v1617, %v1967
    %v1999 = vmul.f32 %v1619, %v1971
    %v2000 = vmul.f32 %v1781, %v1975
    %v2001 = vmul.f32 %v1783, %v1979
    %v2002 = vmul.f32 %v1945, %v1983
    %v2003 = vmul.f32 %v1947, %v1987
    %s2004 = scalar_lea.vmem [#allocation16], 1
    %v2005 = vld [vmem:[%s2004] ss:$8 sm:$0xf]
    %v2006 = vld [vmem:[%s2004] ss:$8 sm:$0xf0]
    %v2007 = vor.u32 %v2005, %v2006
    %v2009 = vlaneseq
    %v2010 = vshrl.u32 %v2009, 7
    %v2011 = vsub.s32 0, %v2010
    %v2012 = vrot.slane %v2007, %v2011
    %v2013 = vlaneseq
    %v2014 = vshrl.u32 %v2013, 7
    %v2015 = vsub.s32 1, %v2014
    %v2016 = vrot.slane %v2007, %v2015
    %v2017 = vlaneseq
    %v2018 = vshrl.u32 %v2017, 7
    %v2019 = vsub.s32 2, %v2018
    %v2020 = vrot.slane %v2007, %v2019
    %v2021 = vlaneseq
    %v2022 = vshrl.u32 %v2021, 7
    %v2023 = vsub.s32 3, %v2022
    %v2024 = vrot.slane %v2007, %v2023
    %v2025 = vlaneseq
    %v2026 = vshrl.u32 %v2025, 7
    %v2027 = vsub.s32 4, %v2026
    %v2028 = vrot.slane %v2007, %v2027
    %v2029 = vlaneseq
    %v2030 = vshrl.u32 %v2029, 7
    %v2031 = vsub.s32 5, %v2030
    %v2032 = vrot.slane %v2007, %v2031
    %v2033 = vlaneseq
    %v2034 = vshrl.u32 %v2033, 7
    %v2035 = vsub.s32 6, %v2034
    %v2036 = vrot.slane %v2007, %v2035
    %v2037 = vlaneseq
    %v2038 = vshrl.u32 %v2037, 7
    %v2039 = vsub.s32 7, %v2038
    %v2040 = vrot.slane %v2007, %v2039
    %v2049 = vadd.f32 %v1996, %v2012
    %v2050 = vadd.f32 %v1997, %v2016
    %v2051 = vadd.f32 %v1998, %v2020
    %v2052 = vadd.f32 %v1999, %v2024
    %v2053 = vadd.f32 %v2000, %v2028
    %v2054 = vadd.f32 %v2001, %v2032
    %v2055 = vadd.f32 %v2002, %v2036
    %v2056 = vadd.f32 %v2003, %v2040
    %vm2057 = vcmp.ge.f32.partialorder %v2049, 0.0
    %vm2058 = vcmp.ge.f32.partialorder %v2050, 0.0
    %vm2059 = vcmp.ge.f32.partialorder %v2051, 0.0
    %vm2060 = vcmp.ge.f32.partialorder %v2052, 0.0
    %vm2061 = vcmp.ge.f32.partialorder %v2053, 0.0
    %vm2062 = vcmp.ge.f32.partialorder %v2054, 0.0
    %vm2063 = vcmp.ge.f32.partialorder %v2055, 0.0
    %vm2064 = vcmp.ge.f32.partialorder %v2056, 0.0
    %s2065 = sld [smem:[#allocation19 + $0x1]]
    %v2066 = vstv %s2065
    %v2067 = vmul.f32 %v2066, %v2049
    %v2068 = vmul.f32 %v2066, %v2050
    %v2069 = vmul.f32 %v2066, %v2051
    %v2070 = vmul.f32 %v2066, %v2052
    %v2071 = vmul.f32 %v2066, %v2053
    %v2072 = vmul.f32 %v2066, %v2054
    %v2073 = vmul.f32 %v2066, %v2055
    %v2074 = vmul.f32 %v2066, %v2056
    %v2075 = vsel %vm2057, %v2049, %v2067
    %v2076 = vsel %vm2058, %v2050, %v2068
    %v2077 = vsel %vm2059, %v2051, %v2069
    %v2078 = vsel %vm2060, %v2052, %v2070
    %v2079 = vsel %vm2061, %v2053, %v2071
    %v2080 = vsel %vm2062, %v2054, %v2072
    %v2081 = vsel %vm2063, %v2055, %v2073
    %v2082 = vsel %vm2064, %v2056, %v2074
    %v2083 = vpack.c.bf16 %v2075, %v2075
    %v2084 = vpack.c.bf16 %v2076, %v2076
    %v2085 = vpack.c.bf16 %v2077, %v2077
    %v2086 = vpack.c.bf16 %v2078, %v2078
    %v2087 = vpack.c.bf16 %v2079, %v2079
    %v2088 = vpack.c.bf16 %v2080, %v2080
    %v2089 = vpack.c.bf16 %v2081, %v2081
    %v2090 = vpack.c.bf16 %v2082, %v2082
    %s2091 = sshll.u32 %s524, 4
    %2092 = dma.done %s103, %s2091
    %v2093 = vld [vmem:[#allocation4] sm:$0xff]
    %v2094 = vld [vmem:[#allocation4 + $0x8] sm:$0xff]
    %v2095 = vld [vmem:[#allocation4 + $0x10] sm:$0xff]
    %v2096 = vld [vmem:[#allocation4 + $0x18] sm:$0xff]
    %v2097 = vld [vmem:[#allocation4 + $0x20] sm:$0xff]
    %v2098 = vld [vmem:[#allocation4 + $0x28] sm:$0xff]
    %v2099 = vld [vmem:[#allocation4 + $0x30] sm:$0xff]
    %v2100 = vld [vmem:[#allocation4 + $0x38] sm:$0xff]
    %v2101 = vld [vmem:[#allocation4 + $0x40] sm:$0xff]
    %v2102 = vld [vmem:[#allocation4 + $0x48] sm:$0xff]
    %v2103 = vld [vmem:[#allocation4 + $0x50] sm:$0xff]
    %v2104 = vld [vmem:[#allocation4 + $0x58] sm:$0xff]
    %v2105 = vld [vmem:[#allocation4 + $0x60] sm:$0xff]
    %v2106 = vld [vmem:[#allocation4 + $0x68] sm:$0xff]
    %v2107 = vld [vmem:[#allocation4 + $0x70] sm:$0xff]
    %v2108 = vld [vmem:[#allocation4 + $0x78] sm:$0xff]
    %v2109 = vld [vmem:[#allocation4 + $0x80] sm:$0xff]
    %v2110 = vld [vmem:[#allocation4 + $0x88] sm:$0xff]
    %v2111 = vld [vmem:[#allocation4 + $0x90] sm:$0xff]
    %v2112 = vld [vmem:[#allocation4 + $0x98] sm:$0xff]
    %v2113 = vld [vmem:[#allocation4 + $0xa0] sm:$0xff]
    %v2114 = vld [vmem:[#allocation4 + $0xa8] sm:$0xff]
    %v2115 = vld [vmem:[#allocation4 + $0xb0] sm:$0xff]
    %v2116 = vld [vmem:[#allocation4 + $0xb8] sm:$0xff]
    %v2117 = vld [vmem:[#allocation4 + $0xc0] sm:$0xff]
    %v2118 = vld [vmem:[#allocation4 + $0xc8] sm:$0xff]
    %v2119 = vld [vmem:[#allocation4 + $0xd0] sm:$0xff]
    %v2120 = vld [vmem:[#allocation4 + $0xd8] sm:$0xff]
    %v2121 = vld [vmem:[#allocation4 + $0xe0] sm:$0xff]
    %v2122 = vld [vmem:[#allocation4 + $0xe8] sm:$0xff]
    %v2123 = vld [vmem:[#allocation4 + $0xf0] sm:$0xff]
    %v2124 = vld [vmem:[#allocation4 + $0xf8] sm:$0xff]
    %v2125 = vld [vmem:[#allocation4 + $0x100] sm:$0xff]
    %v2126 = vld [vmem:[#allocation4 + $0x108] sm:$0xff]
    %v2127 = vld [vmem:[#allocation4 + $0x110] sm:$0xff]
    %v2128 = vld [vmem:[#allocation4 + $0x118] sm:$0xff]
    %v2129 = vld [vmem:[#allocation4 + $0x120] sm:$0xff]
    %v2130 = vld [vmem:[#allocation4 + $0x128] sm:$0xff]
    %v2131 = vld [vmem:[#allocation4 + $0x130] sm:$0xff]
    %v2132 = vld [vmem:[#allocation4 + $0x138] sm:$0xff]
    %v2133 = vld [vmem:[#allocation4 + $0x140] sm:$0xff]
    %v2134 = vld [vmem:[#allocation4 + $0x148] sm:$0xff]
    %v2135 = vld [vmem:[#allocation4 + $0x150] sm:$0xff]
    %v2136 = vld [vmem:[#allocation4 + $0x158] sm:$0xff]
    %v2137 = vld [vmem:[#allocation4 + $0x160] sm:$0xff]
    %v2138 = vld [vmem:[#allocation4 + $0x168] sm:$0xff]
    %v2139 = vld [vmem:[#allocation4 + $0x170] sm:$0xff]
    %v2140 = vld [vmem:[#allocation4 + $0x178] sm:$0xff]
    %v2141 = vld [vmem:[#allocation4 + $0x180] sm:$0xff]
    %v2142 = vld [vmem:[#allocation4 + $0x188] sm:$0xff]
    %v2143 = vld [vmem:[#allocation4 + $0x190] sm:$0xff]
    %v2144 = vld [vmem:[#allocation4 + $0x198] sm:$0xff]
    %v2145 = vld [vmem:[#allocation4 + $0x1a0] sm:$0xff]
    %v2146 = vld [vmem:[#allocation4 + $0x1a8] sm:$0xff]
    %v2147 = vld [vmem:[#allocation4 + $0x1b0] sm:$0xff]
    %v2148 = vld [vmem:[#allocation4 + $0x1b8] sm:$0xff]
    %v2149 = vld [vmem:[#allocation4 + $0x1c0] sm:$0xff]
    %v2150 = vld [vmem:[#allocation4 + $0x1c8] sm:$0xff]
    %v2151 = vld [vmem:[#allocation4 + $0x1d0] sm:$0xff]
    %v2152 = vld [vmem:[#allocation4 + $0x1d8] sm:$0xff]
    %v2153 = vld [vmem:[#allocation4 + $0x1e0] sm:$0xff]
    %v2154 = vld [vmem:[#allocation4 + $0x1e8] sm:$0xff]
    %v2155 = vld [vmem:[#allocation4 + $0x1f0] sm:$0xff]
    %v2156 = vld [vmem:[#allocation4 + $0x1f8] sm:$0xff]
    %v2157 = vld [vmem:[#allocation4 + $0x200] sm:$0xff]
    %v2158 = vld [vmem:[#allocation4 + $0x208] sm:$0xff]
    %v2159 = vld [vmem:[#allocation4 + $0x210] sm:$0xff]
    %v2160 = vld [vmem:[#allocation4 + $0x218] sm:$0xff]
    %v2161 = vld [vmem:[#allocation4 + $0x220] sm:$0xff]
    %v2162 = vld [vmem:[#allocation4 + $0x228] sm:$0xff]
    %v2163 = vld [vmem:[#allocation4 + $0x230] sm:$0xff]
    %v2164 = vld [vmem:[#allocation4 + $0x238] sm:$0xff]
    %v2165 = vld [vmem:[#allocation4 + $0x240] sm:$0xff]
    %v2166 = vld [vmem:[#allocation4 + $0x248] sm:$0xff]
    %v2167 = vld [vmem:[#allocation4 + $0x250] sm:$0xff]
    %v2168 = vld [vmem:[#allocation4 + $0x258] sm:$0xff]
    %v2169 = vld [vmem:[#allocation4 + $0x260] sm:$0xff]
    %v2170 = vld [vmem:[#allocation4 + $0x268] sm:$0xff]
    %v2171 = vld [vmem:[#allocation4 + $0x270] sm:$0xff]
    %v2172 = vld [vmem:[#allocation4 + $0x278] sm:$0xff]
    %v2173 = vld [vmem:[#allocation4 + $0x280] sm:$0xff]
    %v2174 = vld [vmem:[#allocation4 + $0x288] sm:$0xff]
    %v2175 = vld [vmem:[#allocation4 + $0x290] sm:$0xff]
    %v2176 = vld [vmem:[#allocation4 + $0x298] sm:$0xff]
    %v2177 = vld [vmem:[#allocation4 + $0x2a0] sm:$0xff]
    %v2178 = vld [vmem:[#allocation4 + $0x2a8] sm:$0xff]
    %v2179 = vld [vmem:[#allocation4 + $0x2b0] sm:$0xff]
    %v2180 = vld [vmem:[#allocation4 + $0x2b8] sm:$0xff]
    %v2181 = vld [vmem:[#allocation4 + $0x2c0] sm:$0xff]
    %v2182 = vld [vmem:[#allocation4 + $0x2c8] sm:$0xff]
    %v2183 = vld [vmem:[#allocation4 + $0x2d0] sm:$0xff]
    %v2184 = vld [vmem:[#allocation4 + $0x2d8] sm:$0xff]
    %v2185 = vld [vmem:[#allocation4 + $0x2e0] sm:$0xff]
    %v2186 = vld [vmem:[#allocation4 + $0x2e8] sm:$0xff]
    %v2187 = vld [vmem:[#allocation4 + $0x2f0] sm:$0xff]
    %v2188 = vld [vmem:[#allocation4 + $0x2f8] sm:$0xff]
    %v2189 = vld [vmem:[#allocation4 + $0x300] sm:$0xff]
    %v2190 = vld [vmem:[#allocation4 + $0x308] sm:$0xff]
    %v2191 = vld [vmem:[#allocation4 + $0x310] sm:$0xff]
    %v2192 = vld [vmem:[#allocation4 + $0x318] sm:$0xff]
    %v2193 = vld [vmem:[#allocation4 + $0x320] sm:$0xff]
    %v2194 = vld [vmem:[#allocation4 + $0x328] sm:$0xff]
    %v2195 = vld [vmem:[#allocation4 + $0x330] sm:$0xff]
    %v2196 = vld [vmem:[#allocation4 + $0x338] sm:$0xff]
    %v2197 = vld [vmem:[#allocation4 + $0x340] sm:$0xff]
    %v2198 = vld [vmem:[#allocation4 + $0x348] sm:$0xff]
    %v2199 = vld [vmem:[#allocation4 + $0x350] sm:$0xff]
    %v2200 = vld [vmem:[#allocation4 + $0x358] sm:$0xff]
    %v2201 = vld [vmem:[#allocation4 + $0x360] sm:$0xff]
    %v2202 = vld [vmem:[#allocation4 + $0x368] sm:$0xff]
    %v2203 = vld [vmem:[#allocation4 + $0x370] sm:$0xff]
    %v2204 = vld [vmem:[#allocation4 + $0x378] sm:$0xff]
    %v2205 = vld [vmem:[#allocation4 + $0x380] sm:$0xff]
    %v2206 = vld [vmem:[#allocation4 + $0x388] sm:$0xff]
    %v2207 = vld [vmem:[#allocation4 + $0x390] sm:$0xff]
    %v2208 = vld [vmem:[#allocation4 + $0x398] sm:$0xff]
    %v2209 = vld [vmem:[#allocation4 + $0x3a0] sm:$0xff]
    %v2210 = vld [vmem:[#allocation4 + $0x3a8] sm:$0xff]
    %v2211 = vld [vmem:[#allocation4 + $0x3b0] sm:$0xff]
    %v2212 = vld [vmem:[#allocation4 + $0x3b8] sm:$0xff]
    %v2213 = vld [vmem:[#allocation4 + $0x3c0] sm:$0xff]
    %v2214 = vld [vmem:[#allocation4 + $0x3c8] sm:$0xff]
    %v2215 = vld [vmem:[#allocation4 + $0x3d0] sm:$0xff]
    %v2216 = vld [vmem:[#allocation4 + $0x3d8] sm:$0xff]
    %v2217 = vld [vmem:[#allocation4 + $0x3e0] sm:$0xff]
    %v2218 = vld [vmem:[#allocation4 + $0x3e8] sm:$0xff]
    %v2219 = vld [vmem:[#allocation4 + $0x3f0] sm:$0xff]
    %v2220 = vld [vmem:[#allocation4 + $0x3f8] sm:$0xff]
    %v2221 = vld [vmem:[#allocation4 + $0x400] sm:$0xff]
    %v2222 = vld [vmem:[#allocation4 + $0x408] sm:$0xff]
    %v2223 = vld [vmem:[#allocation4 + $0x410] sm:$0xff]
    %v2224 = vld [vmem:[#allocation4 + $0x418] sm:$0xff]
    %v2225 = vld [vmem:[#allocation4 + $0x420] sm:$0xff]
    %v2226 = vld [vmem:[#allocation4 + $0x428] sm:$0xff]
    %v2227 = vld [vmem:[#allocation4 + $0x430] sm:$0xff]
    %v2228 = vld [vmem:[#allocation4 + $0x438] sm:$0xff]
    %v2229 = vld [vmem:[#allocation4 + $0x440] sm:$0xff]
    %v2230 = vld [vmem:[#allocation4 + $0x448] sm:$0xff]
    %v2231 = vld [vmem:[#allocation4 + $0x450] sm:$0xff]
    %v2232 = vld [vmem:[#allocation4 + $0x458] sm:$0xff]
    %v2233 = vld [vmem:[#allocation4 + $0x460] sm:$0xff]
    %v2234 = vld [vmem:[#allocation4 + $0x468] sm:$0xff]
    %v2235 = vld [vmem:[#allocation4 + $0x470] sm:$0xff]
    %v2236 = vld [vmem:[#allocation4 + $0x478] sm:$0xff]
    %v2237 = vld [vmem:[#allocation4 + $0x480] sm:$0xff]
    %v2238 = vld [vmem:[#allocation4 + $0x488] sm:$0xff]
    %v2239 = vld [vmem:[#allocation4 + $0x490] sm:$0xff]
    %v2240 = vld [vmem:[#allocation4 + $0x498] sm:$0xff]
    %v2241 = vld [vmem:[#allocation4 + $0x4a0] sm:$0xff]
    %v2242 = vld [vmem:[#allocation4 + $0x4a8] sm:$0xff]
    %v2243 = vld [vmem:[#allocation4 + $0x4b0] sm:$0xff]
    %v2244 = vld [vmem:[#allocation4 + $0x4b8] sm:$0xff]
    %v2245 = vld [vmem:[#allocation4 + $0x4c0] sm:$0xff]
    %v2246 = vld [vmem:[#allocation4 + $0x4c8] sm:$0xff]
    %v2247 = vld [vmem:[#allocation4 + $0x4d0] sm:$0xff]
    %v2248 = vld [vmem:[#allocation4 + $0x4d8] sm:$0xff]
    %v2249 = vld [vmem:[#allocation4 + $0x4e0] sm:$0xff]
    %v2250 = vld [vmem:[#allocation4 + $0x4e8] sm:$0xff]
    %v2251 = vld [vmem:[#allocation4 + $0x4f0] sm:$0xff]
    %v2252 = vld [vmem:[#allocation4 + $0x4f8] sm:$0xff]
    %v2253 = vld [vmem:[#allocation4 + $0x500] sm:$0xff]
    %v2254 = vld [vmem:[#allocation4 + $0x508] sm:$0xff]
    %v2255 = vld [vmem:[#allocation4 + $0x510] sm:$0xff]
    %v2256 = vld [vmem:[#allocation4 + $0x518] sm:$0xff]
    %v2257 = vld [vmem:[#allocation4 + $0x520] sm:$0xff]
    %v2258 = vld [vmem:[#allocation4 + $0x528] sm:$0xff]
    %v2259 = vld [vmem:[#allocation4 + $0x530] sm:$0xff]
    %v2260 = vld [vmem:[#allocation4 + $0x538] sm:$0xff]
    %v2261 = vld [vmem:[#allocation4 + $0x540] sm:$0xff]
    %v2262 = vld [vmem:[#allocation4 + $0x548] sm:$0xff]
    %v2263 = vld [vmem:[#allocation4 + $0x550] sm:$0xff]
    %v2264 = vld [vmem:[#allocation4 + $0x558] sm:$0xff]
    %v2265 = vld [vmem:[#allocation4 + $0x560] sm:$0xff]
    %v2266 = vld [vmem:[#allocation4 + $0x568] sm:$0xff]
    %v2267 = vld [vmem:[#allocation4 + $0x570] sm:$0xff]
    %v2268 = vld [vmem:[#allocation4 + $0x578] sm:$0xff]
    %v2269 = vld [vmem:[#allocation4 + $0x580] sm:$0xff]
    %v2270 = vld [vmem:[#allocation4 + $0x588] sm:$0xff]
    %v2271 = vld [vmem:[#allocation4 + $0x590] sm:$0xff]
    %v2272 = vld [vmem:[#allocation4 + $0x598] sm:$0xff]
    %v2273 = vld [vmem:[#allocation4 + $0x5a0] sm:$0xff]
    %v2274 = vld [vmem:[#allocation4 + $0x5a8] sm:$0xff]
    %v2275 = vld [vmem:[#allocation4 + $0x5b0] sm:$0xff]
    %v2276 = vld [vmem:[#allocation4 + $0x5b8] sm:$0xff]
    %v2277 = vld [vmem:[#allocation4 + $0x5c0] sm:$0xff]
    %v2278 = vld [vmem:[#allocation4 + $0x5c8] sm:$0xff]
    %v2279 = vld [vmem:[#allocation4 + $0x5d0] sm:$0xff]
    %v2280 = vld [vmem:[#allocation4 + $0x5d8] sm:$0xff]
    %v2281 = vld [vmem:[#allocation4 + $0x5e0] sm:$0xff]
    %v2282 = vld [vmem:[#allocation4 + $0x5e8] sm:$0xff]
    %v2283 = vld [vmem:[#allocation4 + $0x5f0] sm:$0xff]
    %v2284 = vld [vmem:[#allocation4 + $0x5f8] sm:$0xff]
    %v2285 = vld [vmem:[#allocation4 + $0x600] sm:$0xff]
    %v2286 = vld [vmem:[#allocation4 + $0x608] sm:$0xff]
    %v2287 = vld [vmem:[#allocation4 + $0x610] sm:$0xff]
    %v2288 = vld [vmem:[#allocation4 + $0x618] sm:$0xff]
    %v2289 = vld [vmem:[#allocation4 + $0x620] sm:$0xff]
    %v2290 = vld [vmem:[#allocation4 + $0x628] sm:$0xff]
    %v2291 = vld [vmem:[#allocation4 + $0x630] sm:$0xff]
    %v2292 = vld [vmem:[#allocation4 + $0x638] sm:$0xff]
    %v2293 = vld [vmem:[#allocation4 + $0x640] sm:$0xff]
    %v2294 = vld [vmem:[#allocation4 + $0x648] sm:$0xff]
    %v2295 = vld [vmem:[#allocation4 + $0x650] sm:$0xff]
    %v2296 = vld [vmem:[#allocation4 + $0x658] sm:$0xff]
    %v2297 = vld [vmem:[#allocation4 + $0x660] sm:$0xff]
    %v2298 = vld [vmem:[#allocation4 + $0x668] sm:$0xff]
    %v2299 = vld [vmem:[#allocation4 + $0x670] sm:$0xff]
    %v2300 = vld [vmem:[#allocation4 + $0x678] sm:$0xff]
    %v2301 = vld [vmem:[#allocation4 + $0x680] sm:$0xff]
    %v2302 = vld [vmem:[#allocation4 + $0x688] sm:$0xff]
    %v2303 = vld [vmem:[#allocation4 + $0x690] sm:$0xff]
    %v2304 = vld [vmem:[#allocation4 + $0x698] sm:$0xff]
    %v2305 = vld [vmem:[#allocation4 + $0x6a0] sm:$0xff]
    %v2306 = vld [vmem:[#allocation4 + $0x6a8] sm:$0xff]
    %v2307 = vld [vmem:[#allocation4 + $0x6b0] sm:$0xff]
    %v2308 = vld [vmem:[#allocation4 + $0x6b8] sm:$0xff]
    %v2309 = vld [vmem:[#allocation4 + $0x6c0] sm:$0xff]
    %v2310 = vld [vmem:[#allocation4 + $0x6c8] sm:$0xff]
    %v2311 = vld [vmem:[#allocation4 + $0x6d0] sm:$0xff]
    %v2312 = vld [vmem:[#allocation4 + $0x6d8] sm:$0xff]
    %v2313 = vld [vmem:[#allocation4 + $0x6e0] sm:$0xff]
    %v2314 = vld [vmem:[#allocation4 + $0x6e8] sm:$0xff]
    %v2315 = vld [vmem:[#allocation4 + $0x6f0] sm:$0xff]
    %v2316 = vld [vmem:[#allocation4 + $0x6f8] sm:$0xff]
    %v2317 = vld [vmem:[#allocation4 + $0x700] sm:$0xff]
    %v2318 = vld [vmem:[#allocation4 + $0x708] sm:$0xff]
    %v2319 = vld [vmem:[#allocation4 + $0x710] sm:$0xff]
    %v2320 = vld [vmem:[#allocation4 + $0x718] sm:$0xff]
    %v2321 = vld [vmem:[#allocation4 + $0x720] sm:$0xff]
    %v2322 = vld [vmem:[#allocation4 + $0x728] sm:$0xff]
    %v2323 = vld [vmem:[#allocation4 + $0x730] sm:$0xff]
    %v2324 = vld [vmem:[#allocation4 + $0x738] sm:$0xff]
    %v2325 = vld [vmem:[#allocation4 + $0x740] sm:$0xff]
    %v2326 = vld [vmem:[#allocation4 + $0x748] sm:$0xff]
    %v2327 = vld [vmem:[#allocation4 + $0x750] sm:$0xff]
    %v2328 = vld [vmem:[#allocation4 + $0x758] sm:$0xff]
    %v2329 = vld [vmem:[#allocation4 + $0x760] sm:$0xff]
    %v2330 = vld [vmem:[#allocation4 + $0x768] sm:$0xff]
    %v2331 = vld [vmem:[#allocation4 + $0x770] sm:$0xff]
    %v2332 = vld [vmem:[#allocation4 + $0x778] sm:$0xff]
    %v2333 = vld [vmem:[#allocation4 + $0x780] sm:$0xff]
    %v2334 = vld [vmem:[#allocation4 + $0x788] sm:$0xff]
    %v2335 = vld [vmem:[#allocation4 + $0x790] sm:$0xff]
    %v2336 = vld [vmem:[#allocation4 + $0x798] sm:$0xff]
    %v2337 = vld [vmem:[#allocation4 + $0x7a0] sm:$0xff]
    %v2338 = vld [vmem:[#allocation4 + $0x7a8] sm:$0xff]
    %v2339 = vld [vmem:[#allocation4 + $0x7b0] sm:$0xff]
    %v2340 = vld [vmem:[#allocation4 + $0x7b8] sm:$0xff]
    %v2341 = vld [vmem:[#allocation4 + $0x7c0] sm:$0xff]
    %v2342 = vld [vmem:[#allocation4 + $0x7c8] sm:$0xff]
    %v2343 = vld [vmem:[#allocation4 + $0x7d0] sm:$0xff]
    %v2344 = vld [vmem:[#allocation4 + $0x7d8] sm:$0xff]
    %v2345 = vld [vmem:[#allocation4 + $0x7e0] sm:$0xff]
    %v2346 = vld [vmem:[#allocation4 + $0x7e8] sm:$0xff]
    %v2347 = vld [vmem:[#allocation4 + $0x7f0] sm:$0xff]
    %v2348 = vld [vmem:[#allocation4 + $0x7f8] sm:$0xff]
    %v2349 = vunpack.c.l.s8.bf16 %v2093
    %v2350 = vunpack.c.l.s8.bf16 %v2094
    %v2351 = vunpack.c.l.s8.bf16 %v2095
    %v2352 = vunpack.c.l.s8.bf16 %v2096
    %v2353 = vunpack.c.l.s8.bf16 %v2097
    %v2354 = vunpack.c.l.s8.bf16 %v2098
    %v2355 = vunpack.c.l.s8.bf16 %v2099
    %v2356 = vunpack.c.l.s8.bf16 %v2100
    %v2357 = vunpack.c.h.s8.bf16 %v2093
    %v2358 = vunpack.c.h.s8.bf16 %v2094
    %v2359 = vunpack.c.h.s8.bf16 %v2095
    %v2360 = vunpack.c.h.s8.bf16 %v2096
    %v2361 = vunpack.c.h.s8.bf16 %v2097
    %v2362 = vunpack.c.h.s8.bf16 %v2098
    %v2363 = vunpack.c.h.s8.bf16 %v2099
    %v2364 = vunpack.c.h.s8.bf16 %v2100
    %v2365 = vunpack.c.l.s8.bf16 %v2101
    %v2366 = vunpack.c.l.s8.bf16 %v2102
    %v2367 = vunpack.c.l.s8.bf16 %v2103
    %v2368 = vunpack.c.l.s8.bf16 %v2104
    %v2369 = vunpack.c.l.s8.bf16 %v2105
    %v2370 = vunpack.c.l.s8.bf16 %v2106
    %v2371 = vunpack.c.l.s8.bf16 %v2107
    %v2372 = vunpack.c.l.s8.bf16 %v2108
    %v2373 = vunpack.c.h.s8.bf16 %v2101
    %v2374 = vunpack.c.h.s8.bf16 %v2102
    %v2375 = vunpack.c.h.s8.bf16 %v2103
    %v2376 = vunpack.c.h.s8.bf16 %v2104
    %v2377 = vunpack.c.h.s8.bf16 %v2105
    %v2378 = vunpack.c.h.s8.bf16 %v2106
    %v2379 = vunpack.c.h.s8.bf16 %v2107
    %v2380 = vunpack.c.h.s8.bf16 %v2108
    %v2381 = vunpack.c.l.s8.bf16 %v2109
    %v2382 = vunpack.c.l.s8.bf16 %v2110
    %v2383 = vunpack.c.l.s8.bf16 %v2111
    %v2384 = vunpack.c.l.s8.bf16 %v2112
    %v2385 = vunpack.c.l.s8.bf16 %v2113
    %v2386 = vunpack.c.l.s8.bf16 %v2114
    %v2387 = vunpack.c.l.s8.bf16 %v2115
    %v2388 = vunpack.c.l.s8.bf16 %v2116
    %v2389 = vunpack.c.h.s8.bf16 %v2109
    %v2390 = vunpack.c.h.s8.bf16 %v2110
    %v2391 = vunpack.c.h.s8.bf16 %v2111
    %v2392 = vunpack.c.h.s8.bf16 %v2112
    %v2393 = vunpack.c.h.s8.bf16 %v2113
    %v2394 = vunpack.c.h.s8.bf16 %v2114
    %v2395 = vunpack.c.h.s8.bf16 %v2115
    %v2396 = vunpack.c.h.s8.bf16 %v2116
    %v2397 = vunpack.c.l.s8.bf16 %v2117
    %v2398 = vunpack.c.l.s8.bf16 %v2118
    %v2399 = vunpack.c.l.s8.bf16 %v2119
    %v2400 = vunpack.c.l.s8.bf16 %v2120
    %v2401 = vunpack.c.l.s8.bf16 %v2121
    %v2402 = vunpack.c.l.s8.bf16 %v2122
    %v2403 = vunpack.c.l.s8.bf16 %v2123
    %v2404 = vunpack.c.l.s8.bf16 %v2124
    %v2405 = vunpack.c.h.s8.bf16 %v2117
    %v2406 = vunpack.c.h.s8.bf16 %v2118
    %v2407 = vunpack.c.h.s8.bf16 %v2119
    %v2408 = vunpack.c.h.s8.bf16 %v2120
    %v2409 = vunpack.c.h.s8.bf16 %v2121
    %v2410 = vunpack.c.h.s8.bf16 %v2122
    %v2411 = vunpack.c.h.s8.bf16 %v2123
    %v2412 = vunpack.c.h.s8.bf16 %v2124
    %v2413 = vunpack.c.l.s8.bf16 %v2125
    %v2414 = vunpack.c.l.s8.bf16 %v2126
    %v2415 = vunpack.c.l.s8.bf16 %v2127
    %v2416 = vunpack.c.l.s8.bf16 %v2128
    %v2417 = vunpack.c.l.s8.bf16 %v2129
    %v2418 = vunpack.c.l.s8.bf16 %v2130
    %v2419 = vunpack.c.l.s8.bf16 %v2131
    %v2420 = vunpack.c.l.s8.bf16 %v2132
    %v2421 = vunpack.c.h.s8.bf16 %v2125
    %v2422 = vunpack.c.h.s8.bf16 %v2126
    %v2423 = vunpack.c.h.s8.bf16 %v2127
    %v2424 = vunpack.c.h.s8.bf16 %v2128
    %v2425 = vunpack.c.h.s8.bf16 %v2129
    %v2426 = vunpack.c.h.s8.bf16 %v2130
    %v2427 = vunpack.c.h.s8.bf16 %v2131
    %v2428 = vunpack.c.h.s8.bf16 %v2132
    %v2429 = vunpack.c.l.s8.bf16 %v2133
    %v2430 = vunpack.c.l.s8.bf16 %v2134
    %v2431 = vunpack.c.l.s8.bf16 %v2135
    %v2432 = vunpack.c.l.s8.bf16 %v2136
    %v2433 = vunpack.c.l.s8.bf16 %v2137
    %v2434 = vunpack.c.l.s8.bf16 %v2138
    %v2435 = vunpack.c.l.s8.bf16 %v2139
    %v2436 = vunpack.c.l.s8.bf16 %v2140
    %v2437 = vunpack.c.h.s8.bf16 %v2133
    %v2438 = vunpack.c.h.s8.bf16 %v2134
    %v2439 = vunpack.c.h.s8.bf16 %v2135
    %v2440 = vunpack.c.h.s8.bf16 %v2136
    %v2441 = vunpack.c.h.s8.bf16 %v2137
    %v2442 = vunpack.c.h.s8.bf16 %v2138
    %v2443 = vunpack.c.h.s8.bf16 %v2139
    %v2444 = vunpack.c.h.s8.bf16 %v2140
    %v2445 = vunpack.c.l.s8.bf16 %v2141
    %v2446 = vunpack.c.l.s8.bf16 %v2142
    %v2447 = vunpack.c.l.s8.bf16 %v2143
    %v2448 = vunpack.c.l.s8.bf16 %v2144
    %v2449 = vunpack.c.l.s8.bf16 %v2145
    %v2450 = vunpack.c.l.s8.bf16 %v2146
    %v2451 = vunpack.c.l.s8.bf16 %v2147
    %v2452 = vunpack.c.l.s8.bf16 %v2148
    %v2453 = vunpack.c.h.s8.bf16 %v2141
    %v2454 = vunpack.c.h.s8.bf16 %v2142
    %v2455 = vunpack.c.h.s8.bf16 %v2143
    %v2456 = vunpack.c.h.s8.bf16 %v2144
    %v2457 = vunpack.c.h.s8.bf16 %v2145
    %v2458 = vunpack.c.h.s8.bf16 %v2146
    %v2459 = vunpack.c.h.s8.bf16 %v2147
    %v2460 = vunpack.c.h.s8.bf16 %v2148
    %v2461 = vunpack.c.l.s8.bf16 %v2149
    %v2462 = vunpack.c.l.s8.bf16 %v2150
    %v2463 = vunpack.c.l.s8.bf16 %v2151
    %v2464 = vunpack.c.l.s8.bf16 %v2152
    %v2465 = vunpack.c.l.s8.bf16 %v2153
    %v2466 = vunpack.c.l.s8.bf16 %v2154
    %v2467 = vunpack.c.l.s8.bf16 %v2155
    %v2468 = vunpack.c.l.s8.bf16 %v2156
    %v2469 = vunpack.c.h.s8.bf16 %v2149
    %v2470 = vunpack.c.h.s8.bf16 %v2150
    %v2471 = vunpack.c.h.s8.bf16 %v2151
    %v2472 = vunpack.c.h.s8.bf16 %v2152
    %v2473 = vunpack.c.h.s8.bf16 %v2153
    %v2474 = vunpack.c.h.s8.bf16 %v2154
    %v2475 = vunpack.c.h.s8.bf16 %v2155
    %v2476 = vunpack.c.h.s8.bf16 %v2156
    %v2477 = vunpack.c.l.s8.bf16 %v2157
    %v2478 = vunpack.c.l.s8.bf16 %v2158
    %v2479 = vunpack.c.l.s8.bf16 %v2159
    %v2480 = vunpack.c.l.s8.bf16 %v2160
    %v2481 = vunpack.c.l.s8.bf16 %v2161
    %v2482 = vunpack.c.l.s8.bf16 %v2162
    %v2483 = vunpack.c.l.s8.bf16 %v2163
    %v2484 = vunpack.c.l.s8.bf16 %v2164
    %v2485 = vunpack.c.h.s8.bf16 %v2157
    %v2486 = vunpack.c.h.s8.bf16 %v2158
    %v2487 = vunpack.c.h.s8.bf16 %v2159
    %v2488 = vunpack.c.h.s8.bf16 %v2160
    %v2489 = vunpack.c.h.s8.bf16 %v2161
    %v2490 = vunpack.c.h.s8.bf16 %v2162
    %v2491 = vunpack.c.h.s8.bf16 %v2163
    %v2492 = vunpack.c.h.s8.bf16 %v2164
    %v2493 = vunpack.c.l.s8.bf16 %v2165
    %v2494 = vunpack.c.l.s8.bf16 %v2166
    %v2495 = vunpack.c.l.s8.bf16 %v2167
    %v2496 = vunpack.c.l.s8.bf16 %v2168
    %v2497 = vunpack.c.l.s8.bf16 %v2169
    %v2498 = vunpack.c.l.s8.bf16 %v2170
    %v2499 = vunpack.c.l.s8.bf16 %v2171
    %v2500 = vunpack.c.l.s8.bf16 %v2172
    %v2501 = vunpack.c.h.s8.bf16 %v2165
    %v2502 = vunpack.c.h.s8.bf16 %v2166
    %v2503 = vunpack.c.h.s8.bf16 %v2167
    %v2504 = vunpack.c.h.s8.bf16 %v2168
    %v2505 = vunpack.c.h.s8.bf16 %v2169
    %v2506 = vunpack.c.h.s8.bf16 %v2170
    %v2507 = vunpack.c.h.s8.bf16 %v2171
    %v2508 = vunpack.c.h.s8.bf16 %v2172
    %v2509 = vunpack.c.l.s8.bf16 %v2173
    %v2510 = vunpack.c.l.s8.bf16 %v2174
    %v2511 = vunpack.c.l.s8.bf16 %v2175
    %v2512 = vunpack.c.l.s8.bf16 %v2176
    %v2513 = vunpack.c.l.s8.bf16 %v2177
    %v2514 = vunpack.c.l.s8.bf16 %v2178
    %v2515 = vunpack.c.l.s8.bf16 %v2179
    %v2516 = vunpack.c.l.s8.bf16 %v2180
    %v2517 = vunpack.c.h.s8.bf16 %v2173
    %v2518 = vunpack.c.h.s8.bf16 %v2174
    %v2519 = vunpack.c.h.s8.bf16 %v2175
    %v2520 = vunpack.c.h.s8.bf16 %v2176
    %v2521 = vunpack.c.h.s8.bf16 %v2177
    %v2522 = vunpack.c.h.s8.bf16 %v2178
    %v2523 = vunpack.c.h.s8.bf16 %v2179
    %v2524 = vunpack.c.h.s8.bf16 %v2180
    %v2525 = vunpack.c.l.s8.bf16 %v2181
    %v2526 = vunpack.c.l.s8.bf16 %v2182
    %v2527 = vunpack.c.l.s8.bf16 %v2183
    %v2528 = vunpack.c.l.s8.bf16 %v2184
    %v2529 = vunpack.c.l.s8.bf16 %v2185
    %v2530 = vunpack.c.l.s8.bf16 %v2186
    %v2531 = vunpack.c.l.s8.bf16 %v2187
    %v2532 = vunpack.c.l.s8.bf16 %v2188
    %v2533 = vunpack.c.h.s8.bf16 %v2181
    %v2534 = vunpack.c.h.s8.bf16 %v2182
    %v2535 = vunpack.c.h.s8.bf16 %v2183
    %v2536 = vunpack.c.h.s8.bf16 %v2184
    %v2537 = vunpack.c.h.s8.bf16 %v2185
    %v2538 = vunpack.c.h.s8.bf16 %v2186
    %v2539 = vunpack.c.h.s8.bf16 %v2187
    %v2540 = vunpack.c.h.s8.bf16 %v2188
    %v2541 = vunpack.c.l.s8.bf16 %v2189
    %v2542 = vunpack.c.l.s8.bf16 %v2190
    %v2543 = vunpack.c.l.s8.bf16 %v2191
    %v2544 = vunpack.c.l.s8.bf16 %v2192
    %v2545 = vunpack.c.l.s8.bf16 %v2193
    %v2546 = vunpack.c.l.s8.bf16 %v2194
    %v2547 = vunpack.c.l.s8.bf16 %v2195
    %v2548 = vunpack.c.l.s8.bf16 %v2196
    %v2549 = vunpack.c.h.s8.bf16 %v2189
    %v2550 = vunpack.c.h.s8.bf16 %v2190
    %v2551 = vunpack.c.h.s8.bf16 %v2191
    %v2552 = vunpack.c.h.s8.bf16 %v2192
    %v2553 = vunpack.c.h.s8.bf16 %v2193
    %v2554 = vunpack.c.h.s8.bf16 %v2194
    %v2555 = vunpack.c.h.s8.bf16 %v2195
    %v2556 = vunpack.c.h.s8.bf16 %v2196
    %v2557 = vunpack.c.l.s8.bf16 %v2197
    %v2558 = vunpack.c.l.s8.bf16 %v2198
    %v2559 = vunpack.c.l.s8.bf16 %v2199
    %v2560 = vunpack.c.l.s8.bf16 %v2200
    %v2561 = vunpack.c.l.s8.bf16 %v2201
    %v2562 = vunpack.c.l.s8.bf16 %v2202
    %v2563 = vunpack.c.l.s8.bf16 %v2203
    %v2564 = vunpack.c.l.s8.bf16 %v2204
    %v2565 = vunpack.c.h.s8.bf16 %v2197
    %v2566 = vunpack.c.h.s8.bf16 %v2198
    %v2567 = vunpack.c.h.s8.bf16 %v2199
    %v2568 = vunpack.c.h.s8.bf16 %v2200
    %v2569 = vunpack.c.h.s8.bf16 %v2201
    %v2570 = vunpack.c.h.s8.bf16 %v2202
    %v2571 = vunpack.c.h.s8.bf16 %v2203
    %v2572 = vunpack.c.h.s8.bf16 %v2204
    %v2573 = vunpack.c.l.s8.bf16 %v2205
    %v2574 = vunpack.c.l.s8.bf16 %v2206
    %v2575 = vunpack.c.l.s8.bf16 %v2207
    %v2576 = vunpack.c.l.s8.bf16 %v2208
    %v2577 = vunpack.c.l.s8.bf16 %v2209
    %v2578 = vunpack.c.l.s8.bf16 %v2210
    %v2579 = vunpack.c.l.s8.bf16 %v2211
    %v2580 = vunpack.c.l.s8.bf16 %v2212
    %v2581 = vunpack.c.h.s8.bf16 %v2205
    %v2582 = vunpack.c.h.s8.bf16 %v2206
    %v2583 = vunpack.c.h.s8.bf16 %v2207
    %v2584 = vunpack.c.h.s8.bf16 %v2208
    %v2585 = vunpack.c.h.s8.bf16 %v2209
    %v2586 = vunpack.c.h.s8.bf16 %v2210
    %v2587 = vunpack.c.h.s8.bf16 %v2211
    %v2588 = vunpack.c.h.s8.bf16 %v2212
    %v2589 = vunpack.c.l.s8.bf16 %v2213
    %v2590 = vunpack.c.l.s8.bf16 %v2214
    %v2591 = vunpack.c.l.s8.bf16 %v2215
    %v2592 = vunpack.c.l.s8.bf16 %v2216
    %v2593 = vunpack.c.l.s8.bf16 %v2217
    %v2594 = vunpack.c.l.s8.bf16 %v2218
    %v2595 = vunpack.c.l.s8.bf16 %v2219
    %v2596 = vunpack.c.l.s8.bf16 %v2220
    %v2597 = vunpack.c.h.s8.bf16 %v2213
    %v2598 = vunpack.c.h.s8.bf16 %v2214
    %v2599 = vunpack.c.h.s8.bf16 %v2215
    %v2600 = vunpack.c.h.s8.bf16 %v2216
    %v2601 = vunpack.c.h.s8.bf16 %v2217
    %v2602 = vunpack.c.h.s8.bf16 %v2218
    %v2603 = vunpack.c.h.s8.bf16 %v2219
    %v2604 = vunpack.c.h.s8.bf16 %v2220
    %v2605 = vunpack.c.l.s8.bf16 %v2221
    %v2606 = vunpack.c.l.s8.bf16 %v2222
    %v2607 = vunpack.c.l.s8.bf16 %v2223
    %v2608 = vunpack.c.l.s8.bf16 %v2224
    %v2609 = vunpack.c.l.s8.bf16 %v2225
    %v2610 = vunpack.c.l.s8.bf16 %v2226
    %v2611 = vunpack.c.l.s8.bf16 %v2227
    %v2612 = vunpack.c.l.s8.bf16 %v2228
    %v2613 = vunpack.c.h.s8.bf16 %v2221
    %v2614 = vunpack.c.h.s8.bf16 %v2222
    %v2615 = vunpack.c.h.s8.bf16 %v2223
    %v2616 = vunpack.c.h.s8.bf16 %v2224
    %v2617 = vunpack.c.h.s8.bf16 %v2225
    %v2618 = vunpack.c.h.s8.bf16 %v2226
    %v2619 = vunpack.c.h.s8.bf16 %v2227
    %v2620 = vunpack.c.h.s8.bf16 %v2228
    %v2621 = vunpack.c.l.s8.bf16 %v2229
    %v2622 = vunpack.c.l.s8.bf16 %v2230
    %v2623 = vunpack.c.l.s8.bf16 %v2231
    %v2624 = vunpack.c.l.s8.bf16 %v2232
    %v2625 = vunpack.c.l.s8.bf16 %v2233
    %v2626 = vunpack.c.l.s8.bf16 %v2234
    %v2627 = vunpack.c.l.s8.bf16 %v2235
    %v2628 = vunpack.c.l.s8.bf16 %v2236
    %v2629 = vunpack.c.h.s8.bf16 %v2229
    %v2630 = vunpack.c.h.s8.bf16 %v2230
    %v2631 = vunpack.c.h.s8.bf16 %v2231
    %v2632 = vunpack.c.h.s8.bf16 %v2232
    %v2633 = vunpack.c.h.s8.bf16 %v2233
    %v2634 = vunpack.c.h.s8.bf16 %v2234
    %v2635 = vunpack.c.h.s8.bf16 %v2235
    %v2636 = vunpack.c.h.s8.bf16 %v2236
    %v2637 = vunpack.c.l.s8.bf16 %v2237
    %v2638 = vunpack.c.l.s8.bf16 %v2238
    %v2639 = vunpack.c.l.s8.bf16 %v2239
    %v2640 = vunpack.c.l.s8.bf16 %v2240
    %v2641 = vunpack.c.l.s8.bf16 %v2241
    %v2642 = vunpack.c.l.s8.bf16 %v2242
    %v2643 = vunpack.c.l.s8.bf16 %v2243
    %v2644 = vunpack.c.l.s8.bf16 %v2244
    %v2645 = vunpack.c.h.s8.bf16 %v2237
    %v2646 = vunpack.c.h.s8.bf16 %v2238
    %v2647 = vunpack.c.h.s8.bf16 %v2239
    %v2648 = vunpack.c.h.s8.bf16 %v2240
    %v2649 = vunpack.c.h.s8.bf16 %v2241
    %v2650 = vunpack.c.h.s8.bf16 %v2242
    %v2651 = vunpack.c.h.s8.bf16 %v2243
    %v2652 = vunpack.c.h.s8.bf16 %v2244
    %v2653 = vunpack.c.l.s8.bf16 %v2245
    %v2654 = vunpack.c.l.s8.bf16 %v2246
    %v2655 = vunpack.c.l.s8.bf16 %v2247
    %v2656 = vunpack.c.l.s8.bf16 %v2248
    %v2657 = vunpack.c.l.s8.bf16 %v2249
    %v2658 = vunpack.c.l.s8.bf16 %v2250
    %v2659 = vunpack.c.l.s8.bf16 %v2251
    %v2660 = vunpack.c.l.s8.bf16 %v2252
    %v2661 = vunpack.c.h.s8.bf16 %v2245
    %v2662 = vunpack.c.h.s8.bf16 %v2246
    %v2663 = vunpack.c.h.s8.bf16 %v2247
    %v2664 = vunpack.c.h.s8.bf16 %v2248
    %v2665 = vunpack.c.h.s8.bf16 %v2249
    %v2666 = vunpack.c.h.s8.bf16 %v2250
    %v2667 = vunpack.c.h.s8.bf16 %v2251
    %v2668 = vunpack.c.h.s8.bf16 %v2252
    %v2669 = vunpack.c.l.s8.bf16 %v2253
    %v2670 = vunpack.c.l.s8.bf16 %v2254
    %v2671 = vunpack.c.l.s8.bf16 %v2255
    %v2672 = vunpack.c.l.s8.bf16 %v2256
    %v2673 = vunpack.c.l.s8.bf16 %v2257
    %v2674 = vunpack.c.l.s8.bf16 %v2258
    %v2675 = vunpack.c.l.s8.bf16 %v2259
    %v2676 = vunpack.c.l.s8.bf16 %v2260
    %v2677 = vunpack.c.h.s8.bf16 %v2253
    %v2678 = vunpack.c.h.s8.bf16 %v2254
    %v2679 = vunpack.c.h.s8.bf16 %v2255
    %v2680 = vunpack.c.h.s8.bf16 %v2256
    %v2681 = vunpack.c.h.s8.bf16 %v2257
    %v2682 = vunpack.c.h.s8.bf16 %v2258
    %v2683 = vunpack.c.h.s8.bf16 %v2259
    %v2684 = vunpack.c.h.s8.bf16 %v2260
    %v2685 = vunpack.c.l.s8.bf16 %v2261
    %v2686 = vunpack.c.l.s8.bf16 %v2262
    %v2687 = vunpack.c.l.s8.bf16 %v2263
    %v2688 = vunpack.c.l.s8.bf16 %v2264
    %v2689 = vunpack.c.l.s8.bf16 %v2265
    %v2690 = vunpack.c.l.s8.bf16 %v2266
    %v2691 = vunpack.c.l.s8.bf16 %v2267
    %v2692 = vunpack.c.l.s8.bf16 %v2268
    %v2693 = vunpack.c.h.s8.bf16 %v2261
    %v2694 = vunpack.c.h.s8.bf16 %v2262
    %v2695 = vunpack.c.h.s8.bf16 %v2263
    %v2696 = vunpack.c.h.s8.bf16 %v2264
    %v2697 = vunpack.c.h.s8.bf16 %v2265
    %v2698 = vunpack.c.h.s8.bf16 %v2266
    %v2699 = vunpack.c.h.s8.bf16 %v2267
    %v2700 = vunpack.c.h.s8.bf16 %v2268
    %v2701 = vunpack.c.l.s8.bf16 %v2269
    %v2702 = vunpack.c.l.s8.bf16 %v2270
    %v2703 = vunpack.c.l.s8.bf16 %v2271
    %v2704 = vunpack.c.l.s8.bf16 %v2272
    %v2705 = vunpack.c.l.s8.bf16 %v2273
    %v2706 = vunpack.c.l.s8.bf16 %v2274
    %v2707 = vunpack.c.l.s8.bf16 %v2275
    %v2708 = vunpack.c.l.s8.bf16 %v2276
    %v2709 = vunpack.c.h.s8.bf16 %v2269
    %v2710 = vunpack.c.h.s8.bf16 %v2270
    %v2711 = vunpack.c.h.s8.bf16 %v2271
    %v2712 = vunpack.c.h.s8.bf16 %v2272
    %v2713 = vunpack.c.h.s8.bf16 %v2273
    %v2714 = vunpack.c.h.s8.bf16 %v2274
    %v2715 = vunpack.c.h.s8.bf16 %v2275
    %v2716 = vunpack.c.h.s8.bf16 %v2276
    %v2717 = vunpack.c.l.s8.bf16 %v2277
    %v2718 = vunpack.c.l.s8.bf16 %v2278
    %v2719 = vunpack.c.l.s8.bf16 %v2279
    %v2720 = vunpack.c.l.s8.bf16 %v2280
    %v2721 = vunpack.c.l.s8.bf16 %v2281
    %v2722 = vunpack.c.l.s8.bf16 %v2282
    %v2723 = vunpack.c.l.s8.bf16 %v2283
    %v2724 = vunpack.c.l.s8.bf16 %v2284
    %v2725 = vunpack.c.h.s8.bf16 %v2277
    %v2726 = vunpack.c.h.s8.bf16 %v2278
    %v2727 = vunpack.c.h.s8.bf16 %v2279
    %v2728 = vunpack.c.h.s8.bf16 %v2280
    %v2729 = vunpack.c.h.s8.bf16 %v2281
    %v2730 = vunpack.c.h.s8.bf16 %v2282
    %v2731 = vunpack.c.h.s8.bf16 %v2283
    %v2732 = vunpack.c.h.s8.bf16 %v2284
    %v2733 = vunpack.c.l.s8.bf16 %v2285
    %v2734 = vunpack.c.l.s8.bf16 %v2286
    %v2735 = vunpack.c.l.s8.bf16 %v2287
    %v2736 = vunpack.c.l.s8.bf16 %v2288
    %v2737 = vunpack.c.l.s8.bf16 %v2289
    %v2738 = vunpack.c.l.s8.bf16 %v2290
    %v2739 = vunpack.c.l.s8.bf16 %v2291
    %v2740 = vunpack.c.l.s8.bf16 %v2292
    %v2741 = vunpack.c.h.s8.bf16 %v2285
    %v2742 = vunpack.c.h.s8.bf16 %v2286
    %v2743 = vunpack.c.h.s8.bf16 %v2287
    %v2744 = vunpack.c.h.s8.bf16 %v2288
    %v2745 = vunpack.c.h.s8.bf16 %v2289
    %v2746 = vunpack.c.h.s8.bf16 %v2290
    %v2747 = vunpack.c.h.s8.bf16 %v2291
    %v2748 = vunpack.c.h.s8.bf16 %v2292
    %v2749 = vunpack.c.l.s8.bf16 %v2293
    %v2750 = vunpack.c.l.s8.bf16 %v2294
    %v2751 = vunpack.c.l.s8.bf16 %v2295
    %v2752 = vunpack.c.l.s8.bf16 %v2296
    %v2753 = vunpack.c.l.s8.bf16 %v2297
    %v2754 = vunpack.c.l.s8.bf16 %v2298
    %v2755 = vunpack.c.l.s8.bf16 %v2299
    %v2756 = vunpack.c.l.s8.bf16 %v2300
    %v2757 = vunpack.c.h.s8.bf16 %v2293
    %v2758 = vunpack.c.h.s8.bf16 %v2294
    %v2759 = vunpack.c.h.s8.bf16 %v2295
    %v2760 = vunpack.c.h.s8.bf16 %v2296
    %v2761 = vunpack.c.h.s8.bf16 %v2297
    %v2762 = vunpack.c.h.s8.bf16 %v2298
    %v2763 = vunpack.c.h.s8.bf16 %v2299
    %v2764 = vunpack.c.h.s8.bf16 %v2300
    %v2765 = vunpack.c.l.s8.bf16 %v2301
    %v2766 = vunpack.c.l.s8.bf16 %v2302
    %v2767 = vunpack.c.l.s8.bf16 %v2303
    %v2768 = vunpack.c.l.s8.bf16 %v2304
    %v2769 = vunpack.c.l.s8.bf16 %v2305
    %v2770 = vunpack.c.l.s8.bf16 %v2306
    %v2771 = vunpack.c.l.s8.bf16 %v2307
    %v2772 = vunpack.c.l.s8.bf16 %v2308
    %v2773 = vunpack.c.h.s8.bf16 %v2301
    %v2774 = vunpack.c.h.s8.bf16 %v2302
    %v2775 = vunpack.c.h.s8.bf16 %v2303
    %v2776 = vunpack.c.h.s8.bf16 %v2304
    %v2777 = vunpack.c.h.s8.bf16 %v2305
    %v2778 = vunpack.c.h.s8.bf16 %v2306
    %v2779 = vunpack.c.h.s8.bf16 %v2307
    %v2780 = vunpack.c.h.s8.bf16 %v2308
    %v2781 = vunpack.c.l.s8.bf16 %v2309
    %v2782 = vunpack.c.l.s8.bf16 %v2310
    %v2783 = vunpack.c.l.s8.bf16 %v2311
    %v2784 = vunpack.c.l.s8.bf16 %v2312
    %v2785 = vunpack.c.l.s8.bf16 %v2313
    %v2786 = vunpack.c.l.s8.bf16 %v2314
    %v2787 = vunpack.c.l.s8.bf16 %v2315
    %v2788 = vunpack.c.l.s8.bf16 %v2316
    %v2789 = vunpack.c.h.s8.bf16 %v2309
    %v2790 = vunpack.c.h.s8.bf16 %v2310
    %v2791 = vunpack.c.h.s8.bf16 %v2311
    %v2792 = vunpack.c.h.s8.bf16 %v2312
    %v2793 = vunpack.c.h.s8.bf16 %v2313
    %v2794 = vunpack.c.h.s8.bf16 %v2314
    %v2795 = vunpack.c.h.s8.bf16 %v2315
    %v2796 = vunpack.c.h.s8.bf16 %v2316
    %v2797 = vunpack.c.l.s8.bf16 %v2317
    %v2798 = vunpack.c.l.s8.bf16 %v2318
    %v2799 = vunpack.c.l.s8.bf16 %v2319
    %v2800 = vunpack.c.l.s8.bf16 %v2320
    %v2801 = vunpack.c.l.s8.bf16 %v2321
    %v2802 = vunpack.c.l.s8.bf16 %v2322
    %v2803 = vunpack.c.l.s8.bf16 %v2323
    %v2804 = vunpack.c.l.s8.bf16 %v2324
    %v2805 = vunpack.c.h.s8.bf16 %v2317
    %v2806 = vunpack.c.h.s8.bf16 %v2318
    %v2807 = vunpack.c.h.s8.bf16 %v2319
    %v2808 = vunpack.c.h.s8.bf16 %v2320
    %v2809 = vunpack.c.h.s8.bf16 %v2321
    %v2810 = vunpack.c.h.s8.bf16 %v2322
    %v2811 = vunpack.c.h.s8.bf16 %v2323
    %v2812 = vunpack.c.h.s8.bf16 %v2324
    %v2813 = vunpack.c.l.s8.bf16 %v2325
    %v2814 = vunpack.c.l.s8.bf16 %v2326
    %v2815 = vunpack.c.l.s8.bf16 %v2327
    %v2816 = vunpack.c.l.s8.bf16 %v2328
    %v2817 = vunpack.c.l.s8.bf16 %v2329
    %v2818 = vunpack.c.l.s8.bf16 %v2330
    %v2819 = vunpack.c.l.s8.bf16 %v2331
    %v2820 = vunpack.c.l.s8.bf16 %v2332
    %v2821 = vunpack.c.h.s8.bf16 %v2325
    %v2822 = vunpack.c.h.s8.bf16 %v2326
    %v2823 = vunpack.c.h.s8.bf16 %v2327
    %v2824 = vunpack.c.h.s8.bf16 %v2328
    %v2825 = vunpack.c.h.s8.bf16 %v2329
    %v2826 = vunpack.c.h.s8.bf16 %v2330
    %v2827 = vunpack.c.h.s8.bf16 %v2331
    %v2828 = vunpack.c.h.s8.bf16 %v2332
    %v2829 = vunpack.c.l.s8.bf16 %v2333
    %v2830 = vunpack.c.l.s8.bf16 %v2334
    %v2831 = vunpack.c.l.s8.bf16 %v2335
    %v2832 = vunpack.c.l.s8.bf16 %v2336
    %v2833 = vunpack.c.l.s8.bf16 %v2337
    %v2834 = vunpack.c.l.s8.bf16 %v2338
    %v2835 = vunpack.c.l.s8.bf16 %v2339
    %v2836 = vunpack.c.l.s8.bf16 %v2340
    %v2837 = vunpack.c.h.s8.bf16 %v2333
    %v2838 = vunpack.c.h.s8.bf16 %v2334
    %v2839 = vunpack.c.h.s8.bf16 %v2335
    %v2840 = vunpack.c.h.s8.bf16 %v2336
    %v2841 = vunpack.c.h.s8.bf16 %v2337
    %v2842 = vunpack.c.h.s8.bf16 %v2338
    %v2843 = vunpack.c.h.s8.bf16 %v2339
    %v2844 = vunpack.c.h.s8.bf16 %v2340
    %v2845 = vunpack.c.l.s8.bf16 %v2341
    %v2846 = vunpack.c.l.s8.bf16 %v2342
    %v2847 = vunpack.c.l.s8.bf16 %v2343
    %v2848 = vunpack.c.l.s8.bf16 %v2344
    %v2849 = vunpack.c.l.s8.bf16 %v2345
    %v2850 = vunpack.c.l.s8.bf16 %v2346
    %v2851 = vunpack.c.l.s8.bf16 %v2347
    %v2852 = vunpack.c.l.s8.bf16 %v2348
    %v2853 = vunpack.c.h.s8.bf16 %v2341
    %v2854 = vunpack.c.h.s8.bf16 %v2342
    %v2855 = vunpack.c.h.s8.bf16 %v2343
    %v2856 = vunpack.c.h.s8.bf16 %v2344
    %v2857 = vunpack.c.h.s8.bf16 %v2345
    %v2858 = vunpack.c.h.s8.bf16 %v2346
    %v2859 = vunpack.c.h.s8.bf16 %v2347
    %v2860 = vunpack.c.h.s8.bf16 %v2348
    %2861 = vmatprep.subr.bf16.mxu0 %v2350
    %2862 = vmatpush1.bf16.msra.mxu0 %v2349
    %2863 = vmatprep.subr.bf16.mxu0 %v2358
    %2864 = vmatpush1.bf16.msra.mxu0 %v2357
    %2865 = vmatprep.subr.bf16.mxu0 %v2366
    %2866 = vmatpush1.bf16.msra.mxu0 %v2365
    %2867 = vmatprep.subr.bf16.mxu0 %v2374
    %2868 = vmatpush1.bf16.msra.mxu0 %v2373
    %2869 = vmatprep.subr.bf16.mxu0 %v2382
    %2870 = vmatpush1.bf16.msra.mxu0 %v2381
    %2871 = vmatprep.subr.bf16.mxu0 %v2390
    %2872 = vmatpush1.bf16.msra.mxu0 %v2389
    %2873 = vmatprep.subr.bf16.mxu0 %v2398
    %2874 = vmatpush1.bf16.msra.mxu0 %v2397
    %2875 = vmatprep.subr.bf16.mxu0 %v2406
    %2876 = vmatpush1.bf16.msra.mxu0 %v2405
    %2877 = vmatprep.subr.bf16.mxu0 %v2414
    %2878 = vmatpush1.bf16.msra.mxu0 %v2413
    %2879 = vmatprep.subr.bf16.mxu0 %v2422
    %2880 = vmatpush1.bf16.msra.mxu0 %v2421
    %2881 = vmatprep.subr.bf16.mxu0 %v2430
    %2882 = vmatpush1.bf16.msra.mxu0 %v2429
    %2883 = vmatprep.subr.bf16.mxu0 %v2438
    %2884 = vmatpush1.bf16.msra.mxu0 %v2437
    %2885 = vmatprep.subr.bf16.mxu0 %v2446
    %2886 = vmatpush1.bf16.msra.mxu0 %v2445
    %2887 = vmatprep.subr.bf16.mxu0 %v2454
    %2888 = vmatpush1.bf16.msra.mxu0 %v2453
    %2889 = vmatprep.subr.bf16.mxu0 %v2462
    %2890 = vmatpush1.bf16.msra.mxu0 %v2461
    %2891 = vmatprep.subr.bf16.mxu0 %v2470
    %2892 = vmatpush1.bf16.msra.mxu0 %v2469
    %2893 = vmatprep.mubr.bf16.mxu0 %v2084
    %2894 = vmatmul.mubr.bf16.gmra.mrb[0].mxu0 %v2083
    %v2895 = vpop.f32.mrb[0].mxu0
    %v2896 = vadd.f32 0.0, %v2895
    %v2897 = vpop.f32.mrb[0].mxu0
    %v2898 = vadd.f32 0.0, %v2897
    %v2899 = vpop.f32.mrb[0].mxu0
    %v2900 = vpop.f32.mrb[0].mxu0
    %2901 = vdwg.mxu0
    %2902 = vmatprep.subr.bf16.mxu0 %v2478
    %2903 = vmatpush1.bf16.msra.mxu0 %v2477
    %2904 = vmatprep.subr.bf16.mxu0 %v2486
    %2905 = vmatpush1.bf16.msra.mxu0 %v2485
    %2906 = vmatprep.subr.bf16.mxu0 %v2494
    %2907 = vmatpush1.bf16.msra.mxu0 %v2493
    %2908 = vmatprep.subr.bf16.mxu0 %v2502
    %2909 = vmatpush1.bf16.msra.mxu0 %v2501
    %2910 = vmatprep.subr.bf16.mxu0 %v2510
    %2911 = vmatpush1.bf16.msra.mxu0 %v2509
    %2912 = vmatprep.subr.bf16.mxu0 %v2518
    %2913 = vmatpush1.bf16.msra.mxu0 %v2517
    %2914 = vmatprep.subr.bf16.mxu0 %v2526
    %2915 = vmatpush1.bf16.msra.mxu0 %v2525
    %2916 = vmatprep.subr.bf16.mxu0 %v2534
    %2917 = vmatpush1.bf16.msra.mxu0 %v2533
    %2918 = vmatprep.subr.bf16.mxu0 %v2542
    %2919 = vmatpush1.bf16.msra.mxu0 %v2541
    %2920 = vmatprep.subr.bf16.mxu0 %v2550
    %2921 = vmatpush1.bf16.msra.mxu0 %v2549
    %2922 = vmatprep.subr.bf16.mxu0 %v2558
    %2923 = vmatpush1.bf16.msra.mxu0 %v2557
    %2924 = vmatprep.subr.bf16.mxu0 %v2566
    %2925 = vmatpush1.bf16.msra.mxu0 %v2565
    %2926 = vmatprep.subr.bf16.mxu0 %v2574
    %2927 = vmatpush1.bf16.msra.mxu0 %v2573
    %2928 = vmatprep.subr.bf16.mxu0 %v2582
    %2929 = vmatpush1.bf16.msra.mxu0 %v2581
    %2930 = vmatprep.subr.bf16.mxu0 %v2590
    %2931 = vmatpush1.bf16.msra.mxu0 %v2589
    %2932 = vmatprep.subr.bf16.mxu0 %v2598
    %2933 = vmatpush1.bf16.msra.mxu0 %v2597
    %2934 = vmatprep.mubr.bf16.mxu0 %v2086
    %2935 = vmatmul.mubr.bf16.gmra.mrb[0].mxu0 %v2085
    %v2936 = vpop.f32.mrb[0].mxu0
    %v2937 = vadd.f32 %v2896, %v2936
    %v2938 = vpop.f32.mrb[0].mxu0
    %v2939 = vadd.f32 %v2898, %v2938
    %v2940 = vpop.f32.mrb[0].mxu0
    %v2941 = vpop.f32.mrb[0].mxu0
    %2942 = vdwg.mxu0
    %2943 = vmatprep.subr.bf16.mxu0 %v2606
    %2944 = vmatpush1.bf16.msra.mxu0 %v2605
    %2945 = vmatprep.subr.bf16.mxu0 %v2614
    %2946 = vmatpush1.bf16.msra.mxu0 %v2613
    %2947 = vmatprep.subr.bf16.mxu0 %v2622
    %2948 = vmatpush1.bf16.msra.mxu0 %v2621
    %2949 = vmatprep.subr.bf16.mxu0 %v2630
    %2950 = vmatpush1.bf16.msra.mxu0 %v2629
    %2951 = vmatprep.subr.bf16.mxu0 %v2638
    %2952 = vmatpush1.bf16.msra.mxu0 %v2637
    %2953 = vmatprep.subr.bf16.mxu0 %v2646
    %2954 = vmatpush1.bf16.msra.mxu0 %v2645
    %2955 = vmatprep.subr.bf16.mxu0 %v2654
    %2956 = vmatpush1.bf16.msra.mxu0 %v2653
    %2957 = vmatprep.subr.bf16.mxu0 %v2662
    %2958 = vmatpush1.bf16.msra.mxu0 %v2661
    %2959 = vmatprep.subr.bf16.mxu0 %v2670
    %2960 = vmatpush1.bf16.msra.mxu0 %v2669
    %2961 = vmatprep.subr.bf16.mxu0 %v2678
    %2962 = vmatpush1.bf16.msra.mxu0 %v2677
    %2963 = vmatprep.subr.bf16.mxu0 %v2686
    %2964 = vmatpush1.bf16.msra.mxu0 %v2685
    %2965 = vmatprep.subr.bf16.mxu0 %v2694
    %2966 = vmatpush1.bf16.msra.mxu0 %v2693
    %2967 = vmatprep.subr.bf16.mxu0 %v2702
    %2968 = vmatpush1.bf16.msra.mxu0 %v2701
    %2969 = vmatprep.subr.bf16.mxu0 %v2710
    %2970 = vmatpush1.bf16.msra.mxu0 %v2709
    %2971 = vmatprep.subr.bf16.mxu0 %v2718
    %2972 = vmatpush1.bf16.msra.mxu0 %v2717
    %2973 = vmatprep.subr.bf16.mxu0 %v2726
    %2974 = vmatpush1.bf16.msra.mxu0 %v2725
    %2975 = vmatprep.mubr.bf16.mxu0 %v2088
    %2976 = vmatmul.mubr.bf16.gmra.mrb[0].mxu0 %v2087
    %v2977 = vpop.f32.mrb[0].mxu0
    %v2978 = vadd.f32 %v2937, %v2977
    %v2979 = vpop.f32.mrb[0].mxu0
    %v2980 = vadd.f32 %v2939, %v2979
    %v2981 = vpop.f32.mrb[0].mxu0
    %v2982 = vpop.f32.mrb[0].mxu0
    %2983 = vdwg.mxu0
    %2984 = vmatprep.subr.bf16.mxu0 %v2734
    %2985 = vmatpush1.bf16.msra.mxu0 %v2733
    %2986 = vmatprep.subr.bf16.mxu0 %v2742
    %2987 = vmatpush1.bf16.msra.mxu0 %v2741
    %2988 = vmatprep.subr.bf16.mxu0 %v2750
    %2989 = vmatpush1.bf16.msra.mxu0 %v2749
    %2990 = vmatprep.subr.bf16.mxu0 %v2758
    %2991 = vmatpush1.bf16.msra.mxu0 %v2757
    %2992 = vmatprep.subr.bf16.mxu0 %v2766
    %2993 = vmatpush1.bf16.msra.mxu0 %v2765
    %2994 = vmatprep.subr.bf16.mxu0 %v2774
    %2995 = vmatpush1.bf16.msra.mxu0 %v2773
    %2996 = vmatprep.subr.bf16.mxu0 %v2782
    %2997 = vmatpush1.bf16.msra.mxu0 %v2781
    %2998 = vmatprep.subr.bf16.mxu0 %v2790
    %2999 = vmatpush1.bf16.msra.mxu0 %v2789
    %3000 = vmatprep.subr.bf16.mxu0 %v2798
    %3001 = vmatpush1.bf16.msra.mxu0 %v2797
    %3002 = vmatprep.subr.bf16.mxu0 %v2806
    %3003 = vmatpush1.bf16.msra.mxu0 %v2805
    %3004 = vmatprep.subr.bf16.mxu0 %v2814
    %3005 = vmatpush1.bf16.msra.mxu0 %v2813
    %3006 = vmatprep.subr.bf16.mxu0 %v2822
    %3007 = vmatpush1.bf16.msra.mxu0 %v2821
    %3008 = vmatprep.subr.bf16.mxu0 %v2830
    %3009 = vmatpush1.bf16.msra.mxu0 %v2829
    %3010 = vmatprep.subr.bf16.mxu0 %v2838
    %3011 = vmatpush1.bf16.msra.mxu0 %v2837
    %3012 = vmatprep.subr.bf16.mxu0 %v2846
    %3013 = vmatpush1.bf16.msra.mxu0 %v2845
    %3014 = vmatprep.subr.bf16.mxu0 %v2854
    %3015 = vmatpush1.bf16.msra.mxu0 %v2853
    %3016 = vmatprep.mubr.bf16.mxu0 %v2090
    %3017 = vmatmul.mubr.bf16.gmra.mrb[0].mxu0 %v2089
    %v3018 = vpop.f32.mrb[0].mxu0
    %v3019 = vadd.f32 %v2978, %v3018
    %v3020 = vpop.f32.mrb[0].mxu0
    %v3021 = vadd.f32 %v2980, %v3020
    %v3022 = vpop.f32.mrb[0].mxu0
    %v3023 = vpop.f32.mrb[0].mxu0
    %3024 = vdwg.mxu0
    %3025 = vmatprep.subr.bf16.mxu0 %v2352
    %3026 = vmatpush1.bf16.msra.mxu0 %v2351
    %3027 = vmatprep.subr.bf16.mxu0 %v2360
    %3028 = vmatpush1.bf16.msra.mxu0 %v2359
    %3029 = vmatprep.subr.bf16.mxu0 %v2368
    %3030 = vmatpush1.bf16.msra.mxu0 %v2367
    %3031 = vmatprep.subr.bf16.mxu0 %v2376
    %3032 = vmatpush1.bf16.msra.mxu0 %v2375
    %3033 = vmatprep.subr.bf16.mxu0 %v2384
    %3034 = vmatpush1.bf16.msra.mxu0 %v2383
    %3035 = vmatprep.subr.bf16.mxu0 %v2392
    %3036 = vmatpush1.bf16.msra.mxu0 %v2391
    %3037 = vmatprep.subr.bf16.mxu0 %v2400
    %3038 = vmatpush1.bf16.msra.mxu0 %v2399
    %3039 = vmatprep.subr.bf16.mxu0 %v2408
    %3040 = vmatpush1.bf16.msra.mxu0 %v2407
    %3041 = vmatprep.subr.bf16.mxu0 %v2416
    %3042 = vmatpush1.bf16.msra.mxu0 %v2415
    %3043 = vmatprep.subr.bf16.mxu0 %v2424
    %3044 = vmatpush1.bf16.msra.mxu0 %v2423
    %3045 = vmatprep.subr.bf16.mxu0 %v2432
    %3046 = vmatpush1.bf16.msra.mxu0 %v2431
    %3047 = vmatprep.subr.bf16.mxu0 %v2440
    %3048 = vmatpush1.bf16.msra.mxu0 %v2439
    %3049 = vmatprep.subr.bf16.mxu0 %v2448
    %3050 = vmatpush1.bf16.msra.mxu0 %v2447
    %3051 = vmatprep.subr.bf16.mxu0 %v2456
    %3052 = vmatpush1.bf16.msra.mxu0 %v2455
    %3053 = vmatprep.subr.bf16.mxu0 %v2464
    %3054 = vmatpush1.bf16.msra.mxu0 %v2463
    %3055 = vmatprep.subr.bf16.mxu0 %v2472
    %3056 = vmatpush1.bf16.msra.mxu0 %v2471
    %3057 = vmatprep.mubr.bf16.mxu0 %v2084
    %3058 = vmatmul.mubr.bf16.gmra.mrb[0].mxu0 %v2083
    %v3059 = vpop.f32.mrb[0].mxu0
    %v3060 = vadd.f32 0.0, %v3059
    %v3061 = vpop.f32.mrb[0].mxu0
    %v3062 = vadd.f32 0.0, %v3061
    %v3063 = vpop.f32.mrb[0].mxu0
    %v3064 = vpop.f32.mrb[0].mxu0
    %3065 = vdwg.mxu0
    %3066 = vmatprep.subr.bf16.mxu0 %v2480
    %3067 = vmatpush1.bf16.msra.mxu0 %v2479
    %3068 = vmatprep.subr.bf16.mxu0 %v2488
    %3069 = vmatpush1.bf16.msra.mxu0 %v2487
    %3070 = vmatprep.subr.bf16.mxu0 %v2496
    %3071 = vmatpush1.bf16.msra.mxu0 %v2495
    %3072 = vmatprep.subr.bf16.mxu0 %v2504
    %3073 = vmatpush1.bf16.msra.mxu0 %v2503
    %3074 = vmatprep.subr.bf16.mxu0 %v2512
    %3075 = vmatpush1.bf16.msra.mxu0 %v2511
    %3076 = vmatprep.subr.bf16.mxu0 %v2520
    %3077 = vmatpush1.bf16.msra.mxu0 %v2519
    %3078 = vmatprep.subr.bf16.mxu0 %v2528
    %3079 = vmatpush1.bf16.msra.mxu0 %v2527
    %3080 = vmatprep.subr.bf16.mxu0 %v2536
    %3081 = vmatpush1.bf16.msra.mxu0 %v2535
    %3082 = vmatprep.subr.bf16.mxu0 %v2544
    %3083 = vmatpush1.bf16.msra.mxu0 %v2543
    %3084 = vmatprep.subr.bf16.mxu0 %v2552
    %3085 = vmatpush1.bf16.msra.mxu0 %v2551
    %3086 = vmatprep.subr.bf16.mxu0 %v2560
    %3087 = vmatpush1.bf16.msra.mxu0 %v2559
    %3088 = vmatprep.subr.bf16.mxu0 %v2568
    %3089 = vmatpush1.bf16.msra.mxu0 %v2567
    %3090 = vmatprep.subr.bf16.mxu0 %v2576
    %3091 = vmatpush1.bf16.msra.mxu0 %v2575
    %3092 = vmatprep.subr.bf16.mxu0 %v2584
    %3093 = vmatpush1.bf16.msra.mxu0 %v2583
    %3094 = vmatprep.subr.bf16.mxu0 %v2592
    %3095 = vmatpush1.bf16.msra.mxu0 %v2591
    %3096 = vmatprep.subr.bf16.mxu0 %v2600
    %3097 = vmatpush1.bf16.msra.mxu0 %v2599
    %3098 = vmatprep.mubr.bf16.mxu0 %v2086
    %3099 = vmatmul.mubr.bf16.gmra.mrb[0].mxu0 %v2085
    %v3100 = vpop.f32.mrb[0].mxu0
    %v3101 = vadd.f32 %v3060, %v3100
    %v3102 = vpop.f32.mrb[0].mxu0
    %v3103 = vadd.f32 %v3062, %v3102
    %v3104 = vpop.f32.mrb[0].mxu0
    %v3105 = vpop.f32.mrb[0].mxu0
    %3106 = vdwg.mxu0
    %3107 = vmatprep.subr.bf16.mxu0 %v2608
    %3108 = vmatpush1.bf16.msra.mxu0 %v2607
    %3109 = vmatprep.subr.bf16.mxu0 %v2616
    %3110 = vmatpush1.bf16.msra.mxu0 %v2615
    %3111 = vmatprep.subr.bf16.mxu0 %v2624
    %3112 = vmatpush1.bf16.msra.mxu0 %v2623
    %3113 = vmatprep.subr.bf16.mxu0 %v2632
    %3114 = vmatpush1.bf16.msra.mxu0 %v2631
    %3115 = vmatprep.subr.bf16.mxu0 %v2640
    %3116 = vmatpush1.bf16.msra.mxu0 %v2639
    %3117 = vmatprep.subr.bf16.mxu0 %v2648
    %3118 = vmatpush1.bf16.msra.mxu0 %v2647
    %3119 = vmatprep.subr.bf16.mxu0 %v2656
    %3120 = vmatpush1.bf16.msra.mxu0 %v2655
    %3121 = vmatprep.subr.bf16.mxu0 %v2664
    %3122 = vmatpush1.bf16.msra.mxu0 %v2663
    %3123 = vmatprep.subr.bf16.mxu0 %v2672
    %3124 = vmatpush1.bf16.msra.mxu0 %v2671
    %3125 = vmatprep.subr.bf16.mxu0 %v2680
    %3126 = vmatpush1.bf16.msra.mxu0 %v2679
    %3127 = vmatprep.subr.bf16.mxu0 %v2688
    %3128 = vmatpush1.bf16.msra.mxu0 %v2687
    %3129 = vmatprep.subr.bf16.mxu0 %v2696
    %3130 = vmatpush1.bf16.msra.mxu0 %v2695
    %3131 = vmatprep.subr.bf16.mxu0 %v2704
    %3132 = vmatpush1.bf16.msra.mxu0 %v2703
    %3133 = vmatprep.subr.bf16.mxu0 %v2712
    %3134 = vmatpush1.bf16.msra.mxu0 %v2711
    %3135 = vmatprep.subr.bf16.mxu0 %v2720
    %3136 = vmatpush1.bf16.msra.mxu0 %v2719
    %3137 = vmatprep.subr.bf16.mxu0 %v2728
    %3138 = vmatpush1.bf16.msra.mxu0 %v2727
    %3139 = vmatprep.mubr.bf16.mxu0 %v2088
    %3140 = vmatmul.mubr.bf16.gmra.mrb[0].mxu0 %v2087
    %v3141 = vpop.f32.mrb[0].mxu0
    %v3142 = vadd.f32 %v3101, %v3141
    %v3143 = vpop.f32.mrb[0].mxu0
    %v3144 = vadd.f32 %v3103, %v3143
    %v3145 = vpop.f32.mrb[0].mxu0
    %v3146 = vpop.f32.mrb[0].mxu0
    %3147 = vdwg.mxu0
    %3148 = vmatprep.subr.bf16.mxu0 %v2736
    %3149 = vmatpush1.bf16.msra.mxu0 %v2735
    %3150 = vmatprep.subr.bf16.mxu0 %v2744
    %3151 = vmatpush1.bf16.msra.mxu0 %v2743
    %3152 = vmatprep.subr.bf16.mxu0 %v2752
    %3153 = vmatpush1.bf16.msra.mxu0 %v2751
    %3154 = vmatprep.subr.bf16.mxu0 %v2760
    %3155 = vmatpush1.bf16.msra.mxu0 %v2759
    %3156 = vmatprep.subr.bf16.mxu0 %v2768
    %3157 = vmatpush1.bf16.msra.mxu0 %v2767
    %3158 = vmatprep.subr.bf16.mxu0 %v2776
    %3159 = vmatpush1.bf16.msra.mxu0 %v2775
    %3160 = vmatprep.subr.bf16.mxu0 %v2784
    %3161 = vmatpush1.bf16.msra.mxu0 %v2783
    %3162 = vmatprep.subr.bf16.mxu0 %v2792
    %3163 = vmatpush1.bf16.msra.mxu0 %v2791
    %3164 = vmatprep.subr.bf16.mxu0 %v2800
    %3165 = vmatpush1.bf16.msra.mxu0 %v2799
    %3166 = vmatprep.subr.bf16.mxu0 %v2808
    %3167 = vmatpush1.bf16.msra.mxu0 %v2807
    %3168 = vmatprep.subr.bf16.mxu0 %v2816
    %3169 = vmatpush1.bf16.msra.mxu0 %v2815
    %3170 = vmatprep.subr.bf16.mxu0 %v2824
    %3171 = vmatpush1.bf16.msra.mxu0 %v2823
    %3172 = vmatprep.subr.bf16.mxu0 %v2832
    %3173 = vmatpush1.bf16.msra.mxu0 %v2831
    %3174 = vmatprep.subr.bf16.mxu0 %v2840
    %3175 = vmatpush1.bf16.msra.mxu0 %v2839
    %3176 = vmatprep.subr.bf16.mxu0 %v2848
    %3177 = vmatpush1.bf16.msra.mxu0 %v2847
    %3178 = vmatprep.subr.bf16.mxu0 %v2856
    %3179 = vmatpush1.bf16.msra.mxu0 %v2855
    %3180 = vmatprep.mubr.bf16.mxu0 %v2090
    %3181 = vmatmul.mubr.bf16.gmra.mrb[0].mxu0 %v2089
    %v3182 = vpop.f32.mrb[0].mxu0
    %v3183 = vadd.f32 %v3142, %v3182
    %v3184 = vpop.f32.mrb[0].mxu0
    %v3185 = vadd.f32 %v3144, %v3184
    %v3186 = vpop.f32.mrb[0].mxu0
    %v3187 = vpop.f32.mrb[0].mxu0
    %3188 = vdwg.mxu0
    %3189 = vmatprep.subr.bf16.mxu0 %v2354
    %3190 = vmatpush1.bf16.msra.mxu0 %v2353
    %3191 = vmatprep.subr.bf16.mxu0 %v2362
    %3192 = vmatpush1.bf16.msra.mxu0 %v2361
    %3193 = vmatprep.subr.bf16.mxu0 %v2370
    %3194 = vmatpush1.bf16.msra.mxu0 %v2369
    %3195 = vmatprep.subr.bf16.mxu0 %v2378
    %3196 = vmatpush1.bf16.msra.mxu0 %v2377
    %3197 = vmatprep.subr.bf16.mxu0 %v2386
    %3198 = vmatpush1.bf16.msra.mxu0 %v2385
    %3199 = vmatprep.subr.bf16.mxu0 %v2394
    %3200 = vmatpush1.bf16.msra.mxu0 %v2393
    %3201 = vmatprep.subr.bf16.mxu0 %v2402
    %3202 = vmatpush1.bf16.msra.mxu0 %v2401
    %3203 = vmatprep.subr.bf16.mxu0 %v2410
    %3204 = vmatpush1.bf16.msra.mxu0 %v2409
    %3205 = vmatprep.subr.bf16.mxu0 %v2418
    %3206 = vmatpush1.bf16.msra.mxu0 %v2417
    %3207 = vmatprep.subr.bf16.mxu0 %v2426
    %3208 = vmatpush1.bf16.msra.mxu0 %v2425
    %3209 = vmatprep.subr.bf16.mxu0 %v2434
    %3210 = vmatpush1.bf16.msra.mxu0 %v2433
    %3211 = vmatprep.subr.bf16.mxu0 %v2442
    %3212 = vmatpush1.bf16.msra.mxu0 %v2441
    %3213 = vmatprep.subr.bf16.mxu0 %v2450
    %3214 = vmatpush1.bf16.msra.mxu0 %v2449
    %3215 = vmatprep.subr.bf16.mxu0 %v2458
    %3216 = vmatpush1.bf16.msra.mxu0 %v2457
    %3217 = vmatprep.subr.bf16.mxu0 %v2466
    %3218 = vmatpush1.bf16.msra.mxu0 %v2465
    %3219 = vmatprep.subr.bf16.mxu0 %v2474
    %3220 = vmatpush1.bf16.msra.mxu0 %v2473
    %3221 = vmatprep.mubr.bf16.mxu0 %v2084
    %3222 = vmatmul.mubr.bf16.gmra.mrb[0].mxu0 %v2083
    %v3223 = vpop.f32.mrb[0].mxu0
    %v3224 = vadd.f32 0.0, %v3223
    %v3225 = vpop.f32.mrb[0].mxu0
    %v3226 = vadd.f32 0.0, %v3225
    %v3227 = vpop.f32.mrb[0].mxu0
    %v3228 = vpop.f32.mrb[0].mxu0
    %3229 = vdwg.mxu0
    %3230 = vmatprep.subr.bf16.mxu0 %v2482
    %3231 = vmatpush1.bf16.msra.mxu0 %v2481
    %3232 = vmatprep.subr.bf16.mxu0 %v2490
    %3233 = vmatpush1.bf16.msra.mxu0 %v2489
    %3234 = vmatprep.subr.bf16.mxu0 %v2498
    %3235 = vmatpush1.bf16.msra.mxu0 %v2497
    %3236 = vmatprep.subr.bf16.mxu0 %v2506
    %3237 = vmatpush1.bf16.msra.mxu0 %v2505
    %3238 = vmatprep.subr.bf16.mxu0 %v2514
    %3239 = vmatpush1.bf16.msra.mxu0 %v2513
    %3240 = vmatprep.subr.bf16.mxu0 %v2522
    %3241 = vmatpush1.bf16.msra.mxu0 %v2521
    %3242 = vmatprep.subr.bf16.mxu0 %v2530
    %3243 = vmatpush1.bf16.msra.mxu0 %v2529
    %3244 = vmatprep.subr.bf16.mxu0 %v2538
    %3245 = vmatpush1.bf16.msra.mxu0 %v2537
    %3246 = vmatprep.subr.bf16.mxu0 %v2546
    %3247 = vmatpush1.bf16.msra.mxu0 %v2545
    %3248 = vmatprep.subr.bf16.mxu0 %v2554
    %3249 = vmatpush1.bf16.msra.mxu0 %v2553
    %3250 = vmatprep.subr.bf16.mxu0 %v2562
    %3251 = vmatpush1.bf16.msra.mxu0 %v2561
    %3252 = vmatprep.subr.bf16.mxu0 %v2570
    %3253 = vmatpush1.bf16.msra.mxu0 %v2569
    %3254 = vmatprep.subr.bf16.mxu0 %v2578
    %3255 = vmatpush1.bf16.msra.mxu0 %v2577
    %3256 = vmatprep.subr.bf16.mxu0 %v2586
    %3257 = vmatpush1.bf16.msra.mxu0 %v2585
    %3258 = vmatprep.subr.bf16.mxu0 %v2594
    %3259 = vmatpush1.bf16.msra.mxu0 %v2593
    %3260 = vmatprep.subr.bf16.mxu0 %v2602
    %3261 = vmatpush1.bf16.msra.mxu0 %v2601
    %3262 = vmatprep.mubr.bf16.mxu0 %v2086
    %3263 = vmatmul.mubr.bf16.gmra.mrb[0].mxu0 %v2085
    %v3264 = vpop.f32.mrb[0].mxu0
    %v3265 = vadd.f32 %v3224, %v3264
    %v3266 = vpop.f32.mrb[0].mxu0
    %v3267 = vadd.f32 %v3226, %v3266
    %v3268 = vpop.f32.mrb[0].mxu0
    %v3269 = vpop.f32.mrb[0].mxu0
    %3270 = vdwg.mxu0
    %3271 = vmatprep.subr.bf16.mxu0 %v2610
    %3272 = vmatpush1.bf16.msra.mxu0 %v2609
    %3273 = vmatprep.subr.bf16.mxu0 %v2618
    %3274 = vmatpush1.bf16.msra.mxu0 %v2617
    %3275 = vmatprep.subr.bf16.mxu0 %v2626
    %3276 = vmatpush1.bf16.msra.mxu0 %v2625
    %3277 = vmatprep.subr.bf16.mxu0 %v2634
    %3278 = vmatpush1.bf16.msra.mxu0 %v2633
    %3279 = vmatprep.subr.bf16.mxu0 %v2642
    %3280 = vmatpush1.bf16.msra.mxu0 %v2641
    %3281 = vmatprep.subr.bf16.mxu0 %v2650
    %3282 = vmatpush1.bf16.msra.mxu0 %v2649
    %3283 = vmatprep.subr.bf16.mxu0 %v2658
    %3284 = vmatpush1.bf16.msra.mxu0 %v2657
    %3285 = vmatprep.subr.bf16.mxu0 %v2666
    %3286 = vmatpush1.bf16.msra.mxu0 %v2665
    %3287 = vmatprep.subr.bf16.mxu0 %v2674
    %3288 = vmatpush1.bf16.msra.mxu0 %v2673
    %3289 = vmatprep.subr.bf16.mxu0 %v2682
    %3290 = vmatpush1.bf16.msra.mxu0 %v2681
    %3291 = vmatprep.subr.bf16.mxu0 %v2690
    %3292 = vmatpush1.bf16.msra.mxu0 %v2689
    %3293 = vmatprep.subr.bf16.mxu0 %v2698
    %3294 = vmatpush1.bf16.msra.mxu0 %v2697
    %3295 = vmatprep.subr.bf16.mxu0 %v2706
    %3296 = vmatpush1.bf16.msra.mxu0 %v2705
    %3297 = vmatprep.subr.bf16.mxu0 %v2714
    %3298 = vmatpush1.bf16.msra.mxu0 %v2713
    %3299 = vmatprep.subr.bf16.mxu0 %v2722
    %3300 = vmatpush1.bf16.msra.mxu0 %v2721
    %3301 = vmatprep.subr.bf16.mxu0 %v2730
    %3302 = vmatpush1.bf16.msra.mxu0 %v2729
    %3303 = vmatprep.mubr.bf16.mxu0 %v2088
    %3304 = vmatmul.mubr.bf16.gmra.mrb[0].mxu0 %v2087
    %v3305 = vpop.f32.mrb[0].mxu0
    %v3306 = vadd.f32 %v3265, %v3305
    %v3307 = vpop.f32.mrb[0].mxu0
    %v3308 = vadd.f32 %v3267, %v3307
    %v3309 = vpop.f32.mrb[0].mxu0
    %v3310 = vpop.f32.mrb[0].mxu0
    %3311 = vdwg.mxu0
    %3312 = vmatprep.subr.bf16.mxu0 %v2738
    %3313 = vmatpush1.bf16.msra.mxu0 %v2737
    %3314 = vmatprep.subr.bf16.mxu0 %v2746
    %3315 = vmatpush1.bf16.msra.mxu0 %v2745
    %3316 = vmatprep.subr.bf16.mxu0 %v2754
    %3317 = vmatpush1.bf16.msra.mxu0 %v2753
    %3318 = vmatprep.subr.bf16.mxu0 %v2762
    %3319 = vmatpush1.bf16.msra.mxu0 %v2761
    %3320 = vmatprep.subr.bf16.mxu0 %v2770
    %3321 = vmatpush1.bf16.msra.mxu0 %v2769
    %3322 = vmatprep.subr.bf16.mxu0 %v2778
    %3323 = vmatpush1.bf16.msra.mxu0 %v2777
    %3324 = vmatprep.subr.bf16.mxu0 %v2786
    %3325 = vmatpush1.bf16.msra.mxu0 %v2785
    %3326 = vmatprep.subr.bf16.mxu0 %v2794
    %3327 = vmatpush1.bf16.msra.mxu0 %v2793
    %3328 = vmatprep.subr.bf16.mxu0 %v2802
    %3329 = vmatpush1.bf16.msra.mxu0 %v2801
    %3330 = vmatprep.subr.bf16.mxu0 %v2810
    %3331 = vmatpush1.bf16.msra.mxu0 %v2809
    %3332 = vmatprep.subr.bf16.mxu0 %v2818
    %3333 = vmatpush1.bf16.msra.mxu0 %v2817
    %3334 = vmatprep.subr.bf16.mxu0 %v2826
    %3335 = vmatpush1.bf16.msra.mxu0 %v2825
    %3336 = vmatprep.subr.bf16.mxu0 %v2834
    %3337 = vmatpush1.bf16.msra.mxu0 %v2833
    %3338 = vmatprep.subr.bf16.mxu0 %v2842
    %3339 = vmatpush1.bf16.msra.mxu0 %v2841
    %3340 = vmatprep.subr.bf16.mxu0 %v2850
    %3341 = vmatpush1.bf16.msra.mxu0 %v2849
    %3342 = vmatprep.subr.bf16.mxu0 %v2858
    %3343 = vmatpush1.bf16.msra.mxu0 %v2857
    %3344 = vmatprep.mubr.bf16.mxu0 %v2090
    %3345 = vmatmul.mubr.bf16.gmra.mrb[0].mxu0 %v2089
    %v3346 = vpop.f32.mrb[0].mxu0
    %v3347 = vadd.f32 %v3306, %v3346
    %v3348 = vpop.f32.mrb[0].mxu0
    %v3349 = vadd.f32 %v3308, %v3348
    %v3350 = vpop.f32.mrb[0].mxu0
    %v3351 = vpop.f32.mrb[0].mxu0
    %3352 = vdwg.mxu0
    %3353 = vmatprep.subr.bf16.mxu0 %v2356
    %3354 = vmatpush1.bf16.msra.mxu0 %v2355
    %3355 = vmatprep.subr.bf16.mxu0 %v2364
    %3356 = vmatpush1.bf16.msra.mxu0 %v2363
    %3357 = vmatprep.subr.bf16.mxu0 %v2372
    %3358 = vmatpush1.bf16.msra.mxu0 %v2371
    %3359 = vmatprep.subr.bf16.mxu0 %v2380
    %3360 = vmatpush1.bf16.msra.mxu0 %v2379
    %3361 = vmatprep.subr.bf16.mxu0 %v2388
    %3362 = vmatpush1.bf16.msra.mxu0 %v2387
    %3363 = vmatprep.subr.bf16.mxu0 %v2396
    %3364 = vmatpush1.bf16.msra.mxu0 %v2395
    %3365 = vmatprep.subr.bf16.mxu0 %v2404
    %3366 = vmatpush1.bf16.msra.mxu0 %v2403
    %3367 = vmatprep.subr.bf16.mxu0 %v2412
    %3368 = vmatpush1.bf16.msra.mxu0 %v2411
    %3369 = vmatprep.subr.bf16.mxu0 %v2420
    %3370 = vmatpush1.bf16.msra.mxu0 %v2419
    %3371 = vmatprep.subr.bf16.mxu0 %v2428
    %3372 = vmatpush1.bf16.msra.mxu0 %v2427
    %3373 = vmatprep.subr.bf16.mxu0 %v2436
    %3374 = vmatpush1.bf16.msra.mxu0 %v2435
    %3375 = vmatprep.subr.bf16.mxu0 %v2444
    %3376 = vmatpush1.bf16.msra.mxu0 %v2443
    %3377 = vmatprep.subr.bf16.mxu0 %v2452
    %3378 = vmatpush1.bf16.msra.mxu0 %v2451
    %3379 = vmatprep.subr.bf16.mxu0 %v2460
    %3380 = vmatpush1.bf16.msra.mxu0 %v2459
    %3381 = vmatprep.subr.bf16.mxu0 %v2468
    %3382 = vmatpush1.bf16.msra.mxu0 %v2467
    %3383 = vmatprep.subr.bf16.mxu0 %v2476
    %3384 = vmatpush1.bf16.msra.mxu0 %v2475
    %3385 = vmatprep.mubr.bf16.mxu0 %v2084
    %3386 = vmatmul.mubr.bf16.gmra.mrb[0].mxu0 %v2083
    %v3387 = vpop.f32.mrb[0].mxu0
    %v3388 = vadd.f32 0.0, %v3387
    %v3389 = vpop.f32.mrb[0].mxu0
    %v3390 = vadd.f32 0.0, %v3389
    %v3391 = vpop.f32.mrb[0].mxu0
    %v3392 = vpop.f32.mrb[0].mxu0
    %3393 = vdwg.mxu0
    %3394 = vmatprep.subr.bf16.mxu0 %v2484
    %3395 = vmatpush1.bf16.msra.mxu0 %v2483
    %3396 = vmatprep.subr.bf16.mxu0 %v2492
    %3397 = vmatpush1.bf16.msra.mxu0 %v2491
    %3398 = vmatprep.subr.bf16.mxu0 %v2500
    %3399 = vmatpush1.bf16.msra.mxu0 %v2499
    %3400 = vmatprep.subr.bf16.mxu0 %v2508
    %3401 = vmatpush1.bf16.msra.mxu0 %v2507
    %3402 = vmatprep.subr.bf16.mxu0 %v2516
    %3403 = vmatpush1.bf16.msra.mxu0 %v2515
    %3404 = vmatprep.subr.bf16.mxu0 %v2524
    %3405 = vmatpush1.bf16.msra.mxu0 %v2523
    %3406 = vmatprep.subr.bf16.mxu0 %v2532
    %3407 = vmatpush1.bf16.msra.mxu0 %v2531
    %3408 = vmatprep.subr.bf16.mxu0 %v2540
    %3409 = vmatpush1.bf16.msra.mxu0 %v2539
    %3410 = vmatprep.subr.bf16.mxu0 %v2548
    %3411 = vmatpush1.bf16.msra.mxu0 %v2547
    %3412 = vmatprep.subr.bf16.mxu0 %v2556
    %3413 = vmatpush1.bf16.msra.mxu0 %v2555
    %3414 = vmatprep.subr.bf16.mxu0 %v2564
    %3415 = vmatpush1.bf16.msra.mxu0 %v2563
    %3416 = vmatprep.subr.bf16.mxu0 %v2572
    %3417 = vmatpush1.bf16.msra.mxu0 %v2571
    %3418 = vmatprep.subr.bf16.mxu0 %v2580
    %3419 = vmatpush1.bf16.msra.mxu0 %v2579
    %3420 = vmatprep.subr.bf16.mxu0 %v2588
    %3421 = vmatpush1.bf16.msra.mxu0 %v2587
    %3422 = vmatprep.subr.bf16.mxu0 %v2596
    %3423 = vmatpush1.bf16.msra.mxu0 %v2595
    %3424 = vmatprep.subr.bf16.mxu0 %v2604
    %3425 = vmatpush1.bf16.msra.mxu0 %v2603
    %3426 = vmatprep.mubr.bf16.mxu0 %v2086
    %3427 = vmatmul.mubr.bf16.gmra.mrb[0].mxu0 %v2085
    %v3428 = vpop.f32.mrb[0].mxu0
    %v3429 = vadd.f32 %v3388, %v3428
    %v3430 = vpop.f32.mrb[0].mxu0
    %v3431 = vadd.f32 %v3390, %v3430
    %v3432 = vpop.f32.mrb[0].mxu0
    %v3433 = vpop.f32.mrb[0].mxu0
    %3434 = vdwg.mxu0
    %3435 = vmatprep.subr.bf16.mxu0 %v2612
    %3436 = vmatpush1.bf16.msra.mxu0 %v2611
    %3437 = vmatprep.subr.bf16.mxu0 %v2620
    %3438 = vmatpush1.bf16.msra.mxu0 %v2619
    %3439 = vmatprep.subr.bf16.mxu0 %v2628
    %3440 = vmatpush1.bf16.msra.mxu0 %v2627
    %3441 = vmatprep.subr.bf16.mxu0 %v2636
    %3442 = vmatpush1.bf16.msra.mxu0 %v2635
    %3443 = vmatprep.subr.bf16.mxu0 %v2644
    %3444 = vmatpush1.bf16.msra.mxu0 %v2643
    %3445 = vmatprep.subr.bf16.mxu0 %v2652
    %3446 = vmatpush1.bf16.msra.mxu0 %v2651
    %3447 = vmatprep.subr.bf16.mxu0 %v2660
    %3448 = vmatpush1.bf16.msra.mxu0 %v2659
    %3449 = vmatprep.subr.bf16.mxu0 %v2668
    %3450 = vmatpush1.bf16.msra.mxu0 %v2667
    %3451 = vmatprep.subr.bf16.mxu0 %v2676
    %3452 = vmatpush1.bf16.msra.mxu0 %v2675
    %3453 = vmatprep.subr.bf16.mxu0 %v2684
    %3454 = vmatpush1.bf16.msra.mxu0 %v2683
    %3455 = vmatprep.subr.bf16.mxu0 %v2692
    %3456 = vmatpush1.bf16.msra.mxu0 %v2691
    %3457 = vmatprep.subr.bf16.mxu0 %v2700
    %3458 = vmatpush1.bf16.msra.mxu0 %v2699
    %3459 = vmatprep.subr.bf16.mxu0 %v2708
    %3460 = vmatpush1.bf16.msra.mxu0 %v2707
    %3461 = vmatprep.subr.bf16.mxu0 %v2716
    %3462 = vmatpush1.bf16.msra.mxu0 %v2715
    %3463 = vmatprep.subr.bf16.mxu0 %v2724
    %3464 = vmatpush1.bf16.msra.mxu0 %v2723
    %3465 = vmatprep.subr.bf16.mxu0 %v2732
    %3466 = vmatpush1.bf16.msra.mxu0 %v2731
    %3467 = vmatprep.mubr.bf16.mxu0 %v2088
    %3468 = vmatmul.mubr.bf16.gmra.mrb[0].mxu0 %v2087
    %v3469 = vpop.f32.mrb[0].mxu0
    %v3470 = vadd.f32 %v3429, %v3469
    %v3471 = vpop.f32.mrb[0].mxu0
    %v3472 = vadd.f32 %v3431, %v3471
    %v3473 = vpop.f32.mrb[0].mxu0
    %v3474 = vpop.f32.mrb[0].mxu0
    %3475 = vdwg.mxu0
    %3476 = vmatprep.subr.bf16.mxu0 %v2740
    %3477 = vmatpush1.bf16.msra.mxu0 %v2739
    %3478 = vmatprep.subr.bf16.mxu0 %v2748
    %3479 = vmatpush1.bf16.msra.mxu0 %v2747
    %3480 = vmatprep.subr.bf16.mxu0 %v2756
    %3481 = vmatpush1.bf16.msra.mxu0 %v2755
    %3482 = vmatprep.subr.bf16.mxu0 %v2764
    %3483 = vmatpush1.bf16.msra.mxu0 %v2763
    %3484 = vmatprep.subr.bf16.mxu0 %v2772
    %3485 = vmatpush1.bf16.msra.mxu0 %v2771
    %3486 = vmatprep.subr.bf16.mxu0 %v2780
    %3487 = vmatpush1.bf16.msra.mxu0 %v2779
    %3488 = vmatprep.subr.bf16.mxu0 %v2788
    %3489 = vmatpush1.bf16.msra.mxu0 %v2787
    %3490 = vmatprep.subr.bf16.mxu0 %v2796
    %3491 = vmatpush1.bf16.msra.mxu0 %v2795
    %3492 = vmatprep.subr.bf16.mxu0 %v2804
    %3493 = vmatpush1.bf16.msra.mxu0 %v2803
    %3494 = vmatprep.subr.bf16.mxu0 %v2812
    %3495 = vmatpush1.bf16.msra.mxu0 %v2811
    %3496 = vmatprep.subr.bf16.mxu0 %v2820
    %3497 = vmatpush1.bf16.msra.mxu0 %v2819
    %3498 = vmatprep.subr.bf16.mxu0 %v2828
    %3499 = vmatpush1.bf16.msra.mxu0 %v2827
    %3500 = vmatprep.subr.bf16.mxu0 %v2836
    %3501 = vmatpush1.bf16.msra.mxu0 %v2835
    %3502 = vmatprep.subr.bf16.mxu0 %v2844
    %3503 = vmatpush1.bf16.msra.mxu0 %v2843
    %3504 = vmatprep.subr.bf16.mxu0 %v2852
    %3505 = vmatpush1.bf16.msra.mxu0 %v2851
    %3506 = vmatprep.subr.bf16.mxu0 %v2860
    %3507 = vmatpush1.bf16.msra.mxu0 %v2859
    %3508 = vmatprep.mubr.bf16.mxu0 %v2090
    %3509 = vmatmul.mubr.bf16.gmra.mrb[0].mxu0 %v2089
    %v3510 = vpop.f32.mrb[0].mxu0
    %v3511 = vadd.f32 %v3470, %v3510
    %v3512 = vpop.f32.mrb[0].mxu0
    %v3513 = vadd.f32 %v3472, %v3512
    %v3514 = vpop.f32.mrb[0].mxu0
    %v3515 = vpop.f32.mrb[0].mxu0
    %3516 = vdwg.mxu0
    %s3517 = scalar_lea.vmem [#allocation18], 2
    %v3518 = vld [vmem:[%s3517] ss:$8 sm:$0xf]
    %v3519 = vld [vmem:[%s3517] ss:$8 sm:$0xf0]
    %v3520 = vor.u32 %v3518, %v3519
    %v3522 = vlaneseq
    %v3523 = vshrl.u32 %v3522, 7
    %v3524 = vsub.s32 0, %v3523
    %v3525 = vrot.slane %v3520, %v3524
    %v3526 = vlaneseq
    %v3527 = vshrl.u32 %v3526, 7
    %v3528 = vsub.s32 1, %v3527
    %v3529 = vrot.slane %v3520, %v3528
    %v3530 = vlaneseq
    %v3531 = vshrl.u32 %v3530, 7
    %v3532 = vsub.s32 2, %v3531
    %v3533 = vrot.slane %v3520, %v3532
    %v3534 = vlaneseq
    %v3535 = vshrl.u32 %v3534, 7
    %v3536 = vsub.s32 3, %v3535
    %v3537 = vrot.slane %v3520, %v3536
    %v3538 = vlaneseq
    %v3539 = vshrl.u32 %v3538, 7
    %v3540 = vsub.s32 4, %v3539
    %v3541 = vrot.slane %v3520, %v3540
    %v3542 = vlaneseq
    %v3543 = vshrl.u32 %v3542, 7
    %v3544 = vsub.s32 5, %v3543
    %v3545 = vrot.slane %v3520, %v3544
    %v3546 = vlaneseq
    %v3547 = vshrl.u32 %v3546, 7
    %v3548 = vsub.s32 6, %v3547
    %v3549 = vrot.slane %v3520, %v3548
    %v3550 = vlaneseq
    %v3551 = vshrl.u32 %v3550, 7
    %v3552 = vsub.s32 7, %v3551
    %v3553 = vrot.slane %v3520, %v3552
    %v3562 = vmul.f32 %v3019, %v3525
    %v3563 = vmul.f32 %v3021, %v3529
    %v3564 = vmul.f32 %v3183, %v3533
    %v3565 = vmul.f32 %v3185, %v3537
    %v3566 = vmul.f32 %v3347, %v3541
    %v3567 = vmul.f32 %v3349, %v3545
    %v3568 = vmul.f32 %v3511, %v3549
    %v3569 = vmul.f32 %v3513, %v3553
    %s3570 = scalar_lea.vmem [#allocation16], 2
    %v3571 = vld [vmem:[%s3570] ss:$8 sm:$0xf]
    %v3572 = vld [vmem:[%s3570] ss:$8 sm:$0xf0]
    %v3573 = vor.u32 %v3571, %v3572
    %v3575 = vlaneseq
    %v3576 = vshrl.u32 %v3575, 7
    %v3577 = vsub.s32 0, %v3576
    %v3578 = vrot.slane %v3573, %v3577
    %v3579 = vlaneseq
    %v3580 = vshrl.u32 %v3579, 7
    %v3581 = vsub.s32 1, %v3580
    %v3582 = vrot.slane %v3573, %v3581
    %v3583 = vlaneseq
    %v3584 = vshrl.u32 %v3583, 7
    %v3585 = vsub.s32 2, %v3584
    %v3586 = vrot.slane %v3573, %v3585
    %v3587 = vlaneseq
    %v3588 = vshrl.u32 %v3587, 7
    %v3589 = vsub.s32 3, %v3588
    %v3590 = vrot.slane %v3573, %v3589
    %v3591 = vlaneseq
    %v3592 = vshrl.u32 %v3591, 7
    %v3593 = vsub.s32 4, %v3592
    %v3594 = vrot.slane %v3573, %v3593
    %v3595 = vlaneseq
    %v3596 = vshrl.u32 %v3595, 7
    %v3597 = vsub.s32 5, %v3596
    %v3598 = vrot.slane %v3573, %v3597
    %v3599 = vlaneseq
    %v3600 = vshrl.u32 %v3599, 7
    %v3601 = vsub.s32 6, %v3600
    %v3602 = vrot.slane %v3573, %v3601
    %v3603 = vlaneseq
    %v3604 = vshrl.u32 %v3603, 7
    %v3605 = vsub.s32 7, %v3604
    %v3606 = vrot.slane %v3573, %v3605
    %v3615 = vadd.f32 %v3562, %v3578
    %v3616 = vadd.f32 %v3563, %v3582
    %v3617 = vadd.f32 %v3564, %v3586
    %v3618 = vadd.f32 %v3565, %v3590
    %v3619 = vadd.f32 %v3566, %v3594
    %v3620 = vadd.f32 %v3567, %v3598
    %v3621 = vadd.f32 %v3568, %v3602
    %v3622 = vadd.f32 %v3569, %v3606
    %vm3623 = vcmp.ge.f32.partialorder %v3615, 0.0
    %vm3624 = vcmp.ge.f32.partialorder %v3616, 0.0
    %vm3625 = vcmp.ge.f32.partialorder %v3617, 0.0
    %vm3626 = vcmp.ge.f32.partialorder %v3618, 0.0
    %vm3627 = vcmp.ge.f32.partialorder %v3619, 0.0
    %vm3628 = vcmp.ge.f32.partialorder %v3620, 0.0
    %vm3629 = vcmp.ge.f32.partialorder %v3621, 0.0
    %vm3630 = vcmp.ge.f32.partialorder %v3622, 0.0
    %s3631 = sld [smem:[#allocation19 + $0x2]]
    %v3632 = vstv %s3631
    %v3633 = vmul.f32 %v3632, %v3615
    %v3634 = vmul.f32 %v3632, %v3616
    %v3635 = vmul.f32 %v3632, %v3617
    %v3636 = vmul.f32 %v3632, %v3618
    %v3637 = vmul.f32 %v3632, %v3619
    %v3638 = vmul.f32 %v3632, %v3620
    %v3639 = vmul.f32 %v3632, %v3621
    %v3640 = vmul.f32 %v3632, %v3622
    %v3641 = vsel %vm3623, %v3615, %v3633
    %v3642 = vsel %vm3624, %v3616, %v3634
    %v3643 = vsel %vm3625, %v3617, %v3635
    %v3644 = vsel %vm3626, %v3618, %v3636
    %v3645 = vsel %vm3627, %v3619, %v3637
    %v3646 = vsel %vm3628, %v3620, %v3638
    %v3647 = vsel %vm3629, %v3621, %v3639
    %v3648 = vsel %vm3630, %v3622, %v3640
    %v3649 = vpack.c.bf16 %v3641, %v3641
    %v3650 = vpack.c.bf16 %v3642, %v3642
    %v3651 = vpack.c.bf16 %v3643, %v3643
    %v3652 = vpack.c.bf16 %v3644, %v3644
    %v3653 = vpack.c.bf16 %v3645, %v3645
    %v3654 = vpack.c.bf16 %v3646, %v3646
    %v3655 = vpack.c.bf16 %v3647, %v3647
    %v3656 = vpack.c.bf16 %v3648, %v3648
    %s3657 = smul.u32 %s523, 4
    %s3658 = sshll.u32 %s3657, 4
    %3659 = dma.done %s115, %s3658
    %v3660 = vld [vmem:[#allocation5] sm:$0xff]
    %v3661 = vld [vmem:[#allocation5 + $0x8] sm:$0xff]
    %v3662 = vld [vmem:[#allocation5 + $0x10] sm:$0xff]
    %v3663 = vld [vmem:[#allocation5 + $0x18] sm:$0xff]
    %v3664 = vld [vmem:[#allocation5 + $0x20] sm:$0xff]
    %v3665 = vld [vmem:[#allocation5 + $0x28] sm:$0xff]
    %v3666 = vld [vmem:[#allocation5 + $0x30] sm:$0xff]
    %v3667 = vld [vmem:[#allocation5 + $0x38] sm:$0xff]
    %v3668 = vld [vmem:[#allocation5 + $0x40] sm:$0xff]
    %v3669 = vld [vmem:[#allocation5 + $0x48] sm:$0xff]
    %v3670 = vld [vmem:[#allocation5 + $0x50] sm:$0xff]
    %v3671 = vld [vmem:[#allocation5 + $0x58] sm:$0xff]
    %v3672 = vld [vmem:[#allocation5 + $0x60] sm:$0xff]
    %v3673 = vld [vmem:[#allocation5 + $0x68] sm:$0xff]
    %v3674 = vld [vmem:[#allocation5 + $0x70] sm:$0xff]
    %v3675 = vld [vmem:[#allocation5 + $0x78] sm:$0xff]
    %v3676 = vld [vmem:[#allocation5 + $0x80] sm:$0xff]
    %v3677 = vld [vmem:[#allocation5 + $0x88] sm:$0xff]
    %v3678 = vld [vmem:[#allocation5 + $0x90] sm:$0xff]
    %v3679 = vld [vmem:[#allocation5 + $0x98] sm:$0xff]
    %v3680 = vld [vmem:[#allocation5 + $0xa0] sm:$0xff]
    %v3681 = vld [vmem:[#allocation5 + $0xa8] sm:$0xff]
    %v3682 = vld [vmem:[#allocation5 + $0xb0] sm:$0xff]
    %v3683 = vld [vmem:[#allocation5 + $0xb8] sm:$0xff]
    %v3684 = vld [vmem:[#allocation5 + $0xc0] sm:$0xff]
    %v3685 = vld [vmem:[#allocation5 + $0xc8] sm:$0xff]
    %v3686 = vld [vmem:[#allocation5 + $0xd0] sm:$0xff]
    %v3687 = vld [vmem:[#allocation5 + $0xd8] sm:$0xff]
    %v3688 = vld [vmem:[#allocation5 + $0xe0] sm:$0xff]
    %v3689 = vld [vmem:[#allocation5 + $0xe8] sm:$0xff]
    %v3690 = vld [vmem:[#allocation5 + $0xf0] sm:$0xff]
    %v3691 = vld [vmem:[#allocation5 + $0xf8] sm:$0xff]
    %v3692 = vld [vmem:[#allocation5 + $0x100] sm:$0xff]
    %v3693 = vld [vmem:[#allocation5 + $0x108] sm:$0xff]
    %v3694 = vld [vmem:[#allocation5 + $0x110] sm:$0xff]
    %v3695 = vld [vmem:[#allocation5 + $0x118] sm:$0xff]
    %v3696 = vld [vmem:[#allocation5 + $0x120] sm:$0xff]
    %v3697 = vld [vmem:[#allocation5 + $0x128] sm:$0xff]
    %v3698 = vld [vmem:[#allocation5 + $0x130] sm:$0xff]
    %v3699 = vld [vmem:[#allocation5 + $0x138] sm:$0xff]
    %v3700 = vld [vmem:[#allocation5 + $0x140] sm:$0xff]
    %v3701 = vld [vmem:[#allocation5 + $0x148] sm:$0xff]
    %v3702 = vld [vmem:[#allocation5 + $0x150] sm:$0xff]
    %v3703 = vld [vmem:[#allocation5 + $0x158] sm:$0xff]
    %v3704 = vld [vmem:[#allocation5 + $0x160] sm:$0xff]
    %v3705 = vld [vmem:[#allocation5 + $0x168] sm:$0xff]
    %v3706 = vld [vmem:[#allocation5 + $0x170] sm:$0xff]
    %v3707 = vld [vmem:[#allocation5 + $0x178] sm:$0xff]
    %v3708 = vld [vmem:[#allocation5 + $0x180] sm:$0xff]
    %v3709 = vld [vmem:[#allocation5 + $0x188] sm:$0xff]
    %v3710 = vld [vmem:[#allocation5 + $0x190] sm:$0xff]
    %v3711 = vld [vmem:[#allocation5 + $0x198] sm:$0xff]
    %v3712 = vld [vmem:[#allocation5 + $0x1a0] sm:$0xff]
    %v3713 = vld [vmem:[#allocation5 + $0x1a8] sm:$0xff]
    %v3714 = vld [vmem:[#allocation5 + $0x1b0] sm:$0xff]
    %v3715 = vld [vmem:[#allocation5 + $0x1b8] sm:$0xff]
    %v3716 = vld [vmem:[#allocation5 + $0x1c0] sm:$0xff]
    %v3717 = vld [vmem:[#allocation5 + $0x1c8] sm:$0xff]
    %v3718 = vld [vmem:[#allocation5 + $0x1d0] sm:$0xff]
    %v3719 = vld [vmem:[#allocation5 + $0x1d8] sm:$0xff]
    %v3720 = vld [vmem:[#allocation5 + $0x1e0] sm:$0xff]
    %v3721 = vld [vmem:[#allocation5 + $0x1e8] sm:$0xff]
    %v3722 = vld [vmem:[#allocation5 + $0x1f0] sm:$0xff]
    %v3723 = vld [vmem:[#allocation5 + $0x1f8] sm:$0xff]
    %v3724 = vld [vmem:[#allocation5 + $0x200] sm:$0xff]
    %v3725 = vld [vmem:[#allocation5 + $0x208] sm:$0xff]
    %v3726 = vld [vmem:[#allocation5 + $0x210] sm:$0xff]
    %v3727 = vld [vmem:[#allocation5 + $0x218] sm:$0xff]
    %v3728 = vld [vmem:[#allocation5 + $0x220] sm:$0xff]
    %v3729 = vld [vmem:[#allocation5 + $0x228] sm:$0xff]
    %v3730 = vld [vmem:[#allocation5 + $0x230] sm:$0xff]
    %v3731 = vld [vmem:[#allocation5 + $0x238] sm:$0xff]
    %v3732 = vld [vmem:[#allocation5 + $0x240] sm:$0xff]
    %v3733 = vld [vmem:[#allocation5 + $0x248] sm:$0xff]
    %v3734 = vld [vmem:[#allocation5 + $0x250] sm:$0xff]
    %v3735 = vld [vmem:[#allocation5 + $0x258] sm:$0xff]
    %v3736 = vld [vmem:[#allocation5 + $0x260] sm:$0xff]
    %v3737 = vld [vmem:[#allocation5 + $0x268] sm:$0xff]
    %v3738 = vld [vmem:[#allocation5 + $0x270] sm:$0xff]
    %v3739 = vld [vmem:[#allocation5 + $0x278] sm:$0xff]
    %v3740 = vld [vmem:[#allocation5 + $0x280] sm:$0xff]
    %v3741 = vld [vmem:[#allocation5 + $0x288] sm:$0xff]
    %v3742 = vld [vmem:[#allocation5 + $0x290] sm:$0xff]
    %v3743 = vld [vmem:[#allocation5 + $0x298] sm:$0xff]
    %v3744 = vld [vmem:[#allocation5 + $0x2a0] sm:$0xff]
    %v3745 = vld [vmem:[#allocation5 + $0x2a8] sm:$0xff]
    %v3746 = vld [vmem:[#allocation5 + $0x2b0] sm:$0xff]
    %v3747 = vld [vmem:[#allocation5 + $0x2b8] sm:$0xff]
    %v3748 = vld [vmem:[#allocation5 + $0x2c0] sm:$0xff]
    %v3749 = vld [vmem:[#allocation5 + $0x2c8] sm:$0xff]
    %v3750 = vld [vmem:[#allocation5 + $0x2d0] sm:$0xff]
    %v3751 = vld [vmem:[#allocation5 + $0x2d8] sm:$0xff]
    %v3752 = vld [vmem:[#allocation5 + $0x2e0] sm:$0xff]
    %v3753 = vld [vmem:[#allocation5 + $0x2e8] sm:$0xff]
    %v3754 = vld [vmem:[#allocation5 + $0x2f0] sm:$0xff]
    %v3755 = vld [vmem:[#allocation5 + $0x2f8] sm:$0xff]
    %v3756 = vld [vmem:[#allocation5 + $0x300] sm:$0xff]
    %v3757 = vld [vmem:[#allocation5 + $0x308] sm:$0xff]
    %v3758 = vld [vmem:[#allocation5 + $0x310] sm:$0xff]
    %v3759 = vld [vmem:[#allocation5 + $0x318] sm:$0xff]
    %v3760 = vld [vmem:[#allocation5 + $0x320] sm:$0xff]
    %v3761 = vld [vmem:[#allocation5 + $0x328] sm:$0xff]
    %v3762 = vld [vmem:[#allocation5 + $0x330] sm:$0xff]
    %v3763 = vld [vmem:[#allocation5 + $0x338] sm:$0xff]
    %v3764 = vld [vmem:[#allocation5 + $0x340] sm:$0xff]
    %v3765 = vld [vmem:[#allocation5 + $0x348] sm:$0xff]
    %v3766 = vld [vmem:[#allocation5 + $0x350] sm:$0xff]
    %v3767 = vld [vmem:[#allocation5 + $0x358] sm:$0xff]
    %v3768 = vld [vmem:[#allocation5 + $0x360] sm:$0xff]
    %v3769 = vld [vmem:[#allocation5 + $0x368] sm:$0xff]
    %v3770 = vld [vmem:[#allocation5 + $0x370] sm:$0xff]
    %v3771 = vld [vmem:[#allocation5 + $0x378] sm:$0xff]
    %v3772 = vld [vmem:[#allocation5 + $0x380] sm:$0xff]
    %v3773 = vld [vmem:[#allocation5 + $0x388] sm:$0xff]
    %v3774 = vld [vmem:[#allocation5 + $0x390] sm:$0xff]
    %v3775 = vld [vmem:[#allocation5 + $0x398] sm:$0xff]
    %v3776 = vld [vmem:[#allocation5 + $0x3a0] sm:$0xff]
    %v3777 = vld [vmem:[#allocation5 + $0x3a8] sm:$0xff]
    %v3778 = vld [vmem:[#allocation5 + $0x3b0] sm:$0xff]
    %v3779 = vld [vmem:[#allocation5 + $0x3b8] sm:$0xff]
    %v3780 = vld [vmem:[#allocation5 + $0x3c0] sm:$0xff]
    %v3781 = vld [vmem:[#allocation5 + $0x3c8] sm:$0xff]
    %v3782 = vld [vmem:[#allocation5 + $0x3d0] sm:$0xff]
    %v3783 = vld [vmem:[#allocation5 + $0x3d8] sm:$0xff]
    %v3784 = vld [vmem:[#allocation5 + $0x3e0] sm:$0xff]
    %v3785 = vld [vmem:[#allocation5 + $0x3e8] sm:$0xff]
    %v3786 = vld [vmem:[#allocation5 + $0x3f0] sm:$0xff]
    %v3787 = vld [vmem:[#allocation5 + $0x3f8] sm:$0xff]
    %v3788 = vunpack.c.l.s8.bf16 %v3660
    %v3789 = vunpack.c.l.s8.bf16 %v3661
    %v3790 = vunpack.c.l.s8.bf16 %v3662
    %v3791 = vunpack.c.l.s8.bf16 %v3663
    %v3792 = vunpack.c.h.s8.bf16 %v3660
    %v3793 = vunpack.c.h.s8.bf16 %v3661
    %v3794 = vunpack.c.h.s8.bf16 %v3662
    %v3795 = vunpack.c.h.s8.bf16 %v3663
    %v3796 = vunpack.c.l.s8.bf16 %v3664
    %v3797 = vunpack.c.l.s8.bf16 %v3665
    %v3798 = vunpack.c.l.s8.bf16 %v3666
    %v3799 = vunpack.c.l.s8.bf16 %v3667
    %v3800 = vunpack.c.h.s8.bf16 %v3664
    %v3801 = vunpack.c.h.s8.bf16 %v3665
    %v3802 = vunpack.c.h.s8.bf16 %v3666
    %v3803 = vunpack.c.h.s8.bf16 %v3667
    %v3804 = vunpack.c.l.s8.bf16 %v3668
    %v3805 = vunpack.c.l.s8.bf16 %v3669
    %v3806 = vunpack.c.l.s8.bf16 %v3670
    %v3807 = vunpack.c.l.s8.bf16 %v3671
    %v3808 = vunpack.c.h.s8.bf16 %v3668
    %v3809 = vunpack.c.h.s8.bf16 %v3669
    %v3810 = vunpack.c.h.s8.bf16 %v3670
    %v3811 = vunpack.c.h.s8.bf16 %v3671
    %v3812 = vunpack.c.l.s8.bf16 %v3672
    %v3813 = vunpack.c.l.s8.bf16 %v3673
    %v3814 = vunpack.c.l.s8.bf16 %v3674
    %v3815 = vunpack.c.l.s8.bf16 %v3675
    %v3816 = vunpack.c.h.s8.bf16 %v3672
    %v3817 = vunpack.c.h.s8.bf16 %v3673
    %v3818 = vunpack.c.h.s8.bf16 %v3674
    %v3819 = vunpack.c.h.s8.bf16 %v3675
    %v3820 = vunpack.c.l.s8.bf16 %v3676
    %v3821 = vunpack.c.l.s8.bf16 %v3677
    %v3822 = vunpack.c.l.s8.bf16 %v3678
    %v3823 = vunpack.c.l.s8.bf16 %v3679
    %v3824 = vunpack.c.h.s8.bf16 %v3676
    %v3825 = vunpack.c.h.s8.bf16 %v3677
    %v3826 = vunpack.c.h.s8.bf16 %v3678
    %v3827 = vunpack.c.h.s8.bf16 %v3679
    %v3828 = vunpack.c.l.s8.bf16 %v3680
    %v3829 = vunpack.c.l.s8.bf16 %v3681
    %v3830 = vunpack.c.l.s8.bf16 %v3682
    %v3831 = vunpack.c.l.s8.bf16 %v3683
    %v3832 = vunpack.c.h.s8.bf16 %v3680
    %v3833 = vunpack.c.h.s8.bf16 %v3681
    %v3834 = vunpack.c.h.s8.bf16 %v3682
    %v3835 = vunpack.c.h.s8.bf16 %v3683
    %v3836 = vunpack.c.l.s8.bf16 %v3684
    %v3837 = vunpack.c.l.s8.bf16 %v3685
    %v3838 = vunpack.c.l.s8.bf16 %v3686
    %v3839 = vunpack.c.l.s8.bf16 %v3687
    %v3840 = vunpack.c.h.s8.bf16 %v3684
    %v3841 = vunpack.c.h.s8.bf16 %v3685
    %v3842 = vunpack.c.h.s8.bf16 %v3686
    %v3843 = vunpack.c.h.s8.bf16 %v3687
    %v3844 = vunpack.c.l.s8.bf16 %v3688
    %v3845 = vunpack.c.l.s8.bf16 %v3689
    %v3846 = vunpack.c.l.s8.bf16 %v3690
    %v3847 = vunpack.c.l.s8.bf16 %v3691
    %v3848 = vunpack.c.h.s8.bf16 %v3688
    %v3849 = vunpack.c.h.s8.bf16 %v3689
    %v3850 = vunpack.c.h.s8.bf16 %v3690
    %v3851 = vunpack.c.h.s8.bf16 %v3691
    %v3852 = vunpack.c.l.s8.bf16 %v3692
    %v3853 = vunpack.c.l.s8.bf16 %v3693
    %v3854 = vunpack.c.l.s8.bf16 %v3694
    %v3855 = vunpack.c.l.s8.bf16 %v3695
    %v3856 = vunpack.c.h.s8.bf16 %v3692
    %v3857 = vunpack.c.h.s8.bf16 %v3693
    %v3858 = vunpack.c.h.s8.bf16 %v3694
    %v3859 = vunpack.c.h.s8.bf16 %v3695
    %v3860 = vunpack.c.l.s8.bf16 %v3696
    %v3861 = vunpack.c.l.s8.bf16 %v3697
    %v3862 = vunpack.c.l.s8.bf16 %v3698
    %v3863 = vunpack.c.l.s8.bf16 %v3699
    %v3864 = vunpack.c.h.s8.bf16 %v3696
    %v3865 = vunpack.c.h.s8.bf16 %v3697
    %v3866 = vunpack.c.h.s8.bf16 %v3698
    %v3867 = vunpack.c.h.s8.bf16 %v3699
    %v3868 = vunpack.c.l.s8.bf16 %v3700
    %v3869 = vunpack.c.l.s8.bf16 %v3701
    %v3870 = vunpack.c.l.s8.bf16 %v3702
    %v3871 = vunpack.c.l.s8.bf16 %v3703
    %v3872 = vunpack.c.h.s8.bf16 %v3700
    %v3873 = vunpack.c.h.s8.bf16 %v3701
    %v3874 = vunpack.c.h.s8.bf16 %v3702
    %v3875 = vunpack.c.h.s8.bf16 %v3703
    %v3876 = vunpack.c.l.s8.bf16 %v3704
    %v3877 = vunpack.c.l.s8.bf16 %v3705
    %v3878 = vunpack.c.l.s8.bf16 %v3706
    %v3879 = vunpack.c.l.s8.bf16 %v3707
    %v3880 = vunpack.c.h.s8.bf16 %v3704
    %v3881 = vunpack.c.h.s8.bf16 %v3705
    %v3882 = vunpack.c.h.s8.bf16 %v3706
    %v3883 = vunpack.c.h.s8.bf16 %v3707
    %v3884 = vunpack.c.l.s8.bf16 %v3708
    %v3885 = vunpack.c.l.s8.bf16 %v3709
    %v3886 = vunpack.c.l.s8.bf16 %v3710
    %v3887 = vunpack.c.l.s8.bf16 %v3711
    %v3888 = vunpack.c.h.s8.bf16 %v3708
    %v3889 = vunpack.c.h.s8.bf16 %v3709
    %v3890 = vunpack.c.h.s8.bf16 %v3710
    %v3891 = vunpack.c.h.s8.bf16 %v3711
    %v3892 = vunpack.c.l.s8.bf16 %v3712
    %v3893 = vunpack.c.l.s8.bf16 %v3713
    %v3894 = vunpack.c.l.s8.bf16 %v3714
    %v3895 = vunpack.c.l.s8.bf16 %v3715
    %v3896 = vunpack.c.h.s8.bf16 %v3712
    %v3897 = vunpack.c.h.s8.bf16 %v3713
    %v3898 = vunpack.c.h.s8.bf16 %v3714
    %v3899 = vunpack.c.h.s8.bf16 %v3715
    %v3900 = vunpack.c.l.s8.bf16 %v3716
    %v3901 = vunpack.c.l.s8.bf16 %v3717
    %v3902 = vunpack.c.l.s8.bf16 %v3718
    %v3903 = vunpack.c.l.s8.bf16 %v3719
    %v3904 = vunpack.c.h.s8.bf16 %v3716
    %v3905 = vunpack.c.h.s8.bf16 %v3717
    %v3906 = vunpack.c.h.s8.bf16 %v3718
    %v3907 = vunpack.c.h.s8.bf16 %v3719
    %v3908 = vunpack.c.l.s8.bf16 %v3720
    %v3909 = vunpack.c.l.s8.bf16 %v3721
    %v3910 = vunpack.c.l.s8.bf16 %v3722
    %v3911 = vunpack.c.l.s8.bf16 %v3723
    %v3912 = vunpack.c.h.s8.bf16 %v3720
    %v3913 = vunpack.c.h.s8.bf16 %v3721
    %v3914 = vunpack.c.h.s8.bf16 %v3722
    %v3915 = vunpack.c.h.s8.bf16 %v3723
    %v3916 = vunpack.c.l.s8.bf16 %v3724
    %v3917 = vunpack.c.l.s8.bf16 %v3725
    %v3918 = vunpack.c.l.s8.bf16 %v3726
    %v3919 = vunpack.c.l.s8.bf16 %v3727
    %v3920 = vunpack.c.h.s8.bf16 %v3724
    %v3921 = vunpack.c.h.s8.bf16 %v3725
    %v3922 = vunpack.c.h.s8.bf16 %v3726
    %v3923 = vunpack.c.h.s8.bf16 %v3727
    %v3924 = vunpack.c.l.s8.bf16 %v3728
    %v3925 = vunpack.c.l.s8.bf16 %v3729
    %v3926 = vunpack.c.l.s8.bf16 %v3730
    %v3927 = vunpack.c.l.s8.bf16 %v3731
    %v3928 = vunpack.c.h.s8.bf16 %v3728
    %v3929 = vunpack.c.h.s8.bf16 %v3729
    %v3930 = vunpack.c.h.s8.bf16 %v3730
    %v3931 = vunpack.c.h.s8.bf16 %v3731
    %v3932 = vunpack.c.l.s8.bf16 %v3732
    %v3933 = vunpack.c.l.s8.bf16 %v3733
    %v3934 = vunpack.c.l.s8.bf16 %v3734
    %v3935 = vunpack.c.l.s8.bf16 %v3735
    %v3936 = vunpack.c.h.s8.bf16 %v3732
    %v3937 = vunpack.c.h.s8.bf16 %v3733
    %v3938 = vunpack.c.h.s8.bf16 %v3734
    %v3939 = vunpack.c.h.s8.bf16 %v3735
    %v3940 = vunpack.c.l.s8.bf16 %v3736
    %v3941 = vunpack.c.l.s8.bf16 %v3737
    %v3942 = vunpack.c.l.s8.bf16 %v3738
    %v3943 = vunpack.c.l.s8.bf16 %v3739
    %v3944 = vunpack.c.h.s8.bf16 %v3736
    %v3945 = vunpack.c.h.s8.bf16 %v3737
    %v3946 = vunpack.c.h.s8.bf16 %v3738
    %v3947 = vunpack.c.h.s8.bf16 %v3739
    %v3948 = vunpack.c.l.s8.bf16 %v3740
    %v3949 = vunpack.c.l.s8.bf16 %v3741
    %v3950 = vunpack.c.l.s8.bf16 %v3742
    %v3951 = vunpack.c.l.s8.bf16 %v3743
    %v3952 = vunpack.c.h.s8.bf16 %v3740
    %v3953 = vunpack.c.h.s8.bf16 %v3741
    %v3954 = vunpack.c.h.s8.bf16 %v3742
    %v3955 = vunpack.c.h.s8.bf16 %v3743
    %v3956 = vunpack.c.l.s8.bf16 %v3744
    %v3957 = vunpack.c.l.s8.bf16 %v3745
    %v3958 = vunpack.c.l.s8.bf16 %v3746
    %v3959 = vunpack.c.l.s8.bf16 %v3747
    %v3960 = vunpack.c.h.s8.bf16 %v3744
    %v3961 = vunpack.c.h.s8.bf16 %v3745
    %v3962 = vunpack.c.h.s8.bf16 %v3746
    %v3963 = vunpack.c.h.s8.bf16 %v3747
    %v3964 = vunpack.c.l.s8.bf16 %v3748
    %v3965 = vunpack.c.l.s8.bf16 %v3749
    %v3966 = vunpack.c.l.s8.bf16 %v3750
    %v3967 = vunpack.c.l.s8.bf16 %v3751
    %v3968 = vunpack.c.h.s8.bf16 %v3748
    %v3969 = vunpack.c.h.s8.bf16 %v3749
    %v3970 = vunpack.c.h.s8.bf16 %v3750
    %v3971 = vunpack.c.h.s8.bf16 %v3751
    %v3972 = vunpack.c.l.s8.bf16 %v3752
    %v3973 = vunpack.c.l.s8.bf16 %v3753
    %v3974 = vunpack.c.l.s8.bf16 %v3754
    %v3975 = vunpack.c.l.s8.bf16 %v3755
    %v3976 = vunpack.c.h.s8.bf16 %v3752
    %v3977 = vunpack.c.h.s8.bf16 %v3753
    %v3978 = vunpack.c.h.s8.bf16 %v3754
    %v3979 = vunpack.c.h.s8.bf16 %v3755
    %v3980 = vunpack.c.l.s8.bf16 %v3756
    %v3981 = vunpack.c.l.s8.bf16 %v3757
    %v3982 = vunpack.c.l.s8.bf16 %v3758
    %v3983 = vunpack.c.l.s8.bf16 %v3759
    %v3984 = vunpack.c.h.s8.bf16 %v3756
    %v3985 = vunpack.c.h.s8.bf16 %v3757
    %v3986 = vunpack.c.h.s8.bf16 %v3758
    %v3987 = vunpack.c.h.s8.bf16 %v3759
    %v3988 = vunpack.c.l.s8.bf16 %v3760
    %v3989 = vunpack.c.l.s8.bf16 %v3761
    %v3990 = vunpack.c.l.s8.bf16 %v3762
    %v3991 = vunpack.c.l.s8.bf16 %v3763
    %v3992 = vunpack.c.h.s8.bf16 %v3760
    %v3993 = vunpack.c.h.s8.bf16 %v3761
    %v3994 = vunpack.c.h.s8.bf16 %v3762
    %v3995 = vunpack.c.h.s8.bf16 %v3763
    %v3996 = vunpack.c.l.s8.bf16 %v3764
    %v3997 = vunpack.c.l.s8.bf16 %v3765
    %v3998 = vunpack.c.l.s8.bf16 %v3766
    %v3999 = vunpack.c.l.s8.bf16 %v3767
    %v4000 = vunpack.c.h.s8.bf16 %v3764
    %v4001 = vunpack.c.h.s8.bf16 %v3765
    %v4002 = vunpack.c.h.s8.bf16 %v3766
    %v4003 = vunpack.c.h.s8.bf16 %v3767
    %v4004 = vunpack.c.l.s8.bf16 %v3768
    %v4005 = vunpack.c.l.s8.bf16 %v3769
    %v4006 = vunpack.c.l.s8.bf16 %v3770
    %v4007 = vunpack.c.l.s8.bf16 %v3771
    %v4008 = vunpack.c.h.s8.bf16 %v3768
    %v4009 = vunpack.c.h.s8.bf16 %v3769
    %v4010 = vunpack.c.h.s8.bf16 %v3770
    %v4011 = vunpack.c.h.s8.bf16 %v3771
    %v4012 = vunpack.c.l.s8.bf16 %v3772
    %v4013 = vunpack.c.l.s8.bf16 %v3773
    %v4014 = vunpack.c.l.s8.bf16 %v3774
    %v4015 = vunpack.c.l.s8.bf16 %v3775
    %v4016 = vunpack.c.h.s8.bf16 %v3772
    %v4017 = vunpack.c.h.s8.bf16 %v3773
    %v4018 = vunpack.c.h.s8.bf16 %v3774
    %v4019 = vunpack.c.h.s8.bf16 %v3775
    %v4020 = vunpack.c.l.s8.bf16 %v3776
    %v4021 = vunpack.c.l.s8.bf16 %v3777
    %v4022 = vunpack.c.l.s8.bf16 %v3778
    %v4023 = vunpack.c.l.s8.bf16 %v3779
    %v4024 = vunpack.c.h.s8.bf16 %v3776
    %v4025 = vunpack.c.h.s8.bf16 %v3777
    %v4026 = vunpack.c.h.s8.bf16 %v3778
    %v4027 = vunpack.c.h.s8.bf16 %v3779
    %v4028 = vunpack.c.l.s8.bf16 %v3780
    %v4029 = vunpack.c.l.s8.bf16 %v3781
    %v4030 = vunpack.c.l.s8.bf16 %v3782
    %v4031 = vunpack.c.l.s8.bf16 %v3783
    %v4032 = vunpack.c.h.s8.bf16 %v3780
    %v4033 = vunpack.c.h.s8.bf16 %v3781
    %v4034 = vunpack.c.h.s8.bf16 %v3782
    %v4035 = vunpack.c.h.s8.bf16 %v3783
    %v4036 = vunpack.c.l.s8.bf16 %v3784
    %v4037 = vunpack.c.l.s8.bf16 %v3785
    %v4038 = vunpack.c.l.s8.bf16 %v3786
    %v4039 = vunpack.c.l.s8.bf16 %v3787
    %v4040 = vunpack.c.h.s8.bf16 %v3784
    %v4041 = vunpack.c.h.s8.bf16 %v3785
    %v4042 = vunpack.c.h.s8.bf16 %v3786
    %v4043 = vunpack.c.h.s8.bf16 %v3787
    %4044 = vmatprep.subr.bf16.mxu0 %v3789
    %4045 = vmatpush1.bf16.msra.mxu0 %v3788
    %4046 = vmatprep.subr.bf16.mxu0 %v3793
    %4047 = vmatpush1.bf16.msra.mxu0 %v3792
    %4048 = vmatprep.subr.bf16.mxu0 %v3797
    %4049 = vmatpush1.bf16.msra.mxu0 %v3796
    %4050 = vmatprep.subr.bf16.mxu0 %v3801
    %4051 = vmatpush1.bf16.msra.mxu0 %v3800
    %4052 = vmatprep.subr.bf16.mxu0 %v3805
    %4053 = vmatpush1.bf16.msra.mxu0 %v3804
    %4054 = vmatprep.subr.bf16.mxu0 %v3809
    %4055 = vmatpush1.bf16.msra.mxu0 %v3808
    %4056 = vmatprep.subr.bf16.mxu0 %v3813
    %4057 = vmatpush1.bf16.msra.mxu0 %v3812
    %4058 = vmatprep.subr.bf16.mxu0 %v3817
    %4059 = vmatpush1.bf16.msra.mxu0 %v3816
    %4060 = vmatprep.subr.bf16.mxu0 %v3821
    %4061 = vmatpush1.bf16.msra.mxu0 %v3820
    %4062 = vmatprep.subr.bf16.mxu0 %v3825
    %4063 = vmatpush1.bf16.msra.mxu0 %v3824
    %4064 = vmatprep.subr.bf16.mxu0 %v3829
    %4065 = vmatpush1.bf16.msra.mxu0 %v3828
    %4066 = vmatprep.subr.bf16.mxu0 %v3833
    %4067 = vmatpush1.bf16.msra.mxu0 %v3832
    %4068 = vmatprep.subr.bf16.mxu0 %v3837
    %4069 = vmatpush1.bf16.msra.mxu0 %v3836
    %4070 = vmatprep.subr.bf16.mxu0 %v3841
    %4071 = vmatpush1.bf16.msra.mxu0 %v3840
    %4072 = vmatprep.subr.bf16.mxu0 %v3845
    %4073 = vmatpush1.bf16.msra.mxu0 %v3844
    %4074 = vmatprep.subr.bf16.mxu0 %v3849
    %4075 = vmatpush1.bf16.msra.mxu0 %v3848
    %4076 = vmatprep.mubr.bf16.mxu0 %v3650
    %4077 = vmatmul.mubr.bf16.gmra.mrb[0].mxu0 %v3649
    %v4078 = vpop.f32.mrb[0].mxu0
    %v4079 = vadd.f32 0.0, %v4078
    %v4080 = vpop.f32.mrb[0].mxu0
    %v4081 = vadd.f32 0.0, %v4080
    %v4082 = vpop.f32.mrb[0].mxu0
    %v4083 = vpop.f32.mrb[0].mxu0
    %4084 = vdwg.mxu0
    %4085 = vmatprep.subr.bf16.mxu0 %v3853
    %4086 = vmatpush1.bf16.msra.mxu0 %v3852
    %4087 = vmatprep.subr.bf16.mxu0 %v3857
    %4088 = vmatpush1.bf16.msra.mxu0 %v3856
    %4089 = vmatprep.subr.bf16.mxu0 %v3861
    %4090 = vmatpush1.bf16.msra.mxu0 %v3860
    %4091 = vmatprep.subr.bf16.mxu0 %v3865
    %4092 = vmatpush1.bf16.msra.mxu0 %v3864
    %4093 = vmatprep.subr.bf16.mxu0 %v3869
    %4094 = vmatpush1.bf16.msra.mxu0 %v3868
    %4095 = vmatprep.subr.bf16.mxu0 %v3873
    %4096 = vmatpush1.bf16.msra.mxu0 %v3872
    %4097 = vmatprep.subr.bf16.mxu0 %v3877
    %4098 = vmatpush1.bf16.msra.mxu0 %v3876
    %4099 = vmatprep.subr.bf16.mxu0 %v3881
    %4100 = vmatpush1.bf16.msra.mxu0 %v3880
    %4101 = vmatprep.subr.bf16.mxu0 %v3885
    %4102 = vmatpush1.bf16.msra.mxu0 %v3884
    %4103 = vmatprep.subr.bf16.mxu0 %v3889
    %4104 = vmatpush1.bf16.msra.mxu0 %v3888
    %4105 = vmatprep.subr.bf16.mxu0 %v3893
    %4106 = vmatpush1.bf16.msra.mxu0 %v3892
    %4107 = vmatprep.subr.bf16.mxu0 %v3897
    %4108 = vmatpush1.bf16.msra.mxu0 %v3896
    %4109 = vmatprep.subr.bf16.mxu0 %v3901
    %4110 = vmatpush1.bf16.msra.mxu0 %v3900
    %4111 = vmatprep.subr.bf16.mxu0 %v3905
    %4112 = vmatpush1.bf16.msra.mxu0 %v3904
    %4113 = vmatprep.subr.bf16.mxu0 %v3909
    %4114 = vmatpush1.bf16.msra.mxu0 %v3908
    %4115 = vmatprep.subr.bf16.mxu0 %v3913
    %4116 = vmatpush1.bf16.msra.mxu0 %v3912
    %4117 = vmatprep.mubr.bf16.mxu0 %v3652
    %4118 = vmatmul.mubr.bf16.gmra.mrb[0].mxu0 %v3651
    %v4119 = vpop.f32.mrb[0].mxu0
    %v4120 = vadd.f32 %v4079, %v4119
    %v4121 = vpop.f32.mrb[0].mxu0
    %v4122 = vadd.f32 %v4081, %v4121
    %v4123 = vpop.f32.mrb[0].mxu0
    %v4124 = vpop.f32.mrb[0].mxu0
    %4125 = vdwg.mxu0
    %4126 = vmatprep.subr.bf16.mxu0 %v3917
    %4127 = vmatpush1.bf16.msra.mxu0 %v3916
    %4128 = vmatprep.subr.bf16.mxu0 %v3921
    %4129 = vmatpush1.bf16.msra.mxu0 %v3920
    %4130 = vmatprep.subr.bf16.mxu0 %v3925
    %4131 = vmatpush1.bf16.msra.mxu0 %v3924
    %4132 = vmatprep.subr.bf16.mxu0 %v3929
    %4133 = vmatpush1.bf16.msra.mxu0 %v3928
    %4134 = vmatprep.subr.bf16.mxu0 %v3933
    %4135 = vmatpush1.bf16.msra.mxu0 %v3932
    %4136 = vmatprep.subr.bf16.mxu0 %v3937
    %4137 = vmatpush1.bf16.msra.mxu0 %v3936
    %4138 = vmatprep.subr.bf16.mxu0 %v3941
    %4139 = vmatpush1.bf16.msra.mxu0 %v3940
    %4140 = vmatprep.subr.bf16.mxu0 %v3945
    %4141 = vmatpush1.bf16.msra.mxu0 %v3944
    %4142 = vmatprep.subr.bf16.mxu0 %v3949
    %4143 = vmatpush1.bf16.msra.mxu0 %v3948
    %4144 = vmatprep.subr.bf16.mxu0 %v3953
    %4145 = vmatpush1.bf16.msra.mxu0 %v3952
    %4146 = vmatprep.subr.bf16.mxu0 %v3957
    %4147 = vmatpush1.bf16.msra.mxu0 %v3956
    %4148 = vmatprep.subr.bf16.mxu0 %v3961
    %4149 = vmatpush1.bf16.msra.mxu0 %v3960
    %4150 = vmatprep.subr.bf16.mxu0 %v3965
    %4151 = vmatpush1.bf16.msra.mxu0 %v3964
    %4152 = vmatprep.subr.bf16.mxu0 %v3969
    %4153 = vmatpush1.bf16.msra.mxu0 %v3968
    %4154 = vmatprep.subr.bf16.mxu0 %v3973
    %4155 = vmatpush1.bf16.msra.mxu0 %v3972
    %4156 = vmatprep.subr.bf16.mxu0 %v3977
    %4157 = vmatpush1.bf16.msra.mxu0 %v3976
    %4158 = vmatprep.mubr.bf16.mxu0 %v3654
    %4159 = vmatmul.mubr.bf16.gmra.mrb[0].mxu0 %v3653
    %v4160 = vpop.f32.mrb[0].mxu0
    %v4161 = vadd.f32 %v4120, %v4160
    %v4162 = vpop.f32.mrb[0].mxu0
    %v4163 = vadd.f32 %v4122, %v4162
    %v4164 = vpop.f32.mrb[0].mxu0
    %v4165 = vpop.f32.mrb[0].mxu0
    %4166 = vdwg.mxu0
    %4167 = vmatprep.subr.bf16.mxu0 %v3981
    %4168 = vmatpush1.bf16.msra.mxu0 %v3980
    %4169 = vmatprep.subr.bf16.mxu0 %v3985
    %4170 = vmatpush1.bf16.msra.mxu0 %v3984
    %4171 = vmatprep.subr.bf16.mxu0 %v3989
    %4172 = vmatpush1.bf16.msra.mxu0 %v3988
    %4173 = vmatprep.subr.bf16.mxu0 %v3993
    %4174 = vmatpush1.bf16.msra.mxu0 %v3992
    %4175 = vmatprep.subr.bf16.mxu0 %v3997
    %4176 = vmatpush1.bf16.msra.mxu0 %v3996
    %4177 = vmatprep.subr.bf16.mxu0 %v4001
    %4178 = vmatpush1.bf16.msra.mxu0 %v4000
    %4179 = vmatprep.subr.bf16.mxu0 %v4005
    %4180 = vmatpush1.bf16.msra.mxu0 %v4004
    %4181 = vmatprep.subr.bf16.mxu0 %v4009
    %4182 = vmatpush1.bf16.msra.mxu0 %v4008
    %4183 = vmatprep.subr.bf16.mxu0 %v4013
    %4184 = vmatpush1.bf16.msra.mxu0 %v4012
    %4185 = vmatprep.subr.bf16.mxu0 %v4017
    %4186 = vmatpush1.bf16.msra.mxu0 %v4016
    %4187 = vmatprep.subr.bf16.mxu0 %v4021
    %4188 = vmatpush1.bf16.msra.mxu0 %v4020
    %4189 = vmatprep.subr.bf16.mxu0 %v4025
    %4190 = vmatpush1.bf16.msra.mxu0 %v4024
    %4191 = vmatprep.subr.bf16.mxu0 %v4029
    %4192 = vmatpush1.bf16.msra.mxu0 %v4028
    %4193 = vmatprep.subr.bf16.mxu0 %v4033
    %4194 = vmatpush1.bf16.msra.mxu0 %v4032
    %4195 = vmatprep.subr.bf16.mxu0 %v4037
    %4196 = vmatpush1.bf16.msra.mxu0 %v4036
    %4197 = vmatprep.subr.bf16.mxu0 %v4041
    %4198 = vmatpush1.bf16.msra.mxu0 %v4040
    %4199 = vmatprep.mubr.bf16.mxu0 %v3656
    %4200 = vmatmul.mubr.bf16.gmra.mrb[0].mxu0 %v3655
    %v4201 = vpop.f32.mrb[0].mxu0
    %v4202 = vadd.f32 %v4161, %v4201
    %v4203 = vpop.f32.mrb[0].mxu0
    %v4204 = vadd.f32 %v4163, %v4203
    %v4205 = vpop.f32.mrb[0].mxu0
    %v4206 = vpop.f32.mrb[0].mxu0
    %4207 = vdwg.mxu0
    %4208 = vmatprep.subr.bf16.mxu0 %v3791
    %4209 = vmatpush1.bf16.msra.mxu0 %v3790
    %4210 = vmatprep.subr.bf16.mxu0 %v3795
    %4211 = vmatpush1.bf16.msra.mxu0 %v3794
    %4212 = vmatprep.subr.bf16.mxu0 %v3799
    %4213 = vmatpush1.bf16.msra.mxu0 %v3798
    %4214 = vmatprep.subr.bf16.mxu0 %v3803
    %4215 = vmatpush1.bf16.msra.mxu0 %v3802
    %4216 = vmatprep.subr.bf16.mxu0 %v3807
    %4217 = vmatpush1.bf16.msra.mxu0 %v3806
    %4218 = vmatprep.subr.bf16.mxu0 %v3811
    %4219 = vmatpush1.bf16.msra.mxu0 %v3810
    %4220 = vmatprep.subr.bf16.mxu0 %v3815
    %4221 = vmatpush1.bf16.msra.mxu0 %v3814
    %4222 = vmatprep.subr.bf16.mxu0 %v3819
    %4223 = vmatpush1.bf16.msra.mxu0 %v3818
    %4224 = vmatprep.subr.bf16.mxu0 %v3823
    %4225 = vmatpush1.bf16.msra.mxu0 %v3822
    %4226 = vmatprep.subr.bf16.mxu0 %v3827
    %4227 = vmatpush1.bf16.msra.mxu0 %v3826
    %4228 = vmatprep.subr.bf16.mxu0 %v3831
    %4229 = vmatpush1.bf16.msra.mxu0 %v3830
    %4230 = vmatprep.subr.bf16.mxu0 %v3835
    %4231 = vmatpush1.bf16.msra.mxu0 %v3834
    %4232 = vmatprep.subr.bf16.mxu0 %v3839
    %4233 = vmatpush1.bf16.msra.mxu0 %v3838
    %4234 = vmatprep.subr.bf16.mxu0 %v3843
    %4235 = vmatpush1.bf16.msra.mxu0 %v3842
    %4236 = vmatprep.subr.bf16.mxu0 %v3847
    %4237 = vmatpush1.bf16.msra.mxu0 %v3846
    %4238 = vmatprep.subr.bf16.mxu0 %v3851
    %4239 = vmatpush1.bf16.msra.mxu0 %v3850
    %4240 = vmatprep.mubr.bf16.mxu0 %v3650
    %4241 = vmatmul.mubr.bf16.gmra.mrb[0].mxu0 %v3649
    %v4242 = vpop.f32.mrb[0].mxu0
    %v4243 = vadd.f32 0.0, %v4242
    %v4244 = vpop.f32.mrb[0].mxu0
    %v4245 = vadd.f32 0.0, %v4244
    %v4246 = vpop.f32.mrb[0].mxu0
    %v4247 = vpop.f32.mrb[0].mxu0
    %4248 = vdwg.mxu0
    %4249 = vmatprep.subr.bf16.mxu0 %v3855
    %4250 = vmatpush1.bf16.msra.mxu0 %v3854
    %4251 = vmatprep.subr.bf16.mxu0 %v3859
    %4252 = vmatpush1.bf16.msra.mxu0 %v3858
    %4253 = vmatprep.subr.bf16.mxu0 %v3863
    %4254 = vmatpush1.bf16.msra.mxu0 %v3862
    %4255 = vmatprep.subr.bf16.mxu0 %v3867
    %4256 = vmatpush1.bf16.msra.mxu0 %v3866
    %4257 = vmatprep.subr.bf16.mxu0 %v3871
    %4258 = vmatpush1.bf16.msra.mxu0 %v3870
    %4259 = vmatprep.subr.bf16.mxu0 %v3875
    %4260 = vmatpush1.bf16.msra.mxu0 %v3874
    %4261 = vmatprep.subr.bf16.mxu0 %v3879
    %4262 = vmatpush1.bf16.msra.mxu0 %v3878
    %4263 = vmatprep.subr.bf16.mxu0 %v3883
    %4264 = vmatpush1.bf16.msra.mxu0 %v3882
    %4265 = vmatprep.subr.bf16.mxu0 %v3887
    %4266 = vmatpush1.bf16.msra.mxu0 %v3886
    %4267 = vmatprep.subr.bf16.mxu0 %v3891
    %4268 = vmatpush1.bf16.msra.mxu0 %v3890
    %4269 = vmatprep.subr.bf16.mxu0 %v3895
    %4270 = vmatpush1.bf16.msra.mxu0 %v3894
    %4271 = vmatprep.subr.bf16.mxu0 %v3899
    %4272 = vmatpush1.bf16.msra.mxu0 %v3898
    %4273 = vmatprep.subr.bf16.mxu0 %v3903
    %4274 = vmatpush1.bf16.msra.mxu0 %v3902
    %4275 = vmatprep.subr.bf16.mxu0 %v3907
    %4276 = vmatpush1.bf16.msra.mxu0 %v3906
    %4277 = vmatprep.subr.bf16.mxu0 %v3911
    %4278 = vmatpush1.bf16.msra.mxu0 %v3910
    %4279 = vmatprep.subr.bf16.mxu0 %v3915
    %4280 = vmatpush1.bf16.msra.mxu0 %v3914
    %4281 = vmatprep.mubr.bf16.mxu0 %v3652
    %4282 = vmatmul.mubr.bf16.gmra.mrb[0].mxu0 %v3651
    %v4283 = vpop.f32.mrb[0].mxu0
    %v4284 = vadd.f32 %v4243, %v4283
    %v4285 = vpop.f32.mrb[0].mxu0
    %v4286 = vadd.f32 %v4245, %v4285
    %v4287 = vpop.f32.mrb[0].mxu0
    %v4288 = vpop.f32.mrb[0].mxu0
    %4289 = vdwg.mxu0
    %4290 = vmatprep.subr.bf16.mxu0 %v3919
    %4291 = vmatpush1.bf16.msra.mxu0 %v3918
    %4292 = vmatprep.subr.bf16.mxu0 %v3923
    %4293 = vmatpush1.bf16.msra.mxu0 %v3922
    %4294 = vmatprep.subr.bf16.mxu0 %v3927
    %4295 = vmatpush1.bf16.msra.mxu0 %v3926
    %4296 = vmatprep.subr.bf16.mxu0 %v3931
    %4297 = vmatpush1.bf16.msra.mxu0 %v3930
    %4298 = vmatprep.subr.bf16.mxu0 %v3935
    %4299 = vmatpush1.bf16.msra.mxu0 %v3934
    %4300 = vmatprep.subr.bf16.mxu0 %v3939
    %4301 = vmatpush1.bf16.msra.mxu0 %v3938
    %4302 = vmatprep.subr.bf16.mxu0 %v3943
    %4303 = vmatpush1.bf16.msra.mxu0 %v3942
    %4304 = vmatprep.subr.bf16.mxu0 %v3947
    %4305 = vmatpush1.bf16.msra.mxu0 %v3946
    %4306 = vmatprep.subr.bf16.mxu0 %v3951
    %4307 = vmatpush1.bf16.msra.mxu0 %v3950
    %4308 = vmatprep.subr.bf16.mxu0 %v3955
    %4309 = vmatpush1.bf16.msra.mxu0 %v3954
    %4310 = vmatprep.subr.bf16.mxu0 %v3959
    %4311 = vmatpush1.bf16.msra.mxu0 %v3958
    %4312 = vmatprep.subr.bf16.mxu0 %v3963
    %4313 = vmatpush1.bf16.msra.mxu0 %v3962
    %4314 = vmatprep.subr.bf16.mxu0 %v3967
    %4315 = vmatpush1.bf16.msra.mxu0 %v3966
    %4316 = vmatprep.subr.bf16.mxu0 %v3971
    %4317 = vmatpush1.bf16.msra.mxu0 %v3970
    %4318 = vmatprep.subr.bf16.mxu0 %v3975
    %4319 = vmatpush1.bf16.msra.mxu0 %v3974
    %4320 = vmatprep.subr.bf16.mxu0 %v3979
    %4321 = vmatpush1.bf16.msra.mxu0 %v3978
    %4322 = vmatprep.mubr.bf16.mxu0 %v3654
    %4323 = vmatmul.mubr.bf16.gmra.mrb[0].mxu0 %v3653
    %v4324 = vpop.f32.mrb[0].mxu0
    %v4325 = vadd.f32 %v4284, %v4324
    %v4326 = vpop.f32.mrb[0].mxu0
    %v4327 = vadd.f32 %v4286, %v4326
    %v4328 = vpop.f32.mrb[0].mxu0
    %v4329 = vpop.f32.mrb[0].mxu0
    %4330 = vdwg.mxu0
    %4331 = vmatprep.subr.bf16.mxu0 %v3983
    %4332 = vmatpush1.bf16.msra.mxu0 %v3982
    %4333 = vmatprep.subr.bf16.mxu0 %v3987
    %4334 = vmatpush1.bf16.msra.mxu0 %v3986
    %4335 = vmatprep.subr.bf16.mxu0 %v3991
    %4336 = vmatpush1.bf16.msra.mxu0 %v3990
    %4337 = vmatprep.subr.bf16.mxu0 %v3995
    %4338 = vmatpush1.bf16.msra.mxu0 %v3994
    %4339 = vmatprep.subr.bf16.mxu0 %v3999
    %4340 = vmatpush1.bf16.msra.mxu0 %v3998
    %4341 = vmatprep.subr.bf16.mxu0 %v4003
    %4342 = vmatpush1.bf16.msra.mxu0 %v4002
    %4343 = vmatprep.subr.bf16.mxu0 %v4007
    %4344 = vmatpush1.bf16.msra.mxu0 %v4006
    %4345 = vmatprep.subr.bf16.mxu0 %v4011
    %4346 = vmatpush1.bf16.msra.mxu0 %v4010
    %4347 = vmatprep.subr.bf16.mxu0 %v4015
    %4348 = vmatpush1.bf16.msra.mxu0 %v4014
    %4349 = vmatprep.subr.bf16.mxu0 %v4019
    %4350 = vmatpush1.bf16.msra.mxu0 %v4018
    %4351 = vmatprep.subr.bf16.mxu0 %v4023
    %4352 = vmatpush1.bf16.msra.mxu0 %v4022
    %4353 = vmatprep.subr.bf16.mxu0 %v4027
    %4354 = vmatpush1.bf16.msra.mxu0 %v4026
    %4355 = vmatprep.subr.bf16.mxu0 %v4031
    %4356 = vmatpush1.bf16.msra.mxu0 %v4030
    %4357 = vmatprep.subr.bf16.mxu0 %v4035
    %4358 = vmatpush1.bf16.msra.mxu0 %v4034
    %4359 = vmatprep.subr.bf16.mxu0 %v4039
    %4360 = vmatpush1.bf16.msra.mxu0 %v4038
    %4361 = vmatprep.subr.bf16.mxu0 %v4043
    %4362 = vmatpush1.bf16.msra.mxu0 %v4042
    %4363 = vmatprep.mubr.bf16.mxu0 %v3656
    %4364 = vmatmul.mubr.bf16.gmra.mrb[0].mxu0 %v3655
    %v4365 = vpop.f32.mrb[0].mxu0
    %v4366 = vadd.f32 %v4325, %v4365
    %v4367 = vpop.f32.mrb[0].mxu0
    %v4368 = vadd.f32 %v4327, %v4367
    %v4369 = vpop.f32.mrb[0].mxu0
    %v4370 = vpop.f32.mrb[0].mxu0
    %4371 = vdwg.mxu0
    %s4372 = scalar_lea.vmem [#allocation18], 3
    %v4373 = vld [vmem:[%s4372] ss:$8 sm:$0xf]
    %v4375 = vlaneseq
    %v4376 = vshrl.u32 %v4375, 7
    %v4377 = vsub.s32 0, %v4376
    %v4378 = vrot.slane %v4373, %v4377
    %v4379 = vlaneseq
    %v4380 = vshrl.u32 %v4379, 7
    %v4381 = vsub.s32 1, %v4380
    %v4382 = vrot.slane %v4373, %v4381
    %v4383 = vlaneseq
    %v4384 = vshrl.u32 %v4383, 7
    %v4385 = vsub.s32 2, %v4384
    %v4386 = vrot.slane %v4373, %v4385
    %v4387 = vlaneseq
    %v4388 = vshrl.u32 %v4387, 7
    %v4389 = vsub.s32 3, %v4388
    %v4390 = vrot.slane %v4373, %v4389
    %v4395 = vmul.f32 %v4202, %v4378
    %v4396 = vmul.f32 %v4204, %v4382
    %v4397 = vmul.f32 %v4366, %v4386
    %v4398 = vmul.f32 %v4368, %v4390
    %s4399 = scalar_lea.vmem [#allocation16], 3
    %v4400 = vld [vmem:[%s4399] ss:$8 sm:$0xf]
    %v4402 = vlaneseq
    %v4403 = vshrl.u32 %v4402, 7
    %v4404 = vsub.s32 0, %v4403
    %v4405 = vrot.slane %v4400, %v4404
    %v4406 = vlaneseq
    %v4407 = vshrl.u32 %v4406, 7
    %v4408 = vsub.s32 1, %v4407
    %v4409 = vrot.slane %v4400, %v4408
    %v4410 = vlaneseq
    %v4411 = vshrl.u32 %v4410, 7
    %v4412 = vsub.s32 2, %v4411
    %v4413 = vrot.slane %v4400, %v4412
    %v4414 = vlaneseq
    %v4415 = vshrl.u32 %v4414, 7
    %v4416 = vsub.s32 3, %v4415
    %v4417 = vrot.slane %v4400, %v4416
    %v4422 = vadd.f32 %v4395, %v4405
    %v4423 = vadd.f32 %v4396, %v4409
    %v4424 = vadd.f32 %v4397, %v4413
    %v4425 = vadd.f32 %v4398, %v4417
    %vm4426 = vcmp.ge.f32.partialorder %v4422, 0.0
    %vm4427 = vcmp.ge.f32.partialorder %v4423, 0.0
    %vm4428 = vcmp.ge.f32.partialorder %v4424, 0.0
    %vm4429 = vcmp.ge.f32.partialorder %v4425, 0.0
    %s4430 = sld [smem:[#allocation19 + $0x3]]
    %v4431 = vstv %s4430
    %v4432 = vmul.f32 %v4431, %v4422
    %v4433 = vmul.f32 %v4431, %v4423
    %v4434 = vmul.f32 %v4431, %v4424
    %v4435 = vmul.f32 %v4431, %v4425
    %v4436 = vsel %vm4426, %v4422, %v4432
    %v4437 = vsel %vm4427, %v4423, %v4433
    %v4438 = vsel %vm4428, %v4424, %v4434
    %v4439 = vsel %vm4429, %v4425, %v4435
    %v4440 = vpack.c.bf16 %v4436, %v4436
    %v4441 = vpack.c.bf16 %v4437, %v4437
    %v4442 = vpack.c.bf16 %v4438, %v4438
    %v4443 = vpack.c.bf16 %v4439, %v4439
    %s4444 = smul.u32 2, 64
    %s4445 = smul.u32 %s4444, 4
    %s4446 = sshll.u32 %s4445, 4
    %4447 = dma.done %s127, %s4446
    %v4448 = vld [vmem:[#allocation6] sm:$0xff]
    %v4449 = vld [vmem:[#allocation6 + $0x8] sm:$0xff]
    %v4450 = vld [vmem:[#allocation6 + $0x10] sm:$0xff]
    %v4451 = vld [vmem:[#allocation6 + $0x18] sm:$0xff]
    %v4452 = vld [vmem:[#allocation6 + $0x20] sm:$0xff]
    %v4453 = vld [vmem:[#allocation6 + $0x28] sm:$0xff]
    %v4454 = vld [vmem:[#allocation6 + $0x30] sm:$0xff]
    %v4455 = vld [vmem:[#allocation6 + $0x38] sm:$0xff]
    %v4456 = vld [vmem:[#allocation6 + $0x40] sm:$0xff]
    %v4457 = vld [vmem:[#allocation6 + $0x48] sm:$0xff]
    %v4458 = vld [vmem:[#allocation6 + $0x50] sm:$0xff]
    %v4459 = vld [vmem:[#allocation6 + $0x58] sm:$0xff]
    %v4460 = vld [vmem:[#allocation6 + $0x60] sm:$0xff]
    %v4461 = vld [vmem:[#allocation6 + $0x68] sm:$0xff]
    %v4462 = vld [vmem:[#allocation6 + $0x70] sm:$0xff]
    %v4463 = vld [vmem:[#allocation6 + $0x78] sm:$0xff]
    %v4464 = vld [vmem:[#allocation6 + $0x80] sm:$0xff]
    %v4465 = vld [vmem:[#allocation6 + $0x88] sm:$0xff]
    %v4466 = vld [vmem:[#allocation6 + $0x90] sm:$0xff]
    %v4467 = vld [vmem:[#allocation6 + $0x98] sm:$0xff]
    %v4468 = vld [vmem:[#allocation6 + $0xa0] sm:$0xff]
    %v4469 = vld [vmem:[#allocation6 + $0xa8] sm:$0xff]
    %v4470 = vld [vmem:[#allocation6 + $0xb0] sm:$0xff]
    %v4471 = vld [vmem:[#allocation6 + $0xb8] sm:$0xff]
    %v4472 = vld [vmem:[#allocation6 + $0xc0] sm:$0xff]
    %v4473 = vld [vmem:[#allocation6 + $0xc8] sm:$0xff]
    %v4474 = vld [vmem:[#allocation6 + $0xd0] sm:$0xff]
    %v4475 = vld [vmem:[#allocation6 + $0xd8] sm:$0xff]
    %v4476 = vld [vmem:[#allocation6 + $0xe0] sm:$0xff]
    %v4477 = vld [vmem:[#allocation6 + $0xe8] sm:$0xff]
    %v4478 = vld [vmem:[#allocation6 + $0xf0] sm:$0xff]
    %v4479 = vld [vmem:[#allocation6 + $0xf8] sm:$0xff]
    %v4480 = vld [vmem:[#allocation6 + $0x100] sm:$0xff]
    %v4481 = vld [vmem:[#allocation6 + $0x108] sm:$0xff]
    %v4482 = vld [vmem:[#allocation6 + $0x110] sm:$0xff]
    %v4483 = vld [vmem:[#allocation6 + $0x118] sm:$0xff]
    %v4484 = vld [vmem:[#allocation6 + $0x120] sm:$0xff]
    %v4485 = vld [vmem:[#allocation6 + $0x128] sm:$0xff]
    %v4486 = vld [vmem:[#allocation6 + $0x130] sm:$0xff]
    %v4487 = vld [vmem:[#allocation6 + $0x138] sm:$0xff]
    %v4488 = vld [vmem:[#allocation6 + $0x140] sm:$0xff]
    %v4489 = vld [vmem:[#allocation6 + $0x148] sm:$0xff]
    %v4490 = vld [vmem:[#allocation6 + $0x150] sm:$0xff]
    %v4491 = vld [vmem:[#allocation6 + $0x158] sm:$0xff]
    %v4492 = vld [vmem:[#allocation6 + $0x160] sm:$0xff]
    %v4493 = vld [vmem:[#allocation6 + $0x168] sm:$0xff]
    %v4494 = vld [vmem:[#allocation6 + $0x170] sm:$0xff]
    %v4495 = vld [vmem:[#allocation6 + $0x178] sm:$0xff]
    %v4496 = vld [vmem:[#allocation6 + $0x180] sm:$0xff]
    %v4497 = vld [vmem:[#allocation6 + $0x188] sm:$0xff]
    %v4498 = vld [vmem:[#allocation6 + $0x190] sm:$0xff]
    %v4499 = vld [vmem:[#allocation6 + $0x198] sm:$0xff]
    %v4500 = vld [vmem:[#allocation6 + $0x1a0] sm:$0xff]
    %v4501 = vld [vmem:[#allocation6 + $0x1a8] sm:$0xff]
    %v4502 = vld [vmem:[#allocation6 + $0x1b0] sm:$0xff]
    %v4503 = vld [vmem:[#allocation6 + $0x1b8] sm:$0xff]
    %v4504 = vld [vmem:[#allocation6 + $0x1c0] sm:$0xff]
    %v4505 = vld [vmem:[#allocation6 + $0x1c8] sm:$0xff]
    %v4506 = vld [vmem:[#allocation6 + $0x1d0] sm:$0xff]
    %v4507 = vld [vmem:[#allocation6 + $0x1d8] sm:$0xff]
    %v4508 = vld [vmem:[#allocation6 + $0x1e0] sm:$0xff]
    %v4509 = vld [vmem:[#allocation6 + $0x1e8] sm:$0xff]
    %v4510 = vld [vmem:[#allocation6 + $0x1f0] sm:$0xff]
    %v4511 = vld [vmem:[#allocation6 + $0x1f8] sm:$0xff]
    %v4512 = vunpack.c.l.s8.bf16 %v4448
    %v4513 = vunpack.c.l.s8.bf16 %v4449
    %v4514 = vunpack.c.l.s8.bf16 %v4450
    %v4515 = vunpack.c.l.s8.bf16 %v4451
    %v4516 = vunpack.c.h.s8.bf16 %v4448
    %v4517 = vunpack.c.h.s8.bf16 %v4449
    %v4518 = vunpack.c.h.s8.bf16 %v4450
    %v4519 = vunpack.c.h.s8.bf16 %v4451
    %v4520 = vunpack.c.l.s8.bf16 %v4452
    %v4521 = vunpack.c.l.s8.bf16 %v4453
    %v4522 = vunpack.c.l.s8.bf16 %v4454
    %v4523 = vunpack.c.l.s8.bf16 %v4455
    %v4524 = vunpack.c.h.s8.bf16 %v4452
    %v4525 = vunpack.c.h.s8.bf16 %v4453
    %v4526 = vunpack.c.h.s8.bf16 %v4454
    %v4527 = vunpack.c.h.s8.bf16 %v4455
    %v4528 = vunpack.c.l.s8.bf16 %v4456
    %v4529 = vunpack.c.l.s8.bf16 %v4457
    %v4530 = vunpack.c.l.s8.bf16 %v4458
    %v4531 = vunpack.c.l.s8.bf16 %v4459
    %v4532 = vunpack.c.h.s8.bf16 %v4456
    %v4533 = vunpack.c.h.s8.bf16 %v4457
    %v4534 = vunpack.c.h.s8.bf16 %v4458
    %v4535 = vunpack.c.h.s8.bf16 %v4459
    %v4536 = vunpack.c.l.s8.bf16 %v4460
    %v4537 = vunpack.c.l.s8.bf16 %v4461
    %v4538 = vunpack.c.l.s8.bf16 %v4462
    %v4539 = vunpack.c.l.s8.bf16 %v4463
    %v4540 = vunpack.c.h.s8.bf16 %v4460
    %v4541 = vunpack.c.h.s8.bf16 %v4461
    %v4542 = vunpack.c.h.s8.bf16 %v4462
    %v4543 = vunpack.c.h.s8.bf16 %v4463
    %v4544 = vunpack.c.l.s8.bf16 %v4464
    %v4545 = vunpack.c.l.s8.bf16 %v4465
    %v4546 = vunpack.c.l.s8.bf16 %v4466
    %v4547 = vunpack.c.l.s8.bf16 %v4467
    %v4548 = vunpack.c.h.s8.bf16 %v4464
    %v4549 = vunpack.c.h.s8.bf16 %v4465
    %v4550 = vunpack.c.h.s8.bf16 %v4466
    %v4551 = vunpack.c.h.s8.bf16 %v4467
    %v4552 = vunpack.c.l.s8.bf16 %v4468
    %v4553 = vunpack.c.l.s8.bf16 %v4469
    %v4554 = vunpack.c.l.s8.bf16 %v4470
    %v4555 = vunpack.c.l.s8.bf16 %v4471
    %v4556 = vunpack.c.h.s8.bf16 %v4468
    %v4557 = vunpack.c.h.s8.bf16 %v4469
    %v4558 = vunpack.c.h.s8.bf16 %v4470
    %v4559 = vunpack.c.h.s8.bf16 %v4471
    %v4560 = vunpack.c.l.s8.bf16 %v4472
    %v4561 = vunpack.c.l.s8.bf16 %v4473
    %v4562 = vunpack.c.l.s8.bf16 %v4474
    %v4563 = vunpack.c.l.s8.bf16 %v4475
    %v4564 = vunpack.c.h.s8.bf16 %v4472
    %v4565 = vunpack.c.h.s8.bf16 %v4473
    %v4566 = vunpack.c.h.s8.bf16 %v4474
    %v4567 = vunpack.c.h.s8.bf16 %v4475
    %v4568 = vunpack.c.l.s8.bf16 %v4476
    %v4569 = vunpack.c.l.s8.bf16 %v4477
    %v4570 = vunpack.c.l.s8.bf16 %v4478
    %v4571 = vunpack.c.l.s8.bf16 %v4479
    %v4572 = vunpack.c.h.s8.bf16 %v4476
    %v4573 = vunpack.c.h.s8.bf16 %v4477
    %v4574 = vunpack.c.h.s8.bf16 %v4478
    %v4575 = vunpack.c.h.s8.bf16 %v4479
    %v4576 = vunpack.c.l.s8.bf16 %v4480
    %v4577 = vunpack.c.l.s8.bf16 %v4481
    %v4578 = vunpack.c.l.s8.bf16 %v4482
    %v4579 = vunpack.c.l.s8.bf16 %v4483
    %v4580 = vunpack.c.h.s8.bf16 %v4480
    %v4581 = vunpack.c.h.s8.bf16 %v4481
    %v4582 = vunpack.c.h.s8.bf16 %v4482
    %v4583 = vunpack.c.h.s8.bf16 %v4483
    %v4584 = vunpack.c.l.s8.bf16 %v4484
    %v4585 = vunpack.c.l.s8.bf16 %v4485
    %v4586 = vunpack.c.l.s8.bf16 %v4486
    %v4587 = vunpack.c.l.s8.bf16 %v4487
    %v4588 = vunpack.c.h.s8.bf16 %v4484
    %v4589 = vunpack.c.h.s8.bf16 %v4485
    %v4590 = vunpack.c.h.s8.bf16 %v4486
    %v4591 = vunpack.c.h.s8.bf16 %v4487
    %v4592 = vunpack.c.l.s8.bf16 %v4488
    %v4593 = vunpack.c.l.s8.bf16 %v4489
    %v4594 = vunpack.c.l.s8.bf16 %v4490
    %v4595 = vunpack.c.l.s8.bf16 %v4491
    %v4596 = vunpack.c.h.s8.bf16 %v4488
    %v4597 = vunpack.c.h.s8.bf16 %v4489
    %v4598 = vunpack.c.h.s8.bf16 %v4490
    %v4599 = vunpack.c.h.s8.bf16 %v4491
    %v4600 = vunpack.c.l.s8.bf16 %v4492
    %v4601 = vunpack.c.l.s8.bf16 %v4493
    %v4602 = vunpack.c.l.s8.bf16 %v4494
    %v4603 = vunpack.c.l.s8.bf16 %v4495
    %v4604 = vunpack.c.h.s8.bf16 %v4492
    %v4605 = vunpack.c.h.s8.bf16 %v4493
    %v4606 = vunpack.c.h.s8.bf16 %v4494
    %v4607 = vunpack.c.h.s8.bf16 %v4495
    %v4608 = vunpack.c.l.s8.bf16 %v4496
    %v4609 = vunpack.c.l.s8.bf16 %v4497
    %v4610 = vunpack.c.l.s8.bf16 %v4498
    %v4611 = vunpack.c.l.s8.bf16 %v4499
    %v4612 = vunpack.c.h.s8.bf16 %v4496
    %v4613 = vunpack.c.h.s8.bf16 %v4497
    %v4614 = vunpack.c.h.s8.bf16 %v4498
    %v4615 = vunpack.c.h.s8.bf16 %v4499
    %v4616 = vunpack.c.l.s8.bf16 %v4500
    %v4617 = vunpack.c.l.s8.bf16 %v4501
    %v4618 = vunpack.c.l.s8.bf16 %v4502
    %v4619 = vunpack.c.l.s8.bf16 %v4503
    %v4620 = vunpack.c.h.s8.bf16 %v4500
    %v4621 = vunpack.c.h.s8.bf16 %v4501
    %v4622 = vunpack.c.h.s8.bf16 %v4502
    %v4623 = vunpack.c.h.s8.bf16 %v4503
    %v4624 = vunpack.c.l.s8.bf16 %v4504
    %v4625 = vunpack.c.l.s8.bf16 %v4505
    %v4626 = vunpack.c.l.s8.bf16 %v4506
    %v4627 = vunpack.c.l.s8.bf16 %v4507
    %v4628 = vunpack.c.h.s8.bf16 %v4504
    %v4629 = vunpack.c.h.s8.bf16 %v4505
    %v4630 = vunpack.c.h.s8.bf16 %v4506
    %v4631 = vunpack.c.h.s8.bf16 %v4507
    %v4632 = vunpack.c.l.s8.bf16 %v4508
    %v4633 = vunpack.c.l.s8.bf16 %v4509
    %v4634 = vunpack.c.l.s8.bf16 %v4510
    %v4635 = vunpack.c.l.s8.bf16 %v4511
    %v4636 = vunpack.c.h.s8.bf16 %v4508
    %v4637 = vunpack.c.h.s8.bf16 %v4509
    %v4638 = vunpack.c.h.s8.bf16 %v4510
    %v4639 = vunpack.c.h.s8.bf16 %v4511
    %4640 = vmatprep.subr.bf16.mxu0 %v4513
    %4641 = vmatpush1.bf16.msra.mxu0 %v4512
    %4642 = vmatprep.subr.bf16.mxu0 %v4517
    %4643 = vmatpush1.bf16.msra.mxu0 %v4516
    %4644 = vmatprep.subr.bf16.mxu0 %v4521
    %4645 = vmatpush1.bf16.msra.mxu0 %v4520
    %4646 = vmatprep.subr.bf16.mxu0 %v4525
    %4647 = vmatpush1.bf16.msra.mxu0 %v4524
    %4648 = vmatprep.subr.bf16.mxu0 %v4529
    %4649 = vmatpush1.bf16.msra.mxu0 %v4528
    %4650 = vmatprep.subr.bf16.mxu0 %v4533
    %4651 = vmatpush1.bf16.msra.mxu0 %v4532
    %4652 = vmatprep.subr.bf16.mxu0 %v4537
    %4653 = vmatpush1.bf16.msra.mxu0 %v4536
    %4654 = vmatprep.subr.bf16.mxu0 %v4541
    %4655 = vmatpush1.bf16.msra.mxu0 %v4540
    %4656 = vmatprep.subr.bf16.mxu0 %v4545
    %4657 = vmatpush1.bf16.msra.mxu0 %v4544
    %4658 = vmatprep.subr.bf16.mxu0 %v4549
    %4659 = vmatpush1.bf16.msra.mxu0 %v4548
    %4660 = vmatprep.subr.bf16.mxu0 %v4553
    %4661 = vmatpush1.bf16.msra.mxu0 %v4552
    %4662 = vmatprep.subr.bf16.mxu0 %v4557
    %4663 = vmatpush1.bf16.msra.mxu0 %v4556
    %4664 = vmatprep.subr.bf16.mxu0 %v4561
    %4665 = vmatpush1.bf16.msra.mxu0 %v4560
    %4666 = vmatprep.subr.bf16.mxu0 %v4565
    %4667 = vmatpush1.bf16.msra.mxu0 %v4564
    %4668 = vmatprep.subr.bf16.mxu0 %v4569
    %4669 = vmatpush1.bf16.msra.mxu0 %v4568
    %4670 = vmatprep.subr.bf16.mxu0 %v4573
    %4671 = vmatpush1.bf16.msra.mxu0 %v4572
    %4672 = vmatprep.mubr.bf16.mxu0 %v4441
    %4673 = vmatmul.mubr.bf16.gmra.mrb[0].mxu0 %v4440
    %v4674 = vpop.f32.mrb[0].mxu0
    %v4675 = vadd.f32 0.0, %v4674
    %v4676 = vpop.f32.mrb[0].mxu0
    %v4677 = vadd.f32 0.0, %v4676
    %v4678 = vpop.f32.mrb[0].mxu0
    %v4679 = vpop.f32.mrb[0].mxu0
    %4680 = vdwg.mxu0
    %4681 = vmatprep.subr.bf16.mxu0 %v4577
    %4682 = vmatpush1.bf16.msra.mxu0 %v4576
    %4683 = vmatprep.subr.bf16.mxu0 %v4581
    %4684 = vmatpush1.bf16.msra.mxu0 %v4580
    %4685 = vmatprep.subr.bf16.mxu0 %v4585
    %4686 = vmatpush1.bf16.msra.mxu0 %v4584
    %4687 = vmatprep.subr.bf16.mxu0 %v4589
    %4688 = vmatpush1.bf16.msra.mxu0 %v4588
    %4689 = vmatprep.subr.bf16.mxu0 %v4593
    %4690 = vmatpush1.bf16.msra.mxu0 %v4592
    %4691 = vmatprep.subr.bf16.mxu0 %v4597
    %4692 = vmatpush1.bf16.msra.mxu0 %v4596
    %4693 = vmatprep.subr.bf16.mxu0 %v4601
    %4694 = vmatpush1.bf16.msra.mxu0 %v4600
    %4695 = vmatprep.subr.bf16.mxu0 %v4605
    %4696 = vmatpush1.bf16.msra.mxu0 %v4604
    %4697 = vmatprep.subr.bf16.mxu0 %v4609
    %4698 = vmatpush1.bf16.msra.mxu0 %v4608
    %4699 = vmatprep.subr.bf16.mxu0 %v4613
    %4700 = vmatpush1.bf16.msra.mxu0 %v4612
    %4701 = vmatprep.subr.bf16.mxu0 %v4617
    %4702 = vmatpush1.bf16.msra.mxu0 %v4616
    %4703 = vmatprep.subr.bf16.mxu0 %v4621
    %4704 = vmatpush1.bf16.msra.mxu0 %v4620
    %4705 = vmatprep.subr.bf16.mxu0 %v4625
    %4706 = vmatpush1.bf16.msra.mxu0 %v4624
    %4707 = vmatprep.subr.bf16.mxu0 %v4629
    %4708 = vmatpush1.bf16.msra.mxu0 %v4628
    %4709 = vmatprep.subr.bf16.mxu0 %v4633
    %4710 = vmatpush1.bf16.msra.mxu0 %v4632
    %4711 = vmatprep.subr.bf16.mxu0 %v4637
    %4712 = vmatpush1.bf16.msra.mxu0 %v4636
    %4713 = vmatprep.mubr.bf16.mxu0 %v4443
    %4714 = vmatmul.mubr.bf16.gmra.mrb[0].mxu0 %v4442
    %v4715 = vpop.f32.mrb[0].mxu0
    %v4716 = vadd.f32 %v4675, %v4715
    %v4717 = vpop.f32.mrb[0].mxu0
    %v4718 = vadd.f32 %v4677, %v4717
    %v4719 = vpop.f32.mrb[0].mxu0
    %v4720 = vpop.f32.mrb[0].mxu0
    %4721 = vdwg.mxu0
    %4722 = vmatprep.subr.bf16.mxu0 %v4515
    %4723 = vmatpush1.bf16.msra.mxu0 %v4514
    %4724 = vmatprep.subr.bf16.mxu0 %v4519
    %4725 = vmatpush1.bf16.msra.mxu0 %v4518
    %4726 = vmatprep.subr.bf16.mxu0 %v4523
    %4727 = vmatpush1.bf16.msra.mxu0 %v4522
    %4728 = vmatprep.subr.bf16.mxu0 %v4527
    %4729 = vmatpush1.bf16.msra.mxu0 %v4526
    %4730 = vmatprep.subr.bf16.mxu0 %v4531
    %4731 = vmatpush1.bf16.msra.mxu0 %v4530
    %4732 = vmatprep.subr.bf16.mxu0 %v4535
    %4733 = vmatpush1.bf16.msra.mxu0 %v4534
    %4734 = vmatprep.subr.bf16.mxu0 %v4539
    %4735 = vmatpush1.bf16.msra.mxu0 %v4538
    %4736 = vmatprep.subr.bf16.mxu0 %v4543
    %4737 = vmatpush1.bf16.msra.mxu0 %v4542
    %4738 = vmatprep.subr.bf16.mxu0 %v4547
    %4739 = vmatpush1.bf16.msra.mxu0 %v4546
    %4740 = vmatprep.subr.bf16.mxu0 %v4551
    %4741 = vmatpush1.bf16.msra.mxu0 %v4550
    %4742 = vmatprep.subr.bf16.mxu0 %v4555
    %4743 = vmatpush1.bf16.msra.mxu0 %v4554
    %4744 = vmatprep.subr.bf16.mxu0 %v4559
    %4745 = vmatpush1.bf16.msra.mxu0 %v4558
    %4746 = vmatprep.subr.bf16.mxu0 %v4563
    %4747 = vmatpush1.bf16.msra.mxu0 %v4562
    %4748 = vmatprep.subr.bf16.mxu0 %v4567
    %4749 = vmatpush1.bf16.msra.mxu0 %v4566
    %4750 = vmatprep.subr.bf16.mxu0 %v4571
    %4751 = vmatpush1.bf16.msra.mxu0 %v4570
    %4752 = vmatprep.subr.bf16.mxu0 %v4575
    %4753 = vmatpush1.bf16.msra.mxu0 %v4574
    %4754 = vmatprep.mubr.bf16.mxu0 %v4441
    %4755 = vmatmul.mubr.bf16.gmra.mrb[0].mxu0 %v4440
    %v4756 = vpop.f32.mrb[0].mxu0
    %v4757 = vadd.f32 0.0, %v4756
    %v4758 = vpop.f32.mrb[0].mxu0
    %v4759 = vadd.f32 0.0, %v4758
    %v4760 = vpop.f32.mrb[0].mxu0
    %v4761 = vpop.f32.mrb[0].mxu0
    %4762 = vdwg.mxu0
    %4763 = vmatprep.subr.bf16.mxu0 %v4579
    %4764 = vmatpush1.bf16.msra.mxu0 %v4578
    %4765 = vmatprep.subr.bf16.mxu0 %v4583
    %4766 = vmatpush1.bf16.msra.mxu0 %v4582
    %4767 = vmatprep.subr.bf16.mxu0 %v4587
    %4768 = vmatpush1.bf16.msra.mxu0 %v4586
    %4769 = vmatprep.subr.bf16.mxu0 %v4591
    %4770 = vmatpush1.bf16.msra.mxu0 %v4590
    %4771 = vmatprep.subr.bf16.mxu0 %v4595
    %4772 = vmatpush1.bf16.msra.mxu0 %v4594
    %4773 = vmatprep.subr.bf16.mxu0 %v4599
    %4774 = vmatpush1.bf16.msra.mxu0 %v4598
    %4775 = vmatprep.subr.bf16.mxu0 %v4603
    %4776 = vmatpush1.bf16.msra.mxu0 %v4602
    %4777 = vmatprep.subr.bf16.mxu0 %v4607
    %4778 = vmatpush1.bf16.msra.mxu0 %v4606
    %4779 = vmatprep.subr.bf16.mxu0 %v4611
    %4780 = vmatpush1.bf16.msra.mxu0 %v4610
    %4781 = vmatprep.subr.bf16.mxu0 %v4615
    %4782 = vmatpush1.bf16.msra.mxu0 %v4614
    %4783 = vmatprep.subr.bf16.mxu0 %v4619
    %4784 = vmatpush1.bf16.msra.mxu0 %v4618
    %4785 = vmatprep.subr.bf16.mxu0 %v4623
    %4786 = vmatpush1.bf16.msra.mxu0 %v4622
    %4787 = vmatprep.subr.bf16.mxu0 %v4627
    %4788 = vmatpush1.bf16.msra.mxu0 %v4626
    %4789 = vmatprep.subr.bf16.mxu0 %v4631
    %4790 = vmatpush1.bf16.msra.mxu0 %v4630
    %4791 = vmatprep.subr.bf16.mxu0 %v4635
    %4792 = vmatpush1.bf16.msra.mxu0 %v4634
    %4793 = vmatprep.subr.bf16.mxu0 %v4639
    %4794 = vmatpush1.bf16.msra.mxu0 %v4638
    %4795 = vmatprep.mubr.bf16.mxu0 %v4443
    %4796 = vmatmul.mubr.bf16.gmra.mrb[0].mxu0 %v4442
    %v4797 = vpop.f32.mrb[0].mxu0
    %v4798 = vadd.f32 %v4757, %v4797
    %v4799 = vpop.f32.mrb[0].mxu0
    %v4800 = vadd.f32 %v4759, %v4799
    %v4801 = vpop.f32.mrb[0].mxu0
    %v4802 = vpop.f32.mrb[0].mxu0
    %4803 = vdwg.mxu0
    %s4804 = scalar_lea.vmem [#allocation18], 4
    %v4805 = vld [vmem:[%s4804] ss:$8 sm:$0xf]
    %v4807 = vlaneseq
    %v4808 = vshrl.u32 %v4807, 7
    %v4809 = vsub.s32 0, %v4808
    %v4810 = vrot.slane %v4805, %v4809
    %v4811 = vlaneseq
    %v4812 = vshrl.u32 %v4811, 7
    %v4813 = vsub.s32 1, %v4812
    %v4814 = vrot.slane %v4805, %v4813
    %v4815 = vlaneseq
    %v4816 = vshrl.u32 %v4815, 7
    %v4817 = vsub.s32 2, %v4816
    %v4818 = vrot.slane %v4805, %v4817
    %v4819 = vlaneseq
    %v4820 = vshrl.u32 %v4819, 7
    %v4821 = vsub.s32 3, %v4820
    %v4822 = vrot.slane %v4805, %v4821
    %v4827 = vmul.f32 %v4716, %v4810
    %v4828 = vmul.f32 %v4718, %v4814
    %v4829 = vmul.f32 %v4798, %v4818
    %v4830 = vmul.f32 %v4800, %v4822
    %s4831 = scalar_lea.vmem [#allocation16], 4
    %v4832 = vld [vmem:[%s4831] ss:$8 sm:$0xf]
    %v4834 = vlaneseq
    %v4835 = vshrl.u32 %v4834, 7
    %v4836 = vsub.s32 0, %v4835
    %v4837 = vrot.slane %v4832, %v4836
    %v4838 = vlaneseq
    %v4839 = vshrl.u32 %v4838, 7
    %v4840 = vsub.s32 1, %v4839
    %v4841 = vrot.slane %v4832, %v4840
    %v4842 = vlaneseq
    %v4843 = vshrl.u32 %v4842, 7
    %v4844 = vsub.s32 2, %v4843
    %v4845 = vrot.slane %v4832, %v4844
    %v4846 = vlaneseq
    %v4847 = vshrl.u32 %v4846, 7
    %v4848 = vsub.s32 3, %v4847
    %v4849 = vrot.slane %v4832, %v4848
    %v4854 = vadd.f32 %v4827, %v4837
    %v4855 = vadd.f32 %v4828, %v4841
    %v4856 = vadd.f32 %v4829, %v4845
    %v4857 = vadd.f32 %v4830, %v4849
    %vm4858 = vcmp.ge.f32.partialorder %v4854, 0.0
    %vm4859 = vcmp.ge.f32.partialorder %v4855, 0.0
    %vm4860 = vcmp.ge.f32.partialorder %v4856, 0.0
    %vm4861 = vcmp.ge.f32.partialorder %v4857, 0.0
    %s4862 = sld [smem:[#allocation19 + $0x4]]
    %v4863 = vstv %s4862
    %v4864 = vmul.f32 %v4863, %v4854
    %v4865 = vmul.f32 %v4863, %v4855
    %v4866 = vmul.f32 %v4863, %v4856
    %v4867 = vmul.f32 %v4863, %v4857
    %v4868 = vsel %vm4858, %v4854, %v4864
    %v4869 = vsel %vm4859, %v4855, %v4865
    %v4870 = vsel %vm4860, %v4856, %v4866
    %v4871 = vsel %vm4861, %v4857, %v4867
    %v4872 = vpack.c.bf16 %v4868, %v4868
    %v4873 = vpack.c.bf16 %v4869, %v4869
    %v4874 = vpack.c.bf16 %v4870, %v4870
    %v4875 = vpack.c.bf16 %v4871, %v4871
    %s4876 = sshll.u32 %s4445, 4
    %4877 = dma.done %s139, %s4876
    %v4878 = vld [vmem:[#allocation7] sm:$0xff]
    %v4879 = vld [vmem:[#allocation7 + $0x8] sm:$0xff]
    %v4880 = vld [vmem:[#allocation7 + $0x10] sm:$0xff]
    %v4881 = vld [vmem:[#allocation7 + $0x18] sm:$0xff]
    %v4882 = vld [vmem:[#allocation7 + $0x20] sm:$0xff]
    %v4883 = vld [vmem:[#allocation7 + $0x28] sm:$0xff]
    %v4884 = vld [vmem:[#allocation7 + $0x30] sm:$0xff]
    %v4885 = vld [vmem:[#allocation7 + $0x38] sm:$0xff]
    %v4886 = vld [vmem:[#allocation7 + $0x40] sm:$0xff]
    %v4887 = vld [vmem:[#allocation7 + $0x48] sm:$0xff]
    %v4888 = vld [vmem:[#allocation7 + $0x50] sm:$0xff]
    %v4889 = vld [vmem:[#allocation7 + $0x58] sm:$0xff]
    %v4890 = vld [vmem:[#allocation7 + $0x60] sm:$0xff]
    %v4891 = vld [vmem:[#allocation7 + $0x68] sm:$0xff]
    %v4892 = vld [vmem:[#allocation7 + $0x70] sm:$0xff]
    %v4893 = vld [vmem:[#allocation7 + $0x78] sm:$0xff]
    %v4894 = vld [vmem:[#allocation7 + $0x80] sm:$0xff]
    %v4895 = vld [vmem:[#allocation7 + $0x88] sm:$0xff]
    %v4896 = vld [vmem:[#allocation7 + $0x90] sm:$0xff]
    %v4897 = vld [vmem:[#allocation7 + $0x98] sm:$0xff]
    %v4898 = vld [vmem:[#allocation7 + $0xa0] sm:$0xff]
    %v4899 = vld [vmem:[#allocation7 + $0xa8] sm:$0xff]
    %v4900 = vld [vmem:[#allocation7 + $0xb0] sm:$0xff]
    %v4901 = vld [vmem:[#allocation7 + $0xb8] sm:$0xff]
    %v4902 = vld [vmem:[#allocation7 + $0xc0] sm:$0xff]
    %v4903 = vld [vmem:[#allocation7 + $0xc8] sm:$0xff]
    %v4904 = vld [vmem:[#allocation7 + $0xd0] sm:$0xff]
    %v4905 = vld [vmem:[#allocation7 + $0xd8] sm:$0xff]
    %v4906 = vld [vmem:[#allocation7 + $0xe0] sm:$0xff]
    %v4907 = vld [vmem:[#allocation7 + $0xe8] sm:$0xff]
    %v4908 = vld [vmem:[#allocation7 + $0xf0] sm:$0xff]
    %v4909 = vld [vmem:[#allocation7 + $0xf8] sm:$0xff]
    %v4910 = vld [vmem:[#allocation7 + $0x100] sm:$0xff]
    %v4911 = vld [vmem:[#allocation7 + $0x108] sm:$0xff]
    %v4912 = vld [vmem:[#allocation7 + $0x110] sm:$0xff]
    %v4913 = vld [vmem:[#allocation7 + $0x118] sm:$0xff]
    %v4914 = vld [vmem:[#allocation7 + $0x120] sm:$0xff]
    %v4915 = vld [vmem:[#allocation7 + $0x128] sm:$0xff]
    %v4916 = vld [vmem:[#allocation7 + $0x130] sm:$0xff]
    %v4917 = vld [vmem:[#allocation7 + $0x138] sm:$0xff]
    %v4918 = vld [vmem:[#allocation7 + $0x140] sm:$0xff]
    %v4919 = vld [vmem:[#allocation7 + $0x148] sm:$0xff]
    %v4920 = vld [vmem:[#allocation7 + $0x150] sm:$0xff]
    %v4921 = vld [vmem:[#allocation7 + $0x158] sm:$0xff]
    %v4922 = vld [vmem:[#allocation7 + $0x160] sm:$0xff]
    %v4923 = vld [vmem:[#allocation7 + $0x168] sm:$0xff]
    %v4924 = vld [vmem:[#allocation7 + $0x170] sm:$0xff]
    %v4925 = vld [vmem:[#allocation7 + $0x178] sm:$0xff]
    %v4926 = vld [vmem:[#allocation7 + $0x180] sm:$0xff]
    %v4927 = vld [vmem:[#allocation7 + $0x188] sm:$0xff]
    %v4928 = vld [vmem:[#allocation7 + $0x190] sm:$0xff]
    %v4929 = vld [vmem:[#allocation7 + $0x198] sm:$0xff]
    %v4930 = vld [vmem:[#allocation7 + $0x1a0] sm:$0xff]
    %v4931 = vld [vmem:[#allocation7 + $0x1a8] sm:$0xff]
    %v4932 = vld [vmem:[#allocation7 + $0x1b0] sm:$0xff]
    %v4933 = vld [vmem:[#allocation7 + $0x1b8] sm:$0xff]
    %v4934 = vld [vmem:[#allocation7 + $0x1c0] sm:$0xff]
    %v4935 = vld [vmem:[#allocation7 + $0x1c8] sm:$0xff]
    %v4936 = vld [vmem:[#allocation7 + $0x1d0] sm:$0xff]
    %v4937 = vld [vmem:[#allocation7 + $0x1d8] sm:$0xff]
    %v4938 = vld [vmem:[#allocation7 + $0x1e0] sm:$0xff]
    %v4939 = vld [vmem:[#allocation7 + $0x1e8] sm:$0xff]
    %v4940 = vld [vmem:[#allocation7 + $0x1f0] sm:$0xff]
    %v4941 = vld [vmem:[#allocation7 + $0x1f8] sm:$0xff]
    %v4942 = vunpack.c.l.s8.bf16 %v4878
    %v4943 = vunpack.c.l.s8.bf16 %v4879
    %v4944 = vunpack.c.l.s8.bf16 %v4880
    %v4945 = vunpack.c.l.s8.bf16 %v4881
    %v4946 = vunpack.c.h.s8.bf16 %v4878
    %v4947 = vunpack.c.h.s8.bf16 %v4879
    %v4948 = vunpack.c.h.s8.bf16 %v4880
    %v4949 = vunpack.c.h.s8.bf16 %v4881
    %v4950 = vunpack.c.l.s8.bf16 %v4882
    %v4951 = vunpack.c.l.s8.bf16 %v4883
    %v4952 = vunpack.c.l.s8.bf16 %v4884
    %v4953 = vunpack.c.l.s8.bf16 %v4885
    %v4954 = vunpack.c.h.s8.bf16 %v4882
    %v4955 = vunpack.c.h.s8.bf16 %v4883
    %v4956 = vunpack.c.h.s8.bf16 %v4884
    %v4957 = vunpack.c.h.s8.bf16 %v4885
    %v4958 = vunpack.c.l.s8.bf16 %v4886
    %v4959 = vunpack.c.l.s8.bf16 %v4887
    %v4960 = vunpack.c.l.s8.bf16 %v4888
    %v4961 = vunpack.c.l.s8.bf16 %v4889
    %v4962 = vunpack.c.h.s8.bf16 %v4886
    %v4963 = vunpack.c.h.s8.bf16 %v4887
    %v4964 = vunpack.c.h.s8.bf16 %v4888
    %v4965 = vunpack.c.h.s8.bf16 %v4889
    %v4966 = vunpack.c.l.s8.bf16 %v4890
    %v4967 = vunpack.c.l.s8.bf16 %v4891
    %v4968 = vunpack.c.l.s8.bf16 %v4892
    %v4969 = vunpack.c.l.s8.bf16 %v4893
    %v4970 = vunpack.c.h.s8.bf16 %v4890
    %v4971 = vunpack.c.h.s8.bf16 %v4891
    %v4972 = vunpack.c.h.s8.bf16 %v4892
    %v4973 = vunpack.c.h.s8.bf16 %v4893
    %v4974 = vunpack.c.l.s8.bf16 %v4894
    %v4975 = vunpack.c.l.s8.bf16 %v4895
    %v4976 = vunpack.c.l.s8.bf16 %v4896
    %v4977 = vunpack.c.l.s8.bf16 %v4897
    %v4978 = vunpack.c.h.s8.bf16 %v4894
    %v4979 = vunpack.c.h.s8.bf16 %v4895
    %v4980 = vunpack.c.h.s8.bf16 %v4896
    %v4981 = vunpack.c.h.s8.bf16 %v4897
    %v4982 = vunpack.c.l.s8.bf16 %v4898
    %v4983 = vunpack.c.l.s8.bf16 %v4899
    %v4984 = vunpack.c.l.s8.bf16 %v4900
    %v4985 = vunpack.c.l.s8.bf16 %v4901
    %v4986 = vunpack.c.h.s8.bf16 %v4898
    %v4987 = vunpack.c.h.s8.bf16 %v4899
    %v4988 = vunpack.c.h.s8.bf16 %v4900
    %v4989 = vunpack.c.h.s8.bf16 %v4901
    %v4990 = vunpack.c.l.s8.bf16 %v4902
    %v4991 = vunpack.c.l.s8.bf16 %v4903
    %v4992 = vunpack.c.l.s8.bf16 %v4904
    %v4993 = vunpack.c.l.s8.bf16 %v4905
    %v4994 = vunpack.c.h.s8.bf16 %v4902
    %v4995 = vunpack.c.h.s8.bf16 %v4903
    %v4996 = vunpack.c.h.s8.bf16 %v4904
    %v4997 = vunpack.c.h.s8.bf16 %v4905
    %v4998 = vunpack.c.l.s8.bf16 %v4906
    %v4999 = vunpack.c.l.s8.bf16 %v4907
    %v5000 = vunpack.c.l.s8.bf16 %v4908
    %v5001 = vunpack.c.l.s8.bf16 %v4909
    %v5002 = vunpack.c.h.s8.bf16 %v4906
    %v5003 = vunpack.c.h.s8.bf16 %v4907
    %v5004 = vunpack.c.h.s8.bf16 %v4908
    %v5005 = vunpack.c.h.s8.bf16 %v4909
    %v5006 = vunpack.c.l.s8.bf16 %v4910
    %v5007 = vunpack.c.l.s8.bf16 %v4911
    %v5008 = vunpack.c.l.s8.bf16 %v4912
    %v5009 = vunpack.c.l.s8.bf16 %v4913
    %v5010 = vunpack.c.h.s8.bf16 %v4910
    %v5011 = vunpack.c.h.s8.bf16 %v4911
    %v5012 = vunpack.c.h.s8.bf16 %v4912
    %v5013 = vunpack.c.h.s8.bf16 %v4913
    %v5014 = vunpack.c.l.s8.bf16 %v4914
    %v5015 = vunpack.c.l.s8.bf16 %v4915
    %v5016 = vunpack.c.l.s8.bf16 %v4916
    %v5017 = vunpack.c.l.s8.bf16 %v4917
    %v5018 = vunpack.c.h.s8.bf16 %v4914
    %v5019 = vunpack.c.h.s8.bf16 %v4915
    %v5020 = vunpack.c.h.s8.bf16 %v4916
    %v5021 = vunpack.c.h.s8.bf16 %v4917
    %v5022 = vunpack.c.l.s8.bf16 %v4918
    %v5023 = vunpack.c.l.s8.bf16 %v4919
    %v5024 = vunpack.c.l.s8.bf16 %v4920
    %v5025 = vunpack.c.l.s8.bf16 %v4921
    %v5026 = vunpack.c.h.s8.bf16 %v4918
    %v5027 = vunpack.c.h.s8.bf16 %v4919
    %v5028 = vunpack.c.h.s8.bf16 %v4920
    %v5029 = vunpack.c.h.s8.bf16 %v4921
    %v5030 = vunpack.c.l.s8.bf16 %v4922
    %v5031 = vunpack.c.l.s8.bf16 %v4923
    %v5032 = vunpack.c.l.s8.bf16 %v4924
    %v5033 = vunpack.c.l.s8.bf16 %v4925
    %v5034 = vunpack.c.h.s8.bf16 %v4922
    %v5035 = vunpack.c.h.s8.bf16 %v4923
    %v5036 = vunpack.c.h.s8.bf16 %v4924
    %v5037 = vunpack.c.h.s8.bf16 %v4925
    %v5038 = vunpack.c.l.s8.bf16 %v4926
    %v5039 = vunpack.c.l.s8.bf16 %v4927
    %v5040 = vunpack.c.l.s8.bf16 %v4928
    %v5041 = vunpack.c.l.s8.bf16 %v4929
    %v5042 = vunpack.c.h.s8.bf16 %v4926
    %v5043 = vunpack.c.h.s8.bf16 %v4927
    %v5044 = vunpack.c.h.s8.bf16 %v4928
    %v5045 = vunpack.c.h.s8.bf16 %v4929
    %v5046 = vunpack.c.l.s8.bf16 %v4930
    %v5047 = vunpack.c.l.s8.bf16 %v4931
    %v5048 = vunpack.c.l.s8.bf16 %v4932
    %v5049 = vunpack.c.l.s8.bf16 %v4933
    %v5050 = vunpack.c.h.s8.bf16 %v4930
    %v5051 = vunpack.c.h.s8.bf16 %v4931
    %v5052 = vunpack.c.h.s8.bf16 %v4932
    %v5053 = vunpack.c.h.s8.bf16 %v4933
    %v5054 = vunpack.c.l.s8.bf16 %v4934
    %v5055 = vunpack.c.l.s8.bf16 %v4935
    %v5056 = vunpack.c.l.s8.bf16 %v4936
    %v5057 = vunpack.c.l.s8.bf16 %v4937
    %v5058 = vunpack.c.h.s8.bf16 %v4934
    %v5059 = vunpack.c.h.s8.bf16 %v4935
    %v5060 = vunpack.c.h.s8.bf16 %v4936
    %v5061 = vunpack.c.h.s8.bf16 %v4937
    %v5062 = vunpack.c.l.s8.bf16 %v4938
    %v5063 = vunpack.c.l.s8.bf16 %v4939
    %v5064 = vunpack.c.l.s8.bf16 %v4940
    %v5065 = vunpack.c.l.s8.bf16 %v4941
    %v5066 = vunpack.c.h.s8.bf16 %v4938
    %v5067 = vunpack.c.h.s8.bf16 %v4939
    %v5068 = vunpack.c.h.s8.bf16 %v4940
    %v5069 = vunpack.c.h.s8.bf16 %v4941
    %5070 = vmatprep.subr.bf16.mxu0 %v4943
    %5071 = vmatpush1.bf16.msra.mxu0 %v4942
    %5072 = vmatprep.subr.bf16.mxu0 %v4947
    %5073 = vmatpush1.bf16.msra.mxu0 %v4946
    %5074 = vmatprep.subr.bf16.mxu0 %v4951
    %5075 = vmatpush1.bf16.msra.mxu0 %v4950
    %5076 = vmatprep.subr.bf16.mxu0 %v4955
    %5077 = vmatpush1.bf16.msra.mxu0 %v4954
    %5078 = vmatprep.subr.bf16.mxu0 %v4959
    %5079 = vmatpush1.bf16.msra.mxu0 %v4958
    %5080 = vmatprep.subr.bf16.mxu0 %v4963
    %5081 = vmatpush1.bf16.msra.mxu0 %v4962
    %5082 = vmatprep.subr.bf16.mxu0 %v4967
    %5083 = vmatpush1.bf16.msra.mxu0 %v4966
    %5084 = vmatprep.subr.bf16.mxu0 %v4971
    %5085 = vmatpush1.bf16.msra.mxu0 %v4970
    %5086 = vmatprep.subr.bf16.mxu0 %v4975
    %5087 = vmatpush1.bf16.msra.mxu0 %v4974
    %5088 = vmatprep.subr.bf16.mxu0 %v4979
    %5089 = vmatpush1.bf16.msra.mxu0 %v4978
    %5090 = vmatprep.subr.bf16.mxu0 %v4983
    %5091 = vmatpush1.bf16.msra.mxu0 %v4982
    %5092 = vmatprep.subr.bf16.mxu0 %v4987
    %5093 = vmatpush1.bf16.msra.mxu0 %v4986
    %5094 = vmatprep.subr.bf16.mxu0 %v4991
    %5095 = vmatpush1.bf16.msra.mxu0 %v4990
    %5096 = vmatprep.subr.bf16.mxu0 %v4995
    %5097 = vmatpush1.bf16.msra.mxu0 %v4994
    %5098 = vmatprep.subr.bf16.mxu0 %v4999
    %5099 = vmatpush1.bf16.msra.mxu0 %v4998
    %5100 = vmatprep.subr.bf16.mxu0 %v5003
    %5101 = vmatpush1.bf16.msra.mxu0 %v5002
    %5102 = vmatprep.mubr.bf16.mxu0 %v4873
    %5103 = vmatmul.mubr.bf16.gmra.mrb[0].mxu0 %v4872
    %v5104 = vpop.f32.mrb[0].mxu0
    %v5105 = vadd.f32 0.0, %v5104
    %v5106 = vpop.f32.mrb[0].mxu0
    %v5107 = vadd.f32 0.0, %v5106
    %v5108 = vpop.f32.mrb[0].mxu0
    %v5109 = vpop.f32.mrb[0].mxu0
    %5110 = vdwg.mxu0
    %5111 = vmatprep.subr.bf16.mxu0 %v5007
    %5112 = vmatpush1.bf16.msra.mxu0 %v5006
    %5113 = vmatprep.subr.bf16.mxu0 %v5011
    %5114 = vmatpush1.bf16.msra.mxu0 %v5010
    %5115 = vmatprep.subr.bf16.mxu0 %v5015
    %5116 = vmatpush1.bf16.msra.mxu0 %v5014
    %5117 = vmatprep.subr.bf16.mxu0 %v5019
    %5118 = vmatpush1.bf16.msra.mxu0 %v5018
    %5119 = vmatprep.subr.bf16.mxu0 %v5023
    %5120 = vmatpush1.bf16.msra.mxu0 %v5022
    %5121 = vmatprep.subr.bf16.mxu0 %v5027
    %5122 = vmatpush1.bf16.msra.mxu0 %v5026
    %5123 = vmatprep.subr.bf16.mxu0 %v5031
    %5124 = vmatpush1.bf16.msra.mxu0 %v5030
    %5125 = vmatprep.subr.bf16.mxu0 %v5035
    %5126 = vmatpush1.bf16.msra.mxu0 %v5034
    %5127 = vmatprep.subr.bf16.mxu0 %v5039
    %5128 = vmatpush1.bf16.msra.mxu0 %v5038
    %5129 = vmatprep.subr.bf16.mxu0 %v5043
    %5130 = vmatpush1.bf16.msra.mxu0 %v5042
    %5131 = vmatprep.subr.bf16.mxu0 %v5047
    %5132 = vmatpush1.bf16.msra.mxu0 %v5046
    %5133 = vmatprep.subr.bf16.mxu0 %v5051
    %5134 = vmatpush1.bf16.msra.mxu0 %v5050
    %5135 = vmatprep.subr.bf16.mxu0 %v5055
    %5136 = vmatpush1.bf16.msra.mxu0 %v5054
    %5137 = vmatprep.subr.bf16.mxu0 %v5059
    %5138 = vmatpush1.bf16.msra.mxu0 %v5058
    %5139 = vmatprep.subr.bf16.mxu0 %v5063
    %5140 = vmatpush1.bf16.msra.mxu0 %v5062
    %5141 = vmatprep.subr.bf16.mxu0 %v5067
    %5142 = vmatpush1.bf16.msra.mxu0 %v5066
    %5143 = vmatprep.mubr.bf16.mxu0 %v4875
    %5144 = vmatmul.mubr.bf16.gmra.mrb[0].mxu0 %v4874
    %v5145 = vpop.f32.mrb[0].mxu0
    %v5146 = vadd.f32 %v5105, %v5145
    %v5147 = vpop.f32.mrb[0].mxu0
    %v5148 = vadd.f32 %v5107, %v5147
    %v5149 = vpop.f32.mrb[0].mxu0
    %v5150 = vpop.f32.mrb[0].mxu0
    %5151 = vdwg.mxu0
    %5152 = vmatprep.subr.bf16.mxu0 %v4945
    %5153 = vmatpush1.bf16.msra.mxu0 %v4944
    %5154 = vmatprep.subr.bf16.mxu0 %v4949
    %5155 = vmatpush1.bf16.msra.mxu0 %v4948
    %5156 = vmatprep.subr.bf16.mxu0 %v4953
    %5157 = vmatpush1.bf16.msra.mxu0 %v4952
    %5158 = vmatprep.subr.bf16.mxu0 %v4957
    %5159 = vmatpush1.bf16.msra.mxu0 %v4956
    %5160 = vmatprep.subr.bf16.mxu0 %v4961
    %5161 = vmatpush1.bf16.msra.mxu0 %v4960
    %5162 = vmatprep.subr.bf16.mxu0 %v4965
    %5163 = vmatpush1.bf16.msra.mxu0 %v4964
    %5164 = vmatprep.subr.bf16.mxu0 %v4969
    %5165 = vmatpush1.bf16.msra.mxu0 %v4968
    %5166 = vmatprep.subr.bf16.mxu0 %v4973
    %5167 = vmatpush1.bf16.msra.mxu0 %v4972
    %5168 = vmatprep.subr.bf16.mxu0 %v4977
    %5169 = vmatpush1.bf16.msra.mxu0 %v4976
    %5170 = vmatprep.subr.bf16.mxu0 %v4981
    %5171 = vmatpush1.bf16.msra.mxu0 %v4980
    %5172 = vmatprep.subr.bf16.mxu0 %v4985
    %5173 = vmatpush1.bf16.msra.mxu0 %v4984
    %5174 = vmatprep.subr.bf16.mxu0 %v4989
    %5175 = vmatpush1.bf16.msra.mxu0 %v4988
    %5176 = vmatprep.subr.bf16.mxu0 %v4993
    %5177 = vmatpush1.bf16.msra.mxu0 %v4992
    %5178 = vmatprep.subr.bf16.mxu0 %v4997
    %5179 = vmatpush1.bf16.msra.mxu0 %v4996
    %5180 = vmatprep.subr.bf16.mxu0 %v5001
    %5181 = vmatpush1.bf16.msra.mxu0 %v5000
    %5182 = vmatprep.subr.bf16.mxu0 %v5005
    %5183 = vmatpush1.bf16.msra.mxu0 %v5004
    %5184 = vmatprep.mubr.bf16.mxu0 %v4873
    %5185 = vmatmul.mubr.bf16.gmra.mrb[0].mxu0 %v4872
    %v5186 = vpop.f32.mrb[0].mxu0
    %v5187 = vadd.f32 0.0, %v5186
    %v5188 = vpop.f32.mrb[0].mxu0
    %v5189 = vadd.f32 0.0, %v5188
    %v5190 = vpop.f32.mrb[0].mxu0
    %v5191 = vpop.f32.mrb[0].mxu0
    %5192 = vdwg.mxu0
    %5193 = vmatprep.subr.bf16.mxu0 %v5009
    %5194 = vmatpush1.bf16.msra.mxu0 %v5008
    %5195 = vmatprep.subr.bf16.mxu0 %v5013
    %5196 = vmatpush1.bf16.msra.mxu0 %v5012
    %5197 = vmatprep.subr.bf16.mxu0 %v5017
    %5198 = vmatpush1.bf16.msra.mxu0 %v5016
    %5199 = vmatprep.subr.bf16.mxu0 %v5021
    %5200 = vmatpush1.bf16.msra.mxu0 %v5020
    %5201 = vmatprep.subr.bf16.mxu0 %v5025
    %5202 = vmatpush1.bf16.msra.mxu0 %v5024
    %5203 = vmatprep.subr.bf16.mxu0 %v5029
    %5204 = vmatpush1.bf16.msra.mxu0 %v5028
    %5205 = vmatprep.subr.bf16.mxu0 %v5033
    %5206 = vmatpush1.bf16.msra.mxu0 %v5032
    %5207 = vmatprep.subr.bf16.mxu0 %v5037
    %5208 = vmatpush1.bf16.msra.mxu0 %v5036
    %5209 = vmatprep.subr.bf16.mxu0 %v5041
    %5210 = vmatpush1.bf16.msra.mxu0 %v5040
    %5211 = vmatprep.subr.bf16.mxu0 %v5045
    %5212 = vmatpush1.bf16.msra.mxu0 %v5044
    %5213 = vmatprep.subr.bf16.mxu0 %v5049
    %5214 = vmatpush1.bf16.msra.mxu0 %v5048
    %5215 = vmatprep.subr.bf16.mxu0 %v5053
    %5216 = vmatpush1.bf16.msra.mxu0 %v5052
    %5217 = vmatprep.subr.bf16.mxu0 %v5057
    %5218 = vmatpush1.bf16.msra.mxu0 %v5056
    %5219 = vmatprep.subr.bf16.mxu0 %v5061
    %5220 = vmatpush1.bf16.msra.mxu0 %v5060
    %5221 = vmatprep.subr.bf16.mxu0 %v5065
    %5222 = vmatpush1.bf16.msra.mxu0 %v5064
    %5223 = vmatprep.subr.bf16.mxu0 %v5069
    %5224 = vmatpush1.bf16.msra.mxu0 %v5068
    %5225 = vmatprep.mubr.bf16.mxu0 %v4875
    %5226 = vmatmul.mubr.bf16.gmra.mrb[0].mxu0 %v4874
    %v5227 = vpop.f32.mrb[0].mxu0
    %v5228 = vadd.f32 %v5187, %v5227
    %v5229 = vpop.f32.mrb[0].mxu0
    %v5230 = vadd.f32 %v5189, %v5229
    %v5231 = vpop.f32.mrb[0].mxu0
    %v5232 = vpop.f32.mrb[0].mxu0
    %5233 = vdwg.mxu0
    %s5234 = scalar_lea.vmem [#allocation18], 5
    %v5235 = vld [vmem:[%s5234] ss:$8 sm:$0xf]
    %v5237 = vlaneseq
    %v5238 = vshrl.u32 %v5237, 7
    %v5239 = vsub.s32 0, %v5238
    %v5240 = vrot.slane %v5235, %v5239
    %v5241 = vlaneseq
    %v5242 = vshrl.u32 %v5241, 7
    %v5243 = vsub.s32 1, %v5242
    %v5244 = vrot.slane %v5235, %v5243
    %v5245 = vlaneseq
    %v5246 = vshrl.u32 %v5245, 7
    %v5247 = vsub.s32 2, %v5246
    %v5248 = vrot.slane %v5235, %v5247
    %v5249 = vlaneseq
    %v5250 = vshrl.u32 %v5249, 7
    %v5251 = vsub.s32 3, %v5250
    %v5252 = vrot.slane %v5235, %v5251
    %v5257 = vmul.f32 %v5146, %v5240
    %v5258 = vmul.f32 %v5148, %v5244
    %v5259 = vmul.f32 %v5228, %v5248
    %v5260 = vmul.f32 %v5230, %v5252
    %s5261 = scalar_lea.vmem [#allocation16], 5
    %v5262 = vld [vmem:[%s5261] ss:$8 sm:$0xf]
    %v5264 = vlaneseq
    %v5265 = vshrl.u32 %v5264, 7
    %v5266 = vsub.s32 0, %v5265
    %v5267 = vrot.slane %v5262, %v5266
    %v5268 = vlaneseq
    %v5269 = vshrl.u32 %v5268, 7
    %v5270 = vsub.s32 1, %v5269
    %v5271 = vrot.slane %v5262, %v5270
    %v5272 = vlaneseq
    %v5273 = vshrl.u32 %v5272, 7
    %v5274 = vsub.s32 2, %v5273
    %v5275 = vrot.slane %v5262, %v5274
    %v5276 = vlaneseq
    %v5277 = vshrl.u32 %v5276, 7
    %v5278 = vsub.s32 3, %v5277
    %v5279 = vrot.slane %v5262, %v5278
    %v5284 = vadd.f32 %v5257, %v5267
    %v5285 = vadd.f32 %v5258, %v5271
    %v5286 = vadd.f32 %v5259, %v5275
    %v5287 = vadd.f32 %v5260, %v5279
    %vm5288 = vcmp.ge.f32.partialorder %v5284, 0.0
    %vm5289 = vcmp.ge.f32.partialorder %v5285, 0.0
    %vm5290 = vcmp.ge.f32.partialorder %v5286, 0.0
    %vm5291 = vcmp.ge.f32.partialorder %v5287, 0.0
    %s5292 = sld [smem:[#allocation19 + $0x5]]
    %v5293 = vstv %s5292
    %v5294 = vmul.f32 %v5293, %v5284
    %v5295 = vmul.f32 %v5293, %v5285
    %v5296 = vmul.f32 %v5293, %v5286
    %v5297 = vmul.f32 %v5293, %v5287
    %v5298 = vsel %vm5288, %v5284, %v5294
    %v5299 = vsel %vm5289, %v5285, %v5295
    %v5300 = vsel %vm5290, %v5286, %v5296
    %v5301 = vsel %vm5291, %v5287, %v5297
    %v5302 = vpack.c.bf16 %v5298, %v5298
    %v5303 = vpack.c.bf16 %v5299, %v5299
    %v5304 = vpack.c.bf16 %v5300, %v5300
    %v5305 = vpack.c.bf16 %v5301, %v5301
    %s5306 = sshll.u32 %s4445, 4
    %5307 = dma.done %s151, %s5306
    %v5308 = vld [vmem:[#allocation8] sm:$0xff]
    %v5309 = vld [vmem:[#allocation8 + $0x8] sm:$0xff]
    %v5310 = vld [vmem:[#allocation8 + $0x10] sm:$0xff]
    %v5311 = vld [vmem:[#allocation8 + $0x18] sm:$0xff]
    %v5312 = vld [vmem:[#allocation8 + $0x20] sm:$0xff]
    %v5313 = vld [vmem:[#allocation8 + $0x28] sm:$0xff]
    %v5314 = vld [vmem:[#allocation8 + $0x30] sm:$0xff]
    %v5315 = vld [vmem:[#allocation8 + $0x38] sm:$0xff]
    %v5316 = vld [vmem:[#allocation8 + $0x40] sm:$0xff]
    %v5317 = vld [vmem:[#allocation8 + $0x48] sm:$0xff]
    %v5318 = vld [vmem:[#allocation8 + $0x50] sm:$0xff]
    %v5319 = vld [vmem:[#allocation8 + $0x58] sm:$0xff]
    %v5320 = vld [vmem:[#allocation8 + $0x60] sm:$0xff]
    %v5321 = vld [vmem:[#allocation8 + $0x68] sm:$0xff]
    %v5322 = vld [vmem:[#allocation8 + $0x70] sm:$0xff]
    %v5323 = vld [vmem:[#allocation8 + $0x78] sm:$0xff]
    %v5324 = vld [vmem:[#allocation8 + $0x80] sm:$0xff]
    %v5325 = vld [vmem:[#allocation8 + $0x88] sm:$0xff]
    %v5326 = vld [vmem:[#allocation8 + $0x90] sm:$0xff]
    %v5327 = vld [vmem:[#allocation8 + $0x98] sm:$0xff]
    %v5328 = vld [vmem:[#allocation8 + $0xa0] sm:$0xff]
    %v5329 = vld [vmem:[#allocation8 + $0xa8] sm:$0xff]
    %v5330 = vld [vmem:[#allocation8 + $0xb0] sm:$0xff]
    %v5331 = vld [vmem:[#allocation8 + $0xb8] sm:$0xff]
    %v5332 = vld [vmem:[#allocation8 + $0xc0] sm:$0xff]
    %v5333 = vld [vmem:[#allocation8 + $0xc8] sm:$0xff]
    %v5334 = vld [vmem:[#allocation8 + $0xd0] sm:$0xff]
    %v5335 = vld [vmem:[#allocation8 + $0xd8] sm:$0xff]
    %v5336 = vld [vmem:[#allocation8 + $0xe0] sm:$0xff]
    %v5337 = vld [vmem:[#allocation8 + $0xe8] sm:$0xff]
    %v5338 = vld [vmem:[#allocation8 + $0xf0] sm:$0xff]
    %v5339 = vld [vmem:[#allocation8 + $0xf8] sm:$0xff]
    %v5340 = vld [vmem:[#allocation8 + $0x100] sm:$0xff]
    %v5341 = vld [vmem:[#allocation8 + $0x108] sm:$0xff]
    %v5342 = vld [vmem:[#allocation8 + $0x110] sm:$0xff]
    %v5343 = vld [vmem:[#allocation8 + $0x118] sm:$0xff]
    %v5344 = vld [vmem:[#allocation8 + $0x120] sm:$0xff]
    %v5345 = vld [vmem:[#allocation8 + $0x128] sm:$0xff]
    %v5346 = vld [vmem:[#allocation8 + $0x130] sm:$0xff]
    %v5347 = vld [vmem:[#allocation8 + $0x138] sm:$0xff]
    %v5348 = vld [vmem:[#allocation8 + $0x140] sm:$0xff]
    %v5349 = vld [vmem:[#allocation8 + $0x148] sm:$0xff]
    %v5350 = vld [vmem:[#allocation8 + $0x150] sm:$0xff]
    %v5351 = vld [vmem:[#allocation8 + $0x158] sm:$0xff]
    %v5352 = vld [vmem:[#allocation8 + $0x160] sm:$0xff]
    %v5353 = vld [vmem:[#allocation8 + $0x168] sm:$0xff]
    %v5354 = vld [vmem:[#allocation8 + $0x170] sm:$0xff]
    %v5355 = vld [vmem:[#allocation8 + $0x178] sm:$0xff]
    %v5356 = vld [vmem:[#allocation8 + $0x180] sm:$0xff]
    %v5357 = vld [vmem:[#allocation8 + $0x188] sm:$0xff]
    %v5358 = vld [vmem:[#allocation8 + $0x190] sm:$0xff]
    %v5359 = vld [vmem:[#allocation8 + $0x198] sm:$0xff]
    %v5360 = vld [vmem:[#allocation8 + $0x1a0] sm:$0xff]
    %v5361 = vld [vmem:[#allocation8 + $0x1a8] sm:$0xff]
    %v5362 = vld [vmem:[#allocation8 + $0x1b0] sm:$0xff]
    %v5363 = vld [vmem:[#allocation8 + $0x1b8] sm:$0xff]
    %v5364 = vld [vmem:[#allocation8 + $0x1c0] sm:$0xff]
    %v5365 = vld [vmem:[#allocation8 + $0x1c8] sm:$0xff]
    %v5366 = vld [vmem:[#allocation8 + $0x1d0] sm:$0xff]
    %v5367 = vld [vmem:[#allocation8 + $0x1d8] sm:$0xff]
    %v5368 = vld [vmem:[#allocation8 + $0x1e0] sm:$0xff]
    %v5369 = vld [vmem:[#allocation8 + $0x1e8] sm:$0xff]
    %v5370 = vld [vmem:[#allocation8 + $0x1f0] sm:$0xff]
    %v5371 = vld [vmem:[#allocation8 + $0x1f8] sm:$0xff]
    %v5372 = vunpack.c.l.s8.bf16 %v5308
    %v5373 = vunpack.c.l.s8.bf16 %v5309
    %v5374 = vunpack.c.l.s8.bf16 %v5310
    %v5375 = vunpack.c.l.s8.bf16 %v5311
    %v5376 = vunpack.c.h.s8.bf16 %v5308
    %v5377 = vunpack.c.h.s8.bf16 %v5309
    %v5378 = vunpack.c.h.s8.bf16 %v5310
    %v5379 = vunpack.c.h.s8.bf16 %v5311
    %v5380 = vunpack.c.l.s8.bf16 %v5312
    %v5381 = vunpack.c.l.s8.bf16 %v5313
    %v5382 = vunpack.c.l.s8.bf16 %v5314
    %v5383 = vunpack.c.l.s8.bf16 %v5315
    %v5384 = vunpack.c.h.s8.bf16 %v5312
    %v5385 = vunpack.c.h.s8.bf16 %v5313
    %v5386 = vunpack.c.h.s8.bf16 %v5314
    %v5387 = vunpack.c.h.s8.bf16 %v5315
    %v5388 = vunpack.c.l.s8.bf16 %v5316
    %v5389 = vunpack.c.l.s8.bf16 %v5317
    %v5390 = vunpack.c.l.s8.bf16 %v5318
    %v5391 = vunpack.c.l.s8.bf16 %v5319
    %v5392 = vunpack.c.h.s8.bf16 %v5316
    %v5393 = vunpack.c.h.s8.bf16 %v5317
    %v5394 = vunpack.c.h.s8.bf16 %v5318
    %v5395 = vunpack.c.h.s8.bf16 %v5319
    %v5396 = vunpack.c.l.s8.bf16 %v5320
    %v5397 = vunpack.c.l.s8.bf16 %v5321
    %v5398 = vunpack.c.l.s8.bf16 %v5322
    %v5399 = vunpack.c.l.s8.bf16 %v5323
    %v5400 = vunpack.c.h.s8.bf16 %v5320
    %v5401 = vunpack.c.h.s8.bf16 %v5321
    %v5402 = vunpack.c.h.s8.bf16 %v5322
    %v5403 = vunpack.c.h.s8.bf16 %v5323
    %v5404 = vunpack.c.l.s8.bf16 %v5324
    %v5405 = vunpack.c.l.s8.bf16 %v5325
    %v5406 = vunpack.c.l.s8.bf16 %v5326
    %v5407 = vunpack.c.l.s8.bf16 %v5327
    %v5408 = vunpack.c.h.s8.bf16 %v5324
    %v5409 = vunpack.c.h.s8.bf16 %v5325
    %v5410 = vunpack.c.h.s8.bf16 %v5326
    %v5411 = vunpack.c.h.s8.bf16 %v5327
    %v5412 = vunpack.c.l.s8.bf16 %v5328
    %v5413 = vunpack.c.l.s8.bf16 %v5329
    %v5414 = vunpack.c.l.s8.bf16 %v5330
    %v5415 = vunpack.c.l.s8.bf16 %v5331
    %v5416 = vunpack.c.h.s8.bf16 %v5328
    %v5417 = vunpack.c.h.s8.bf16 %v5329
    %v5418 = vunpack.c.h.s8.bf16 %v5330
    %v5419 = vunpack.c.h.s8.bf16 %v5331
    %v5420 = vunpack.c.l.s8.bf16 %v5332
    %v5421 = vunpack.c.l.s8.bf16 %v5333
    %v5422 = vunpack.c.l.s8.bf16 %v5334
    %v5423 = vunpack.c.l.s8.bf16 %v5335
    %v5424 = vunpack.c.h.s8.bf16 %v5332
    %v5425 = vunpack.c.h.s8.bf16 %v5333
    %v5426 = vunpack.c.h.s8.bf16 %v5334
    %v5427 = vunpack.c.h.s8.bf16 %v5335
    %v5428 = vunpack.c.l.s8.bf16 %v5336
    %v5429 = vunpack.c.l.s8.bf16 %v5337
    %v5430 = vunpack.c.l.s8.bf16 %v5338
    %v5431 = vunpack.c.l.s8.bf16 %v5339
    %v5432 = vunpack.c.h.s8.bf16 %v5336
    %v5433 = vunpack.c.h.s8.bf16 %v5337
    %v5434 = vunpack.c.h.s8.bf16 %v5338
    %v5435 = vunpack.c.h.s8.bf16 %v5339
    %v5436 = vunpack.c.l.s8.bf16 %v5340
    %v5437 = vunpack.c.l.s8.bf16 %v5341
    %v5438 = vunpack.c.l.s8.bf16 %v5342
    %v5439 = vunpack.c.l.s8.bf16 %v5343
    %v5440 = vunpack.c.h.s8.bf16 %v5340
    %v5441 = vunpack.c.h.s8.bf16 %v5341
    %v5442 = vunpack.c.h.s8.bf16 %v5342
    %v5443 = vunpack.c.h.s8.bf16 %v5343
    %v5444 = vunpack.c.l.s8.bf16 %v5344
    %v5445 = vunpack.c.l.s8.bf16 %v5345
    %v5446 = vunpack.c.l.s8.bf16 %v5346
    %v5447 = vunpack.c.l.s8.bf16 %v5347
    %v5448 = vunpack.c.h.s8.bf16 %v5344
    %v5449 = vunpack.c.h.s8.bf16 %v5345
    %v5450 = vunpack.c.h.s8.bf16 %v5346
    %v5451 = vunpack.c.h.s8.bf16 %v5347
    %v5452 = vunpack.c.l.s8.bf16 %v5348
    %v5453 = vunpack.c.l.s8.bf16 %v5349
    %v5454 = vunpack.c.l.s8.bf16 %v5350
    %v5455 = vunpack.c.l.s8.bf16 %v5351
    %v5456 = vunpack.c.h.s8.bf16 %v5348
    %v5457 = vunpack.c.h.s8.bf16 %v5349
    %v5458 = vunpack.c.h.s8.bf16 %v5350
    %v5459 = vunpack.c.h.s8.bf16 %v5351
    %v5460 = vunpack.c.l.s8.bf16 %v5352
    %v5461 = vunpack.c.l.s8.bf16 %v5353
    %v5462 = vunpack.c.l.s8.bf16 %v5354
    %v5463 = vunpack.c.l.s8.bf16 %v5355
    %v5464 = vunpack.c.h.s8.bf16 %v5352
    %v5465 = vunpack.c.h.s8.bf16 %v5353
    %v5466 = vunpack.c.h.s8.bf16 %v5354
    %v5467 = vunpack.c.h.s8.bf16 %v5355
    %v5468 = vunpack.c.l.s8.bf16 %v5356
    %v5469 = vunpack.c.l.s8.bf16 %v5357
    %v5470 = vunpack.c.l.s8.bf16 %v5358
    %v5471 = vunpack.c.l.s8.bf16 %v5359
    %v5472 = vunpack.c.h.s8.bf16 %v5356
    %v5473 = vunpack.c.h.s8.bf16 %v5357
    %v5474 = vunpack.c.h.s8.bf16 %v5358
    %v5475 = vunpack.c.h.s8.bf16 %v5359
    %v5476 = vunpack.c.l.s8.bf16 %v5360
    %v5477 = vunpack.c.l.s8.bf16 %v5361
    %v5478 = vunpack.c.l.s8.bf16 %v5362
    %v5479 = vunpack.c.l.s8.bf16 %v5363
    %v5480 = vunpack.c.h.s8.bf16 %v5360
    %v5481 = vunpack.c.h.s8.bf16 %v5361
    %v5482 = vunpack.c.h.s8.bf16 %v5362
    %v5483 = vunpack.c.h.s8.bf16 %v5363
    %v5484 = vunpack.c.l.s8.bf16 %v5364
    %v5485 = vunpack.c.l.s8.bf16 %v5365
    %v5486 = vunpack.c.l.s8.bf16 %v5366
    %v5487 = vunpack.c.l.s8.bf16 %v5367
    %v5488 = vunpack.c.h.s8.bf16 %v5364
    %v5489 = vunpack.c.h.s8.bf16 %v5365
    %v5490 = vunpack.c.h.s8.bf16 %v5366
    %v5491 = vunpack.c.h.s8.bf16 %v5367
    %v5492 = vunpack.c.l.s8.bf16 %v5368
    %v5493 = vunpack.c.l.s8.bf16 %v5369
    %v5494 = vunpack.c.l.s8.bf16 %v5370
    %v5495 = vunpack.c.l.s8.bf16 %v5371
    %v5496 = vunpack.c.h.s8.bf16 %v5368
    %v5497 = vunpack.c.h.s8.bf16 %v5369
    %v5498 = vunpack.c.h.s8.bf16 %v5370
    %v5499 = vunpack.c.h.s8.bf16 %v5371
    %5500 = vmatprep.subr.bf16.mxu0 %v5373
    %5501 = vmatpush1.bf16.msra.mxu0 %v5372
    %5502 = vmatprep.subr.bf16.mxu0 %v5377
    %5503 = vmatpush1.bf16.msra.mxu0 %v5376
    %5504 = vmatprep.subr.bf16.mxu0 %v5381
    %5505 = vmatpush1.bf16.msra.mxu0 %v5380
    %5506 = vmatprep.subr.bf16.mxu0 %v5385
    %5507 = vmatpush1.bf16.msra.mxu0 %v5384
    %5508 = vmatprep.subr.bf16.mxu0 %v5389
    %5509 = vmatpush1.bf16.msra.mxu0 %v5388
    %5510 = vmatprep.subr.bf16.mxu0 %v5393
    %5511 = vmatpush1.bf16.msra.mxu0 %v5392
    %5512 = vmatprep.subr.bf16.mxu0 %v5397
    %5513 = vmatpush1.bf16.msra.mxu0 %v5396
    %5514 = vmatprep.subr.bf16.mxu0 %v5401
    %5515 = vmatpush1.bf16.msra.mxu0 %v5400
    %5516 = vmatprep.subr.bf16.mxu0 %v5405
    %5517 = vmatpush1.bf16.msra.mxu0 %v5404
    %5518 = vmatprep.subr.bf16.mxu0 %v5409
    %5519 = vmatpush1.bf16.msra.mxu0 %v5408
    %5520 = vmatprep.subr.bf16.mxu0 %v5413
    %5521 = vmatpush1.bf16.msra.mxu0 %v5412
    %5522 = vmatprep.subr.bf16.mxu0 %v5417
    %5523 = vmatpush1.bf16.msra.mxu0 %v5416
    %5524 = vmatprep.subr.bf16.mxu0 %v5421
    %5525 = vmatpush1.bf16.msra.mxu0 %v5420
    %5526 = vmatprep.subr.bf16.mxu0 %v5425
    %5527 = vmatpush1.bf16.msra.mxu0 %v5424
    %5528 = vmatprep.subr.bf16.mxu0 %v5429
    %5529 = vmatpush1.bf16.msra.mxu0 %v5428
    %5530 = vmatprep.subr.bf16.mxu0 %v5433
    %5531 = vmatpush1.bf16.msra.mxu0 %v5432
    %5532 = vmatprep.mubr.bf16.mxu0 %v5303
    %5533 = vmatmul.mubr.bf16.gmra.mrb[0].mxu0 %v5302
    %v5534 = vpop.f32.mrb[0].mxu0
    %v5535 = vadd.f32 0.0, %v5534
    %v5536 = vpop.f32.mrb[0].mxu0
    %v5537 = vadd.f32 0.0, %v5536
    %v5538 = vpop.f32.mrb[0].mxu0
    %v5539 = vpop.f32.mrb[0].mxu0
    %5540 = vdwg.mxu0
    %5541 = vmatprep.subr.bf16.mxu0 %v5437
    %5542 = vmatpush1.bf16.msra.mxu0 %v5436
    %5543 = vmatprep.subr.bf16.mxu0 %v5441
    %5544 = vmatpush1.bf16.msra.mxu0 %v5440
    %5545 = vmatprep.subr.bf16.mxu0 %v5445
    %5546 = vmatpush1.bf16.msra.mxu0 %v5444
    %5547 = vmatprep.subr.bf16.mxu0 %v5449
    %5548 = vmatpush1.bf16.msra.mxu0 %v5448
    %5549 = vmatprep.subr.bf16.mxu0 %v5453
    %5550 = vmatpush1.bf16.msra.mxu0 %v5452
    %5551 = vmatprep.subr.bf16.mxu0 %v5457
    %5552 = vmatpush1.bf16.msra.mxu0 %v5456
    %5553 = vmatprep.subr.bf16.mxu0 %v5461
    %5554 = vmatpush1.bf16.msra.mxu0 %v5460
    %5555 = vmatprep.subr.bf16.mxu0 %v5465
    %5556 = vmatpush1.bf16.msra.mxu0 %v5464
    %5557 = vmatprep.subr.bf16.mxu0 %v5469
    %5558 = vmatpush1.bf16.msra.mxu0 %v5468
    %5559 = vmatprep.subr.bf16.mxu0 %v5473
    %5560 = vmatpush1.bf16.msra.mxu0 %v5472
    %5561 = vmatprep.subr.bf16.mxu0 %v5477
    %5562 = vmatpush1.bf16.msra.mxu0 %v5476
    %5563 = vmatprep.subr.bf16.mxu0 %v5481
    %5564 = vmatpush1.bf16.msra.mxu0 %v5480
    %5565 = vmatprep.subr.bf16.mxu0 %v5485
    %5566 = vmatpush1.bf16.msra.mxu0 %v5484
    %5567 = vmatprep.subr.bf16.mxu0 %v5489
    %5568 = vmatpush1.bf16.msra.mxu0 %v5488
    %5569 = vmatprep.subr.bf16.mxu0 %v5493
    %5570 = vmatpush1.bf16.msra.mxu0 %v5492
    %5571 = vmatprep.subr.bf16.mxu0 %v5497
    %5572 = vmatpush1.bf16.msra.mxu0 %v5496
    %5573 = vmatprep.mubr.bf16.mxu0 %v5305
    %5574 = vmatmul.mubr.bf16.gmra.mrb[0].mxu0 %v5304
    %v5575 = vpop.f32.mrb[0].mxu0
    %v5576 = vadd.f32 %v5535, %v5575
    %v5577 = vpop.f32.mrb[0].mxu0
    %v5578 = vadd.f32 %v5537, %v5577
    %v5579 = vpop.f32.mrb[0].mxu0
    %v5580 = vpop.f32.mrb[0].mxu0
    %5581 = vdwg.mxu0
    %5582 = vmatprep.subr.bf16.mxu0 %v5375
    %5583 = vmatpush1.bf16.msra.mxu0 %v5374
    %5584 = vmatprep.subr.bf16.mxu0 %v5379
    %5585 = vmatpush1.bf16.msra.mxu0 %v5378
    %5586 = vmatprep.subr.bf16.mxu0 %v5383
    %5587 = vmatpush1.bf16.msra.mxu0 %v5382
    %5588 = vmatprep.subr.bf16.mxu0 %v5387
    %5589 = vmatpush1.bf16.msra.mxu0 %v5386
    %5590 = vmatprep.subr.bf16.mxu0 %v5391
    %5591 = vmatpush1.bf16.msra.mxu0 %v5390
    %5592 = vmatprep.subr.bf16.mxu0 %v5395
    %5593 = vmatpush1.bf16.msra.mxu0 %v5394
    %5594 = vmatprep.subr.bf16.mxu0 %v5399
    %5595 = vmatpush1.bf16.msra.mxu0 %v5398
    %5596 = vmatprep.subr.bf16.mxu0 %v5403
    %5597 = vmatpush1.bf16.msra.mxu0 %v5402
    %5598 = vmatprep.subr.bf16.mxu0 %v5407
    %5599 = vmatpush1.bf16.msra.mxu0 %v5406
    %5600 = vmatprep.subr.bf16.mxu0 %v5411
    %5601 = vmatpush1.bf16.msra.mxu0 %v5410
    %5602 = vmatprep.subr.bf16.mxu0 %v5415
    %5603 = vmatpush1.bf16.msra.mxu0 %v5414
    %5604 = vmatprep.subr.bf16.mxu0 %v5419
    %5605 = vmatpush1.bf16.msra.mxu0 %v5418
    %5606 = vmatprep.subr.bf16.mxu0 %v5423
    %5607 = vmatpush1.bf16.msra.mxu0 %v5422
    %5608 = vmatprep.subr.bf16.mxu0 %v5427
    %5609 = vmatpush1.bf16.msra.mxu0 %v5426
    %5610 = vmatprep.subr.bf16.mxu0 %v5431
    %5611 = vmatpush1.bf16.msra.mxu0 %v5430
    %5612 = vmatprep.subr.bf16.mxu0 %v5435
    %5613 = vmatpush1.bf16.msra.mxu0 %v5434
    %5614 = vmatprep.mubr.bf16.mxu0 %v5303
    %5615 = vmatmul.mubr.bf16.gmra.mrb[0].mxu0 %v5302
    %v5616 = vpop.f32.mrb[0].mxu0
    %v5617 = vadd.f32 0.0, %v5616
    %v5618 = vpop.f32.mrb[0].mxu0
    %v5619 = vadd.f32 0.0, %v5618
    %v5620 = vpop.f32.mrb[0].mxu0
    %v5621 = vpop.f32.mrb[0].mxu0
    %5622 = vdwg.mxu0
    %5623 = vmatprep.subr.bf16.mxu0 %v5439
    %5624 = vmatpush1.bf16.msra.mxu0 %v5438
    %5625 = vmatprep.subr.bf16.mxu0 %v5443
    %5626 = vmatpush1.bf16.msra.mxu0 %v5442
    %5627 = vmatprep.subr.bf16.mxu0 %v5447
    %5628 = vmatpush1.bf16.msra.mxu0 %v5446
    %5629 = vmatprep.subr.bf16.mxu0 %v5451
    %5630 = vmatpush1.bf16.msra.mxu0 %v5450
    %5631 = vmatprep.subr.bf16.mxu0 %v5455
    %5632 = vmatpush1.bf16.msra.mxu0 %v5454
    %5633 = vmatprep.subr.bf16.mxu0 %v5459
    %5634 = vmatpush1.bf16.msra.mxu0 %v5458
    %5635 = vmatprep.subr.bf16.mxu0 %v5463
    %5636 = vmatpush1.bf16.msra.mxu0 %v5462
    %5637 = vmatprep.subr.bf16.mxu0 %v5467
    %5638 = vmatpush1.bf16.msra.mxu0 %v5466
    %5639 = vmatprep.subr.bf16.mxu0 %v5471
    %5640 = vmatpush1.bf16.msra.mxu0 %v5470
    %5641 = vmatprep.subr.bf16.mxu0 %v5475
    %5642 = vmatpush1.bf16.msra.mxu0 %v5474
    %5643 = vmatprep.subr.bf16.mxu0 %v5479
    %5644 = vmatpush1.bf16.msra.mxu0 %v5478
    %5645 = vmatprep.subr.bf16.mxu0 %v5483
    %5646 = vmatpush1.bf16.msra.mxu0 %v5482
    %5647 = vmatprep.subr.bf16.mxu0 %v5487
    %5648 = vmatpush1.bf16.msra.mxu0 %v5486
    %5649 = vmatprep.subr.bf16.mxu0 %v5491
    %5650 = vmatpush1.bf16.msra.mxu0 %v5490
    %5651 = vmatprep.subr.bf16.mxu0 %v5495
    %5652 = vmatpush1.bf16.msra.mxu0 %v5494
    %5653 = vmatprep.subr.bf16.mxu0 %v5499
    %5654 = vmatpush1.bf16.msra.mxu0 %v5498
    %5655 = vmatprep.mubr.bf16.mxu0 %v5305
    %5656 = vmatmul.mubr.bf16.gmra.mrb[0].mxu0 %v5304
    %v5657 = vpop.f32.mrb[0].mxu0
    %v5658 = vadd.f32 %v5617, %v5657
    %v5659 = vpop.f32.mrb[0].mxu0
    %v5660 = vadd.f32 %v5619, %v5659
    %v5661 = vpop.f32.mrb[0].mxu0
    %v5662 = vpop.f32.mrb[0].mxu0
    %5663 = vdwg.mxu0
    %s5664 = scalar_lea.vmem [#allocation18], 6
    %v5665 = vld [vmem:[%s5664] ss:$8 sm:$0xf]
    %v5667 = vlaneseq
    %v5668 = vshrl.u32 %v5667, 7
    %v5669 = vsub.s32 0, %v5668
    %v5670 = vrot.slane %v5665, %v5669
    %v5671 = vlaneseq
    %v5672 = vshrl.u32 %v5671, 7
    %v5673 = vsub.s32 1, %v5672
    %v5674 = vrot.slane %v5665, %v5673
    %v5675 = vlaneseq
    %v5676 = vshrl.u32 %v5675, 7
    %v5677 = vsub.s32 2, %v5676
    %v5678 = vrot.slane %v5665, %v5677
    %v5679 = vlaneseq
    %v5680 = vshrl.u32 %v5679, 7
    %v5681 = vsub.s32 3, %v5680
    %v5682 = vrot.slane %v5665, %v5681
    %v5687 = vmul.f32 %v5576, %v5670
    %v5688 = vmul.f32 %v5578, %v5674
    %v5689 = vmul.f32 %v5658, %v5678
    %v5690 = vmul.f32 %v5660, %v5682
    %s5691 = scalar_lea.vmem [#allocation16], 6
    %v5692 = vld [vmem:[%s5691] ss:$8 sm:$0xf]
    %v5694 = vlaneseq
    %v5695 = vshrl.u32 %v5694, 7
    %v5696 = vsub.s32 0, %v5695
    %v5697 = vrot.slane %v5692, %v5696
    %v5698 = vlaneseq
    %v5699 = vshrl.u32 %v5698, 7
    %v5700 = vsub.s32 1, %v5699
    %v5701 = vrot.slane %v5692, %v5700
    %v5702 = vlaneseq
    %v5703 = vshrl.u32 %v5702, 7
    %v5704 = vsub.s32 2, %v5703
    %v5705 = vrot.slane %v5692, %v5704
    %v5706 = vlaneseq
    %v5707 = vshrl.u32 %v5706, 7
    %v5708 = vsub.s32 3, %v5707
    %v5709 = vrot.slane %v5692, %v5708
    %v5714 = vadd.f32 %v5687, %v5697
    %v5715 = vadd.f32 %v5688, %v5701
    %v5716 = vadd.f32 %v5689, %v5705
    %v5717 = vadd.f32 %v5690, %v5709
    %vm5718 = vcmp.ge.f32.partialorder %v5714, 0.0
    %vm5719 = vcmp.ge.f32.partialorder %v5715, 0.0
    %vm5720 = vcmp.ge.f32.partialorder %v5716, 0.0
    %vm5721 = vcmp.ge.f32.partialorder %v5717, 0.0
    %s5722 = sld [smem:[#allocation19 + $0x6]]
    %v5723 = vstv %s5722
    %v5724 = vmul.f32 %v5723, %v5714
    %v5725 = vmul.f32 %v5723, %v5715
    %v5726 = vmul.f32 %v5723, %v5716
    %v5727 = vmul.f32 %v5723, %v5717
    %v5728 = vsel %vm5718, %v5714, %v5724
    %v5729 = vsel %vm5719, %v5715, %v5725
    %v5730 = vsel %vm5720, %v5716, %v5726
    %v5731 = vsel %vm5721, %v5717, %v5727
    %v5732 = vpack.c.bf16 %v5728, %v5728
    %v5733 = vpack.c.bf16 %v5729, %v5729
    %v5734 = vpack.c.bf16 %v5730, %v5730
    %v5735 = vpack.c.bf16 %v5731, %v5731
    %s5736 = sshll.u32 %s4445, 4
    %5737 = dma.done %s163, %s5736
    %v5738 = vld [vmem:[#allocation9] sm:$0xff]
    %v5739 = vld [vmem:[#allocation9 + $0x8] sm:$0xff]
    %v5740 = vld [vmem:[#allocation9 + $0x10] sm:$0xff]
    %v5741 = vld [vmem:[#allocation9 + $0x18] sm:$0xff]
    %v5742 = vld [vmem:[#allocation9 + $0x20] sm:$0xff]
    %v5743 = vld [vmem:[#allocation9 + $0x28] sm:$0xff]
    %v5744 = vld [vmem:[#allocation9 + $0x30] sm:$0xff]
    %v5745 = vld [vmem:[#allocation9 + $0x38] sm:$0xff]
    %v5746 = vld [vmem:[#allocation9 + $0x40] sm:$0xff]
    %v5747 = vld [vmem:[#allocation9 + $0x48] sm:$0xff]
    %v5748 = vld [vmem:[#allocation9 + $0x50] sm:$0xff]
    %v5749 = vld [vmem:[#allocation9 + $0x58] sm:$0xff]
    %v5750 = vld [vmem:[#allocation9 + $0x60] sm:$0xff]
    %v5751 = vld [vmem:[#allocation9 + $0x68] sm:$0xff]
    %v5752 = vld [vmem:[#allocation9 + $0x70] sm:$0xff]
    %v5753 = vld [vmem:[#allocation9 + $0x78] sm:$0xff]
    %v5754 = vld [vmem:[#allocation9 + $0x80] sm:$0xff]
    %v5755 = vld [vmem:[#allocation9 + $0x88] sm:$0xff]
    %v5756 = vld [vmem:[#allocation9 + $0x90] sm:$0xff]
    %v5757 = vld [vmem:[#allocation9 + $0x98] sm:$0xff]
    %v5758 = vld [vmem:[#allocation9 + $0xa0] sm:$0xff]
    %v5759 = vld [vmem:[#allocation9 + $0xa8] sm:$0xff]
    %v5760 = vld [vmem:[#allocation9 + $0xb0] sm:$0xff]
    %v5761 = vld [vmem:[#allocation9 + $0xb8] sm:$0xff]
    %v5762 = vld [vmem:[#allocation9 + $0xc0] sm:$0xff]
    %v5763 = vld [vmem:[#allocation9 + $0xc8] sm:$0xff]
    %v5764 = vld [vmem:[#allocation9 + $0xd0] sm:$0xff]
    %v5765 = vld [vmem:[#allocation9 + $0xd8] sm:$0xff]
    %v5766 = vld [vmem:[#allocation9 + $0xe0] sm:$0xff]
    %v5767 = vld [vmem:[#allocation9 + $0xe8] sm:$0xff]
    %v5768 = vld [vmem:[#allocation9 + $0xf0] sm:$0xff]
    %v5769 = vld [vmem:[#allocation9 + $0xf8] sm:$0xff]
    %v5770 = vld [vmem:[#allocation9 + $0x100] sm:$0xff]
    %v5771 = vld [vmem:[#allocation9 + $0x108] sm:$0xff]
    %v5772 = vld [vmem:[#allocation9 + $0x110] sm:$0xff]
    %v5773 = vld [vmem:[#allocation9 + $0x118] sm:$0xff]
    %v5774 = vld [vmem:[#allocation9 + $0x120] sm:$0xff]
    %v5775 = vld [vmem:[#allocation9 + $0x128] sm:$0xff]
    %v5776 = vld [vmem:[#allocation9 + $0x130] sm:$0xff]
    %v5777 = vld [vmem:[#allocation9 + $0x138] sm:$0xff]
    %v5778 = vld [vmem:[#allocation9 + $0x140] sm:$0xff]
    %v5779 = vld [vmem:[#allocation9 + $0x148] sm:$0xff]
    %v5780 = vld [vmem:[#allocation9 + $0x150] sm:$0xff]
    %v5781 = vld [vmem:[#allocation9 + $0x158] sm:$0xff]
    %v5782 = vld [vmem:[#allocation9 + $0x160] sm:$0xff]
    %v5783 = vld [vmem:[#allocation9 + $0x168] sm:$0xff]
    %v5784 = vld [vmem:[#allocation9 + $0x170] sm:$0xff]
    %v5785 = vld [vmem:[#allocation9 + $0x178] sm:$0xff]
    %v5786 = vld [vmem:[#allocation9 + $0x180] sm:$0xff]
    %v5787 = vld [vmem:[#allocation9 + $0x188] sm:$0xff]
    %v5788 = vld [vmem:[#allocation9 + $0x190] sm:$0xff]
    %v5789 = vld [vmem:[#allocation9 + $0x198] sm:$0xff]
    %v5790 = vld [vmem:[#allocation9 + $0x1a0] sm:$0xff]
    %v5791 = vld [vmem:[#allocation9 + $0x1a8] sm:$0xff]
    %v5792 = vld [vmem:[#allocation9 + $0x1b0] sm:$0xff]
    %v5793 = vld [vmem:[#allocation9 + $0x1b8] sm:$0xff]
    %v5794 = vld [vmem:[#allocation9 + $0x1c0] sm:$0xff]
    %v5795 = vld [vmem:[#allocation9 + $0x1c8] sm:$0xff]
    %v5796 = vld [vmem:[#allocation9 + $0x1d0] sm:$0xff]
    %v5797 = vld [vmem:[#allocation9 + $0x1d8] sm:$0xff]
    %v5798 = vld [vmem:[#allocation9 + $0x1e0] sm:$0xff]
    %v5799 = vld [vmem:[#allocation9 + $0x1e8] sm:$0xff]
    %v5800 = vld [vmem:[#allocation9 + $0x1f0] sm:$0xff]
    %v5801 = vld [vmem:[#allocation9 + $0x1f8] sm:$0xff]
    %v5802 = vunpack.c.l.s8.bf16 %v5738
    %v5803 = vunpack.c.l.s8.bf16 %v5739
    %v5804 = vunpack.c.l.s8.bf16 %v5740
    %v5805 = vunpack.c.l.s8.bf16 %v5741
    %v5806 = vunpack.c.h.s8.bf16 %v5738
    %v5807 = vunpack.c.h.s8.bf16 %v5739
    %v5808 = vunpack.c.h.s8.bf16 %v5740
    %v5809 = vunpack.c.h.s8.bf16 %v5741
    %v5810 = vunpack.c.l.s8.bf16 %v5742
    %v5811 = vunpack.c.l.s8.bf16 %v5743
    %v5812 = vunpack.c.l.s8.bf16 %v5744
    %v5813 = vunpack.c.l.s8.bf16 %v5745
    %v5814 = vunpack.c.h.s8.bf16 %v5742
    %v5815 = vunpack.c.h.s8.bf16 %v5743
    %v5816 = vunpack.c.h.s8.bf16 %v5744
    %v5817 = vunpack.c.h.s8.bf16 %v5745
    %v5818 = vunpack.c.l.s8.bf16 %v5746
    %v5819 = vunpack.c.l.s8.bf16 %v5747
    %v5820 = vunpack.c.l.s8.bf16 %v5748
    %v5821 = vunpack.c.l.s8.bf16 %v5749
    %v5822 = vunpack.c.h.s8.bf16 %v5746
    %v5823 = vunpack.c.h.s8.bf16 %v5747
    %v5824 = vunpack.c.h.s8.bf16 %v5748
    %v5825 = vunpack.c.h.s8.bf16 %v5749
    %v5826 = vunpack.c.l.s8.bf16 %v5750
    %v5827 = vunpack.c.l.s8.bf16 %v5751
    %v5828 = vunpack.c.l.s8.bf16 %v5752
    %v5829 = vunpack.c.l.s8.bf16 %v5753
    %v5830 = vunpack.c.h.s8.bf16 %v5750
    %v5831 = vunpack.c.h.s8.bf16 %v5751
    %v5832 = vunpack.c.h.s8.bf16 %v5752
    %v5833 = vunpack.c.h.s8.bf16 %v5753
    %v5834 = vunpack.c.l.s8.bf16 %v5754
    %v5835 = vunpack.c.l.s8.bf16 %v5755
    %v5836 = vunpack.c.l.s8.bf16 %v5756
    %v5837 = vunpack.c.l.s8.bf16 %v5757
    %v5838 = vunpack.c.h.s8.bf16 %v5754
    %v5839 = vunpack.c.h.s8.bf16 %v5755
    %v5840 = vunpack.c.h.s8.bf16 %v5756
    %v5841 = vunpack.c.h.s8.bf16 %v5757
    %v5842 = vunpack.c.l.s8.bf16 %v5758
    %v5843 = vunpack.c.l.s8.bf16 %v5759
    %v5844 = vunpack.c.l.s8.bf16 %v5760
    %v5845 = vunpack.c.l.s8.bf16 %v5761
    %v5846 = vunpack.c.h.s8.bf16 %v5758
    %v5847 = vunpack.c.h.s8.bf16 %v5759
    %v5848 = vunpack.c.h.s8.bf16 %v5760
    %v5849 = vunpack.c.h.s8.bf16 %v5761
    %v5850 = vunpack.c.l.s8.bf16 %v5762
    %v5851 = vunpack.c.l.s8.bf16 %v5763
    %v5852 = vunpack.c.l.s8.bf16 %v5764
    %v5853 = vunpack.c.l.s8.bf16 %v5765
    %v5854 = vunpack.c.h.s8.bf16 %v5762
    %v5855 = vunpack.c.h.s8.bf16 %v5763
    %v5856 = vunpack.c.h.s8.bf16 %v5764
    %v5857 = vunpack.c.h.s8.bf16 %v5765
    %v5858 = vunpack.c.l.s8.bf16 %v5766
    %v5859 = vunpack.c.l.s8.bf16 %v5767
    %v5860 = vunpack.c.l.s8.bf16 %v5768
    %v5861 = vunpack.c.l.s8.bf16 %v5769
    %v5862 = vunpack.c.h.s8.bf16 %v5766
    %v5863 = vunpack.c.h.s8.bf16 %v5767
    %v5864 = vunpack.c.h.s8.bf16 %v5768
    %v5865 = vunpack.c.h.s8.bf16 %v5769
    %v5866 = vunpack.c.l.s8.bf16 %v5770
    %v5867 = vunpack.c.l.s8.bf16 %v5771
    %v5868 = vunpack.c.l.s8.bf16 %v5772
    %v5869 = vunpack.c.l.s8.bf16 %v5773
    %v5870 = vunpack.c.h.s8.bf16 %v5770
    %v5871 = vunpack.c.h.s8.bf16 %v5771
    %v5872 = vunpack.c.h.s8.bf16 %v5772
    %v5873 = vunpack.c.h.s8.bf16 %v5773
    %v5874 = vunpack.c.l.s8.bf16 %v5774
    %v5875 = vunpack.c.l.s8.bf16 %v5775
    %v5876 = vunpack.c.l.s8.bf16 %v5776
    %v5877 = vunpack.c.l.s8.bf16 %v5777
    %v5878 = vunpack.c.h.s8.bf16 %v5774
    %v5879 = vunpack.c.h.s8.bf16 %v5775
    %v5880 = vunpack.c.h.s8.bf16 %v5776
    %v5881 = vunpack.c.h.s8.bf16 %v5777
    %v5882 = vunpack.c.l.s8.bf16 %v5778
    %v5883 = vunpack.c.l.s8.bf16 %v5779
    %v5884 = vunpack.c.l.s8.bf16 %v5780
    %v5885 = vunpack.c.l.s8.bf16 %v5781
    %v5886 = vunpack.c.h.s8.bf16 %v5778
    %v5887 = vunpack.c.h.s8.bf16 %v5779
    %v5888 = vunpack.c.h.s8.bf16 %v5780
    %v5889 = vunpack.c.h.s8.bf16 %v5781
    %v5890 = vunpack.c.l.s8.bf16 %v5782
    %v5891 = vunpack.c.l.s8.bf16 %v5783
    %v5892 = vunpack.c.l.s8.bf16 %v5784
    %v5893 = vunpack.c.l.s8.bf16 %v5785
    %v5894 = vunpack.c.h.s8.bf16 %v5782
    %v5895 = vunpack.c.h.s8.bf16 %v5783
    %v5896 = vunpack.c.h.s8.bf16 %v5784
    %v5897 = vunpack.c.h.s8.bf16 %v5785
    %v5898 = vunpack.c.l.s8.bf16 %v5786
    %v5899 = vunpack.c.l.s8.bf16 %v5787
    %v5900 = vunpack.c.l.s8.bf16 %v5788
    %v5901 = vunpack.c.l.s8.bf16 %v5789
    %v5902 = vunpack.c.h.s8.bf16 %v5786
    %v5903 = vunpack.c.h.s8.bf16 %v5787
    %v5904 = vunpack.c.h.s8.bf16 %v5788
    %v5905 = vunpack.c.h.s8.bf16 %v5789
    %v5906 = vunpack.c.l.s8.bf16 %v5790
    %v5907 = vunpack.c.l.s8.bf16 %v5791
    %v5908 = vunpack.c.l.s8.bf16 %v5792
    %v5909 = vunpack.c.l.s8.bf16 %v5793
    %v5910 = vunpack.c.h.s8.bf16 %v5790
    %v5911 = vunpack.c.h.s8.bf16 %v5791
    %v5912 = vunpack.c.h.s8.bf16 %v5792
    %v5913 = vunpack.c.h.s8.bf16 %v5793
    %v5914 = vunpack.c.l.s8.bf16 %v5794
    %v5915 = vunpack.c.l.s8.bf16 %v5795
    %v5916 = vunpack.c.l.s8.bf16 %v5796
    %v5917 = vunpack.c.l.s8.bf16 %v5797
    %v5918 = vunpack.c.h.s8.bf16 %v5794
    %v5919 = vunpack.c.h.s8.bf16 %v5795
    %v5920 = vunpack.c.h.s8.bf16 %v5796
    %v5921 = vunpack.c.h.s8.bf16 %v5797
    %v5922 = vunpack.c.l.s8.bf16 %v5798
    %v5923 = vunpack.c.l.s8.bf16 %v5799
    %v5924 = vunpack.c.l.s8.bf16 %v5800
    %v5925 = vunpack.c.l.s8.bf16 %v5801
    %v5926 = vunpack.c.h.s8.bf16 %v5798
    %v5927 = vunpack.c.h.s8.bf16 %v5799
    %v5928 = vunpack.c.h.s8.bf16 %v5800
    %v5929 = vunpack.c.h.s8.bf16 %v5801
    %5930 = vmatprep.subr.bf16.mxu0 %v5803
    %5931 = vmatpush1.bf16.msra.mxu0 %v5802
    %5932 = vmatprep.subr.bf16.mxu0 %v5807
    %5933 = vmatpush1.bf16.msra.mxu0 %v5806
    %5934 = vmatprep.subr.bf16.mxu0 %v5811
    %5935 = vmatpush1.bf16.msra.mxu0 %v5810
    %5936 = vmatprep.subr.bf16.mxu0 %v5815
    %5937 = vmatpush1.bf16.msra.mxu0 %v5814
    %5938 = vmatprep.subr.bf16.mxu0 %v5819
    %5939 = vmatpush1.bf16.msra.mxu0 %v5818
    %5940 = vmatprep.subr.bf16.mxu0 %v5823
    %5941 = vmatpush1.bf16.msra.mxu0 %v5822
    %5942 = vmatprep.subr.bf16.mxu0 %v5827
    %5943 = vmatpush1.bf16.msra.mxu0 %v5826
    %5944 = vmatprep.subr.bf16.mxu0 %v5831
    %5945 = vmatpush1.bf16.msra.mxu0 %v5830
    %5946 = vmatprep.subr.bf16.mxu0 %v5835
    %5947 = vmatpush1.bf16.msra.mxu0 %v5834
    %5948 = vmatprep.subr.bf16.mxu0 %v5839
    %5949 = vmatpush1.bf16.msra.mxu0 %v5838
    %5950 = vmatprep.subr.bf16.mxu0 %v5843
    %5951 = vmatpush1.bf16.msra.mxu0 %v5842
    %5952 = vmatprep.subr.bf16.mxu0 %v5847
    %5953 = vmatpush1.bf16.msra.mxu0 %v5846
    %5954 = vmatprep.subr.bf16.mxu0 %v5851
    %5955 = vmatpush1.bf16.msra.mxu0 %v5850
    %5956 = vmatprep.subr.bf16.mxu0 %v5855
    %5957 = vmatpush1.bf16.msra.mxu0 %v5854
    %5958 = vmatprep.subr.bf16.mxu0 %v5859
    %5959 = vmatpush1.bf16.msra.mxu0 %v5858
    %5960 = vmatprep.subr.bf16.mxu0 %v5863
    %5961 = vmatpush1.bf16.msra.mxu0 %v5862
    %5962 = vmatprep.mubr.bf16.mxu0 %v5733
    %5963 = vmatmul.mubr.bf16.gmra.mrb[0].mxu0 %v5732
    %v5964 = vpop.f32.mrb[0].mxu0
    %v5965 = vadd.f32 0.0, %v5964
    %v5966 = vpop.f32.mrb[0].mxu0
    %v5967 = vadd.f32 0.0, %v5966
    %v5968 = vpop.f32.mrb[0].mxu0
    %v5969 = vpop.f32.mrb[0].mxu0
    %5970 = vdwg.mxu0
    %5971 = vmatprep.subr.bf16.mxu0 %v5867
    %5972 = vmatpush1.bf16.msra.mxu0 %v5866
    %5973 = vmatprep.subr.bf16.mxu0 %v5871
    %5974 = vmatpush1.bf16.msra.mxu0 %v5870
    %5975 = vmatprep.subr.bf16.mxu0 %v5875
    %5976 = vmatpush1.bf16.msra.mxu0 %v5874
    %5977 = vmatprep.subr.bf16.mxu0 %v5879
    %5978 = vmatpush1.bf16.msra.mxu0 %v5878
    %5979 = vmatprep.subr.bf16.mxu0 %v5883
    %5980 = vmatpush1.bf16.msra.mxu0 %v5882
    %5981 = vmatprep.subr.bf16.mxu0 %v5887
    %5982 = vmatpush1.bf16.msra.mxu0 %v5886
    %5983 = vmatprep.subr.bf16.mxu0 %v5891
    %5984 = vmatpush1.bf16.msra.mxu0 %v5890
    %5985 = vmatprep.subr.bf16.mxu0 %v5895
    %5986 = vmatpush1.bf16.msra.mxu0 %v5894
    %5987 = vmatprep.subr.bf16.mxu0 %v5899
    %5988 = vmatpush1.bf16.msra.mxu0 %v5898
    %5989 = vmatprep.subr.bf16.mxu0 %v5903
    %5990 = vmatpush1.bf16.msra.mxu0 %v5902
    %5991 = vmatprep.subr.bf16.mxu0 %v5907
    %5992 = vmatpush1.bf16.msra.mxu0 %v5906
    %5993 = vmatprep.subr.bf16.mxu0 %v5911
    %5994 = vmatpush1.bf16.msra.mxu0 %v5910
    %5995 = vmatprep.subr.bf16.mxu0 %v5915
    %5996 = vmatpush1.bf16.msra.mxu0 %v5914
    %5997 = vmatprep.subr.bf16.mxu0 %v5919
    %5998 = vmatpush1.bf16.msra.mxu0 %v5918
    %5999 = vmatprep.subr.bf16.mxu0 %v5923
    %6000 = vmatpush1.bf16.msra.mxu0 %v5922
    %6001 = vmatprep.subr.bf16.mxu0 %v5927
    %6002 = vmatpush1.bf16.msra.mxu0 %v5926
    %6003 = vmatprep.mubr.bf16.mxu0 %v5735
    %6004 = vmatmul.mubr.bf16.gmra.mrb[0].mxu0 %v5734
    %v6005 = vpop.f32.mrb[0].mxu0
    %v6006 = vadd.f32 %v5965, %v6005
    %v6007 = vpop.f32.mrb[0].mxu0
    %v6008 = vadd.f32 %v5967, %v6007
    %v6009 = vpop.f32.mrb[0].mxu0
    %v6010 = vpop.f32.mrb[0].mxu0
    %6011 = vdwg.mxu0
    %6012 = vmatprep.subr.bf16.mxu0 %v5805
    %6013 = vmatpush1.bf16.msra.mxu0 %v5804
    %6014 = vmatprep.subr.bf16.mxu0 %v5809
    %6015 = vmatpush1.bf16.msra.mxu0 %v5808
    %6016 = vmatprep.subr.bf16.mxu0 %v5813
    %6017 = vmatpush1.bf16.msra.mxu0 %v5812
    %6018 = vmatprep.subr.bf16.mxu0 %v5817
    %6019 = vmatpush1.bf16.msra.mxu0 %v5816
    %6020 = vmatprep.subr.bf16.mxu0 %v5821
    %6021 = vmatpush1.bf16.msra.mxu0 %v5820
    %6022 = vmatprep.subr.bf16.mxu0 %v5825
    %6023 = vmatpush1.bf16.msra.mxu0 %v5824
    %6024 = vmatprep.subr.bf16.mxu0 %v5829
    %6025 = vmatpush1.bf16.msra.mxu0 %v5828
    %6026 = vmatprep.subr.bf16.mxu0 %v5833
    %6027 = vmatpush1.bf16.msra.mxu0 %v5832
    %6028 = vmatprep.subr.bf16.mxu0 %v5837
    %6029 = vmatpush1.bf16.msra.mxu0 %v5836
    %6030 = vmatprep.subr.bf16.mxu0 %v5841
    %6031 = vmatpush1.bf16.msra.mxu0 %v5840
    %6032 = vmatprep.subr.bf16.mxu0 %v5845
    %6033 = vmatpush1.bf16.msra.mxu0 %v5844
    %6034 = vmatprep.subr.bf16.mxu0 %v5849
    %6035 = vmatpush1.bf16.msra.mxu0 %v5848
    %6036 = vmatprep.subr.bf16.mxu0 %v5853
    %6037 = vmatpush1.bf16.msra.mxu0 %v5852
    %6038 = vmatprep.subr.bf16.mxu0 %v5857
    %6039 = vmatpush1.bf16.msra.mxu0 %v5856
    %6040 = vmatprep.subr.bf16.mxu0 %v5861
    %6041 = vmatpush1.bf16.msra.mxu0 %v5860
    %6042 = vmatprep.subr.bf16.mxu0 %v5865
    %6043 = vmatpush1.bf16.msra.mxu0 %v5864
    %6044 = vmatprep.mubr.bf16.mxu0 %v5733
    %6045 = vmatmul.mubr.bf16.gmra.mrb[0].mxu0 %v5732
    %v6046 = vpop.f32.mrb[0].mxu0
    %v6047 = vadd.f32 0.0, %v6046
    %v6048 = vpop.f32.mrb[0].mxu0
    %v6049 = vadd.f32 0.0, %v6048
    %v6050 = vpop.f32.mrb[0].mxu0
    %v6051 = vpop.f32.mrb[0].mxu0
    %6052 = vdwg.mxu0
    %6053 = vmatprep.subr.bf16.mxu0 %v5869
    %6054 = vmatpush1.bf16.msra.mxu0 %v5868
    %6055 = vmatprep.subr.bf16.mxu0 %v5873
    %6056 = vmatpush1.bf16.msra.mxu0 %v5872
    %6057 = vmatprep.subr.bf16.mxu0 %v5877
    %6058 = vmatpush1.bf16.msra.mxu0 %v5876
    %6059 = vmatprep.subr.bf16.mxu0 %v5881
    %6060 = vmatpush1.bf16.msra.mxu0 %v5880
    %6061 = vmatprep.subr.bf16.mxu0 %v5885
    %6062 = vmatpush1.bf16.msra.mxu0 %v5884
    %6063 = vmatprep.subr.bf16.mxu0 %v5889
    %6064 = vmatpush1.bf16.msra.mxu0 %v5888
    %6065 = vmatprep.subr.bf16.mxu0 %v5893
    %6066 = vmatpush1.bf16.msra.mxu0 %v5892
    %6067 = vmatprep.subr.bf16.mxu0 %v5897
    %6068 = vmatpush1.bf16.msra.mxu0 %v5896
    %6069 = vmatprep.subr.bf16.mxu0 %v5901
    %6070 = vmatpush1.bf16.msra.mxu0 %v5900
    %6071 = vmatprep.subr.bf16.mxu0 %v5905
    %6072 = vmatpush1.bf16.msra.mxu0 %v5904
    %6073 = vmatprep.subr.bf16.mxu0 %v5909
    %6074 = vmatpush1.bf16.msra.mxu0 %v5908
    %6075 = vmatprep.subr.bf16.mxu0 %v5913
    %6076 = vmatpush1.bf16.msra.mxu0 %v5912
    %6077 = vmatprep.subr.bf16.mxu0 %v5917
    %6078 = vmatpush1.bf16.msra.mxu0 %v5916
    %6079 = vmatprep.subr.bf16.mxu0 %v5921
    %6080 = vmatpush1.bf16.msra.mxu0 %v5920
    %6081 = vmatprep.subr.bf16.mxu0 %v5925
    %6082 = vmatpush1.bf16.msra.mxu0 %v5924
    %6083 = vmatprep.subr.bf16.mxu0 %v5929
    %6084 = vmatpush1.bf16.msra.mxu0 %v5928
    %6085 = vmatprep.mubr.bf16.mxu0 %v5735
    %6086 = vmatmul.mubr.bf16.gmra.mrb[0].mxu0 %v5734
    %v6087 = vpop.f32.mrb[0].mxu0
    %v6088 = vadd.f32 %v6047, %v6087
    %v6089 = vpop.f32.mrb[0].mxu0
    %v6090 = vadd.f32 %v6049, %v6089
    %v6091 = vpop.f32.mrb[0].mxu0
    %v6092 = vpop.f32.mrb[0].mxu0
    %6093 = vdwg.mxu0
    %s6094 = scalar_lea.vmem [#allocation18], 7
    %v6095 = vld [vmem:[%s6094] ss:$8 sm:$0xf]
    %v6097 = vlaneseq
    %v6098 = vshrl.u32 %v6097, 7
    %v6099 = vsub.s32 0, %v6098
    %v6100 = vrot.slane %v6095, %v6099
    %v6101 = vlaneseq
    %v6102 = vshrl.u32 %v6101, 7
    %v6103 = vsub.s32 1, %v6102
    %v6104 = vrot.slane %v6095, %v6103
    %v6105 = vlaneseq
    %v6106 = vshrl.u32 %v6105, 7
    %v6107 = vsub.s32 2, %v6106
    %v6108 = vrot.slane %v6095, %v6107
    %v6109 = vlaneseq
    %v6110 = vshrl.u32 %v6109, 7
    %v6111 = vsub.s32 3, %v6110
    %v6112 = vrot.slane %v6095, %v6111
    %v6117 = vmul.f32 %v6006, %v6100
    %v6118 = vmul.f32 %v6008, %v6104
    %v6119 = vmul.f32 %v6088, %v6108
    %v6120 = vmul.f32 %v6090, %v6112
    %s6121 = scalar_lea.vmem [#allocation16], 7
    %v6122 = vld [vmem:[%s6121] ss:$8 sm:$0xf]
    %v6124 = vlaneseq
    %v6125 = vshrl.u32 %v6124, 7
    %v6126 = vsub.s32 0, %v6125
    %v6127 = vrot.slane %v6122, %v6126
    %v6128 = vlaneseq
    %v6129 = vshrl.u32 %v6128, 7
    %v6130 = vsub.s32 1, %v6129
    %v6131 = vrot.slane %v6122, %v6130
    %v6132 = vlaneseq
    %v6133 = vshrl.u32 %v6132, 7
    %v6134 = vsub.s32 2, %v6133
    %v6135 = vrot.slane %v6122, %v6134
    %v6136 = vlaneseq
    %v6137 = vshrl.u32 %v6136, 7
    %v6138 = vsub.s32 3, %v6137
    %v6139 = vrot.slane %v6122, %v6138
    %v6144 = vadd.f32 %v6117, %v6127
    %v6145 = vadd.f32 %v6118, %v6131
    %v6146 = vadd.f32 %v6119, %v6135
    %v6147 = vadd.f32 %v6120, %v6139
    %vm6148 = vcmp.ge.f32.partialorder %v6144, 0.0
    %vm6149 = vcmp.ge.f32.partialorder %v6145, 0.0
    %vm6150 = vcmp.ge.f32.partialorder %v6146, 0.0
    %vm6151 = vcmp.ge.f32.partialorder %v6147, 0.0
    %s6152 = sld [smem:[#allocation19 + $0x7]]
    %v6153 = vstv %s6152
    %v6154 = vmul.f32 %v6153, %v6144
    %v6155 = vmul.f32 %v6153, %v6145
    %v6156 = vmul.f32 %v6153, %v6146
    %v6157 = vmul.f32 %v6153, %v6147
    %v6158 = vsel %vm6148, %v6144, %v6154
    %v6159 = vsel %vm6149, %v6145, %v6155
    %v6160 = vsel %vm6150, %v6146, %v6156
    %v6161 = vsel %vm6151, %v6147, %v6157
    %v6162 = vpack.c.bf16 %v6158, %v6158
    %v6163 = vpack.c.bf16 %v6159, %v6159
    %v6164 = vpack.c.bf16 %v6160, %v6160
    %v6165 = vpack.c.bf16 %v6161, %v6161
    %s6166 = smul.u32 %s4444, 1
    %s6167 = sshll.u32 %s6166, 4
    %6168 = dma.done %s175, %s6167
    %v6169 = vld [vmem:[#allocation10] sm:$0xff]
    %v6170 = vld [vmem:[#allocation10 + $0x8] sm:$0xff]
    %v6171 = vld [vmem:[#allocation10 + $0x10] sm:$0xff]
    %v6172 = vld [vmem:[#allocation10 + $0x18] sm:$0xff]
    %v6173 = vld [vmem:[#allocation10 + $0x20] sm:$0xff]
    %v6174 = vld [vmem:[#allocation10 + $0x28] sm:$0xff]
    %v6175 = vld [vmem:[#allocation10 + $0x30] sm:$0xff]
    %v6176 = vld [vmem:[#allocation10 + $0x38] sm:$0xff]
    %v6177 = vld [vmem:[#allocation10 + $0x40] sm:$0xff]
    %v6178 = vld [vmem:[#allocation10 + $0x48] sm:$0xff]
    %v6179 = vld [vmem:[#allocation10 + $0x50] sm:$0xff]
    %v6180 = vld [vmem:[#allocation10 + $0x58] sm:$0xff]
    %v6181 = vld [vmem:[#allocation10 + $0x60] sm:$0xff]
    %v6182 = vld [vmem:[#allocation10 + $0x68] sm:$0xff]
    %v6183 = vld [vmem:[#allocation10 + $0x70] sm:$0xff]
    %v6184 = vld [vmem:[#allocation10 + $0x78] sm:$0xff]
    %v6185 = vunpack.c.l.s8.bf16 %v6169
    %v6186 = vunpack.c.h.s8.bf16 %v6169
    %v6187 = vunpack.c.l.s8.bf16 %v6170
    %v6188 = vunpack.c.h.s8.bf16 %v6170
    %v6189 = vunpack.c.l.s8.bf16 %v6171
    %v6190 = vunpack.c.h.s8.bf16 %v6171
    %v6191 = vunpack.c.l.s8.bf16 %v6172
    %v6192 = vunpack.c.h.s8.bf16 %v6172
    %v6193 = vunpack.c.l.s8.bf16 %v6173
    %v6194 = vunpack.c.h.s8.bf16 %v6173
    %v6195 = vunpack.c.l.s8.bf16 %v6174
    %v6196 = vunpack.c.h.s8.bf16 %v6174
    %v6197 = vunpack.c.l.s8.bf16 %v6175
    %v6198 = vunpack.c.h.s8.bf16 %v6175
    %v6199 = vunpack.c.l.s8.bf16 %v6176
    %v6200 = vunpack.c.h.s8.bf16 %v6176
    %v6201 = vunpack.c.l.s8.bf16 %v6177
    %v6202 = vunpack.c.h.s8.bf16 %v6177
    %v6203 = vunpack.c.l.s8.bf16 %v6178
    %v6204 = vunpack.c.h.s8.bf16 %v6178
    %v6205 = vunpack.c.l.s8.bf16 %v6179
    %v6206 = vunpack.c.h.s8.bf16 %v6179
    %v6207 = vunpack.c.l.s8.bf16 %v6180
    %v6208 = vunpack.c.h.s8.bf16 %v6180
    %v6209 = vunpack.c.l.s8.bf16 %v6181
    %v6210 = vunpack.c.h.s8.bf16 %v6181
    %v6211 = vunpack.c.l.s8.bf16 %v6182
    %v6212 = vunpack.c.h.s8.bf16 %v6182
    %v6213 = vunpack.c.l.s8.bf16 %v6183
    %v6214 = vunpack.c.h.s8.bf16 %v6183
    %v6215 = vunpack.c.l.s8.bf16 %v6184
    %v6216 = vunpack.c.h.s8.bf16 %v6184
    %6217 = vmatprep.subr.bf16.mxu0 0
    %6218 = vmatpush1.bf16.msra.mxu0 %v6185
    %6219 = vmatprep.subr.bf16.mxu0 0
    %6220 = vmatpush1.bf16.msra.mxu0 %v6186
    %6221 = vmatprep.subr.bf16.mxu0 0
    %6222 = vmatpush1.bf16.msra.mxu0 %v6187
    %6223 = vmatprep.subr.bf16.mxu0 0
    %6224 = vmatpush1.bf16.msra.mxu0 %v6188
    %6225 = vmatprep.subr.bf16.mxu0 0
    %6226 = vmatpush1.bf16.msra.mxu0 %v6189
    %6227 = vmatprep.subr.bf16.mxu0 0
    %6228 = vmatpush1.bf16.msra.mxu0 %v6190
    %6229 = vmatprep.subr.bf16.mxu0 0
    %6230 = vmatpush1.bf16.msra.mxu0 %v6191
    %6231 = vmatprep.subr.bf16.mxu0 0
    %6232 = vmatpush1.bf16.msra.mxu0 %v6192
    %6233 = vmatprep.subr.bf16.mxu0 0
    %6234 = vmatpush1.bf16.msra.mxu0 %v6193
    %6235 = vmatprep.subr.bf16.mxu0 0
    %6236 = vmatpush1.bf16.msra.mxu0 %v6194
    %6237 = vmatprep.subr.bf16.mxu0 0
    %6238 = vmatpush1.bf16.msra.mxu0 %v6195
    %6239 = vmatprep.subr.bf16.mxu0 0
    %6240 = vmatpush1.bf16.msra.mxu0 %v6196
    %6241 = vmatprep.subr.bf16.mxu0 0
    %6242 = vmatpush1.bf16.msra.mxu0 %v6197
    %6243 = vmatprep.subr.bf16.mxu0 0
    %6244 = vmatpush1.bf16.msra.mxu0 %v6198
    %6245 = vmatprep.subr.bf16.mxu0 0
    %6246 = vmatpush1.bf16.msra.mxu0 %v6199
    %6247 = vmatprep.subr.bf16.mxu0 0
    %6248 = vmatpush1.bf16.msra.mxu0 %v6200
    %6249 = vmatprep.mubr.bf16.mxu0 %v6163
    %6250 = vmatmul.mubr.bf16.gmra.mrb[0].mxu0 %v6162
    %v6251 = vpop.f32.mrb[0].mxu0
    %v6252 = vadd.f32 0.0, %v6251
    %v6253 = vpop.f32.mrb[0].mxu0
    %v6254 = vpop.f32.mrb[0].mxu0
    %v6255 = vpop.f32.mrb[0].mxu0
    %6256 = vdwg.mxu0
    %6257 = vmatprep.subr.bf16.mxu0 0
    %6258 = vmatpush1.bf16.msra.mxu0 %v6201
    %6259 = vmatprep.subr.bf16.mxu0 0
    %6260 = vmatpush1.bf16.msra.mxu0 %v6202
    %6261 = vmatprep.subr.bf16.mxu0 0
    %6262 = vmatpush1.bf16.msra.mxu0 %v6203
    %6263 = vmatprep.subr.bf16.mxu0 0
    %6264 = vmatpush1.bf16.msra.mxu0 %v6204
    %6265 = vmatprep.subr.bf16.mxu0 0
    %6266 = vmatpush1.bf16.msra.mxu0 %v6205
    %6267 = vmatprep.subr.bf16.mxu0 0
    %6268 = vmatpush1.bf16.msra.mxu0 %v6206
    %6269 = vmatprep.subr.bf16.mxu0 0
    %6270 = vmatpush1.bf16.msra.mxu0 %v6207
    %6271 = vmatprep.subr.bf16.mxu0 0
    %6272 = vmatpush1.bf16.msra.mxu0 %v6208
    %6273 = vmatprep.subr.bf16.mxu0 0
    %6274 = vmatpush1.bf16.msra.mxu0 %v6209
    %6275 = vmatprep.subr.bf16.mxu0 0
    %6276 = vmatpush1.bf16.msra.mxu0 %v6210
    %6277 = vmatprep.subr.bf16.mxu0 0
    %6278 = vmatpush1.bf16.msra.mxu0 %v6211
    %6279 = vmatprep.subr.bf16.mxu0 0
    %6280 = vmatpush1.bf16.msra.mxu0 %v6212
    %6281 = vmatprep.subr.bf16.mxu0 0
    %6282 = vmatpush1.bf16.msra.mxu0 %v6213
    %6283 = vmatprep.subr.bf16.mxu0 0
    %6284 = vmatpush1.bf16.msra.mxu0 %v6214
    %6285 = vmatprep.subr.bf16.mxu0 0
    %6286 = vmatpush1.bf16.msra.mxu0 %v6215
    %6287 = vmatprep.subr.bf16.mxu0 0
    %6288 = vmatpush1.bf16.msra.mxu0 %v6216
    %6289 = vmatprep.mubr.bf16.mxu0 %v6165
    %6290 = vmatmul.mubr.bf16.gmra.mrb[0].mxu0 %v6164
    %v6291 = vpop.f32.mrb[0].mxu0
    %v6292 = vadd.f32 %v6252, %v6291
    %v6293 = vpop.f32.mrb[0].mxu0
    %v6294 = vpop.f32.mrb[0].mxu0
    %v6295 = vpop.f32.mrb[0].mxu0
    %6296 = vdwg.mxu0
    %v6297 = vld [vmem:[#allocation18 + $0x40] ss:$0 sm:$0xff]
    %v6298 = vmul.f32 %v6292, %v6297
    %v6299 = vld [vmem:[#allocation16 + $0x40] ss:$0 sm:$0xff]
    %v6300 = vadd.f32 %v6298, %v6299
    %6301 = vst [vmem:[#allocation20] sm:$0xff] %v6300
    // Predicated region
    $region70: #{tpu_custom_call.1} parent=1 // pred_check
      _
    $region71: #{tpu_custom_call.1} parent=1 // pred_check_branch
      %6303 = sbr.rel (0) target = $region73
    $region72: #{tpu_custom_call.1} parent=1 // pred_region
      %s6305 = ssub.s32 128, 128
      %6306 = vsyncadd [#allocation14], %s6305
      %s6308 = sshll.u32 [#allocation20], 4
      %s6309 = int_to_ptr.vmem [resolvable:$true] %s6308
      %6311 = dma.vmem_to_hbm [thread:$0]  %s6309, 128, %s13, [#allocation14]
    $region73: #{tpu_custom_call.1} parent=1 // pred_fallthru
      _
    // Predicated region
    $region74: #{tpu_custom_call.1} parent=1 // pred_check
      _
    $region75: #{tpu_custom_call.1} parent=1 // pred_check_branch
      %6313 = sbr.rel (0) target = $region77
    $region76: #{tpu_custom_call.1} parent=1 // pred_region
      %6314 = dma.done [#allocation14], 128
    $region77: #{tpu_custom_call.1} parent=1 // pred_fallthru
      _
    %6315 = vsyncpa [#allocation13], 1
    %6316 = vsyncpa [#allocation17], 1
    %6317 = vsyncpa [#allocation14], 1
    %6318 = vsyncpa [#allocation15], 1
  %6319 = vsyncmov [#allocation11]
  %s6320 = vpop.sfrf %6319
  %p6321 = scmp.eq.s32.totalorder %s6320, 0
  %p6322 = pneg %p6321
  %6324 = shalt.err (%p6322)
  %s6325 = scalar_lea.sflag [#allocation11], 1
  %6326 = vsyncmov %s6325
  %s6327 = vpop.sfrf %6326
  %p6328 = scmp.eq.s32.totalorder %s6327, 0
  %p6329 = pneg %p6328
  %6331 = shalt.err (%p6329)
  %s6332 = scalar_lea.sflag [#allocation11], 2
  %6333 = vsyncmov %s6332
  %s6334 = vpop.sfrf %6333
  %p6335 = scmp.eq.s32.totalorder %s6334, 0
  %p6336 = pneg %p6335
  %6338 = shalt.err (%p6336)
  %s6339 = scalar_lea.sflag [#allocation11], 3
  %6340 = vsyncmov %s6339
  %s6341 = vpop.sfrf %6340
  %p6342 = scmp.eq.s32.totalorder %s6341, 0
  %p6343 = pneg %p6342
  %6345 = shalt.err (%p6343)
  %s6346 = scalar_lea.sflag [#allocation11], 4
  %6347 = vsyncmov %s6346
  %s6348 = vpop.sfrf %6347
  %p6349 = scmp.eq.s32.totalorder %s6348, 0
  %p6350 = pneg %p6349
  %6352 = shalt.err (%p6350)
  %s6353 = scalar_lea.sflag [#allocation11], 5
  %6354 = vsyncmov %s6353
  %s6355 = vpop.sfrf %6354
  %p6356 = scmp.eq.s32.totalorder %s6355, 0
  %p6357 = pneg %p6356
  %6359 = shalt.err (%p6357)
  %s6360 = scalar_lea.sflag [#allocation11], 6
  %6361 = vsyncmov %s6360
  %s6362 = vpop.sfrf %6361
  %p6363 = scmp.eq.s32.totalorder %s6362, 0
  %p6364 = pneg %p6363
  %6366 = shalt.err (%p6364)
  %s6367 = scalar_lea.sflag [#allocation11], 7
  %6368 = vsyncmov %s6367
  %s6369 = vpop.sfrf %6368
  %p6370 = scmp.eq.s32.totalorder %s6369, 0
  %p6371 = pneg %p6370
  %6373 = shalt.err (%p6371)
  %s6374 = scalar_lea.sflag [#allocation11], 8
  %6375 = vsyncmov %s6374
  %s6376 = vpop.sfrf %6375
  %p6377 = scmp.eq.s32.totalorder %s6376, 0
  %p6378 = pneg %p6377
  %6380 = shalt.err (%p6378)

</llo_original>
